<compile_context>
chip_gen: v6e
topology: v6e:2x2x1
jax: 0.10.0
libtpu: 0.0.40
codegen_flags: <defaults>
</compile_context>

<pallas_src>
import functools
import math

import jax
import jax.numpy as jnp
from jax.experimental import pallas as pl
from jax.experimental.pallas import tpu as pltpu

# ---------------- model config (small, consistent with the module) ----------------
IMG_SIZE = 16
PATCH_SIZE = 4
CHANNELS = 4
NUM_CLASSES = 10
DIM = 32          # embed_size
DEPTH = 2
HEADS = 4
MLP_DIM = 64      # mlp head hidden
FWD_EXPANSION = 4
HEAD_DIM = DIM // HEADS
NUM_PATCHES = (IMG_SIZE // PATCH_SIZE) ** 2       # 16
PATCH_DIM = CHANNELS * PATCH_SIZE ** 2            # 64
SEQ = NUM_PATCHES + 1                             # 17 (cls + patches)
CLS_ROW = NUM_PATCHES                             # internal (reordered) cls row: 16
SEQ_PAD = 24                                      # pad token rows to a multiple of 8
FF_DIM = FWD_EXPANSION * DIM                      # 128
QKV_W = 2 * DIM + HEADS * DIM                     # fused projection width: Q|K|V·Wo = 192
LN_EPS = 1e-5
NEG_INF = -1e30


# ---------------- in-kernel helpers ----------------
def _ln(x, g, b, eps=LN_EPS):
    """LayerNorm over the last dim; g/b are (1, E) and broadcast over rows."""
    mean = jnp.mean(x, axis=-1, keepdims=True)
    var = jnp.mean(jnp.square(x - mean), axis=-1, keepdims=True)
    return (x - mean) * jax.lax.rsqrt(var + eps) * g + b


# ---------------- the single fused ViT kernel ----------------
def _vit_kernel(patches_ref, pw_ref, pb_ref, pospatch_ref, clspad_ref,
                wqkv_ref, bo_ref, ln1g_ref, ln1b_ref,
                w1_ref, b1_ref, w2_ref, b2_ref, ln2g_ref, ln2b_ref,
                hlng_ref, hlnb_ref, hw1_ref, hb1_ref, hw2_ref, hb2_ref,
                out_ref, *, batch):
    f32 = jnp.float32
    B, SP, S, E, H, Dh, NP = batch, SEQ_PAD, SEQ, DIM, HEADS, HEAD_DIM, NUM_PATCHES
    scale = 1.0 / math.sqrt(E)   # reference divides by sqrt(embed_size), not head_dim

    # ---- embedding: patch linear + pos emb; cls(+pos0) and zero-padding come in as
    #      the precomputed 8-row "clspad" slab so every concat is 8-row aligned.
    pe = jnp.dot(patches_ref[...], pw_ref[...],
                 preferred_element_type=f32) + pb_ref[...]           # (B*NP, E)
    pos = pospatch_ref[...]                                          # (NP, E)
    clspad = clspad_ref[...]                                         # (8, E)
    rows = []
    for b in range(B):
        rows.append(pe[b * NP:(b + 1) * NP, :] + pos)                # patch tokens 0..15
        rows.append(clspad)                                          # cls at row 16, pad 17..23
    x = jnp.concatenate(rows, axis=0)                                # (B*SP, E)

    # additive key mask: padded token rows (>= SEQ) contribute 0 after softmax
    col = jax.lax.broadcasted_iota(jnp.int32, (SP, SP), 1)
    kmask = jnp.where(col < S, 0.0, NEG_INF).astype(f32)             # (SP, SP)

    # ---- transformer blocks (statically unrolled over depth, batch and heads)
    for d in range(DEPTH):
        # fused projection: Q (E cols) | K (E cols) | per-head V·Wo (H*E cols)
        qkv = jnp.dot(x, wqkv_ref[d], preferred_element_type=f32)    # (B*SP, 192)

        attn_rows = []
        for b in range(B):
            r0 = b * SP
            acc = jnp.zeros((SP, E), f32)
            for h in range(H):
                q = qkv[r0:r0 + SP, h * Dh:(h + 1) * Dh]                    # (SP, Dh)
                k = qkv[r0:r0 + SP, E + h * Dh:E + (h + 1) * Dh]            # (SP, Dh)
                vo = qkv[r0:r0 + SP, 2 * E + h * E:2 * E + (h + 1) * E]     # (SP, E)
                s = jax.lax.dot_general(q, k, (((1,), (1,)), ((), ())),
                                        preferred_element_type=f32) * scale + kmask
                s = s - jnp.max(s, axis=-1, keepdims=True)
                p = jnp.exp(s)
                p = p * pl.reciprocal(jnp.sum(p, axis=-1, keepdims=True), approx=True)
                acc = acc + jnp.dot(p, vo, preferred_element_type=f32)      # fc_out folded in
            attn_rows.append(acc)
        attn = jnp.concatenate(attn_rows, axis=0) + bo_ref[d]        # (B*SP, E)

        h1 = _ln(attn + x, ln1g_ref[d], ln1b_ref[d])
        ff = jnp.maximum(jnp.dot(h1, w1_ref[d], preferred_element_type=f32)
                         + b1_ref[d], 0.0)
        ff = jnp.dot(ff, w2_ref[d], preferred_element_type=f32) + b2_ref[d]
        x = _ln(ff + h1, ln2g_ref[d], ln2b_ref[d])

    # ---- classifier head on the cls rows only (rows b*SP + 16, 8-aligned slices)
    cls_rows = jnp.concatenate(
        [x[b * SP + CLS_ROW:b * SP + CLS_ROW + 1, :] for b in range(B)], axis=0)  # (B, E)
    hd = _ln(cls_rows, hlng_ref[...], hlnb_ref[...])
    hd = jnp.maximum(jnp.dot(hd, hw1_ref[...], preferred_element_type=f32)
                     + hb1_ref[...], 0.0)
    logits = jnp.dot(hd, hw2_ref[...], preferred_element_type=f32) + hb2_ref[...]
    out_ref[...] = logits.astype(out_ref.dtype)


# ---------------- wrapper: layout plumbing + single pallas_call ----------------
def vit_forward(x, params):
    """x: (B, C, H, W) float32 (NCHW, same as PyTorch)."""
    B, C, H, W = x.shape
    ps = PATCH_SIZE
    nh, nw = H // ps, W // ps
    # torch: unfold(2,p,p).unfold(3,p,p) -> (B,C,nh,nw,p,p); contiguous().view(B, nh*nw, -1)
    patches = x.reshape(B, C, nh, ps, nw, ps).transpose(0, 1, 2, 4, 3, 5)
    patches = patches.reshape(B * nh * nw, C * ps * ps).astype(jnp.float32)

    pos = params["pos_emb"].reshape(SEQ, DIM).astype(jnp.float32)
    cls = params["cls_token"].reshape(1, DIM).astype(jnp.float32)
    pospatch = pos[1:SEQ]                                            # (NP, E)
    clspad = jnp.concatenate(                                        # (8, E)
        [cls + pos[0:1], jnp.zeros((SEQ_PAD - SEQ, DIM), jnp.float32)], axis=0)

    # fused per-layer projection weights:
    #   block-diagonal Q, K (shared-per-head Linear(Dh, Dh) semantics) and the
    #   per-head V·Wo fold (fc_out absorbed; bias stays separate).
    eye_h = jnp.eye(HEADS, dtype=jnp.float32)

    def bd(w):                        # (Dh, Dh) -> block-diagonal (E, E)
        return jnp.kron(eye_h, w)

    def fused_proj(blk):
        wq, wk, wv, wo = blk["wq"], blk["wk"], blk["wv"], blk["wo"]
        vo_cols = []
        for h in range(HEADS):
            m = jnp.zeros((DIM, DIM), jnp.float32)
            m = m.at[h * HEAD_DIM:(h + 1) * HEAD_DIM, :].set(
                wv @ wo[h * HEAD_DIM:(h + 1) * HEAD_DIM, :])
            vo_cols.append(m)
        return jnp.concatenate([bd(wq), bd(wk)] + vo_cols, axis=1)   # (E, QKV_W)

    blocks = params["blocks"]
    wqkv_all = jnp.stack([fused_proj(b) for b in blocks])            # (D, E, 192)
    bo_all = jnp.stack([b["bo"].reshape(1, DIM) for b in blocks])
    ln1g_all = jnp.stack([b["ln1_g"].reshape(1, DIM) for b in blocks])
    ln1b_all = jnp.stack([b["ln1_b"].reshape(1, DIM) for b in blocks])
    w1_all = jnp.stack([b["w1"] for b in blocks])                    # (D, E, FF)
    b1_all = jnp.stack([b["b1"].reshape(1, FF_DIM) for b in blocks])
    w2_all = jnp.stack([b["w2"] for b in blocks])                    # (D, FF, E)
    b2_all = jnp.stack([b["b2"].reshape(1, DIM) for b in blocks])
    ln2g_all = jnp.stack([b["ln2_g"].reshape(1, DIM) for b in blocks])
    ln2b_all = jnp.stack([b["ln2_b"].reshape(1, DIM) for b in blocks])

    args = (
        patches,
        params["patch_w"], params["patch_b"].reshape(1, DIM),
        pospatch, clspad,
        wqkv_all, bo_all, ln1g_all, ln1b_all,
        w1_all, b1_all, w2_all, b2_all, ln2g_all, ln2b_all,
        params["head_ln_g"].reshape(1, DIM), params["head_ln_b"].reshape(1, DIM),
        params["head_w1"], params["head_b1"].reshape(1, MLP_DIM),
        params["head_w2"], params["head_b2"].reshape(1, NUM_CLASSES),
    )

    def _full_spec(a):
        idx = (0,) * a.ndim
        return pl.BlockSpec(a.shape, lambda i, _idx=idx: _idx)

    out = pl.pallas_call(
        functools.partial(_vit_kernel, batch=B),
        out_shape=jax.ShapeDtypeStruct((B, NUM_CLASSES), jnp.float32),
        grid=(1,),
        in_specs=[_full_spec(a) for a in args],
        out_specs=pl.BlockSpec((B, NUM_CLASSES), lambda i: (0, 0)),
        compiler_params=pltpu.CompilerParams(dimension_semantics=("arbitrary",)),
    )(*args)
    return out


# ---------------- deterministic parameter init ----------------
def init_params(key):
    def nrm(k, shape, scale=0.05):
        return (scale * jax.random.normal(k, shape)).astype(jnp.float32)

    keys = jax.random.split(key, 8 + DEPTH)
    params = {
        "patch_w": nrm(keys[0], (PATCH_DIM, DIM)),
        "patch_b": jnp.zeros((DIM,), jnp.float32),
        "cls_token": nrm(keys[1], (1, 1, DIM), 1.0),
        "pos_emb": nrm(keys[2], (1, NUM_PATCHES + 1, DIM), 1.0),
        "head_ln_g": jnp.ones((DIM,), jnp.float32),
        "head_ln_b": jnp.zeros((DIM,), jnp.float32),
        "head_w1": nrm(keys[3], (DIM, MLP_DIM)),
        "head_b1": jnp.zeros((MLP_DIM,), jnp.float32),
        "head_w2": nrm(keys[4], (MLP_DIM, NUM_CLASSES)),
        "head_b2": jnp.zeros((NUM_CLASSES,), jnp.float32),
        "blocks": [],
    }
    for d in range(DEPTH):
        bk = jax.random.split(keys[8 + d], 6)
        params["blocks"].append({
            "wq": nrm(bk[0], (HEAD_DIM, HEAD_DIM)),
            "wk": nrm(bk[1], (HEAD_DIM, HEAD_DIM)),
            "wv": nrm(bk[2], (HEAD_DIM, HEAD_DIM)),
            "wo": nrm(bk[3], (DIM, DIM)),
            "bo": jnp.zeros((DIM,), jnp.float32),
            "ln1_g": jnp.ones((DIM,), jnp.float32),
            "ln1_b": jnp.zeros((DIM,), jnp.float32),
            "w1": nrm(bk[4], (DIM, FWD_EXPANSION * DIM)),
            "b1": jnp.zeros((FWD_EXPANSION * DIM,), jnp.float32),
            "w2": nrm(bk[5], (FWD_EXPANSION * DIM, DIM)),
            "b2": jnp.zeros((DIM,), jnp.float32),
            "ln2_g": jnp.ones((DIM,), jnp.float32),
            "ln2_b": jnp.zeros((DIM,), jnp.float32),
        })
    return params


if __name__ == "__main__":
    key = jax.random.PRNGKey(0)
    x = jax.random.normal(key, (2, CHANNELS, IMG_SIZE, IMG_SIZE), dtype=jnp.float32)
    params = init_params(jax.random.PRNGKey(1))
    fwd = jax.jit(vit_forward)
    out = fwd(x, params)
    out = jax.block_until_ready(out)
    assert out.shape == (2, NUM_CLASSES)
    assert bool(jnp.all(jnp.isfinite(out)))
    print("KERNEL_OK")
</pallas_src>

<mosaic_0001>
module attributes {stable_mosaic.version = 11 : i64} {
  func.func @_vit_kernel(%arg0: i32, %arg1: memref<32x64xf32, #tpu.memory_space<vmem>>, %arg2: memref<64x32xf32, #tpu.memory_space<vmem>>, %arg3: memref<1x32xf32, #tpu.memory_space<vmem>>, %arg4: memref<16x32xf32, #tpu.memory_space<vmem>>, %arg5: memref<8x32xf32, #tpu.memory_space<vmem>>, %arg6: memref<2x32x192xf32, #tpu.memory_space<vmem>>, %arg7: memref<2x1x32xf32, #tpu.memory_space<vmem>>, %arg8: memref<2x1x32xf32, #tpu.memory_space<vmem>>, %arg9: memref<2x1x32xf32, #tpu.memory_space<vmem>>, %arg10: memref<2x32x128xf32, #tpu.memory_space<vmem>>, %arg11: memref<2x1x128xf32, #tpu.memory_space<vmem>>, %arg12: memref<2x128x32xf32, #tpu.memory_space<vmem>>, %arg13: memref<2x1x32xf32, #tpu.memory_space<vmem>>, %arg14: memref<2x1x32xf32, #tpu.memory_space<vmem>>, %arg15: memref<2x1x32xf32, #tpu.memory_space<vmem>>, %arg16: memref<1x32xf32, #tpu.memory_space<vmem>>, %arg17: memref<1x32xf32, #tpu.memory_space<vmem>>, %arg18: memref<32x64xf32, #tpu.memory_space<vmem>>, %arg19: memref<1x64xf32, #tpu.memory_space<vmem>>, %arg20: memref<64x10xf32, #tpu.memory_space<vmem>>, %arg21: memref<1x10xf32, #tpu.memory_space<vmem>>, %arg22: memref<2x10xf32, #tpu.memory_space<vmem>>) attributes {dimension_semantics = [#tpu.dimension_semantics<arbitrary>], iteration_bounds = array<i64: 1>, scalar_prefetch = 0 : i64, scratch_operands = 0 : i64, tpu.core_type = #tpu.core_type<tc>, window_params = [{pipeline_mode = #tpu.pipeline_mode<synchronous>, transform_indices = @transform_0, window_bounds = array<i64: 32, 64>}, {pipeline_mode = #tpu.pipeline_mode<synchronous>, transform_indices = @transform_1, window_bounds = array<i64: 64, 32>}, {pipeline_mode = #tpu.pipeline_mode<synchronous>, transform_indices = @transform_2, window_bounds = array<i64: 1, 32>}, {pipeline_mode = #tpu.pipeline_mode<synchronous>, transform_indices = @transform_3, window_bounds = array<i64: 16, 32>}, {pipeline_mode = #tpu.pipeline_mode<synchronous>, transform_indices = @transform_4, window_bounds = array<i64: 8, 32>}, {pipeline_mode = #tpu.pipeline_mode<synchronous>, transform_indices = @transform_5, window_bounds = array<i64: 2, 32, 192>}, {pipeline_mode = #tpu.pipeline_mode<synchronous>, transform_indices = @transform_6, window_bounds = array<i64: 2, 1, 32>}, {pipeline_mode = #tpu.pipeline_mode<synchronous>, transform_indices = @transform_7, window_bounds = array<i64: 2, 1, 32>}, {pipeline_mode = #tpu.pipeline_mode<synchronous>, transform_indices = @transform_8, window_bounds = array<i64: 2, 1, 32>}, {pipeline_mode = #tpu.pipeline_mode<synchronous>, transform_indices = @transform_9, window_bounds = array<i64: 2, 32, 128>}, {pipeline_mode = #tpu.pipeline_mode<synchronous>, transform_indices = @transform_10, window_bounds = array<i64: 2, 1, 128>}, {pipeline_mode = #tpu.pipeline_mode<synchronous>, transform_indices = @transform_11, window_bounds = array<i64: 2, 128, 32>}, {pipeline_mode = #tpu.pipeline_mode<synchronous>, transform_indices = @transform_12, window_bounds = array<i64: 2, 1, 32>}, {pipeline_mode = #tpu.pipeline_mode<synchronous>, transform_indices = @transform_13, window_bounds = array<i64: 2, 1, 32>}, {pipeline_mode = #tpu.pipeline_mode<synchronous>, transform_indices = @transform_14, window_bounds = array<i64: 2, 1, 32>}, {pipeline_mode = #tpu.pipeline_mode<synchronous>, transform_indices = @transform_15, window_bounds = array<i64: 1, 32>}, {pipeline_mode = #tpu.pipeline_mode<synchronous>, transform_indices = @transform_16, window_bounds = array<i64: 1, 32>}, {pipeline_mode = #tpu.pipeline_mode<synchronous>, transform_indices = @transform_17, window_bounds = array<i64: 32, 64>}, {pipeline_mode = #tpu.pipeline_mode<synchronous>, transform_indices = @transform_18, window_bounds = array<i64: 1, 64>}, {pipeline_mode = #tpu.pipeline_mode<synchronous>, transform_indices = @transform_19, window_bounds = array<i64: 64, 10>}, {pipeline_mode = #tpu.pipeline_mode<synchronous>, transform_indices = @transform_20, window_bounds = array<i64: 1, 10>}, {pipeline_mode = #tpu.pipeline_mode<synchronous>, transform_indices = @transform_21, window_bounds = array<i64: 2, 10>}]} {
    %c0 = arith.constant 0 : index
    %c0_0 = arith.constant 0 : index
    %0 = vector.load %arg1[%c0, %c0_0] : memref<32x64xf32, #tpu.memory_space<vmem>>, vector<32x64xf32>
    %c0_1 = arith.constant 0 : index
    %c0_2 = arith.constant 0 : index
    %1 = vector.load %arg2[%c0_1, %c0_2] : memref<64x32xf32, #tpu.memory_space<vmem>>, vector<64x32xf32>
    %cst = arith.constant dense<0.000000e+00> : vector<32x32xf32>
    %2 = tpu.matmul %0, %1, %cst {dimension_numbers = #tpu.dot_dimension_numbers<[1], [0], [0], [1], [0, 0, 1, 1], [], []>} : vector<32x64xf32>, vector<64x32xf32>, vector<32x32xf32> -> vector<32x32xf32>
    %c0_3 = arith.constant 0 : index
    %c0_4 = arith.constant 0 : index
    %3 = vector.load %arg3[%c0_3, %c0_4] : memref<1x32xf32, #tpu.memory_space<vmem>>, vector<1x32xf32>
    %4 = vector.broadcast %3 : vector<1x32xf32> to vector<32x32xf32>
    %5 = arith.addf %2, %4 : vector<32x32xf32>
    %c0_5 = arith.constant 0 : index
    %c0_6 = arith.constant 0 : index
    %6 = vector.load %arg4[%c0_5, %c0_6] : memref<16x32xf32, #tpu.memory_space<vmem>>, vector<16x32xf32>
    %c0_7 = arith.constant 0 : index
    %c0_8 = arith.constant 0 : index
    %7 = vector.load %arg5[%c0_7, %c0_8] : memref<8x32xf32, #tpu.memory_space<vmem>>, vector<8x32xf32>
    %8 = vector.extract_strided_slice %5 {offsets = [0, 0], sizes = [16, 32], strides = [1, 1]} : vector<32x32xf32> to vector<16x32xf32>
    %9 = arith.addf %8, %6 : vector<16x32xf32>
    %10 = vector.extract_strided_slice %5 {offsets = [16, 0], sizes = [16, 32], strides = [1, 1]} : vector<32x32xf32> to vector<16x32xf32>
    %11 = arith.addf %10, %6 : vector<16x32xf32>
    %12 = tpu.concatenate %9, %7, %11, %7 in 0 : vector<16x32xf32>, vector<8x32xf32>, vector<16x32xf32>, vector<8x32xf32> -> vector<48x32xf32>
    %13 = tpu.iota {dimensions = array<i32: 1>} : vector<24x24xi32>
    %c17_i32 = arith.constant 17 : i32
    %14 = vector.broadcast %c17_i32 : i32 to vector<24x24xi32>
    %15 = arith.cmpi slt, %13, %14 : vector<24x24xi32>
    %cst_9 = arith.constant 0.000000e+00 : f32
    %cst_10 = arith.constant -1.000000e+30 : f32
    %16 = vector.broadcast %cst_9 : f32 to vector<24x24xf32>
    %17 = vector.broadcast %cst_10 : f32 to vector<24x24xf32>
    %18 = arith.select %15, %16, %17 : vector<24x24xi1>, vector<24x24xf32>
    %c0_11 = arith.constant 0 : index
    %c0_12 = arith.constant 0 : index
    %c0_13 = arith.constant 0 : index
    %19 = vector.load %arg6[%c0_11, %c0_12, %c0_13] : memref<2x32x192xf32, #tpu.memory_space<vmem>>, vector<1x32x192xf32>
    %20 = vector.shape_cast %19 : vector<1x32x192xf32> to vector<32x192xf32>
    %cst_14 = arith.constant dense<0.000000e+00> : vector<48x192xf32>
    %21 = tpu.matmul %12, %20, %cst_14 {dimension_numbers = #tpu.dot_dimension_numbers<[1], [0], [0], [1], [0, 0, 1, 1], [], []>} : vector<48x32xf32>, vector<32x192xf32>, vector<48x192xf32> -> vector<48x192xf32>
    %cst_15 = arith.constant 0.000000e+00 : f32
    %22 = vector.broadcast %cst_15 : f32 to vector<24x32xf32>
    %23 = vector.extract_strided_slice %21 {offsets = [0, 0], sizes = [24, 8], strides = [1, 1]} : vector<48x192xf32> to vector<24x8xf32>
    %24 = vector.extract_strided_slice %21 {offsets = [0, 32], sizes = [24, 8], strides = [1, 1]} : vector<48x192xf32> to vector<24x8xf32>
    %25 = vector.extract_strided_slice %21 {offsets = [0, 64], sizes = [24, 32], strides = [1, 1]} : vector<48x192xf32> to vector<24x32xf32>
    %cst_16 = arith.constant dense<0.000000e+00> : vector<24x24xf32>
    %26 = tpu.matmul %23, %24, %cst_16 {dimension_numbers = #tpu.dot_dimension_numbers<[1], [1], [0], [0], [0, 0, 1, 0], [], []>} : vector<24x8xf32>, vector<24x8xf32>, vector<24x24xf32> -> vector<24x24xf32>
    %cst_17 = arith.constant 0.176776692 : f32
    %27 = vector.broadcast %cst_17 : f32 to vector<24x24xf32>
    %28 = arith.mulf %26, %27 : vector<24x24xf32>
    %29 = arith.addf %28, %18 : vector<24x24xf32>
    %cst_18 = arith.constant dense<0xFF800000> : vector<24xf32>
    %30 = vector.multi_reduction <maximumf>, %29, %cst_18 [1] : vector<24x24xf32> to vector<24xf32>
    %31 = vector.shape_cast %30 : vector<24xf32> to vector<24x1xf32>
    %32 = vector.broadcast %31 : vector<24x1xf32> to vector<24x24xf32>
    %33 = arith.subf %29, %32 : vector<24x24xf32>
    %34 = math.exp %33 : vector<24x24xf32>
    %cst_19 = arith.constant dense<0.000000e+00> : vector<24xf32>
    %35 = vector.multi_reduction <add>, %34, %cst_19 [1] : vector<24x24xf32> to vector<24xf32>
    %36 = vector.shape_cast %35 : vector<24xf32> to vector<24x1xf32>
    %37 = tpu.reciprocal %36 {approx = true} : vector<24x1xf32> -> vector<24x1xf32>
    %38 = vector.broadcast %37 : vector<24x1xf32> to vector<24x24xf32>
    %39 = arith.mulf %34, %38 : vector<24x24xf32>
    %cst_20 = arith.constant dense<0.000000e+00> : vector<24x32xf32>
    %40 = tpu.matmul %39, %25, %cst_20 {dimension_numbers = #tpu.dot_dimension_numbers<[1], [0], [0], [1], [0, 0, 1, 1], [], []>} : vector<24x24xf32>, vector<24x32xf32>, vector<24x32xf32> -> vector<24x32xf32>
    %41 = arith.addf %22, %40 : vector<24x32xf32>
    %42 = vector.extract_strided_slice %21 {offsets = [0, 8], sizes = [24, 8], strides = [1, 1]} : vector<48x192xf32> to vector<24x8xf32>
    %43 = vector.extract_strided_slice %21 {offsets = [0, 40], sizes = [24, 8], strides = [1, 1]} : vector<48x192xf32> to vector<24x8xf32>
    %44 = vector.extract_strided_slice %21 {offsets = [0, 96], sizes = [24, 32], strides = [1, 1]} : vector<48x192xf32> to vector<24x32xf32>
    %cst_21 = arith.constant dense<0.000000e+00> : vector<24x24xf32>
    %45 = tpu.matmul %42, %43, %cst_21 {dimension_numbers = #tpu.dot_dimension_numbers<[1], [1], [0], [0], [0, 0, 1, 0], [], []>} : vector<24x8xf32>, vector<24x8xf32>, vector<24x24xf32> -> vector<24x24xf32>
    %cst_22 = arith.constant 0.176776692 : f32
    %46 = vector.broadcast %cst_22 : f32 to vector<24x24xf32>
    %47 = arith.mulf %45, %46 : vector<24x24xf32>
    %48 = arith.addf %47, %18 : vector<24x24xf32>
    %cst_23 = arith.constant dense<0xFF800000> : vector<24xf32>
    %49 = vector.multi_reduction <maximumf>, %48, %cst_23 [1] : vector<24x24xf32> to vector<24xf32>
    %50 = vector.shape_cast %49 : vector<24xf32> to vector<24x1xf32>
    %51 = vector.broadcast %50 : vector<24x1xf32> to vector<24x24xf32>
    %52 = arith.subf %48, %51 : vector<24x24xf32>
    %53 = math.exp %52 : vector<24x24xf32>
    %cst_24 = arith.constant dense<0.000000e+00> : vector<24xf32>
    %54 = vector.multi_reduction <add>, %53, %cst_24 [1] : vector<24x24xf32> to vector<24xf32>
    %55 = vector.shape_cast %54 : vector<24xf32> to vector<24x1xf32>
    %56 = tpu.reciprocal %55 {approx = true} : vector<24x1xf32> -> vector<24x1xf32>
    %57 = vector.broadcast %56 : vector<24x1xf32> to vector<24x24xf32>
    %58 = arith.mulf %53, %57 : vector<24x24xf32>
    %cst_25 = arith.constant dense<0.000000e+00> : vector<24x32xf32>
    %59 = tpu.matmul %58, %44, %cst_25 {dimension_numbers = #tpu.dot_dimension_numbers<[1], [0], [0], [1], [0, 0, 1, 1], [], []>} : vector<24x24xf32>, vector<24x32xf32>, vector<24x32xf32> -> vector<24x32xf32>
    %60 = arith.addf %41, %59 : vector<24x32xf32>
    %61 = vector.extract_strided_slice %21 {offsets = [0, 16], sizes = [24, 8], strides = [1, 1]} : vector<48x192xf32> to vector<24x8xf32>
    %62 = vector.extract_strided_slice %21 {offsets = [0, 48], sizes = [24, 8], strides = [1, 1]} : vector<48x192xf32> to vector<24x8xf32>
    %63 = vector.extract_strided_slice %21 {offsets = [0, 128], sizes = [24, 32], strides = [1, 1]} : vector<48x192xf32> to vector<24x32xf32>
    %cst_26 = arith.constant dense<0.000000e+00> : vector<24x24xf32>
    %64 = tpu.matmul %61, %62, %cst_26 {dimension_numbers = #tpu.dot_dimension_numbers<[1], [1], [0], [0], [0, 0, 1, 0], [], []>} : vector<24x8xf32>, vector<24x8xf32>, vector<24x24xf32> -> vector<24x24xf32>
    %cst_27 = arith.constant 0.176776692 : f32
    %65 = vector.broadcast %cst_27 : f32 to vector<24x24xf32>
    %66 = arith.mulf %64, %65 : vector<24x24xf32>
    %67 = arith.addf %66, %18 : vector<24x24xf32>
    %cst_28 = arith.constant dense<0xFF800000> : vector<24xf32>
    %68 = vector.multi_reduction <maximumf>, %67, %cst_28 [1] : vector<24x24xf32> to vector<24xf32>
    %69 = vector.shape_cast %68 : vector<24xf32> to vector<24x1xf32>
    %70 = vector.broadcast %69 : vector<24x1xf32> to vector<24x24xf32>
    %71 = arith.subf %67, %70 : vector<24x24xf32>
    %72 = math.exp %71 : vector<24x24xf32>
    %cst_29 = arith.constant dense<0.000000e+00> : vector<24xf32>
    %73 = vector.multi_reduction <add>, %72, %cst_29 [1] : vector<24x24xf32> to vector<24xf32>
    %74 = vector.shape_cast %73 : vector<24xf32> to vector<24x1xf32>
    %75 = tpu.reciprocal %74 {approx = true} : vector<24x1xf32> -> vector<24x1xf32>
    %76 = vector.broadcast %75 : vector<24x1xf32> to vector<24x24xf32>
    %77 = arith.mulf %72, %76 : vector<24x24xf32>
    %cst_30 = arith.constant dense<0.000000e+00> : vector<24x32xf32>
    %78 = tpu.matmul %77, %63, %cst_30 {dimension_numbers = #tpu.dot_dimension_numbers<[1], [0], [0], [1], [0, 0, 1, 1], [], []>} : vector<24x24xf32>, vector<24x32xf32>, vector<24x32xf32> -> vector<24x32xf32>
    %79 = arith.addf %60, %78 : vector<24x32xf32>
    %80 = vector.extract_strided_slice %21 {offsets = [0, 24], sizes = [24, 8], strides = [1, 1]} : vector<48x192xf32> to vector<24x8xf32>
    %81 = vector.extract_strided_slice %21 {offsets = [0, 56], sizes = [24, 8], strides = [1, 1]} : vector<48x192xf32> to vector<24x8xf32>
    %82 = vector.extract_strided_slice %21 {offsets = [0, 160], sizes = [24, 32], strides = [1, 1]} : vector<48x192xf32> to vector<24x32xf32>
    %cst_31 = arith.constant dense<0.000000e+00> : vector<24x24xf32>
    %83 = tpu.matmul %80, %81, %cst_31 {dimension_numbers = #tpu.dot_dimension_numbers<[1], [1], [0], [0], [0, 0, 1, 0], [], []>} : vector<24x8xf32>, vector<24x8xf32>, vector<24x24xf32> -> vector<24x24xf32>
    %cst_32 = arith.constant 0.176776692 : f32
    %84 = vector.broadcast %cst_32 : f32 to vector<24x24xf32>
    %85 = arith.mulf %83, %84 : vector<24x24xf32>
    %86 = arith.addf %85, %18 : vector<24x24xf32>
    %cst_33 = arith.constant dense<0xFF800000> : vector<24xf32>
    %87 = vector.multi_reduction <maximumf>, %86, %cst_33 [1] : vector<24x24xf32> to vector<24xf32>
    %88 = vector.shape_cast %87 : vector<24xf32> to vector<24x1xf32>
    %89 = vector.broadcast %88 : vector<24x1xf32> to vector<24x24xf32>
    %90 = arith.subf %86, %89 : vector<24x24xf32>
    %91 = math.exp %90 : vector<24x24xf32>
    %cst_34 = arith.constant dense<0.000000e+00> : vector<24xf32>
    %92 = vector.multi_reduction <add>, %91, %cst_34 [1] : vector<24x24xf32> to vector<24xf32>
    %93 = vector.shape_cast %92 : vector<24xf32> to vector<24x1xf32>
    %94 = tpu.reciprocal %93 {approx = true} : vector<24x1xf32> -> vector<24x1xf32>
    %95 = vector.broadcast %94 : vector<24x1xf32> to vector<24x24xf32>
    %96 = arith.mulf %91, %95 : vector<24x24xf32>
    %cst_35 = arith.constant dense<0.000000e+00> : vector<24x32xf32>
    %97 = tpu.matmul %96, %82, %cst_35 {dimension_numbers = #tpu.dot_dimension_numbers<[1], [0], [0], [1], [0, 0, 1, 1], [], []>} : vector<24x24xf32>, vector<24x32xf32>, vector<24x32xf32> -> vector<24x32xf32>
    %98 = arith.addf %79, %97 : vector<24x32xf32>
    %cst_36 = arith.constant 0.000000e+00 : f32
    %99 = vector.broadcast %cst_36 : f32 to vector<24x32xf32>
    %100 = vector.extract_strided_slice %21 {offsets = [24, 0], sizes = [24, 8], strides = [1, 1]} : vector<48x192xf32> to vector<24x8xf32>
    %101 = vector.extract_strided_slice %21 {offsets = [24, 32], sizes = [24, 8], strides = [1, 1]} : vector<48x192xf32> to vector<24x8xf32>
    %102 = vector.extract_strided_slice %21 {offsets = [24, 64], sizes = [24, 32], strides = [1, 1]} : vector<48x192xf32> to vector<24x32xf32>
    %cst_37 = arith.constant dense<0.000000e+00> : vector<24x24xf32>
    %103 = tpu.matmul %100, %101, %cst_37 {dimension_numbers = #tpu.dot_dimension_numbers<[1], [1], [0], [0], [0, 0, 1, 0], [], []>} : vector<24x8xf32>, vector<24x8xf32>, vector<24x24xf32> -> vector<24x24xf32>
    %cst_38 = arith.constant 0.176776692 : f32
    %104 = vector.broadcast %cst_38 : f32 to vector<24x24xf32>
    %105 = arith.mulf %103, %104 : vector<24x24xf32>
    %106 = arith.addf %105, %18 : vector<24x24xf32>
    %cst_39 = arith.constant dense<0xFF800000> : vector<24xf32>
    %107 = vector.multi_reduction <maximumf>, %106, %cst_39 [1] : vector<24x24xf32> to vector<24xf32>
    %108 = vector.shape_cast %107 : vector<24xf32> to vector<24x1xf32>
    %109 = vector.broadcast %108 : vector<24x1xf32> to vector<24x24xf32>
    %110 = arith.subf %106, %109 : vector<24x24xf32>
    %111 = math.exp %110 : vector<24x24xf32>
    %cst_40 = arith.constant dense<0.000000e+00> : vector<24xf32>
    %112 = vector.multi_reduction <add>, %111, %cst_40 [1] : vector<24x24xf32> to vector<24xf32>
    %113 = vector.shape_cast %112 : vector<24xf32> to vector<24x1xf32>
    %114 = tpu.reciprocal %113 {approx = true} : vector<24x1xf32> -> vector<24x1xf32>
    %115 = vector.broadcast %114 : vector<24x1xf32> to vector<24x24xf32>
    %116 = arith.mulf %111, %115 : vector<24x24xf32>
    %cst_41 = arith.constant dense<0.000000e+00> : vector<24x32xf32>
    %117 = tpu.matmul %116, %102, %cst_41 {dimension_numbers = #tpu.dot_dimension_numbers<[1], [0], [0], [1], [0, 0, 1, 1], [], []>} : vector<24x24xf32>, vector<24x32xf32>, vector<24x32xf32> -> vector<24x32xf32>
    %118 = arith.addf %99, %117 : vector<24x32xf32>
    %119 = vector.extract_strided_slice %21 {offsets = [24, 8], sizes = [24, 8], strides = [1, 1]} : vector<48x192xf32> to vector<24x8xf32>
    %120 = vector.extract_strided_slice %21 {offsets = [24, 40], sizes = [24, 8], strides = [1, 1]} : vector<48x192xf32> to vector<24x8xf32>
    %121 = vector.extract_strided_slice %21 {offsets = [24, 96], sizes = [24, 32], strides = [1, 1]} : vector<48x192xf32> to vector<24x32xf32>
    %cst_42 = arith.constant dense<0.000000e+00> : vector<24x24xf32>
    %122 = tpu.matmul %119, %120, %cst_42 {dimension_numbers = #tpu.dot_dimension_numbers<[1], [1], [0], [0], [0, 0, 1, 0], [], []>} : vector<24x8xf32>, vector<24x8xf32>, vector<24x24xf32> -> vector<24x24xf32>
    %cst_43 = arith.constant 0.176776692 : f32
    %123 = vector.broadcast %cst_43 : f32 to vector<24x24xf32>
    %124 = arith.mulf %122, %123 : vector<24x24xf32>
    %125 = arith.addf %124, %18 : vector<24x24xf32>
    %cst_44 = arith.constant dense<0xFF800000> : vector<24xf32>
    %126 = vector.multi_reduction <maximumf>, %125, %cst_44 [1] : vector<24x24xf32> to vector<24xf32>
    %127 = vector.shape_cast %126 : vector<24xf32> to vector<24x1xf32>
    %128 = vector.broadcast %127 : vector<24x1xf32> to vector<24x24xf32>
    %129 = arith.subf %125, %128 : vector<24x24xf32>
    %130 = math.exp %129 : vector<24x24xf32>
    %cst_45 = arith.constant dense<0.000000e+00> : vector<24xf32>
    %131 = vector.multi_reduction <add>, %130, %cst_45 [1] : vector<24x24xf32> to vector<24xf32>
    %132 = vector.shape_cast %131 : vector<24xf32> to vector<24x1xf32>
    %133 = tpu.reciprocal %132 {approx = true} : vector<24x1xf32> -> vector<24x1xf32>
    %134 = vector.broadcast %133 : vector<24x1xf32> to vector<24x24xf32>
    %135 = arith.mulf %130, %134 : vector<24x24xf32>
    %cst_46 = arith.constant dense<0.000000e+00> : vector<24x32xf32>
    %136 = tpu.matmul %135, %121, %cst_46 {dimension_numbers = #tpu.dot_dimension_numbers<[1], [0], [0], [1], [0, 0, 1, 1], [], []>} : vector<24x24xf32>, vector<24x32xf32>, vector<24x32xf32> -> vector<24x32xf32>
    %137 = arith.addf %118, %136 : vector<24x32xf32>
    %138 = vector.extract_strided_slice %21 {offsets = [24, 16], sizes = [24, 8], strides = [1, 1]} : vector<48x192xf32> to vector<24x8xf32>
    %139 = vector.extract_strided_slice %21 {offsets = [24, 48], sizes = [24, 8], strides = [1, 1]} : vector<48x192xf32> to vector<24x8xf32>
    %140 = vector.extract_strided_slice %21 {offsets = [24, 128], sizes = [24, 32], strides = [1, 1]} : vector<48x192xf32> to vector<24x32xf32>
    %cst_47 = arith.constant dense<0.000000e+00> : vector<24x24xf32>
    %141 = tpu.matmul %138, %139, %cst_47 {dimension_numbers = #tpu.dot_dimension_numbers<[1], [1], [0], [0], [0, 0, 1, 0], [], []>} : vector<24x8xf32>, vector<24x8xf32>, vector<24x24xf32> -> vector<24x24xf32>
    %cst_48 = arith.constant 0.176776692 : f32
    %142 = vector.broadcast %cst_48 : f32 to vector<24x24xf32>
    %143 = arith.mulf %141, %142 : vector<24x24xf32>
    %144 = arith.addf %143, %18 : vector<24x24xf32>
    %cst_49 = arith.constant dense<0xFF800000> : vector<24xf32>
    %145 = vector.multi_reduction <maximumf>, %144, %cst_49 [1] : vector<24x24xf32> to vector<24xf32>
    %146 = vector.shape_cast %145 : vector<24xf32> to vector<24x1xf32>
    %147 = vector.broadcast %146 : vector<24x1xf32> to vector<24x24xf32>
    %148 = arith.subf %144, %147 : vector<24x24xf32>
    %149 = math.exp %148 : vector<24x24xf32>
    %cst_50 = arith.constant dense<0.000000e+00> : vector<24xf32>
    %150 = vector.multi_reduction <add>, %149, %cst_50 [1] : vector<24x24xf32> to vector<24xf32>
    %151 = vector.shape_cast %150 : vector<24xf32> to vector<24x1xf32>
    %152 = tpu.reciprocal %151 {approx = true} : vector<24x1xf32> -> vector<24x1xf32>
    %153 = vector.broadcast %152 : vector<24x1xf32> to vector<24x24xf32>
    %154 = arith.mulf %149, %153 : vector<24x24xf32>
    %cst_51 = arith.constant dense<0.000000e+00> : vector<24x32xf32>
    %155 = tpu.matmul %154, %140, %cst_51 {dimension_numbers = #tpu.dot_dimension_numbers<[1], [0], [0], [1], [0, 0, 1, 1], [], []>} : vector<24x24xf32>, vector<24x32xf32>, vector<24x32xf32> -> vector<24x32xf32>
    %156 = arith.addf %137, %155 : vector<24x32xf32>
    %157 = vector.extract_strided_slice %21 {offsets = [24, 24], sizes = [24, 8], strides = [1, 1]} : vector<48x192xf32> to vector<24x8xf32>
    %158 = vector.extract_strided_slice %21 {offsets = [24, 56], sizes = [24, 8], strides = [1, 1]} : vector<48x192xf32> to vector<24x8xf32>
    %159 = vector.extract_strided_slice %21 {offsets = [24, 160], sizes = [24, 32], strides = [1, 1]} : vector<48x192xf32> to vector<24x32xf32>
    %cst_52 = arith.constant dense<0.000000e+00> : vector<24x24xf32>
    %160 = tpu.matmul %157, %158, %cst_52 {dimension_numbers = #tpu.dot_dimension_numbers<[1], [1], [0], [0], [0, 0, 1, 0], [], []>} : vector<24x8xf32>, vector<24x8xf32>, vector<24x24xf32> -> vector<24x24xf32>
    %cst_53 = arith.constant 0.176776692 : f32
    %161 = vector.broadcast %cst_53 : f32 to vector<24x24xf32>
    %162 = arith.mulf %160, %161 : vector<24x24xf32>
    %163 = arith.addf %162, %18 : vector<24x24xf32>
    %cst_54 = arith.constant dense<0xFF800000> : vector<24xf32>
    %164 = vector.multi_reduction <maximumf>, %163, %cst_54 [1] : vector<24x24xf32> to vector<24xf32>
    %165 = vector.shape_cast %164 : vector<24xf32> to vector<24x1xf32>
    %166 = vector.broadcast %165 : vector<24x1xf32> to vector<24x24xf32>
    %167 = arith.subf %163, %166 : vector<24x24xf32>
    %168 = math.exp %167 : vector<24x24xf32>
    %cst_55 = arith.constant dense<0.000000e+00> : vector<24xf32>
    %169 = vector.multi_reduction <add>, %168, %cst_55 [1] : vector<24x24xf32> to vector<24xf32>
    %170 = vector.shape_cast %169 : vector<24xf32> to vector<24x1xf32>
    %171 = tpu.reciprocal %170 {approx = true} : vector<24x1xf32> -> vector<24x1xf32>
    %172 = vector.broadcast %171 : vector<24x1xf32> to vector<24x24xf32>
    %173 = arith.mulf %168, %172 : vector<24x24xf32>
    %cst_56 = arith.constant dense<0.000000e+00> : vector<24x32xf32>
    %174 = tpu.matmul %173, %159, %cst_56 {dimension_numbers = #tpu.dot_dimension_numbers<[1], [0], [0], [1], [0, 0, 1, 1], [], []>} : vector<24x24xf32>, vector<24x32xf32>, vector<24x32xf32> -> vector<24x32xf32>
    %175 = arith.addf %156, %174 : vector<24x32xf32>
    %176 = tpu.concatenate %98, %175 in 0 : vector<24x32xf32>, vector<24x32xf32> -> vector<48x32xf32>
    %c0_57 = arith.constant 0 : index
    %c0_58 = arith.constant 0 : index
    %c0_59 = arith.constant 0 : index
    %177 = vector.load %arg7[%c0_57, %c0_58, %c0_59] : memref<2x1x32xf32, #tpu.memory_space<vmem>>, vector<1x1x32xf32>
    %178 = vector.shape_cast %177 : vector<1x1x32xf32> to vector<1x32xf32>
    %179 = vector.broadcast %178 : vector<1x32xf32> to vector<48x32xf32>
    %180 = arith.addf %176, %179 : vector<48x32xf32>
    %181 = arith.addf %180, %12 : vector<48x32xf32>
    %c0_60 = arith.constant 0 : index
    %c0_61 = arith.constant 0 : index
    %c0_62 = arith.constant 0 : index
    %182 = vector.load %arg8[%c0_60, %c0_61, %c0_62] : memref<2x1x32xf32, #tpu.memory_space<vmem>>, vector<1x1x32xf32>
    %183 = vector.shape_cast %182 : vector<1x1x32xf32> to vector<1x32xf32>
    %c0_63 = arith.constant 0 : index
    %c0_64 = arith.constant 0 : index
    %c0_65 = arith.constant 0 : index
    %184 = vector.load %arg9[%c0_63, %c0_64, %c0_65] : memref<2x1x32xf32, #tpu.memory_space<vmem>>, vector<1x1x32xf32>
    %185 = vector.shape_cast %184 : vector<1x1x32xf32> to vector<1x32xf32>
    %cst_66 = arith.constant dense<0.000000e+00> : vector<48xf32>
    %186 = vector.multi_reduction <add>, %181, %cst_66 [1] : vector<48x32xf32> to vector<48xf32>
    %187 = vector.shape_cast %186 : vector<48xf32> to vector<48x1xf32>
    %cst_67 = arith.constant 3.200000e+01 : f32
    %188 = vector.broadcast %cst_67 : f32 to vector<48x1xf32>
    %189 = arith.divf %187, %188 : vector<48x1xf32>
    %190 = vector.broadcast %189 : vector<48x1xf32> to vector<48x32xf32>
    %191 = arith.subf %181, %190 : vector<48x32xf32>
    %192 = arith.mulf %191, %191 : vector<48x32xf32>
    %cst_68 = arith.constant dense<0.000000e+00> : vector<48xf32>
    %193 = vector.multi_reduction <add>, %192, %cst_68 [1] : vector<48x32xf32> to vector<48xf32>
    %194 = vector.shape_cast %193 : vector<48xf32> to vector<48x1xf32>
    %cst_69 = arith.constant 3.200000e+01 : f32
    %195 = vector.broadcast %cst_69 : f32 to vector<48x1xf32>
    %196 = arith.divf %194, %195 : vector<48x1xf32>
    %197 = vector.broadcast %189 : vector<48x1xf32> to vector<48x32xf32>
    %198 = arith.subf %181, %197 : vector<48x32xf32>
    %cst_70 = arith.constant 9.99999974E-6 : f32
    %199 = vector.broadcast %cst_70 : f32 to vector<48x1xf32>
    %200 = arith.addf %196, %199 : vector<48x1xf32>
    %201 = math.rsqrt %200 : vector<48x1xf32>
    %202 = vector.broadcast %201 : vector<48x1xf32> to vector<48x32xf32>
    %203 = arith.mulf %198, %202 : vector<48x32xf32>
    %204 = vector.broadcast %183 : vector<1x32xf32> to vector<48x32xf32>
    %205 = arith.mulf %203, %204 : vector<48x32xf32>
    %206 = vector.broadcast %185 : vector<1x32xf32> to vector<48x32xf32>
    %207 = arith.addf %205, %206 : vector<48x32xf32>
    %c0_71 = arith.constant 0 : index
    %c0_72 = arith.constant 0 : index
    %c0_73 = arith.constant 0 : index
    %208 = vector.load %arg10[%c0_71, %c0_72, %c0_73] : memref<2x32x128xf32, #tpu.memory_space<vmem>>, vector<1x32x128xf32>
    %209 = vector.shape_cast %208 : vector<1x32x128xf32> to vector<32x128xf32>
    %cst_74 = arith.constant dense<0.000000e+00> : vector<48x128xf32>
    %210 = tpu.matmul %207, %209, %cst_74 {dimension_numbers = #tpu.dot_dimension_numbers<[1], [0], [0], [1], [0, 0, 1, 1], [], []>} : vector<48x32xf32>, vector<32x128xf32>, vector<48x128xf32> -> vector<48x128xf32>
    %c0_75 = arith.constant 0 : index
    %c0_76 = arith.constant 0 : index
    %c0_77 = arith.constant 0 : index
    %211 = vector.load %arg11[%c0_75, %c0_76, %c0_77] : memref<2x1x128xf32, #tpu.memory_space<vmem>>, vector<1x1x128xf32>
    %212 = vector.shape_cast %211 : vector<1x1x128xf32> to vector<1x128xf32>
    %213 = vector.broadcast %212 : vector<1x128xf32> to vector<48x128xf32>
    %214 = arith.addf %210, %213 : vector<48x128xf32>
    %cst_78 = arith.constant 0.000000e+00 : f32
    %215 = vector.broadcast %cst_78 : f32 to vector<48x128xf32>
    %216 = arith.maximumf %214, %215 : vector<48x128xf32>
    %c0_79 = arith.constant 0 : index
    %c0_80 = arith.constant 0 : index
    %c0_81 = arith.constant 0 : index
    %217 = vector.load %arg12[%c0_79, %c0_80, %c0_81] : memref<2x128x32xf32, #tpu.memory_space<vmem>>, vector<1x128x32xf32>
    %218 = vector.shape_cast %217 : vector<1x128x32xf32> to vector<128x32xf32>
    %cst_82 = arith.constant dense<0.000000e+00> : vector<48x32xf32>
    %219 = tpu.matmul %216, %218, %cst_82 {dimension_numbers = #tpu.dot_dimension_numbers<[1], [0], [0], [1], [0, 0, 1, 1], [], []>} : vector<48x128xf32>, vector<128x32xf32>, vector<48x32xf32> -> vector<48x32xf32>
    %c0_83 = arith.constant 0 : index
    %c0_84 = arith.constant 0 : index
    %c0_85 = arith.constant 0 : index
    %220 = vector.load %arg13[%c0_83, %c0_84, %c0_85] : memref<2x1x32xf32, #tpu.memory_space<vmem>>, vector<1x1x32xf32>
    %221 = vector.shape_cast %220 : vector<1x1x32xf32> to vector<1x32xf32>
    %222 = vector.broadcast %221 : vector<1x32xf32> to vector<48x32xf32>
    %223 = arith.addf %219, %222 : vector<48x32xf32>
    %224 = arith.addf %223, %207 : vector<48x32xf32>
    %c0_86 = arith.constant 0 : index
    %c0_87 = arith.constant 0 : index
    %c0_88 = arith.constant 0 : index
    %225 = vector.load %arg14[%c0_86, %c0_87, %c0_88] : memref<2x1x32xf32, #tpu.memory_space<vmem>>, vector<1x1x32xf32>
    %226 = vector.shape_cast %225 : vector<1x1x32xf32> to vector<1x32xf32>
    %c0_89 = arith.constant 0 : index
    %c0_90 = arith.constant 0 : index
    %c0_91 = arith.constant 0 : index
    %227 = vector.load %arg15[%c0_89, %c0_90, %c0_91] : memref<2x1x32xf32, #tpu.memory_space<vmem>>, vector<1x1x32xf32>
    %228 = vector.shape_cast %227 : vector<1x1x32xf32> to vector<1x32xf32>
    %cst_92 = arith.constant dense<0.000000e+00> : vector<48xf32>
    %229 = vector.multi_reduction <add>, %224, %cst_92 [1] : vector<48x32xf32> to vector<48xf32>
    %230 = vector.shape_cast %229 : vector<48xf32> to vector<48x1xf32>
    %cst_93 = arith.constant 3.200000e+01 : f32
    %231 = vector.broadcast %cst_93 : f32 to vector<48x1xf32>
    %232 = arith.divf %230, %231 : vector<48x1xf32>
    %233 = vector.broadcast %232 : vector<48x1xf32> to vector<48x32xf32>
    %234 = arith.subf %224, %233 : vector<48x32xf32>
    %235 = arith.mulf %234, %234 : vector<48x32xf32>
    %cst_94 = arith.constant dense<0.000000e+00> : vector<48xf32>
    %236 = vector.multi_reduction <add>, %235, %cst_94 [1] : vector<48x32xf32> to vector<48xf32>
    %237 = vector.shape_cast %236 : vector<48xf32> to vector<48x1xf32>
    %cst_95 = arith.constant 3.200000e+01 : f32
    %238 = vector.broadcast %cst_95 : f32 to vector<48x1xf32>
    %239 = arith.divf %237, %238 : vector<48x1xf32>
    %240 = vector.broadcast %232 : vector<48x1xf32> to vector<48x32xf32>
    %241 = arith.subf %224, %240 : vector<48x32xf32>
    %cst_96 = arith.constant 9.99999974E-6 : f32
    %242 = vector.broadcast %cst_96 : f32 to vector<48x1xf32>
    %243 = arith.addf %239, %242 : vector<48x1xf32>
    %244 = math.rsqrt %243 : vector<48x1xf32>
    %245 = vector.broadcast %244 : vector<48x1xf32> to vector<48x32xf32>
    %246 = arith.mulf %241, %245 : vector<48x32xf32>
    %247 = vector.broadcast %226 : vector<1x32xf32> to vector<48x32xf32>
    %248 = arith.mulf %246, %247 : vector<48x32xf32>
    %249 = vector.broadcast %228 : vector<1x32xf32> to vector<48x32xf32>
    %250 = arith.addf %248, %249 : vector<48x32xf32>
    %c1 = arith.constant 1 : index
    %c0_97 = arith.constant 0 : index
    %c0_98 = arith.constant 0 : index
    %251 = vector.load %arg6[%c1, %c0_97, %c0_98] : memref<2x32x192xf32, #tpu.memory_space<vmem>>, vector<1x32x192xf32>
    %252 = vector.shape_cast %251 : vector<1x32x192xf32> to vector<32x192xf32>
    %cst_99 = arith.constant dense<0.000000e+00> : vector<48x192xf32>
    %253 = tpu.matmul %250, %252, %cst_99 {dimension_numbers = #tpu.dot_dimension_numbers<[1], [0], [0], [1], [0, 0, 1, 1], [], []>} : vector<48x32xf32>, vector<32x192xf32>, vector<48x192xf32> -> vector<48x192xf32>
    %cst_100 = arith.constant 0.000000e+00 : f32
    %254 = vector.broadcast %cst_100 : f32 to vector<24x32xf32>
    %255 = vector.extract_strided_slice %253 {offsets = [0, 0], sizes = [24, 8], strides = [1, 1]} : vector<48x192xf32> to vector<24x8xf32>
    %256 = vector.extract_strided_slice %253 {offsets = [0, 32], sizes = [24, 8], strides = [1, 1]} : vector<48x192xf32> to vector<24x8xf32>
    %257 = vector.extract_strided_slice %253 {offsets = [0, 64], sizes = [24, 32], strides = [1, 1]} : vector<48x192xf32> to vector<24x32xf32>
    %cst_101 = arith.constant dense<0.000000e+00> : vector<24x24xf32>
    %258 = tpu.matmul %255, %256, %cst_101 {dimension_numbers = #tpu.dot_dimension_numbers<[1], [1], [0], [0], [0, 0, 1, 0], [], []>} : vector<24x8xf32>, vector<24x8xf32>, vector<24x24xf32> -> vector<24x24xf32>
    %cst_102 = arith.constant 0.176776692 : f32
    %259 = vector.broadcast %cst_102 : f32 to vector<24x24xf32>
    %260 = arith.mulf %258, %259 : vector<24x24xf32>
    %261 = arith.addf %260, %18 : vector<24x24xf32>
    %cst_103 = arith.constant dense<0xFF800000> : vector<24xf32>
    %262 = vector.multi_reduction <maximumf>, %261, %cst_103 [1] : vector<24x24xf32> to vector<24xf32>
    %263 = vector.shape_cast %262 : vector<24xf32> to vector<24x1xf32>
    %264 = vector.broadcast %263 : vector<24x1xf32> to vector<24x24xf32>
    %265 = arith.subf %261, %264 : vector<24x24xf32>
    %266 = math.exp %265 : vector<24x24xf32>
    %cst_104 = arith.constant dense<0.000000e+00> : vector<24xf32>
    %267 = vector.multi_reduction <add>, %266, %cst_104 [1] : vector<24x24xf32> to vector<24xf32>
    %268 = vector.shape_cast %267 : vector<24xf32> to vector<24x1xf32>
    %269 = tpu.reciprocal %268 {approx = true} : vector<24x1xf32> -> vector<24x1xf32>
    %270 = vector.broadcast %269 : vector<24x1xf32> to vector<24x24xf32>
    %271 = arith.mulf %266, %270 : vector<24x24xf32>
    %cst_105 = arith.constant dense<0.000000e+00> : vector<24x32xf32>
    %272 = tpu.matmul %271, %257, %cst_105 {dimension_numbers = #tpu.dot_dimension_numbers<[1], [0], [0], [1], [0, 0, 1, 1], [], []>} : vector<24x24xf32>, vector<24x32xf32>, vector<24x32xf32> -> vector<24x32xf32>
    %273 = arith.addf %254, %272 : vector<24x32xf32>
    %274 = vector.extract_strided_slice %253 {offsets = [0, 8], sizes = [24, 8], strides = [1, 1]} : vector<48x192xf32> to vector<24x8xf32>
    %275 = vector.extract_strided_slice %253 {offsets = [0, 40], sizes = [24, 8], strides = [1, 1]} : vector<48x192xf32> to vector<24x8xf32>
    %276 = vector.extract_strided_slice %253 {offsets = [0, 96], sizes = [24, 32], strides = [1, 1]} : vector<48x192xf32> to vector<24x32xf32>
    %cst_106 = arith.constant dense<0.000000e+00> : vector<24x24xf32>
    %277 = tpu.matmul %274, %275, %cst_106 {dimension_numbers = #tpu.dot_dimension_numbers<[1], [1], [0], [0], [0, 0, 1, 0], [], []>} : vector<24x8xf32>, vector<24x8xf32>, vector<24x24xf32> -> vector<24x24xf32>
    %cst_107 = arith.constant 0.176776692 : f32
    %278 = vector.broadcast %cst_107 : f32 to vector<24x24xf32>
    %279 = arith.mulf %277, %278 : vector<24x24xf32>
    %280 = arith.addf %279, %18 : vector<24x24xf32>
    %cst_108 = arith.constant dense<0xFF800000> : vector<24xf32>
    %281 = vector.multi_reduction <maximumf>, %280, %cst_108 [1] : vector<24x24xf32> to vector<24xf32>
    %282 = vector.shape_cast %281 : vector<24xf32> to vector<24x1xf32>
    %283 = vector.broadcast %282 : vector<24x1xf32> to vector<24x24xf32>
    %284 = arith.subf %280, %283 : vector<24x24xf32>
    %285 = math.exp %284 : vector<24x24xf32>
    %cst_109 = arith.constant dense<0.000000e+00> : vector<24xf32>
    %286 = vector.multi_reduction <add>, %285, %cst_109 [1] : vector<24x24xf32> to vector<24xf32>
    %287 = vector.shape_cast %286 : vector<24xf32> to vector<24x1xf32>
    %288 = tpu.reciprocal %287 {approx = true} : vector<24x1xf32> -> vector<24x1xf32>
    %289 = vector.broadcast %288 : vector<24x1xf32> to vector<24x24xf32>
    %290 = arith.mulf %285, %289 : vector<24x24xf32>
    %cst_110 = arith.constant dense<0.000000e+00> : vector<24x32xf32>
    %291 = tpu.matmul %290, %276, %cst_110 {dimension_numbers = #tpu.dot_dimension_numbers<[1], [0], [0], [1], [0, 0, 1, 1], [], []>} : vector<24x24xf32>, vector<24x32xf32>, vector<24x32xf32> -> vector<24x32xf32>
    %292 = arith.addf %273, %291 : vector<24x32xf32>
    %293 = vector.extract_strided_slice %253 {offsets = [0, 16], sizes = [24, 8], strides = [1, 1]} : vector<48x192xf32> to vector<24x8xf32>
    %294 = vector.extract_strided_slice %253 {offsets = [0, 48], sizes = [24, 8], strides = [1, 1]} : vector<48x192xf32> to vector<24x8xf32>
    %295 = vector.extract_strided_slice %253 {offsets = [0, 128], sizes = [24, 32], strides = [1, 1]} : vector<48x192xf32> to vector<24x32xf32>
    %cst_111 = arith.constant dense<0.000000e+00> : vector<24x24xf32>
    %296 = tpu.matmul %293, %294, %cst_111 {dimension_numbers = #tpu.dot_dimension_numbers<[1], [1], [0], [0], [0, 0, 1, 0], [], []>} : vector<24x8xf32>, vector<24x8xf32>, vector<24x24xf32> -> vector<24x24xf32>
    %cst_112 = arith.constant 0.176776692 : f32
    %297 = vector.broadcast %cst_112 : f32 to vector<24x24xf32>
    %298 = arith.mulf %296, %297 : vector<24x24xf32>
    %299 = arith.addf %298, %18 : vector<24x24xf32>
    %cst_113 = arith.constant dense<0xFF800000> : vector<24xf32>
    %300 = vector.multi_reduction <maximumf>, %299, %cst_113 [1] : vector<24x24xf32> to vector<24xf32>
    %301 = vector.shape_cast %300 : vector<24xf32> to vector<24x1xf32>
    %302 = vector.broadcast %301 : vector<24x1xf32> to vector<24x24xf32>
    %303 = arith.subf %299, %302 : vector<24x24xf32>
    %304 = math.exp %303 : vector<24x24xf32>
    %cst_114 = arith.constant dense<0.000000e+00> : vector<24xf32>
    %305 = vector.multi_reduction <add>, %304, %cst_114 [1] : vector<24x24xf32> to vector<24xf32>
    %306 = vector.shape_cast %305 : vector<24xf32> to vector<24x1xf32>
    %307 = tpu.reciprocal %306 {approx = true} : vector<24x1xf32> -> vector<24x1xf32>
    %308 = vector.broadcast %307 : vector<24x1xf32> to vector<24x24xf32>
    %309 = arith.mulf %304, %308 : vector<24x24xf32>
    %cst_115 = arith.constant dense<0.000000e+00> : vector<24x32xf32>
    %310 = tpu.matmul %309, %295, %cst_115 {dimension_numbers = #tpu.dot_dimension_numbers<[1], [0], [0], [1], [0, 0, 1, 1], [], []>} : vector<24x24xf32>, vector<24x32xf32>, vector<24x32xf32> -> vector<24x32xf32>
    %311 = arith.addf %292, %310 : vector<24x32xf32>
    %312 = vector.extract_strided_slice %253 {offsets = [0, 24], sizes = [24, 8], strides = [1, 1]} : vector<48x192xf32> to vector<24x8xf32>
    %313 = vector.extract_strided_slice %253 {offsets = [0, 56], sizes = [24, 8], strides = [1, 1]} : vector<48x192xf32> to vector<24x8xf32>
    %314 = vector.extract_strided_slice %253 {offsets = [0, 160], sizes = [24, 32], strides = [1, 1]} : vector<48x192xf32> to vector<24x32xf32>
    %cst_116 = arith.constant dense<0.000000e+00> : vector<24x24xf32>
    %315 = tpu.matmul %312, %313, %cst_116 {dimension_numbers = #tpu.dot_dimension_numbers<[1], [1], [0], [0], [0, 0, 1, 0], [], []>} : vector<24x8xf32>, vector<24x8xf32>, vector<24x24xf32> -> vector<24x24xf32>
    %cst_117 = arith.constant 0.176776692 : f32
    %316 = vector.broadcast %cst_117 : f32 to vector<24x24xf32>
    %317 = arith.mulf %315, %316 : vector<24x24xf32>
    %318 = arith.addf %317, %18 : vector<24x24xf32>
    %cst_118 = arith.constant dense<0xFF800000> : vector<24xf32>
    %319 = vector.multi_reduction <maximumf>, %318, %cst_118 [1] : vector<24x24xf32> to vector<24xf32>
    %320 = vector.shape_cast %319 : vector<24xf32> to vector<24x1xf32>
    %321 = vector.broadcast %320 : vector<24x1xf32> to vector<24x24xf32>
    %322 = arith.subf %318, %321 : vector<24x24xf32>
    %323 = math.exp %322 : vector<24x24xf32>
    %cst_119 = arith.constant dense<0.000000e+00> : vector<24xf32>
    %324 = vector.multi_reduction <add>, %323, %cst_119 [1] : vector<24x24xf32> to vector<24xf32>
    %325 = vector.shape_cast %324 : vector<24xf32> to vector<24x1xf32>
    %326 = tpu.reciprocal %325 {approx = true} : vector<24x1xf32> -> vector<24x1xf32>
    %327 = vector.broadcast %326 : vector<24x1xf32> to vector<24x24xf32>
    %328 = arith.mulf %323, %327 : vector<24x24xf32>
    %cst_120 = arith.constant dense<0.000000e+00> : vector<24x32xf32>
    %329 = tpu.matmul %328, %314, %cst_120 {dimension_numbers = #tpu.dot_dimension_numbers<[1], [0], [0], [1], [0, 0, 1, 1], [], []>} : vector<24x24xf32>, vector<24x32xf32>, vector<24x32xf32> -> vector<24x32xf32>
    %330 = arith.addf %311, %329 : vector<24x32xf32>
    %cst_121 = arith.constant 0.000000e+00 : f32
    %331 = vector.broadcast %cst_121 : f32 to vector<24x32xf32>
    %332 = vector.extract_strided_slice %253 {offsets = [24, 0], sizes = [24, 8], strides = [1, 1]} : vector<48x192xf32> to vector<24x8xf32>
    %333 = vector.extract_strided_slice %253 {offsets = [24, 32], sizes = [24, 8], strides = [1, 1]} : vector<48x192xf32> to vector<24x8xf32>
    %334 = vector.extract_strided_slice %253 {offsets = [24, 64], sizes = [24, 32], strides = [1, 1]} : vector<48x192xf32> to vector<24x32xf32>
    %cst_122 = arith.constant dense<0.000000e+00> : vector<24x24xf32>
    %335 = tpu.matmul %332, %333, %cst_122 {dimension_numbers = #tpu.dot_dimension_numbers<[1], [1], [0], [0], [0, 0, 1, 0], [], []>} : vector<24x8xf32>, vector<24x8xf32>, vector<24x24xf32> -> vector<24x24xf32>
    %cst_123 = arith.constant 0.176776692 : f32
    %336 = vector.broadcast %cst_123 : f32 to vector<24x24xf32>
    %337 = arith.mulf %335, %336 : vector<24x24xf32>
    %338 = arith.addf %337, %18 : vector<24x24xf32>
    %cst_124 = arith.constant dense<0xFF800000> : vector<24xf32>
    %339 = vector.multi_reduction <maximumf>, %338, %cst_124 [1] : vector<24x24xf32> to vector<24xf32>
    %340 = vector.shape_cast %339 : vector<24xf32> to vector<24x1xf32>
    %341 = vector.broadcast %340 : vector<24x1xf32> to vector<24x24xf32>
    %342 = arith.subf %338, %341 : vector<24x24xf32>
    %343 = math.exp %342 : vector<24x24xf32>
    %cst_125 = arith.constant dense<0.000000e+00> : vector<24xf32>
    %344 = vector.multi_reduction <add>, %343, %cst_125 [1] : vector<24x24xf32> to vector<24xf32>
    %345 = vector.shape_cast %344 : vector<24xf32> to vector<24x1xf32>
    %346 = tpu.reciprocal %345 {approx = true} : vector<24x1xf32> -> vector<24x1xf32>
    %347 = vector.broadcast %346 : vector<24x1xf32> to vector<24x24xf32>
    %348 = arith.mulf %343, %347 : vector<24x24xf32>
    %cst_126 = arith.constant dense<0.000000e+00> : vector<24x32xf32>
    %349 = tpu.matmul %348, %334, %cst_126 {dimension_numbers = #tpu.dot_dimension_numbers<[1], [0], [0], [1], [0, 0, 1, 1], [], []>} : vector<24x24xf32>, vector<24x32xf32>, vector<24x32xf32> -> vector<24x32xf32>
    %350 = arith.addf %331, %349 : vector<24x32xf32>
    %351 = vector.extract_strided_slice %253 {offsets = [24, 8], sizes = [24, 8], strides = [1, 1]} : vector<48x192xf32> to vector<24x8xf32>
    %352 = vector.extract_strided_slice %253 {offsets = [24, 40], sizes = [24, 8], strides = [1, 1]} : vector<48x192xf32> to vector<24x8xf32>
    %353 = vector.extract_strided_slice %253 {offsets = [24, 96], sizes = [24, 32], strides = [1, 1]} : vector<48x192xf32> to vector<24x32xf32>
    %cst_127 = arith.constant dense<0.000000e+00> : vector<24x24xf32>
    %354 = tpu.matmul %351, %352, %cst_127 {dimension_numbers = #tpu.dot_dimension_numbers<[1], [1], [0], [0], [0, 0, 1, 0], [], []>} : vector<24x8xf32>, vector<24x8xf32>, vector<24x24xf32> -> vector<24x24xf32>
    %cst_128 = arith.constant 0.176776692 : f32
    %355 = vector.broadcast %cst_128 : f32 to vector<24x24xf32>
    %356 = arith.mulf %354, %355 : vector<24x24xf32>
    %357 = arith.addf %356, %18 : vector<24x24xf32>
    %cst_129 = arith.constant dense<0xFF800000> : vector<24xf32>
    %358 = vector.multi_reduction <maximumf>, %357, %cst_129 [1] : vector<24x24xf32> to vector<24xf32>
    %359 = vector.shape_cast %358 : vector<24xf32> to vector<24x1xf32>
    %360 = vector.broadcast %359 : vector<24x1xf32> to vector<24x24xf32>
    %361 = arith.subf %357, %360 : vector<24x24xf32>
    %362 = math.exp %361 : vector<24x24xf32>
    %cst_130 = arith.constant dense<0.000000e+00> : vector<24xf32>
    %363 = vector.multi_reduction <add>, %362, %cst_130 [1] : vector<24x24xf32> to vector<24xf32>
    %364 = vector.shape_cast %363 : vector<24xf32> to vector<24x1xf32>
    %365 = tpu.reciprocal %364 {approx = true} : vector<24x1xf32> -> vector<24x1xf32>
    %366 = vector.broadcast %365 : vector<24x1xf32> to vector<24x24xf32>
    %367 = arith.mulf %362, %366 : vector<24x24xf32>
    %cst_131 = arith.constant dense<0.000000e+00> : vector<24x32xf32>
    %368 = tpu.matmul %367, %353, %cst_131 {dimension_numbers = #tpu.dot_dimension_numbers<[1], [0], [0], [1], [0, 0, 1, 1], [], []>} : vector<24x24xf32>, vector<24x32xf32>, vector<24x32xf32> -> vector<24x32xf32>
    %369 = arith.addf %350, %368 : vector<24x32xf32>
    %370 = vector.extract_strided_slice %253 {offsets = [24, 16], sizes = [24, 8], strides = [1, 1]} : vector<48x192xf32> to vector<24x8xf32>
    %371 = vector.extract_strided_slice %253 {offsets = [24, 48], sizes = [24, 8], strides = [1, 1]} : vector<48x192xf32> to vector<24x8xf32>
    %372 = vector.extract_strided_slice %253 {offsets = [24, 128], sizes = [24, 32], strides = [1, 1]} : vector<48x192xf32> to vector<24x32xf32>
    %cst_132 = arith.constant dense<0.000000e+00> : vector<24x24xf32>
    %373 = tpu.matmul %370, %371, %cst_132 {dimension_numbers = #tpu.dot_dimension_numbers<[1], [1], [0], [0], [0, 0, 1, 0], [], []>} : vector<24x8xf32>, vector<24x8xf32>, vector<24x24xf32> -> vector<24x24xf32>
    %cst_133 = arith.constant 0.176776692 : f32
    %374 = vector.broadcast %cst_133 : f32 to vector<24x24xf32>
    %375 = arith.mulf %373, %374 : vector<24x24xf32>
    %376 = arith.addf %375, %18 : vector<24x24xf32>
    %cst_134 = arith.constant dense<0xFF800000> : vector<24xf32>
    %377 = vector.multi_reduction <maximumf>, %376, %cst_134 [1] : vector<24x24xf32> to vector<24xf32>
    %378 = vector.shape_cast %377 : vector<24xf32> to vector<24x1xf32>
    %379 = vector.broadcast %378 : vector<24x1xf32> to vector<24x24xf32>
    %380 = arith.subf %376, %379 : vector<24x24xf32>
    %381 = math.exp %380 : vector<24x24xf32>
    %cst_135 = arith.constant dense<0.000000e+00> : vector<24xf32>
    %382 = vector.multi_reduction <add>, %381, %cst_135 [1] : vector<24x24xf32> to vector<24xf32>
    %383 = vector.shape_cast %382 : vector<24xf32> to vector<24x1xf32>
    %384 = tpu.reciprocal %383 {approx = true} : vector<24x1xf32> -> vector<24x1xf32>
    %385 = vector.broadcast %384 : vector<24x1xf32> to vector<24x24xf32>
    %386 = arith.mulf %381, %385 : vector<24x24xf32>
    %cst_136 = arith.constant dense<0.000000e+00> : vector<24x32xf32>
    %387 = tpu.matmul %386, %372, %cst_136 {dimension_numbers = #tpu.dot_dimension_numbers<[1], [0], [0], [1], [0, 0, 1, 1], [], []>} : vector<24x24xf32>, vector<24x32xf32>, vector<24x32xf32> -> vector<24x32xf32>
    %388 = arith.addf %369, %387 : vector<24x32xf32>
    %389 = vector.extract_strided_slice %253 {offsets = [24, 24], sizes = [24, 8], strides = [1, 1]} : vector<48x192xf32> to vector<24x8xf32>
    %390 = vector.extract_strided_slice %253 {offsets = [24, 56], sizes = [24, 8], strides = [1, 1]} : vector<48x192xf32> to vector<24x8xf32>
    %391 = vector.extract_strided_slice %253 {offsets = [24, 160], sizes = [24, 32], strides = [1, 1]} : vector<48x192xf32> to vector<24x32xf32>
    %cst_137 = arith.constant dense<0.000000e+00> : vector<24x24xf32>
    %392 = tpu.matmul %389, %390, %cst_137 {dimension_numbers = #tpu.dot_dimension_numbers<[1], [1], [0], [0], [0, 0, 1, 0], [], []>} : vector<24x8xf32>, vector<24x8xf32>, vector<24x24xf32> -> vector<24x24xf32>
    %cst_138 = arith.constant 0.176776692 : f32
    %393 = vector.broadcast %cst_138 : f32 to vector<24x24xf32>
    %394 = arith.mulf %392, %393 : vector<24x24xf32>
    %395 = arith.addf %394, %18 : vector<24x24xf32>
    %cst_139 = arith.constant dense<0xFF800000> : vector<24xf32>
    %396 = vector.multi_reduction <maximumf>, %395, %cst_139 [1] : vector<24x24xf32> to vector<24xf32>
    %397 = vector.shape_cast %396 : vector<24xf32> to vector<24x1xf32>
    %398 = vector.broadcast %397 : vector<24x1xf32> to vector<24x24xf32>
    %399 = arith.subf %395, %398 : vector<24x24xf32>
    %400 = math.exp %399 : vector<24x24xf32>
    %cst_140 = arith.constant dense<0.000000e+00> : vector<24xf32>
    %401 = vector.multi_reduction <add>, %400, %cst_140 [1] : vector<24x24xf32> to vector<24xf32>
    %402 = vector.shape_cast %401 : vector<24xf32> to vector<24x1xf32>
    %403 = tpu.reciprocal %402 {approx = true} : vector<24x1xf32> -> vector<24x1xf32>
    %404 = vector.broadcast %403 : vector<24x1xf32> to vector<24x24xf32>
    %405 = arith.mulf %400, %404 : vector<24x24xf32>
    %cst_141 = arith.constant dense<0.000000e+00> : vector<24x32xf32>
    %406 = tpu.matmul %405, %391, %cst_141 {dimension_numbers = #tpu.dot_dimension_numbers<[1], [0], [0], [1], [0, 0, 1, 1], [], []>} : vector<24x24xf32>, vector<24x32xf32>, vector<24x32xf32> -> vector<24x32xf32>
    %407 = arith.addf %388, %406 : vector<24x32xf32>
    %408 = tpu.concatenate %330, %407 in 0 : vector<24x32xf32>, vector<24x32xf32> -> vector<48x32xf32>
    %c1_142 = arith.constant 1 : index
    %c0_143 = arith.constant 0 : index
    %c0_144 = arith.constant 0 : index
    %409 = vector.load %arg7[%c1_142, %c0_143, %c0_144] : memref<2x1x32xf32, #tpu.memory_space<vmem>>, vector<1x1x32xf32>
    %410 = vector.shape_cast %409 : vector<1x1x32xf32> to vector<1x32xf32>
    %411 = vector.broadcast %410 : vector<1x32xf32> to vector<48x32xf32>
    %412 = arith.addf %408, %411 : vector<48x32xf32>
    %413 = arith.addf %412, %250 : vector<48x32xf32>
    %c1_145 = arith.constant 1 : index
    %c0_146 = arith.constant 0 : index
    %c0_147 = arith.constant 0 : index
    %414 = vector.load %arg8[%c1_145, %c0_146, %c0_147] : memref<2x1x32xf32, #tpu.memory_space<vmem>>, vector<1x1x32xf32>
    %415 = vector.shape_cast %414 : vector<1x1x32xf32> to vector<1x32xf32>
    %c1_148 = arith.constant 1 : index
    %c0_149 = arith.constant 0 : index
    %c0_150 = arith.constant 0 : index
    %416 = vector.load %arg9[%c1_148, %c0_149, %c0_150] : memref<2x1x32xf32, #tpu.memory_space<vmem>>, vector<1x1x32xf32>
    %417 = vector.shape_cast %416 : vector<1x1x32xf32> to vector<1x32xf32>
    %cst_151 = arith.constant dense<0.000000e+00> : vector<48xf32>
    %418 = vector.multi_reduction <add>, %413, %cst_151 [1] : vector<48x32xf32> to vector<48xf32>
    %419 = vector.shape_cast %418 : vector<48xf32> to vector<48x1xf32>
    %cst_152 = arith.constant 3.200000e+01 : f32
    %420 = vector.broadcast %cst_152 : f32 to vector<48x1xf32>
    %421 = arith.divf %419, %420 : vector<48x1xf32>
    %422 = vector.broadcast %421 : vector<48x1xf32> to vector<48x32xf32>
    %423 = arith.subf %413, %422 : vector<48x32xf32>
    %424 = arith.mulf %423, %423 : vector<48x32xf32>
    %cst_153 = arith.constant dense<0.000000e+00> : vector<48xf32>
    %425 = vector.multi_reduction <add>, %424, %cst_153 [1] : vector<48x32xf32> to vector<48xf32>
    %426 = vector.shape_cast %425 : vector<48xf32> to vector<48x1xf32>
    %cst_154 = arith.constant 3.200000e+01 : f32
    %427 = vector.broadcast %cst_154 : f32 to vector<48x1xf32>
    %428 = arith.divf %426, %427 : vector<48x1xf32>
    %429 = vector.broadcast %421 : vector<48x1xf32> to vector<48x32xf32>
    %430 = arith.subf %413, %429 : vector<48x32xf32>
    %cst_155 = arith.constant 9.99999974E-6 : f32
    %431 = vector.broadcast %cst_155 : f32 to vector<48x1xf32>
    %432 = arith.addf %428, %431 : vector<48x1xf32>
    %433 = math.rsqrt %432 : vector<48x1xf32>
    %434 = vector.broadcast %433 : vector<48x1xf32> to vector<48x32xf32>
    %435 = arith.mulf %430, %434 : vector<48x32xf32>
    %436 = vector.broadcast %415 : vector<1x32xf32> to vector<48x32xf32>
    %437 = arith.mulf %435, %436 : vector<48x32xf32>
    %438 = vector.broadcast %417 : vector<1x32xf32> to vector<48x32xf32>
    %439 = arith.addf %437, %438 : vector<48x32xf32>
    %c1_156 = arith.constant 1 : index
    %c0_157 = arith.constant 0 : index
    %c0_158 = arith.constant 0 : index
    %440 = vector.load %arg10[%c1_156, %c0_157, %c0_158] : memref<2x32x128xf32, #tpu.memory_space<vmem>>, vector<1x32x128xf32>
    %441 = vector.shape_cast %440 : vector<1x32x128xf32> to vector<32x128xf32>
    %cst_159 = arith.constant dense<0.000000e+00> : vector<48x128xf32>
    %442 = tpu.matmul %439, %441, %cst_159 {dimension_numbers = #tpu.dot_dimension_numbers<[1], [0], [0], [1], [0, 0, 1, 1], [], []>} : vector<48x32xf32>, vector<32x128xf32>, vector<48x128xf32> -> vector<48x128xf32>
    %c1_160 = arith.constant 1 : index
    %c0_161 = arith.constant 0 : index
    %c0_162 = arith.constant 0 : index
    %443 = vector.load %arg11[%c1_160, %c0_161, %c0_162] : memref<2x1x128xf32, #tpu.memory_space<vmem>>, vector<1x1x128xf32>
    %444 = vector.shape_cast %443 : vector<1x1x128xf32> to vector<1x128xf32>
    %445 = vector.broadcast %444 : vector<1x128xf32> to vector<48x128xf32>
    %446 = arith.addf %442, %445 : vector<48x128xf32>
    %cst_163 = arith.constant 0.000000e+00 : f32
    %447 = vector.broadcast %cst_163 : f32 to vector<48x128xf32>
    %448 = arith.maximumf %446, %447 : vector<48x128xf32>
    %c1_164 = arith.constant 1 : index
    %c0_165 = arith.constant 0 : index
    %c0_166 = arith.constant 0 : index
    %449 = vector.load %arg12[%c1_164, %c0_165, %c0_166] : memref<2x128x32xf32, #tpu.memory_space<vmem>>, vector<1x128x32xf32>
    %450 = vector.shape_cast %449 : vector<1x128x32xf32> to vector<128x32xf32>
    %cst_167 = arith.constant dense<0.000000e+00> : vector<48x32xf32>
    %451 = tpu.matmul %448, %450, %cst_167 {dimension_numbers = #tpu.dot_dimension_numbers<[1], [0], [0], [1], [0, 0, 1, 1], [], []>} : vector<48x128xf32>, vector<128x32xf32>, vector<48x32xf32> -> vector<48x32xf32>
    %c1_168 = arith.constant 1 : index
    %c0_169 = arith.constant 0 : index
    %c0_170 = arith.constant 0 : index
    %452 = vector.load %arg13[%c1_168, %c0_169, %c0_170] : memref<2x1x32xf32, #tpu.memory_space<vmem>>, vector<1x1x32xf32>
    %453 = vector.shape_cast %452 : vector<1x1x32xf32> to vector<1x32xf32>
    %454 = vector.broadcast %453 : vector<1x32xf32> to vector<48x32xf32>
    %455 = arith.addf %451, %454 : vector<48x32xf32>
    %456 = arith.addf %455, %439 : vector<48x32xf32>
    %c1_171 = arith.constant 1 : index
    %c0_172 = arith.constant 0 : index
    %c0_173 = arith.constant 0 : index
    %457 = vector.load %arg14[%c1_171, %c0_172, %c0_173] : memref<2x1x32xf32, #tpu.memory_space<vmem>>, vector<1x1x32xf32>
    %458 = vector.shape_cast %457 : vector<1x1x32xf32> to vector<1x32xf32>
    %c1_174 = arith.constant 1 : index
    %c0_175 = arith.constant 0 : index
    %c0_176 = arith.constant 0 : index
    %459 = vector.load %arg15[%c1_174, %c0_175, %c0_176] : memref<2x1x32xf32, #tpu.memory_space<vmem>>, vector<1x1x32xf32>
    %460 = vector.shape_cast %459 : vector<1x1x32xf32> to vector<1x32xf32>
    %cst_177 = arith.constant dense<0.000000e+00> : vector<48xf32>
    %461 = vector.multi_reduction <add>, %456, %cst_177 [1] : vector<48x32xf32> to vector<48xf32>
    %462 = vector.shape_cast %461 : vector<48xf32> to vector<48x1xf32>
    %cst_178 = arith.constant 3.200000e+01 : f32
    %463 = vector.broadcast %cst_178 : f32 to vector<48x1xf32>
    %464 = arith.divf %462, %463 : vector<48x1xf32>
    %465 = vector.broadcast %464 : vector<48x1xf32> to vector<48x32xf32>
    %466 = arith.subf %456, %465 : vector<48x32xf32>
    %467 = arith.mulf %466, %466 : vector<48x32xf32>
    %cst_179 = arith.constant dense<0.000000e+00> : vector<48xf32>
    %468 = vector.multi_reduction <add>, %467, %cst_179 [1] : vector<48x32xf32> to vector<48xf32>
    %469 = vector.shape_cast %468 : vector<48xf32> to vector<48x1xf32>
    %cst_180 = arith.constant 3.200000e+01 : f32
    %470 = vector.broadcast %cst_180 : f32 to vector<48x1xf32>
    %471 = arith.divf %469, %470 : vector<48x1xf32>
    %472 = vector.broadcast %464 : vector<48x1xf32> to vector<48x32xf32>
    %473 = arith.subf %456, %472 : vector<48x32xf32>
    %cst_181 = arith.constant 9.99999974E-6 : f32
    %474 = vector.broadcast %cst_181 : f32 to vector<48x1xf32>
    %475 = arith.addf %471, %474 : vector<48x1xf32>
    %476 = math.rsqrt %475 : vector<48x1xf32>
    %477 = vector.broadcast %476 : vector<48x1xf32> to vector<48x32xf32>
    %478 = arith.mulf %473, %477 : vector<48x32xf32>
    %479 = vector.broadcast %458 : vector<1x32xf32> to vector<48x32xf32>
    %480 = arith.mulf %478, %479 : vector<48x32xf32>
    %481 = vector.broadcast %460 : vector<1x32xf32> to vector<48x32xf32>
    %482 = arith.addf %480, %481 : vector<48x32xf32>
    %483 = vector.extract_strided_slice %482 {offsets = [16, 0], sizes = [1, 32], strides = [1, 1]} : vector<48x32xf32> to vector<1x32xf32>
    %484 = vector.extract_strided_slice %482 {offsets = [40, 0], sizes = [1, 32], strides = [1, 1]} : vector<48x32xf32> to vector<1x32xf32>
    %485 = tpu.concatenate %483, %484 in 0 : vector<1x32xf32>, vector<1x32xf32> -> vector<2x32xf32>
    %c0_182 = arith.constant 0 : index
    %c0_183 = arith.constant 0 : index
    %486 = vector.load %arg16[%c0_182, %c0_183] : memref<1x32xf32, #tpu.memory_space<vmem>>, vector<1x32xf32>
    %c0_184 = arith.constant 0 : index
    %c0_185 = arith.constant 0 : index
    %487 = vector.load %arg17[%c0_184, %c0_185] : memref<1x32xf32, #tpu.memory_space<vmem>>, vector<1x32xf32>
    %cst_186 = arith.constant dense<0.000000e+00> : vector<2xf32>
    %488 = vector.multi_reduction <add>, %485, %cst_186 [1] : vector<2x32xf32> to vector<2xf32>
    %489 = vector.shape_cast %488 : vector<2xf32> to vector<2x1xf32>
    %cst_187 = arith.constant 3.200000e+01 : f32
    %490 = vector.broadcast %cst_187 : f32 to vector<2x1xf32>
    %491 = arith.divf %489, %490 : vector<2x1xf32>
    %492 = vector.broadcast %491 : vector<2x1xf32> to vector<2x32xf32>
    %493 = arith.subf %485, %492 : vector<2x32xf32>
    %494 = arith.mulf %493, %493 : vector<2x32xf32>
    %cst_188 = arith.constant dense<0.000000e+00> : vector<2xf32>
    %495 = vector.multi_reduction <add>, %494, %cst_188 [1] : vector<2x32xf32> to vector<2xf32>
    %496 = vector.shape_cast %495 : vector<2xf32> to vector<2x1xf32>
    %cst_189 = arith.constant 3.200000e+01 : f32
    %497 = vector.broadcast %cst_189 : f32 to vector<2x1xf32>
    %498 = arith.divf %496, %497 : vector<2x1xf32>
    %499 = vector.broadcast %491 : vector<2x1xf32> to vector<2x32xf32>
    %500 = arith.subf %485, %499 : vector<2x32xf32>
    %cst_190 = arith.constant 9.99999974E-6 : f32
    %501 = vector.broadcast %cst_190 : f32 to vector<2x1xf32>
    %502 = arith.addf %498, %501 : vector<2x1xf32>
    %503 = math.rsqrt %502 : vector<2x1xf32>
    %504 = vector.broadcast %503 : vector<2x1xf32> to vector<2x32xf32>
    %505 = arith.mulf %500, %504 : vector<2x32xf32>
    %506 = vector.broadcast %486 : vector<1x32xf32> to vector<2x32xf32>
    %507 = arith.mulf %505, %506 : vector<2x32xf32>
    %508 = vector.broadcast %487 : vector<1x32xf32> to vector<2x32xf32>
    %509 = arith.addf %507, %508 : vector<2x32xf32>
    %c0_191 = arith.constant 0 : index
    %c0_192 = arith.constant 0 : index
    %510 = vector.load %arg18[%c0_191, %c0_192] : memref<32x64xf32, #tpu.memory_space<vmem>>, vector<32x64xf32>
    %cst_193 = arith.constant dense<0.000000e+00> : vector<2x64xf32>
    %511 = tpu.matmul %509, %510, %cst_193 {dimension_numbers = #tpu.dot_dimension_numbers<[1], [0], [0], [1], [0, 0, 1, 1], [], []>} : vector<2x32xf32>, vector<32x64xf32>, vector<2x64xf32> -> vector<2x64xf32>
    %c0_194 = arith.constant 0 : index
    %c0_195 = arith.constant 0 : index
    %512 = vector.load %arg19[%c0_194, %c0_195] : memref<1x64xf32, #tpu.memory_space<vmem>>, vector<1x64xf32>
    %513 = vector.broadcast %512 : vector<1x64xf32> to vector<2x64xf32>
    %514 = arith.addf %511, %513 : vector<2x64xf32>
    %cst_196 = arith.constant 0.000000e+00 : f32
    %515 = vector.broadcast %cst_196 : f32 to vector<2x64xf32>
    %516 = arith.maximumf %514, %515 : vector<2x64xf32>
    %c0_197 = arith.constant 0 : index
    %c0_198 = arith.constant 0 : index
    %517 = vector.load %arg20[%c0_197, %c0_198] : memref<64x10xf32, #tpu.memory_space<vmem>>, vector<64x10xf32>
    %cst_199 = arith.constant dense<0.000000e+00> : vector<2x10xf32>
    %518 = tpu.matmul %516, %517, %cst_199 {dimension_numbers = #tpu.dot_dimension_numbers<[1], [0], [0], [1], [0, 0, 1, 1], [], []>} : vector<2x64xf32>, vector<64x10xf32>, vector<2x10xf32> -> vector<2x10xf32>
    %c0_200 = arith.constant 0 : index
    %c0_201 = arith.constant 0 : index
    %519 = vector.load %arg21[%c0_200, %c0_201] : memref<1x10xf32, #tpu.memory_space<vmem>>, vector<1x10xf32>
    %520 = vector.broadcast %519 : vector<1x10xf32> to vector<2x10xf32>
    %521 = arith.addf %518, %520 : vector<2x10xf32>
    %c0_202 = arith.constant 0 : index
    %c0_203 = arith.constant 0 : index
    %522 = vector.load %arg22[%c0_202, %c0_203] : memref<2x10xf32, #tpu.memory_space<vmem>>, vector<2x10xf32>
    tpu.vector_store %arg22[%c0_202, %c0_203], %521 {strides = array<i32>} : memref<2x10xf32, #tpu.memory_space<vmem>>, vector<2x10xf32>,
    return
  }
  func.func @transform_0(%arg0: i32) -> (i32, i32) {
    %c0_i32 = arith.constant 0 : i32
    %c0_i32_0 = arith.constant 0 : i32
    %c0_i32_1 = arith.constant 0 : i32
    return %c0_i32, %c0_i32_0 : i32, i32
  }
  func.func @transform_1(%arg0: i32) -> (i32, i32) {
    %c0_i32 = arith.constant 0 : i32
    %c0_i32_0 = arith.constant 0 : i32
    %c0_i32_1 = arith.constant 0 : i32
    return %c0_i32, %c0_i32_0 : i32, i32
  }
  func.func @transform_2(%arg0: i32) -> (i32, i32) {
    %c0_i32 = arith.constant 0 : i32
    %c0_i32_0 = arith.constant 0 : i32
    %c0_i32_1 = arith.constant 0 : i32
    return %c0_i32, %c0_i32_0 : i32, i32
  }
  func.func @transform_3(%arg0: i32) -> (i32, i32) {
    %c0_i32 = arith.constant 0 : i32
    %c0_i32_0 = arith.constant 0 : i32
    %c0_i32_1 = arith.constant 0 : i32
    return %c0_i32, %c0_i32_0 : i32, i32
  }
  func.func @transform_4(%arg0: i32) -> (i32, i32) {
    %c0_i32 = arith.constant 0 : i32
    %c0_i32_0 = arith.constant 0 : i32
    %c0_i32_1 = arith.constant 0 : i32
    return %c0_i32, %c0_i32_0 : i32, i32
  }
  func.func @transform_5(%arg0: i32) -> (i32, i32, i32) {
    %c0_i32 = arith.constant 0 : i32
    %c0_i32_0 = arith.constant 0 : i32
    %c0_i32_1 = arith.constant 0 : i32
    %c0_i32_2 = arith.constant 0 : i32
    return %c0_i32, %c0_i32_0, %c0_i32_1 : i32, i32, i32
  }
  func.func @transform_6(%arg0: i32) -> (i32, i32, i32) {
    %c0_i32 = arith.constant 0 : i32
    %c0_i32_0 = arith.constant 0 : i32
    %c0_i32_1 = arith.constant 0 : i32
    %c0_i32_2 = arith.constant 0 : i32
    return %c0_i32, %c0_i32_0, %c0_i32_1 : i32, i32, i32
  }
  func.func @transform_7(%arg0: i32) -> (i32, i32, i32) {
    %c0_i32 = arith.constant 0 : i32
    %c0_i32_0 = arith.constant 0 : i32
    %c0_i32_1 = arith.constant 0 : i32
    %c0_i32_2 = arith.constant 0 : i32
    return %c0_i32, %c0_i32_0, %c0_i32_1 : i32, i32, i32
  }
  func.func @transform_8(%arg0: i32) -> (i32, i32, i32) {
    %c0_i32 = arith.constant 0 : i32
    %c0_i32_0 = arith.constant 0 : i32
    %c0_i32_1 = arith.constant 0 : i32
    %c0_i32_2 = arith.constant 0 : i32
    return %c0_i32, %c0_i32_0, %c0_i32_1 : i32, i32, i32
  }
  func.func @transform_9(%arg0: i32) -> (i32, i32, i32) {
    %c0_i32 = arith.constant 0 : i32
    %c0_i32_0 = arith.constant 0 : i32
    %c0_i32_1 = arith.constant 0 : i32
    %c0_i32_2 = arith.constant 0 : i32
    return %c0_i32, %c0_i32_0, %c0_i32_1 : i32, i32, i32
  }
  func.func @transform_10(%arg0: i32) -> (i32, i32, i32) {
    %c0_i32 = arith.constant 0 : i32
    %c0_i32_0 = arith.constant 0 : i32
    %c0_i32_1 = arith.constant 0 : i32
    %c0_i32_2 = arith.constant 0 : i32
    return %c0_i32, %c0_i32_0, %c0_i32_1 : i32, i32, i32
  }
  func.func @transform_11(%arg0: i32) -> (i32, i32, i32) {
    %c0_i32 = arith.constant 0 : i32
    %c0_i32_0 = arith.constant 0 : i32
    %c0_i32_1 = arith.constant 0 : i32
    %c0_i32_2 = arith.constant 0 : i32
    return %c0_i32, %c0_i32_0, %c0_i32_1 : i32, i32, i32
  }
  func.func @transform_12(%arg0: i32) -> (i32, i32, i32) {
    %c0_i32 = arith.constant 0 : i32
    %c0_i32_0 = arith.constant 0 : i32
    %c0_i32_1 = arith.constant 0 : i32
    %c0_i32_2 = arith.constant 0 : i32
    return %c0_i32, %c0_i32_0, %c0_i32_1 : i32, i32, i32
  }
  func.func @transform_13(%arg0: i32) -> (i32, i32, i32) {
    %c0_i32 = arith.constant 0 : i32
    %c0_i32_0 = arith.constant 0 : i32
    %c0_i32_1 = arith.constant 0 : i32
    %c0_i32_2 = arith.constant 0 : i32
    return %c0_i32, %c0_i32_0, %c0_i32_1 : i32, i32, i32
  }
  func.func @transform_14(%arg0: i32) -> (i32, i32, i32) {
    %c0_i32 = arith.constant 0 : i32
    %c0_i32_0 = arith.constant 0 : i32
    %c0_i32_1 = arith.constant 0 : i32
    %c0_i32_2 = arith.constant 0 : i32
    return %c0_i32, %c0_i32_0, %c0_i32_1 : i32, i32, i32
  }
  func.func @transform_15(%arg0: i32) -> (i32, i32) {
    %c0_i32 = arith.constant 0 : i32
    %c0_i32_0 = arith.constant 0 : i32
    %c0_i32_1 = arith.constant 0 : i32
    return %c0_i32, %c0_i32_0 : i32, i32
  }
  func.func @transform_16(%arg0: i32) -> (i32, i32) {
    %c0_i32 = arith.constant 0 : i32
    %c0_i32_0 = arith.constant 0 : i32
    %c0_i32_1 = arith.constant 0 : i32
    return %c0_i32, %c0_i32_0 : i32, i32
  }
  func.func @transform_17(%arg0: i32) -> (i32, i32) {
    %c0_i32 = arith.constant 0 : i32
    %c0_i32_0 = arith.constant 0 : i32
    %c0_i32_1 = arith.constant 0 : i32
    return %c0_i32, %c0_i32_0 : i32, i32
  }
  func.func @transform_18(%arg0: i32) -> (i32, i32) {
    %c0_i32 = arith.constant 0 : i32
    %c0_i32_0 = arith.constant 0 : i32
    %c0_i32_1 = arith.constant 0 : i32
    return %c0_i32, %c0_i32_0 : i32, i32
  }
  func.func @transform_19(%arg0: i32) -> (i32, i32) {
    %c0_i32 = arith.constant 0 : i32
    %c0_i32_0 = arith.constant 0 : i32
    %c0_i32_1 = arith.constant 0 : i32
    return %c0_i32, %c0_i32_0 : i32, i32
  }
  func.func @transform_20(%arg0: i32) -> (i32, i32) {
    %c0_i32 = arith.constant 0 : i32
    %c0_i32_0 = arith.constant 0 : i32
    %c0_i32_1 = arith.constant 0 : i32
    return %c0_i32, %c0_i32_0 : i32, i32
  }
  func.func @transform_21(%arg0: i32) -> (i32, i32) {
    %c0_i32 = arith.constant 0 : i32
    %c0_i32_0 = arith.constant 0 : i32
    %c0_i32_1 = arith.constant 0 : i32
    return %c0_i32, %c0_i32_0 : i32, i32
  }
}

</mosaic_0001>

<llo_original>
// kernel: vit_forward.1
$region0: #{vit_forward.1}
  #allocation0 [shape = 'u32[]', space=smem, size = 0x4, offset = 0x4, fixed_abs, tag = 'smem constant byte address 0x4 - core index']
  #allocation1 [shape = 'u32[144,128]{1,0:T(1,128)}', space=vmem, size = 0x12000, scoped, tag = 'internal scratch']
  %s0 = inlined_call_operand.vmem [shape: f32[32,64], index: 0, kind: input, shape index: {}]
  %s1 = inlined_call_operand.vmem [shape: f32[64,32], index: 1, kind: input, shape index: {}]
  %s2 = inlined_call_operand.vmem [shape: f32[1,32], index: 2, kind: input, shape index: {}]
  %s3 = inlined_call_operand.vmem [shape: f32[16,32], index: 3, kind: input, shape index: {}]
  %s4 = inlined_call_operand.vmem [shape: f32[8,32], index: 4, kind: input, shape index: {}]
  %s5 = inlined_call_operand.vmem [shape: f32[2,32,192], index: 5, kind: input, shape index: {}]
  %s6 = inlined_call_operand.vmem [shape: f32[2,1,32], index: 6, kind: input, shape index: {}]
  %s7 = inlined_call_operand.vmem [shape: f32[2,1,32], index: 7, kind: input, shape index: {}]
  %s8 = inlined_call_operand.vmem [shape: f32[2,1,32], index: 8, kind: input, shape index: {}]
  %s9 = inlined_call_operand.vmem [shape: f32[2,32,128], index: 9, kind: input, shape index: {}]
  %s10 = inlined_call_operand.vmem [shape: f32[2,1,128], index: 10, kind: input, shape index: {}]
  %s11 = inlined_call_operand.vmem [shape: f32[2,128,32], index: 11, kind: input, shape index: {}]
  %s12 = inlined_call_operand.vmem [shape: f32[2,1,32], index: 12, kind: input, shape index: {}]
  %s13 = inlined_call_operand.vmem [shape: f32[2,1,32], index: 13, kind: input, shape index: {}]
  %s14 = inlined_call_operand.vmem [shape: f32[2,1,32], index: 14, kind: input, shape index: {}]
  %s15 = inlined_call_operand.vmem [shape: f32[1,32], index: 15, kind: input, shape index: {}]
  %s16 = inlined_call_operand.vmem [shape: f32[1,32], index: 16, kind: input, shape index: {}]
  %s17 = inlined_call_operand.vmem [shape: f32[32,64], index: 17, kind: input, shape index: {}]
  %s18 = inlined_call_operand.vmem [shape: f32[1,64], index: 18, kind: input, shape index: {}]
  %s19 = inlined_call_operand.vmem [shape: f32[64,10], index: 19, kind: input, shape index: {}]
  %s20 = inlined_call_operand.vmem [shape: f32[1,10], index: 20, kind: input, shape index: {}]
  %s21 = inlined_call_operand.hbm [shape: f32[2,10], index: 21, kind: output, shape index: {}]
  %s22 = sld [smem:[#allocation0]]
  $region94: #{vit_forward.1} parent=0
    _
  %s24 = ssub.s32 1, %s22
  %s25 = scalar_select 0, %s24, %s22
  $region1: #{vit_forward.1} parent=0
    #allocation2 [shape = 'u8[1024]{0}', space=vmem, size = 0x400, scoped, tag = 'output window, operand 0, single buffered']
    #allocation3 [shape = 's32[1]{0}', space=sflag, size = 0x4, scoped, tag = 'scoped memory for vit_forward.1']
    %26 = vsyncpa [#allocation3], 0
    // Predicated region
    $region2: #{vit_forward.1} parent=1 // pred_check
      _
    $region3: #{vit_forward.1} parent=1 // pred_check_branch
      %28 = sbr.rel (0) target = $region5
    $region4: #{vit_forward.1} parent=1 // pred_region
      _
    $region5: #{vit_forward.1} parent=1 // pred_fallthru
      _
    // Predicated region
    $region6: #{vit_forward.1} parent=1 // pred_check
      _
    $region7: #{vit_forward.1} parent=1 // pred_check_branch
      %30 = sbr.rel (0) target = $region9
    $region8: #{vit_forward.1} parent=1 // pred_region
      _
    $region9: #{vit_forward.1} parent=1 // pred_fallthru
      _
    // Predicated region
    $region10: #{vit_forward.1} parent=1 // pred_check
      _
    $region11: #{vit_forward.1} parent=1 // pred_check_branch
      %32 = sbr.rel (0) target = $region13
    $region12: #{vit_forward.1} parent=1 // pred_region
      _
    $region13: #{vit_forward.1} parent=1 // pred_fallthru
      _
    // Predicated region
    $region14: #{vit_forward.1} parent=1 // pred_check
      _
    $region15: #{vit_forward.1} parent=1 // pred_check_branch
      %34 = sbr.rel (0) target = $region17
    $region16: #{vit_forward.1} parent=1 // pred_region
      _
    $region17: #{vit_forward.1} parent=1 // pred_fallthru
      _
    // Predicated region
    $region18: #{vit_forward.1} parent=1 // pred_check
      _
    $region19: #{vit_forward.1} parent=1 // pred_check_branch
      %36 = sbr.rel (0) target = $region21
    $region20: #{vit_forward.1} parent=1 // pred_region
      _
    $region21: #{vit_forward.1} parent=1 // pred_fallthru
      _
    // Predicated region
    $region22: #{vit_forward.1} parent=1 // pred_check
      _
    $region23: #{vit_forward.1} parent=1 // pred_check_branch
      %38 = sbr.rel (0) target = $region25
    $region24: #{vit_forward.1} parent=1 // pred_region
      _
    $region25: #{vit_forward.1} parent=1 // pred_fallthru
      _
    // Predicated region
    $region26: #{vit_forward.1} parent=1 // pred_check
      _
    $region27: #{vit_forward.1} parent=1 // pred_check_branch
      %40 = sbr.rel (0) target = $region29
    $region28: #{vit_forward.1} parent=1 // pred_region
      _
    $region29: #{vit_forward.1} parent=1 // pred_fallthru
      _
    // Predicated region
    $region30: #{vit_forward.1} parent=1 // pred_check
      _
    $region31: #{vit_forward.1} parent=1 // pred_check_branch
      %42 = sbr.rel (0) target = $region33
    $region32: #{vit_forward.1} parent=1 // pred_region
      _
    $region33: #{vit_forward.1} parent=1 // pred_fallthru
      _
    // Predicated region
    $region34: #{vit_forward.1} parent=1 // pred_check
      _
    $region35: #{vit_forward.1} parent=1 // pred_check_branch
      %44 = sbr.rel (0) target = $region37
    $region36: #{vit_forward.1} parent=1 // pred_region
      _
    $region37: #{vit_forward.1} parent=1 // pred_fallthru
      _
    // Predicated region
    $region38: #{vit_forward.1} parent=1 // pred_check
      _
    $region39: #{vit_forward.1} parent=1 // pred_check_branch
      %46 = sbr.rel (0) target = $region41
    $region40: #{vit_forward.1} parent=1 // pred_region
      _
    $region41: #{vit_forward.1} parent=1 // pred_fallthru
      _
    // Predicated region
    $region42: #{vit_forward.1} parent=1 // pred_check
      _
    $region43: #{vit_forward.1} parent=1 // pred_check_branch
      %48 = sbr.rel (0) target = $region45
    $region44: #{vit_forward.1} parent=1 // pred_region
      _
    $region45: #{vit_forward.1} parent=1 // pred_fallthru
      _
    // Predicated region
    $region46: #{vit_forward.1} parent=1 // pred_check
      _
    $region47: #{vit_forward.1} parent=1 // pred_check_branch
      %50 = sbr.rel (0) target = $region49
    $region48: #{vit_forward.1} parent=1 // pred_region
      _
    $region49: #{vit_forward.1} parent=1 // pred_fallthru
      _
    // Predicated region
    $region50: #{vit_forward.1} parent=1 // pred_check
      _
    $region51: #{vit_forward.1} parent=1 // pred_check_branch
      %52 = sbr.rel (0) target = $region53
    $region52: #{vit_forward.1} parent=1 // pred_region
      _
    $region53: #{vit_forward.1} parent=1 // pred_fallthru
      _
    // Predicated region
    $region54: #{vit_forward.1} parent=1 // pred_check
      _
    $region55: #{vit_forward.1} parent=1 // pred_check_branch
      %54 = sbr.rel (0) target = $region57
    $region56: #{vit_forward.1} parent=1 // pred_region
      _
    $region57: #{vit_forward.1} parent=1 // pred_fallthru
      _
    // Predicated region
    $region58: #{vit_forward.1} parent=1 // pred_check
      _
    $region59: #{vit_forward.1} parent=1 // pred_check_branch
      %56 = sbr.rel (0) target = $region61
    $region60: #{vit_forward.1} parent=1 // pred_region
      _
    $region61: #{vit_forward.1} parent=1 // pred_fallthru
      _
    // Predicated region
    $region62: #{vit_forward.1} parent=1 // pred_check
      _
    $region63: #{vit_forward.1} parent=1 // pred_check_branch
      %58 = sbr.rel (0) target = $region65
    $region64: #{vit_forward.1} parent=1 // pred_region
      _
    $region65: #{vit_forward.1} parent=1 // pred_fallthru
      _
    // Predicated region
    $region66: #{vit_forward.1} parent=1 // pred_check
      _
    $region67: #{vit_forward.1} parent=1 // pred_check_branch
      %60 = sbr.rel (0) target = $region69
    $region68: #{vit_forward.1} parent=1 // pred_region
      _
    $region69: #{vit_forward.1} parent=1 // pred_fallthru
      _
    // Predicated region
    $region70: #{vit_forward.1} parent=1 // pred_check
      _
    $region71: #{vit_forward.1} parent=1 // pred_check_branch
      %62 = sbr.rel (0) target = $region73
    $region72: #{vit_forward.1} parent=1 // pred_region
      _
    $region73: #{vit_forward.1} parent=1 // pred_fallthru
      _
    // Predicated region
    $region74: #{vit_forward.1} parent=1 // pred_check
      _
    $region75: #{vit_forward.1} parent=1 // pred_check_branch
      %64 = sbr.rel (0) target = $region77
    $region76: #{vit_forward.1} parent=1 // pred_region
      _
    $region77: #{vit_forward.1} parent=1 // pred_fallthru
      _
    // Predicated region
    $region78: #{vit_forward.1} parent=1 // pred_check
      _
    $region79: #{vit_forward.1} parent=1 // pred_check_branch
      %66 = sbr.rel (0) target = $region81
    $region80: #{vit_forward.1} parent=1 // pred_region
      _
    $region81: #{vit_forward.1} parent=1 // pred_fallthru
      _
    // Predicated region
    $region82: #{vit_forward.1} parent=1 // pred_check
      _
    $region83: #{vit_forward.1} parent=1 // pred_check_branch
      %68 = sbr.rel (0) target = $region85
    $region84: #{vit_forward.1} parent=1 // pred_region
      _
    $region85: #{vit_forward.1} parent=1 // pred_fallthru
      _
    %v69 = vld [vmem:[%s0] sm:$0xff]
    %v70 = vld [vmem:[%s0 + $0x8] sm:$0xff]
    %v71 = vld [vmem:[%s0 + $0x10] sm:$0xff]
    %v72 = vld [vmem:[%s0 + $0x18] sm:$0xff]
    %v73 = vld [vmem:[%s1] sm:$0xff]
    %v74 = vld [vmem:[%s1 + $0x8] sm:$0xff]
    %v75 = vld [vmem:[%s1 + $0x10] sm:$0xff]
    %v76 = vld [vmem:[%s1 + $0x18] sm:$0xff]
    %v77 = vld [vmem:[%s1 + $0x20] sm:$0xff]
    %v78 = vld [vmem:[%s1 + $0x28] sm:$0xff]
    %v79 = vld [vmem:[%s1 + $0x30] sm:$0xff]
    %v80 = vld [vmem:[%s1 + $0x38] sm:$0xff]
    %v81 = vld [vmem:[%s2] sm:$0x1]
    %v83 = vlaneseq
    %v84 = vshrl.u32 %v83, 7
    %v85 = vsub.s32 0, %v84
    %v86 = vrot.slane %v81, %v85
    %vm88 = vcmask 523264
    %v90 = vsel %vm88, %v69, 0
    %v93 = vsel %vm88, %v70, 0
    %v96 = vsel %vm88, %v71, 0
    %v99 = vsel %vm88, %v72, 0
    %101 = vmatprep.subr.mxu0 0.0
    %102 = vmatpush1.msra.mxu0 0.0
    %103 = vmatprep.subr.mxu0 0.0
    %104 = vmatpush1.msra.mxu0 0.0
    %105 = vmatprep.subr.mxu0 0.0
    %106 = vmatpush1.msra.mxu0 0.0
    %107 = vmatprep.subr.mxu0 0.0
    %108 = vmatpush1.msra.mxu0 0.0
    %109 = vmatprep.subr.mxu0 0.0
    %110 = vmatpush1.msra.mxu0 0.0
    %111 = vmatprep.subr.mxu0 0.0
    %112 = vmatpush1.msra.mxu0 0.0
    %113 = vmatprep.subr.mxu0 0.0
    %114 = vmatpush1.msra.mxu0 0.0
    %115 = vmatprep.subr.mxu0 0.0
    %116 = vmatpush1.msra.mxu0 0.0
    %117 = vmatprep.subr.mxu0 0.0
    %118 = vmatpush1.msra.mxu0 %v80
    %119 = vmatprep.subr.mxu0 0.0
    %120 = vmatpush1.msra.mxu0 %v79
    %121 = vmatprep.subr.mxu0 0.0
    %122 = vmatpush1.msra.mxu0 %v78
    %123 = vmatprep.subr.mxu0 0.0
    %124 = vmatpush1.msra.mxu0 %v77
    %125 = vmatprep.subr.mxu0 0.0
    %126 = vmatpush1.msra.mxu0 %v76
    %127 = vmatprep.subr.mxu0 0.0
    %128 = vmatpush1.msra.mxu0 %v75
    %129 = vmatprep.subr.mxu0 0.0
    %130 = vmatpush1.msra.mxu0 %v74
    %131 = vmatprep.subr.mxu0 0.0
    %132 = vmatpush1.msra.mxu0 %v73
    %133 = vmatprep.subr.mxu0 0.0
    %134 = vmatpush2.msra.mxu0 0.0
    %135 = vmatprep.subr.mxu0 0.0
    %136 = vmatpush2.msra.mxu0 0.0
    %137 = vmatprep.subr.mxu0 0.0
    %138 = vmatpush2.msra.mxu0 0.0
    %139 = vmatprep.subr.mxu0 0.0
    %140 = vmatpush2.msra.mxu0 0.0
    %141 = vmatprep.subr.mxu0 0.0
    %142 = vmatpush2.msra.mxu0 0.0
    %143 = vmatprep.subr.mxu0 0.0
    %144 = vmatpush2.msra.mxu0 0.0
    %145 = vmatprep.subr.mxu0 0.0
    %146 = vmatpush2.msra.mxu0 0.0
    %147 = vmatprep.subr.mxu0 0.0
    %148 = vmatpush2.msra.mxu0 0.0
    %149 = vmatprep.subr.mxu0 0.0
    %150 = vmatpush2.msra.mxu0 0.0
    %151 = vmatprep.subr.mxu0 0.0
    %152 = vmatpush2.msra.mxu0 0.0
    %153 = vmatprep.subr.mxu0 0.0
    %154 = vmatpush2.msra.mxu0 0.0
    %155 = vmatprep.subr.mxu0 0.0
    %156 = vmatpush2.msra.mxu0 0.0
    %157 = vmatprep.subr.mxu0 0.0
    %158 = vmatpush2.msra.mxu0 0.0
    %159 = vmatprep.subr.mxu0 0.0
    %160 = vmatpush2.msra.mxu0 0.0
    %161 = vmatprep.subr.mxu0 0.0
    %162 = vmatpush2.msra.mxu0 0.0
    %163 = vmatprep.subr.mxu0 0.0
    %164 = vmatpush2.msra.mxu0 0.0
    %165 = vmatprep.mubr.f32.mxu0 0.0
    %166 = vmatmul.mubr.f32.gmra.mxu0 %v90
    %v167 = vpop.f32.mrf.mxu0
    %v168 = vadd.f32 %v86, %v167
    %v169 = vpop.f32.mrf.mxu0
    %170 = vmatprep.mubr.f32.mxu0 0.0
    %171 = vmatmul.mubr.f32.gmra.mxu0 %v93
    %v172 = vpop.f32.mrf.mxu0
    %v173 = vadd.f32 %v86, %v172
    %v174 = vpop.f32.mrf.mxu0
    %175 = vmatprep.mubr.f32.mxu0 0.0
    %176 = vmatmul.mubr.f32.gmra.mxu0 %v96
    %v177 = vpop.f32.mrf.mxu0
    %v178 = vadd.f32 %v86, %v177
    %v179 = vpop.f32.mrf.mxu0
    %180 = vmatprep.mubr.f32.mxu0 0.0
    %181 = vmatmul.mubr.f32.gmra.mxu0 %v99
    %v182 = vpop.f32.mrf.mxu0
    %v183 = vadd.f32 %v86, %v182
    %v184 = vpop.f32.mrf.mxu0
    %185 = vdwg.mxu0
    %v186 = vld [vmem:[%s3] sm:$0xff]
    %v187 = vld [vmem:[%s3 + $0x8] sm:$0xff]
    %v188 = vld [vmem:[%s4] sm:$0xff]
    %v189 = vadd.f32 %v168, %v186
    %v190 = vadd.f32 %v173, %v187
    %v191 = vadd.f32 %v178, %v186
    %v192 = vadd.f32 %v183, %v187
    %v193 = vlaneseq
    %v194 = vand.u32 %v193, 127
    %vm195 = vcmp.lt.s32.totalorder %v194, 17
    %v196 = vsel %vm195, 0.0, -1e+30
    %v197 = vld [vmem:[%s5] sm:$0xff]
    %v198 = vld [vmem:[%s5 + $0x8] sm:$0xff]
    %v199 = vld [vmem:[%s5 + $0x10] sm:$0xff]
    %v200 = vld [vmem:[%s5 + $0x18] sm:$0xff]
    %v201 = vld [vmem:[%s5 + $0x20] sm:$0xff]
    %v202 = vld [vmem:[%s5 + $0x28] sm:$0xff]
    %v203 = vld [vmem:[%s5 + $0x30] sm:$0xff]
    %v204 = vld [vmem:[%s5 + $0x38] sm:$0xff]
    %vm205 = vcmask 261120
    %v207 = vsel %vm205, %v189, 0
    %v210 = vsel %vm205, %v190, 0
    %v213 = vsel %vm205, %v188, 0
    %v216 = vsel %vm205, %v191, 0
    %v219 = vsel %vm205, %v192, 0
    %221 = vmatprep.subr.mxu0 0.0
    %222 = vmatpush1.msra.mxu0 0.0
    %223 = vmatprep.subr.mxu0 0.0
    %224 = vmatpush1.msra.mxu0 0.0
    %225 = vmatprep.subr.mxu0 0.0
    %226 = vmatpush1.msra.mxu0 0.0
    %227 = vmatprep.subr.mxu0 0.0
    %228 = vmatpush1.msra.mxu0 0.0
    %229 = vmatprep.subr.mxu0 0.0
    %230 = vmatpush1.msra.mxu0 0.0
    %231 = vmatprep.subr.mxu0 0.0
    %232 = vmatpush1.msra.mxu0 0.0
    %233 = vmatprep.subr.mxu0 0.0
    %234 = vmatpush1.msra.mxu0 0.0
    %235 = vmatprep.subr.mxu0 0.0
    %236 = vmatpush1.msra.mxu0 0.0
    %237 = vmatprep.subr.mxu0 0.0
    %238 = vmatpush1.msra.mxu0 0.0
    %239 = vmatprep.subr.mxu0 0.0
    %240 = vmatpush1.msra.mxu0 0.0
    %241 = vmatprep.subr.mxu0 0.0
    %242 = vmatpush1.msra.mxu0 0.0
    %243 = vmatprep.subr.mxu0 0.0
    %244 = vmatpush1.msra.mxu0 0.0
    %245 = vmatprep.subr.mxu0 %v204
    %246 = vmatpush1.msra.mxu0 %v203
    %247 = vmatprep.subr.mxu0 %v202
    %248 = vmatpush1.msra.mxu0 %v201
    %249 = vmatprep.subr.mxu0 %v200
    %250 = vmatpush1.msra.mxu0 %v199
    %251 = vmatprep.subr.mxu0 %v198
    %252 = vmatpush1.msra.mxu0 %v197
    %253 = vmatprep.subr.mxu0 0.0
    %254 = vmatpush2.msra.mxu0 0.0
    %255 = vmatprep.subr.mxu0 0.0
    %256 = vmatpush2.msra.mxu0 0.0
    %257 = vmatprep.subr.mxu0 0.0
    %258 = vmatpush2.msra.mxu0 0.0
    %259 = vmatprep.subr.mxu0 0.0
    %260 = vmatpush2.msra.mxu0 0.0
    %261 = vmatprep.subr.mxu0 0.0
    %262 = vmatpush2.msra.mxu0 0.0
    %263 = vmatprep.subr.mxu0 0.0
    %264 = vmatpush2.msra.mxu0 0.0
    %265 = vmatprep.subr.mxu0 0.0
    %266 = vmatpush2.msra.mxu0 0.0
    %267 = vmatprep.subr.mxu0 0.0
    %268 = vmatpush2.msra.mxu0 0.0
    %269 = vmatprep.subr.mxu0 0.0
    %270 = vmatpush2.msra.mxu0 0.0
    %271 = vmatprep.subr.mxu0 0.0
    %272 = vmatpush2.msra.mxu0 0.0
    %273 = vmatprep.subr.mxu0 0.0
    %274 = vmatpush2.msra.mxu0 0.0
    %275 = vmatprep.subr.mxu0 0.0
    %276 = vmatpush2.msra.mxu0 0.0
    %277 = vmatprep.subr.mxu0 0.0
    %278 = vmatpush2.msra.mxu0 0.0
    %279 = vmatprep.subr.mxu0 0.0
    %280 = vmatpush2.msra.mxu0 0.0
    %281 = vmatprep.subr.mxu0 0.0
    %282 = vmatpush2.msra.mxu0 0.0
    %283 = vmatprep.subr.mxu0 0.0
    %284 = vmatpush2.msra.mxu0 0.0
    %285 = vmatprep.mubr.f32.mxu0 0.0
    %286 = vmatmul.mubr.f32.gmra.mxu0 %v207
    %v287 = vpop.f32.mrf.mxu0
    %v288 = vadd.f32 0.0, %v287
    %v289 = vpop.f32.mrf.mxu0
    %v290 = vadd.f32 0.0, %v289
    %291 = vmatprep.mubr.f32.mxu0 0.0
    %292 = vmatmul.mubr.f32.gmra.mxu0 %v210
    %v293 = vpop.f32.mrf.mxu0
    %v294 = vadd.f32 0.0, %v293
    %v295 = vpop.f32.mrf.mxu0
    %v296 = vadd.f32 0.0, %v295
    %297 = vmatprep.mubr.f32.mxu0 0.0
    %298 = vmatmul.mubr.f32.gmra.mxu0 %v213
    %v299 = vpop.f32.mrf.mxu0
    %v300 = vadd.f32 0.0, %v299
    %v301 = vpop.f32.mrf.mxu0
    %v302 = vadd.f32 0.0, %v301
    %303 = vmatprep.mubr.f32.mxu0 0.0
    %304 = vmatmul.mubr.f32.gmra.mxu0 %v216
    %v305 = vpop.f32.mrf.mxu0
    %v306 = vadd.f32 0.0, %v305
    %v307 = vpop.f32.mrf.mxu0
    %v308 = vadd.f32 0.0, %v307
    %309 = vmatprep.mubr.f32.mxu0 0.0
    %310 = vmatmul.mubr.f32.gmra.mxu0 %v219
    %v311 = vpop.f32.mrf.mxu0
    %v312 = vadd.f32 0.0, %v311
    %v313 = vpop.f32.mrf.mxu0
    %v314 = vadd.f32 0.0, %v313
    %315 = vmatprep.mubr.f32.mxu0 0.0
    %316 = vmatmul.mubr.f32.gmra.mxu0 %v213
    %v317 = vpop.f32.mrf.mxu0
    %v318 = vadd.f32 0.0, %v317
    %v319 = vpop.f32.mrf.mxu0
    %v320 = vadd.f32 0.0, %v319
    %321 = vdwg.mxu0
    %325 = vrot.lane.b32.xlu0 %v288, 96
    %v326 = vpop.permute.xlu0 %325
    %327 = vrot.lane.b32.xlu0 %v294, 96
    %v328 = vpop.permute.xlu0 %327
    %329 = vrot.lane.b32.xlu0 %v300, 96
    %v330 = vpop.permute.xlu0 %329
    %vm331 = vcmask 64512
    %v332 = vsel %vm331, %v288, 0
    %v334 = vsel %vm331, %v294, 0
    %v336 = vsel %vm331, %v300, 0
    %v338 = vsel %vm331, %v326, 0
    %v340 = vsel %vm331, %v328, 0
    %v342 = vsel %vm331, %v330, 0
    %344 = vmatprep.subr.mxu0 0.0
    %345 = vmatpush1.xpose.msra.mxu0 0.0
    %346 = vmatprep.subr.mxu0 0.0
    %347 = vmatpush1.xpose.msra.mxu0 0.0
    %348 = vmatprep.subr.mxu0 0.0
    %349 = vmatpush1.xpose.msra.mxu0 0.0
    %350 = vmatprep.subr.mxu0 0.0
    %351 = vmatpush1.xpose.msra.mxu0 0.0
    %352 = vmatprep.subr.mxu0 0.0
    %353 = vmatpush1.xpose.msra.mxu0 0.0
    %354 = vmatprep.subr.mxu0 0.0
    %355 = vmatpush1.xpose.msra.mxu0 0.0
    %356 = vmatprep.subr.mxu0 0.0
    %357 = vmatpush1.xpose.msra.mxu0 0.0
    %358 = vmatprep.subr.mxu0 0.0
    %359 = vmatpush1.xpose.msra.mxu0 0.0
    %360 = vmatprep.subr.mxu0 0.0
    %361 = vmatpush1.xpose.msra.mxu0 0.0
    %362 = vmatprep.subr.mxu0 0.0
    %363 = vmatpush1.xpose.msra.mxu0 0.0
    %364 = vmatprep.subr.mxu0 0.0
    %365 = vmatpush1.xpose.msra.mxu0 0.0
    %366 = vmatprep.subr.mxu0 0.0
    %367 = vmatpush1.xpose.msra.mxu0 0.0
    %368 = vmatprep.subr.mxu0 0.0
    %369 = vmatpush1.xpose.msra.mxu0 0.0
    %370 = vmatprep.subr.mxu0 0.0
    %371 = vmatpush1.xpose.msra.mxu0 %v342
    %372 = vmatprep.subr.mxu0 0.0
    %373 = vmatpush1.xpose.msra.mxu0 %v340
    %374 = vmatprep.subr.mxu0 0.0
    %375 = vmatpush1.xpose.msra.mxu0 %v338
    %376 = vmatprep.subr.mxu0 0.0
    %377 = vmatpush2.xpose.msra.mxu0 0.0
    %378 = vmatprep.subr.mxu0 0.0
    %379 = vmatpush2.xpose.msra.mxu0 0.0
    %380 = vmatprep.subr.mxu0 0.0
    %381 = vmatpush2.xpose.msra.mxu0 0.0
    %382 = vmatprep.subr.mxu0 0.0
    %383 = vmatpush2.xpose.msra.mxu0 0.0
    %384 = vmatprep.subr.mxu0 0.0
    %385 = vmatpush2.xpose.msra.mxu0 0.0
    %386 = vmatprep.subr.mxu0 0.0
    %387 = vmatpush2.xpose.msra.mxu0 0.0
    %388 = vmatprep.subr.mxu0 0.0
    %389 = vmatpush2.xpose.msra.mxu0 0.0
    %390 = vmatprep.subr.mxu0 0.0
    %391 = vmatpush2.xpose.msra.mxu0 0.0
    %392 = vmatprep.subr.mxu0 0.0
    %393 = vmatpush2.xpose.msra.mxu0 0.0
    %394 = vmatprep.subr.mxu0 0.0
    %395 = vmatpush2.xpose.msra.mxu0 0.0
    %396 = vmatprep.subr.mxu0 0.0
    %397 = vmatpush2.xpose.msra.mxu0 0.0
    %398 = vmatprep.subr.mxu0 0.0
    %399 = vmatpush2.xpose.msra.mxu0 0.0
    %400 = vmatprep.subr.mxu0 0.0
    %401 = vmatpush2.xpose.msra.mxu0 0.0
    %402 = vmatprep.subr.mxu0 0.0
    %403 = vmatpush2.xpose.msra.mxu0 0.0
    %404 = vmatprep.subr.mxu0 0.0
    %405 = vmatpush2.xpose.msra.mxu0 0.0
    %406 = vmatprep.subr.mxu0 0.0
    %407 = vmatpush2.xpose.msra.mxu0 0.0
    %408 = vmatprep.mubr.f32.mxu0 0.0
    %409 = vmatmul.mubr.f32.gmra.mxu0 %v332
    %v410 = vpop.f32.mrf.mxu0
    %v411 = vadd.f32 0.0, %v410
    %v412 = vpop.f32.mrf.mxu0
    %413 = vmatprep.mubr.f32.mxu0 0.0
    %414 = vmatmul.mubr.f32.gmra.mxu0 %v334
    %v415 = vpop.f32.mrf.mxu0
    %v416 = vadd.f32 0.0, %v415
    %v417 = vpop.f32.mrf.mxu0
    %418 = vmatprep.mubr.f32.mxu0 0.0
    %419 = vmatmul.mubr.f32.gmra.mxu0 %v336
    %v420 = vpop.f32.mrf.mxu0
    %v421 = vadd.f32 0.0, %v420
    %v422 = vpop.f32.mrf.mxu0
    %423 = vdwg.mxu0
    %v424 = vmul.f32 %v411, 0.17677669
    %v425 = vmul.f32 %v416, 0.17677669
    %v426 = vmul.f32 %v421, 0.17677669
    %v427 = vadd.f32 %v424, %v196
    %v428 = vadd.f32 %v425, %v196
    %v429 = vadd.f32 %v426, %v196
    %vm430 = vcmask 195584
    %v431 = vsel %vm430, %v427, -inf
    %432 = vmax.xlane.f32.xlu0 %v431
    %v433 = vpop.xlane.xlu0 %432
    %v434 = vsel %vm430, %v428, -inf
    %435 = vmax.xlane.f32.xlu0 %v434
    %v436 = vpop.xlane.xlu0 %435
    %v437 = vsel %vm430, %v429, -inf
    %438 = vmax.xlane.f32.xlu0 %v437
    %v439 = vpop.xlane.xlu0 %438
    %v440 = vsub.f32 %v427, %v433
    %v441 = vsub.f32 %v428, %v436
    %v442 = vsub.f32 %v429, %v439
    %v443 = vmul.f32 %v440, 1.442695
    %v444 = vpow.pop %v443
    %v445 = vmul.f32 %v441, 1.442695
    %v446 = vpow.pop %v445
    %v447 = vmul.f32 %v442, 1.442695
    %v448 = vpow.pop %v447
    %v449 = vsel %vm430, %v444, 0.0
    %450 = vadd.xlane.f32.xlu0 %v449
    %v451 = vpop.xlane.xlu0 %450
    %v452 = vsel %vm430, %v446, 0.0
    %453 = vadd.xlane.f32.xlu0 %v452
    %v454 = vpop.xlane.xlu0 %453
    %v455 = vsel %vm430, %v448, 0.0
    %456 = vadd.xlane.f32.xlu0 %v455
    %v457 = vpop.xlane.xlu0 %456
    %v458 = vrcp.pop %v451
    %v459 = vrcp.pop %v454
    %v460 = vrcp.pop %v457
    %v461 = vmul.f32 %v444, %v458
    %v462 = vmul.f32 %v446, %v459
    %v463 = vmul.f32 %v448, %v460
    %464 = vrot.lane.b32.xlu0 %v288, 120
    %v465 = vpop.permute.xlu0 %464
    %466 = vrot.lane.b32.xlu0 %v294, 120
    %v467 = vpop.permute.xlu0 %466
    %468 = vrot.lane.b32.xlu0 %v300, 120
    %v469 = vpop.permute.xlu0 %468
    %470 = vrot.lane.b32.xlu0 %v288, 88
    %v471 = vpop.permute.xlu0 %470
    %472 = vrot.lane.b32.xlu0 %v294, 88
    %v473 = vpop.permute.xlu0 %472
    %474 = vrot.lane.b32.xlu0 %v300, 88
    %v475 = vpop.permute.xlu0 %474
    %v476 = vsel %vm331, %v465, 0
    %v478 = vsel %vm331, %v467, 0
    %v480 = vsel %vm331, %v469, 0
    %v482 = vsel %vm331, %v471, 0
    %v484 = vsel %vm331, %v473, 0
    %v486 = vsel %vm331, %v475, 0
    %488 = vmatprep.subr.mxu0 0.0
    %489 = vmatpush1.xpose.msra.mxu0 0.0
    %490 = vmatprep.subr.mxu0 0.0
    %491 = vmatpush1.xpose.msra.mxu0 0.0
    %492 = vmatprep.subr.mxu0 0.0
    %493 = vmatpush1.xpose.msra.mxu0 0.0
    %494 = vmatprep.subr.mxu0 0.0
    %495 = vmatpush1.xpose.msra.mxu0 0.0
    %496 = vmatprep.subr.mxu0 0.0
    %497 = vmatpush1.xpose.msra.mxu0 0.0
    %498 = vmatprep.subr.mxu0 0.0
    %499 = vmatpush1.xpose.msra.mxu0 0.0
    %500 = vmatprep.subr.mxu0 0.0
    %501 = vmatpush1.xpose.msra.mxu0 0.0
    %502 = vmatprep.subr.mxu0 0.0
    %503 = vmatpush1.xpose.msra.mxu0 0.0
    %504 = vmatprep.subr.mxu0 0.0
    %505 = vmatpush1.xpose.msra.mxu0 0.0
    %506 = vmatprep.subr.mxu0 0.0
    %507 = vmatpush1.xpose.msra.mxu0 0.0
    %508 = vmatprep.subr.mxu0 0.0
    %509 = vmatpush1.xpose.msra.mxu0 0.0
    %510 = vmatprep.subr.mxu0 0.0
    %511 = vmatpush1.xpose.msra.mxu0 0.0
    %512 = vmatprep.subr.mxu0 0.0
    %513 = vmatpush1.xpose.msra.mxu0 0.0
    %514 = vmatprep.subr.mxu0 0.0
    %515 = vmatpush1.xpose.msra.mxu0 %v486
    %516 = vmatprep.subr.mxu0 0.0
    %517 = vmatpush1.xpose.msra.mxu0 %v484
    %518 = vmatprep.subr.mxu0 0.0
    %519 = vmatpush1.xpose.msra.mxu0 %v482
    %520 = vmatprep.subr.mxu0 0.0
    %521 = vmatpush2.xpose.msra.mxu0 0.0
    %522 = vmatprep.subr.mxu0 0.0
    %523 = vmatpush2.xpose.msra.mxu0 0.0
    %524 = vmatprep.subr.mxu0 0.0
    %525 = vmatpush2.xpose.msra.mxu0 0.0
    %526 = vmatprep.subr.mxu0 0.0
    %527 = vmatpush2.xpose.msra.mxu0 0.0
    %528 = vmatprep.subr.mxu0 0.0
    %529 = vmatpush2.xpose.msra.mxu0 0.0
    %530 = vmatprep.subr.mxu0 0.0
    %531 = vmatpush2.xpose.msra.mxu0 0.0
    %532 = vmatprep.subr.mxu0 0.0
    %533 = vmatpush2.xpose.msra.mxu0 0.0
    %534 = vmatprep.subr.mxu0 0.0
    %535 = vmatpush2.xpose.msra.mxu0 0.0
    %536 = vmatprep.subr.mxu0 0.0
    %537 = vmatpush2.xpose.msra.mxu0 0.0
    %538 = vmatprep.subr.mxu0 0.0
    %539 = vmatpush2.xpose.msra.mxu0 0.0
    %540 = vmatprep.subr.mxu0 0.0
    %541 = vmatpush2.xpose.msra.mxu0 0.0
    %542 = vmatprep.subr.mxu0 0.0
    %543 = vmatpush2.xpose.msra.mxu0 0.0
    %544 = vmatprep.subr.mxu0 0.0
    %545 = vmatpush2.xpose.msra.mxu0 0.0
    %546 = vmatprep.subr.mxu0 0.0
    %547 = vmatpush2.xpose.msra.mxu0 0.0
    %548 = vmatprep.subr.mxu0 0.0
    %549 = vmatpush2.xpose.msra.mxu0 0.0
    %550 = vmatprep.subr.mxu0 0.0
    %551 = vmatpush2.xpose.msra.mxu0 0.0
    %552 = vmatprep.mubr.f32.mxu0 0.0
    %553 = vmatmul.mubr.f32.gmra.mxu0 %v476
    %v554 = vpop.f32.mrf.mxu0
    %v555 = vadd.f32 0.0, %v554
    %v556 = vpop.f32.mrf.mxu0
    %557 = vmatprep.mubr.f32.mxu0 0.0
    %558 = vmatmul.mubr.f32.gmra.mxu0 %v478
    %v559 = vpop.f32.mrf.mxu0
    %v560 = vadd.f32 0.0, %v559
    %v561 = vpop.f32.mrf.mxu0
    %562 = vmatprep.mubr.f32.mxu0 0.0
    %563 = vmatmul.mubr.f32.gmra.mxu0 %v480
    %v564 = vpop.f32.mrf.mxu0
    %v565 = vadd.f32 0.0, %v564
    %v566 = vpop.f32.mrf.mxu0
    %567 = vdwg.mxu0
    %v568 = vmul.f32 %v555, 0.17677669
    %v569 = vmul.f32 %v560, 0.17677669
    %v570 = vmul.f32 %v565, 0.17677669
    %v571 = vadd.f32 %v568, %v196
    %v572 = vadd.f32 %v569, %v196
    %v573 = vadd.f32 %v570, %v196
    %v574 = vsel %vm430, %v571, -inf
    %575 = vmax.xlane.f32.xlu0 %v574
    %v576 = vpop.xlane.xlu0 %575
    %v577 = vsel %vm430, %v572, -inf
    %578 = vmax.xlane.f32.xlu0 %v577
    %v579 = vpop.xlane.xlu0 %578
    %v580 = vsel %vm430, %v573, -inf
    %581 = vmax.xlane.f32.xlu0 %v580
    %v582 = vpop.xlane.xlu0 %581
    %v583 = vsub.f32 %v571, %v576
    %v584 = vsub.f32 %v572, %v579
    %v585 = vsub.f32 %v573, %v582
    %v586 = vmul.f32 %v583, 1.442695
    %v587 = vpow.pop %v586
    %v588 = vmul.f32 %v584, 1.442695
    %v589 = vpow.pop %v588
    %v590 = vmul.f32 %v585, 1.442695
    %v591 = vpow.pop %v590
    %v592 = vsel %vm430, %v587, 0.0
    %593 = vadd.xlane.f32.xlu0 %v592
    %v594 = vpop.xlane.xlu0 %593
    %v595 = vsel %vm430, %v589, 0.0
    %596 = vadd.xlane.f32.xlu0 %v595
    %v597 = vpop.xlane.xlu0 %596
    %v598 = vsel %vm430, %v591, 0.0
    %599 = vadd.xlane.f32.xlu0 %v598
    %v600 = vpop.xlane.xlu0 %599
    %v601 = vrcp.pop %v594
    %v602 = vrcp.pop %v597
    %v603 = vrcp.pop %v600
    %v604 = vmul.f32 %v587, %v601
    %v605 = vmul.f32 %v589, %v602
    %v606 = vmul.f32 %v591, %v603
    %607 = vrot.lane.b32.xlu0 %v288, 32
    %v608 = vpop.permute.xlu0 %607
    %609 = vrot.lane.b32.xlu0 %v294, 32
    %v610 = vpop.permute.xlu0 %609
    %611 = vrot.lane.b32.xlu0 %v300, 32
    %v612 = vpop.permute.xlu0 %611
    %v617 = vsel %vm430, %v604, 0
    %v620 = vsel %vm430, %v605, 0
    %v623 = vsel %vm430, %v606, 0
    %625 = vmatprep.subr.mxu0 0.0
    %626 = vmatpush1.msra.mxu0 0.0
    %627 = vmatprep.subr.mxu0 0.0
    %628 = vmatpush1.msra.mxu0 0.0
    %629 = vmatprep.subr.mxu0 0.0
    %630 = vmatpush1.msra.mxu0 0.0
    %631 = vmatprep.subr.mxu0 0.0
    %632 = vmatpush1.msra.mxu0 0.0
    %633 = vmatprep.subr.mxu0 0.0
    %634 = vmatpush1.msra.mxu0 0.0
    %635 = vmatprep.subr.mxu0 0.0
    %636 = vmatpush1.msra.mxu0 0.0
    %637 = vmatprep.subr.mxu0 0.0
    %638 = vmatpush1.msra.mxu0 0.0
    %639 = vmatprep.subr.mxu0 0.0
    %640 = vmatpush1.msra.mxu0 0.0
    %641 = vmatprep.subr.mxu0 0.0
    %642 = vmatpush1.msra.mxu0 0.0
    %643 = vmatprep.subr.mxu0 0.0
    %644 = vmatpush1.msra.mxu0 0.0
    %645 = vmatprep.subr.mxu0 0.0
    %646 = vmatpush1.msra.mxu0 0.0
    %647 = vmatprep.subr.mxu0 0.0
    %648 = vmatpush1.msra.mxu0 0.0
    %649 = vmatprep.subr.mxu0 0.0
    %650 = vmatpush1.msra.mxu0 0.0
    %651 = vmatprep.subr.mxu0 0.0
    %652 = vmatpush1.msra.mxu0 %v612
    %653 = vmatprep.subr.mxu0 0.0
    %654 = vmatpush1.msra.mxu0 %v610
    %655 = vmatprep.subr.mxu0 0.0
    %656 = vmatpush1.msra.mxu0 %v608
    %657 = vmatprep.subr.mxu0 0.0
    %658 = vmatpush2.msra.mxu0 0.0
    %659 = vmatprep.subr.mxu0 0.0
    %660 = vmatpush2.msra.mxu0 0.0
    %661 = vmatprep.subr.mxu0 0.0
    %662 = vmatpush2.msra.mxu0 0.0
    %663 = vmatprep.subr.mxu0 0.0
    %664 = vmatpush2.msra.mxu0 0.0
    %665 = vmatprep.subr.mxu0 0.0
    %666 = vmatpush2.msra.mxu0 0.0
    %667 = vmatprep.subr.mxu0 0.0
    %668 = vmatpush2.msra.mxu0 0.0
    %669 = vmatprep.subr.mxu0 0.0
    %670 = vmatpush2.msra.mxu0 0.0
    %671 = vmatprep.subr.mxu0 0.0
    %672 = vmatpush2.msra.mxu0 0.0
    %673 = vmatprep.subr.mxu0 0.0
    %674 = vmatpush2.msra.mxu0 0.0
    %675 = vmatprep.subr.mxu0 0.0
    %676 = vmatpush2.msra.mxu0 0.0
    %677 = vmatprep.subr.mxu0 0.0
    %678 = vmatpush2.msra.mxu0 0.0
    %679 = vmatprep.subr.mxu0 0.0
    %680 = vmatpush2.msra.mxu0 0.0
    %681 = vmatprep.subr.mxu0 0.0
    %682 = vmatpush2.msra.mxu0 0.0
    %683 = vmatprep.subr.mxu0 0.0
    %684 = vmatpush2.msra.mxu0 0.0
    %685 = vmatprep.subr.mxu0 0.0
    %686 = vmatpush2.msra.mxu0 0.0
    %687 = vmatprep.subr.mxu0 0.0
    %688 = vmatpush2.msra.mxu0 0.0
    %689 = vmatprep.mubr.f32.mxu0 0.0
    %690 = vmatmul.mubr.f32.gmra.mxu0 %v617
    %v691 = vpop.f32.mrf.mxu0
    %v692 = vadd.f32 0.0, %v691
    %v693 = vpop.f32.mrf.mxu0
    %694 = vmatprep.mubr.f32.mxu0 0.0
    %695 = vmatmul.mubr.f32.gmra.mxu0 %v620
    %v696 = vpop.f32.mrf.mxu0
    %v697 = vadd.f32 0.0, %v696
    %v698 = vpop.f32.mrf.mxu0
    %699 = vmatprep.mubr.f32.mxu0 0.0
    %700 = vmatmul.mubr.f32.gmra.mxu0 %v623
    %v701 = vpop.f32.mrf.mxu0
    %v702 = vadd.f32 0.0, %v701
    %v703 = vpop.f32.mrf.mxu0
    %704 = vdwg.mxu0
    %705 = vrot.lane.b32.xlu0 %v288, 64
    %v706 = vpop.permute.xlu0 %705
    %707 = vrot.lane.b32.xlu0 %v294, 64
    %v708 = vpop.permute.xlu0 %707
    %709 = vrot.lane.b32.xlu0 %v300, 64
    %v710 = vpop.permute.xlu0 %709
    %v715 = vsel %vm430, %v461, 0
    %v718 = vsel %vm430, %v462, 0
    %v721 = vsel %vm430, %v463, 0
    %723 = vmatprep.subr.mxu0 0.0
    %724 = vmatpush1.msra.mxu0 0.0
    %725 = vmatprep.subr.mxu0 0.0
    %726 = vmatpush1.msra.mxu0 0.0
    %727 = vmatprep.subr.mxu0 0.0
    %728 = vmatpush1.msra.mxu0 0.0
    %729 = vmatprep.subr.mxu0 0.0
    %730 = vmatpush1.msra.mxu0 0.0
    %731 = vmatprep.subr.mxu0 0.0
    %732 = vmatpush1.msra.mxu0 0.0
    %733 = vmatprep.subr.mxu0 0.0
    %734 = vmatpush1.msra.mxu0 0.0
    %735 = vmatprep.subr.mxu0 0.0
    %736 = vmatpush1.msra.mxu0 0.0
    %737 = vmatprep.subr.mxu0 0.0
    %738 = vmatpush1.msra.mxu0 0.0
    %739 = vmatprep.subr.mxu0 0.0
    %740 = vmatpush1.msra.mxu0 0.0
    %741 = vmatprep.subr.mxu0 0.0
    %742 = vmatpush1.msra.mxu0 0.0
    %743 = vmatprep.subr.mxu0 0.0
    %744 = vmatpush1.msra.mxu0 0.0
    %745 = vmatprep.subr.mxu0 0.0
    %746 = vmatpush1.msra.mxu0 0.0
    %747 = vmatprep.subr.mxu0 0.0
    %748 = vmatpush1.msra.mxu0 0.0
    %749 = vmatprep.subr.mxu0 0.0
    %750 = vmatpush1.msra.mxu0 %v710
    %751 = vmatprep.subr.mxu0 0.0
    %752 = vmatpush1.msra.mxu0 %v708
    %753 = vmatprep.subr.mxu0 0.0
    %754 = vmatpush1.msra.mxu0 %v706
    %755 = vmatprep.subr.mxu0 0.0
    %756 = vmatpush2.msra.mxu0 0.0
    %757 = vmatprep.subr.mxu0 0.0
    %758 = vmatpush2.msra.mxu0 0.0
    %759 = vmatprep.subr.mxu0 0.0
    %760 = vmatpush2.msra.mxu0 0.0
    %761 = vmatprep.subr.mxu0 0.0
    %762 = vmatpush2.msra.mxu0 0.0
    %763 = vmatprep.subr.mxu0 0.0
    %764 = vmatpush2.msra.mxu0 0.0
    %765 = vmatprep.subr.mxu0 0.0
    %766 = vmatpush2.msra.mxu0 0.0
    %767 = vmatprep.subr.mxu0 0.0
    %768 = vmatpush2.msra.mxu0 0.0
    %769 = vmatprep.subr.mxu0 0.0
    %770 = vmatpush2.msra.mxu0 0.0
    %771 = vmatprep.subr.mxu0 0.0
    %772 = vmatpush2.msra.mxu0 0.0
    %773 = vmatprep.subr.mxu0 0.0
    %774 = vmatpush2.msra.mxu0 0.0
    %775 = vmatprep.subr.mxu0 0.0
    %776 = vmatpush2.msra.mxu0 0.0
    %777 = vmatprep.subr.mxu0 0.0
    %778 = vmatpush2.msra.mxu0 0.0
    %779 = vmatprep.subr.mxu0 0.0
    %780 = vmatpush2.msra.mxu0 0.0
    %781 = vmatprep.subr.mxu0 0.0
    %782 = vmatpush2.msra.mxu0 0.0
    %783 = vmatprep.subr.mxu0 0.0
    %784 = vmatpush2.msra.mxu0 0.0
    %785 = vmatprep.subr.mxu0 0.0
    %786 = vmatpush2.msra.mxu0 0.0
    %787 = vmatprep.mubr.f32.mxu0 0.0
    %788 = vmatmul.mubr.f32.gmra.mxu0 %v715
    %v789 = vpop.f32.mrf.mxu0
    %v790 = vadd.f32 %v692, %v789
    %v791 = vpop.f32.mrf.mxu0
    %792 = vmatprep.mubr.f32.mxu0 0.0
    %793 = vmatmul.mubr.f32.gmra.mxu0 %v718
    %v794 = vpop.f32.mrf.mxu0
    %v795 = vadd.f32 %v697, %v794
    %v796 = vpop.f32.mrf.mxu0
    %797 = vmatprep.mubr.f32.mxu0 0.0
    %798 = vmatmul.mubr.f32.gmra.mxu0 %v721
    %v799 = vpop.f32.mrf.mxu0
    %v800 = vadd.f32 %v702, %v799
    %v801 = vpop.f32.mrf.mxu0
    %802 = vdwg.mxu0
    %803 = vrot.lane.b32.xlu0 %v288, 112
    %v804 = vpop.permute.xlu0 %803
    %805 = vrot.lane.b32.xlu0 %v294, 112
    %v806 = vpop.permute.xlu0 %805
    %807 = vrot.lane.b32.xlu0 %v300, 112
    %v808 = vpop.permute.xlu0 %807
    %809 = vrot.lane.b32.xlu0 %v288, 80
    %v810 = vpop.permute.xlu0 %809
    %811 = vrot.lane.b32.xlu0 %v294, 80
    %v812 = vpop.permute.xlu0 %811
    %813 = vrot.lane.b32.xlu0 %v300, 80
    %v814 = vpop.permute.xlu0 %813
    %v815 = vsel %vm331, %v804, 0
    %v817 = vsel %vm331, %v806, 0
    %v819 = vsel %vm331, %v808, 0
    %v821 = vsel %vm331, %v810, 0
    %v823 = vsel %vm331, %v812, 0
    %v825 = vsel %vm331, %v814, 0
    %827 = vmatprep.subr.mxu0 0.0
    %828 = vmatpush1.xpose.msra.mxu0 0.0
    %829 = vmatprep.subr.mxu0 0.0
    %830 = vmatpush1.xpose.msra.mxu0 0.0
    %831 = vmatprep.subr.mxu0 0.0
    %832 = vmatpush1.xpose.msra.mxu0 0.0
    %833 = vmatprep.subr.mxu0 0.0
    %834 = vmatpush1.xpose.msra.mxu0 0.0
    %835 = vmatprep.subr.mxu0 0.0
    %836 = vmatpush1.xpose.msra.mxu0 0.0
    %837 = vmatprep.subr.mxu0 0.0
    %838 = vmatpush1.xpose.msra.mxu0 0.0
    %839 = vmatprep.subr.mxu0 0.0
    %840 = vmatpush1.xpose.msra.mxu0 0.0
    %841 = vmatprep.subr.mxu0 0.0
    %842 = vmatpush1.xpose.msra.mxu0 0.0
    %843 = vmatprep.subr.mxu0 0.0
    %844 = vmatpush1.xpose.msra.mxu0 0.0
    %845 = vmatprep.subr.mxu0 0.0
    %846 = vmatpush1.xpose.msra.mxu0 0.0
    %847 = vmatprep.subr.mxu0 0.0
    %848 = vmatpush1.xpose.msra.mxu0 0.0
    %849 = vmatprep.subr.mxu0 0.0
    %850 = vmatpush1.xpose.msra.mxu0 0.0
    %851 = vmatprep.subr.mxu0 0.0
    %852 = vmatpush1.xpose.msra.mxu0 0.0
    %853 = vmatprep.subr.mxu0 0.0
    %854 = vmatpush1.xpose.msra.mxu0 %v825
    %855 = vmatprep.subr.mxu0 0.0
    %856 = vmatpush1.xpose.msra.mxu0 %v823
    %857 = vmatprep.subr.mxu0 0.0
    %858 = vmatpush1.xpose.msra.mxu0 %v821
    %859 = vmatprep.subr.mxu0 0.0
    %860 = vmatpush2.xpose.msra.mxu0 0.0
    %861 = vmatprep.subr.mxu0 0.0
    %862 = vmatpush2.xpose.msra.mxu0 0.0
    %863 = vmatprep.subr.mxu0 0.0
    %864 = vmatpush2.xpose.msra.mxu0 0.0
    %865 = vmatprep.subr.mxu0 0.0
    %866 = vmatpush2.xpose.msra.mxu0 0.0
    %867 = vmatprep.subr.mxu0 0.0
    %868 = vmatpush2.xpose.msra.mxu0 0.0
    %869 = vmatprep.subr.mxu0 0.0
    %870 = vmatpush2.xpose.msra.mxu0 0.0
    %871 = vmatprep.subr.mxu0 0.0
    %872 = vmatpush2.xpose.msra.mxu0 0.0
    %873 = vmatprep.subr.mxu0 0.0
    %874 = vmatpush2.xpose.msra.mxu0 0.0
    %875 = vmatprep.subr.mxu0 0.0
    %876 = vmatpush2.xpose.msra.mxu0 0.0
    %877 = vmatprep.subr.mxu0 0.0
    %878 = vmatpush2.xpose.msra.mxu0 0.0
    %879 = vmatprep.subr.mxu0 0.0
    %880 = vmatpush2.xpose.msra.mxu0 0.0
    %881 = vmatprep.subr.mxu0 0.0
    %882 = vmatpush2.xpose.msra.mxu0 0.0
    %883 = vmatprep.subr.mxu0 0.0
    %884 = vmatpush2.xpose.msra.mxu0 0.0
    %885 = vmatprep.subr.mxu0 0.0
    %886 = vmatpush2.xpose.msra.mxu0 0.0
    %887 = vmatprep.subr.mxu0 0.0
    %888 = vmatpush2.xpose.msra.mxu0 0.0
    %889 = vmatprep.subr.mxu0 0.0
    %890 = vmatpush2.xpose.msra.mxu0 0.0
    %891 = vmatprep.mubr.f32.mxu0 0.0
    %892 = vmatmul.mubr.f32.gmra.mxu0 %v815
    %v893 = vpop.f32.mrf.mxu0
    %v894 = vadd.f32 0.0, %v893
    %v895 = vpop.f32.mrf.mxu0
    %896 = vmatprep.mubr.f32.mxu0 0.0
    %897 = vmatmul.mubr.f32.gmra.mxu0 %v817
    %v898 = vpop.f32.mrf.mxu0
    %v899 = vadd.f32 0.0, %v898
    %v900 = vpop.f32.mrf.mxu0
    %901 = vmatprep.mubr.f32.mxu0 0.0
    %902 = vmatmul.mubr.f32.gmra.mxu0 %v819
    %v903 = vpop.f32.mrf.mxu0
    %v904 = vadd.f32 0.0, %v903
    %v905 = vpop.f32.mrf.mxu0
    %906 = vdwg.mxu0
    %v907 = vmul.f32 %v894, 0.17677669
    %v908 = vmul.f32 %v899, 0.17677669
    %v909 = vmul.f32 %v904, 0.17677669
    %v910 = vadd.f32 %v907, %v196
    %v911 = vadd.f32 %v908, %v196
    %v912 = vadd.f32 %v909, %v196
    %v913 = vsel %vm430, %v910, -inf
    %914 = vmax.xlane.f32.xlu0 %v913
    %v915 = vpop.xlane.xlu0 %914
    %v916 = vsel %vm430, %v911, -inf
    %917 = vmax.xlane.f32.xlu0 %v916
    %v918 = vpop.xlane.xlu0 %917
    %v919 = vsel %vm430, %v912, -inf
    %920 = vmax.xlane.f32.xlu0 %v919
    %v921 = vpop.xlane.xlu0 %920
    %v922 = vsub.f32 %v910, %v915
    %v923 = vsub.f32 %v911, %v918
    %v924 = vsub.f32 %v912, %v921
    %v925 = vmul.f32 %v922, 1.442695
    %v926 = vpow.pop %v925
    %v927 = vmul.f32 %v923, 1.442695
    %v928 = vpow.pop %v927
    %v929 = vmul.f32 %v924, 1.442695
    %v930 = vpow.pop %v929
    %v931 = vsel %vm430, %v926, 0.0
    %932 = vadd.xlane.f32.xlu0 %v931
    %v933 = vpop.xlane.xlu0 %932
    %v934 = vsel %vm430, %v928, 0.0
    %935 = vadd.xlane.f32.xlu0 %v934
    %v936 = vpop.xlane.xlu0 %935
    %v937 = vsel %vm430, %v930, 0.0
    %938 = vadd.xlane.f32.xlu0 %v937
    %v939 = vpop.xlane.xlu0 %938
    %v940 = vrcp.pop %v933
    %v941 = vrcp.pop %v936
    %v942 = vrcp.pop %v939
    %v943 = vmul.f32 %v926, %v940
    %v944 = vmul.f32 %v928, %v941
    %v945 = vmul.f32 %v930, %v942
    %v947 = vsel %vm430, %v943, 0
    %v950 = vsel %vm430, %v944, 0
    %v953 = vsel %vm430, %v945, 0
    %955 = vmatprep.subr.mxu0 0.0
    %956 = vmatpush1.msra.mxu0 0.0
    %957 = vmatprep.subr.mxu0 0.0
    %958 = vmatpush1.msra.mxu0 0.0
    %959 = vmatprep.subr.mxu0 0.0
    %960 = vmatpush1.msra.mxu0 0.0
    %961 = vmatprep.subr.mxu0 0.0
    %962 = vmatpush1.msra.mxu0 0.0
    %963 = vmatprep.subr.mxu0 0.0
    %964 = vmatpush1.msra.mxu0 0.0
    %965 = vmatprep.subr.mxu0 0.0
    %966 = vmatpush1.msra.mxu0 0.0
    %967 = vmatprep.subr.mxu0 0.0
    %968 = vmatpush1.msra.mxu0 0.0
    %969 = vmatprep.subr.mxu0 0.0
    %970 = vmatpush1.msra.mxu0 0.0
    %971 = vmatprep.subr.mxu0 0.0
    %972 = vmatpush1.msra.mxu0 0.0
    %973 = vmatprep.subr.mxu0 0.0
    %974 = vmatpush1.msra.mxu0 0.0
    %975 = vmatprep.subr.mxu0 0.0
    %976 = vmatpush1.msra.mxu0 0.0
    %977 = vmatprep.subr.mxu0 0.0
    %978 = vmatpush1.msra.mxu0 0.0
    %979 = vmatprep.subr.mxu0 0.0
    %980 = vmatpush1.msra.mxu0 0.0
    %981 = vmatprep.subr.mxu0 0.0
    %982 = vmatpush1.msra.mxu0 %v302
    %983 = vmatprep.subr.mxu0 0.0
    %984 = vmatpush1.msra.mxu0 %v296
    %985 = vmatprep.subr.mxu0 0.0
    %986 = vmatpush1.msra.mxu0 %v290
    %987 = vmatprep.subr.mxu0 0.0
    %988 = vmatpush2.msra.mxu0 0.0
    %989 = vmatprep.subr.mxu0 0.0
    %990 = vmatpush2.msra.mxu0 0.0
    %991 = vmatprep.subr.mxu0 0.0
    %992 = vmatpush2.msra.mxu0 0.0
    %993 = vmatprep.subr.mxu0 0.0
    %994 = vmatpush2.msra.mxu0 0.0
    %995 = vmatprep.subr.mxu0 0.0
    %996 = vmatpush2.msra.mxu0 0.0
    %997 = vmatprep.subr.mxu0 0.0
    %998 = vmatpush2.msra.mxu0 0.0
    %999 = vmatprep.subr.mxu0 0.0
    %1000 = vmatpush2.msra.mxu0 0.0
    %1001 = vmatprep.subr.mxu0 0.0
    %1002 = vmatpush2.msra.mxu0 0.0
    %1003 = vmatprep.subr.mxu0 0.0
    %1004 = vmatpush2.msra.mxu0 0.0
    %1005 = vmatprep.subr.mxu0 0.0
    %1006 = vmatpush2.msra.mxu0 0.0
    %1007 = vmatprep.subr.mxu0 0.0
    %1008 = vmatpush2.msra.mxu0 0.0
    %1009 = vmatprep.subr.mxu0 0.0
    %1010 = vmatpush2.msra.mxu0 0.0
    %1011 = vmatprep.subr.mxu0 0.0
    %1012 = vmatpush2.msra.mxu0 0.0
    %1013 = vmatprep.subr.mxu0 0.0
    %1014 = vmatpush2.msra.mxu0 0.0
    %1015 = vmatprep.subr.mxu0 0.0
    %1016 = vmatpush2.msra.mxu0 0.0
    %1017 = vmatprep.subr.mxu0 0.0
    %1018 = vmatpush2.msra.mxu0 0.0
    %1019 = vmatprep.mubr.f32.mxu0 0.0
    %1020 = vmatmul.mubr.f32.gmra.mxu0 %v947
    %v1021 = vpop.f32.mrf.mxu0
    %v1022 = vadd.f32 0.0, %v1021
    %v1023 = vpop.f32.mrf.mxu0
    %1024 = vmatprep.mubr.f32.mxu0 0.0
    %1025 = vmatmul.mubr.f32.gmra.mxu0 %v950
    %v1026 = vpop.f32.mrf.mxu0
    %v1027 = vadd.f32 0.0, %v1026
    %v1028 = vpop.f32.mrf.mxu0
    %1029 = vmatprep.mubr.f32.mxu0 0.0
    %1030 = vmatmul.mubr.f32.gmra.mxu0 %v953
    %v1031 = vpop.f32.mrf.mxu0
    %v1032 = vadd.f32 0.0, %v1031
    %v1033 = vpop.f32.mrf.mxu0
    %1034 = vdwg.mxu0
    %v1035 = vadd.f32 %v790, %v1022
    %v1036 = vadd.f32 %v795, %v1027
    %v1037 = vadd.f32 %v800, %v1032
    %1038 = vrot.lane.b32.xlu0 %v288, 104
    %v1039 = vpop.permute.xlu0 %1038
    %1040 = vrot.lane.b32.xlu0 %v294, 104
    %v1041 = vpop.permute.xlu0 %1040
    %1042 = vrot.lane.b32.xlu0 %v300, 104
    %v1043 = vpop.permute.xlu0 %1042
    %1044 = vrot.lane.b32.xlu0 %v288, 72
    %v1045 = vpop.permute.xlu0 %1044
    %1046 = vrot.lane.b32.xlu0 %v294, 72
    %v1047 = vpop.permute.xlu0 %1046
    %1048 = vrot.lane.b32.xlu0 %v300, 72
    %v1049 = vpop.permute.xlu0 %1048
    %v1050 = vsel %vm331, %v1039, 0
    %v1052 = vsel %vm331, %v1041, 0
    %v1054 = vsel %vm331, %v1043, 0
    %v1056 = vsel %vm331, %v1045, 0
    %v1058 = vsel %vm331, %v1047, 0
    %v1060 = vsel %vm331, %v1049, 0
    %1062 = vmatprep.subr.mxu0 0.0
    %1063 = vmatpush1.xpose.msra.mxu0 0.0
    %1064 = vmatprep.subr.mxu0 0.0
    %1065 = vmatpush1.xpose.msra.mxu0 0.0
    %1066 = vmatprep.subr.mxu0 0.0
    %1067 = vmatpush1.xpose.msra.mxu0 0.0
    %1068 = vmatprep.subr.mxu0 0.0
    %1069 = vmatpush1.xpose.msra.mxu0 0.0
    %1070 = vmatprep.subr.mxu0 0.0
    %1071 = vmatpush1.xpose.msra.mxu0 0.0
    %1072 = vmatprep.subr.mxu0 0.0
    %1073 = vmatpush1.xpose.msra.mxu0 0.0
    %1074 = vmatprep.subr.mxu0 0.0
    %1075 = vmatpush1.xpose.msra.mxu0 0.0
    %1076 = vmatprep.subr.mxu0 0.0
    %1077 = vmatpush1.xpose.msra.mxu0 0.0
    %1078 = vmatprep.subr.mxu0 0.0
    %1079 = vmatpush1.xpose.msra.mxu0 0.0
    %1080 = vmatprep.subr.mxu0 0.0
    %1081 = vmatpush1.xpose.msra.mxu0 0.0
    %1082 = vmatprep.subr.mxu0 0.0
    %1083 = vmatpush1.xpose.msra.mxu0 0.0
    %1084 = vmatprep.subr.mxu0 0.0
    %1085 = vmatpush1.xpose.msra.mxu0 0.0
    %1086 = vmatprep.subr.mxu0 0.0
    %1087 = vmatpush1.xpose.msra.mxu0 0.0
    %1088 = vmatprep.subr.mxu0 0.0
    %1089 = vmatpush1.xpose.msra.mxu0 %v1060
    %1090 = vmatprep.subr.mxu0 0.0
    %1091 = vmatpush1.xpose.msra.mxu0 %v1058
    %1092 = vmatprep.subr.mxu0 0.0
    %1093 = vmatpush1.xpose.msra.mxu0 %v1056
    %1094 = vmatprep.subr.mxu0 0.0
    %1095 = vmatpush2.xpose.msra.mxu0 0.0
    %1096 = vmatprep.subr.mxu0 0.0
    %1097 = vmatpush2.xpose.msra.mxu0 0.0
    %1098 = vmatprep.subr.mxu0 0.0
    %1099 = vmatpush2.xpose.msra.mxu0 0.0
    %1100 = vmatprep.subr.mxu0 0.0
    %1101 = vmatpush2.xpose.msra.mxu0 0.0
    %1102 = vmatprep.subr.mxu0 0.0
    %1103 = vmatpush2.xpose.msra.mxu0 0.0
    %1104 = vmatprep.subr.mxu0 0.0
    %1105 = vmatpush2.xpose.msra.mxu0 0.0
    %1106 = vmatprep.subr.mxu0 0.0
    %1107 = vmatpush2.xpose.msra.mxu0 0.0
    %1108 = vmatprep.subr.mxu0 0.0
    %1109 = vmatpush2.xpose.msra.mxu0 0.0
    %1110 = vmatprep.subr.mxu0 0.0
    %1111 = vmatpush2.xpose.msra.mxu0 0.0
    %1112 = vmatprep.subr.mxu0 0.0
    %1113 = vmatpush2.xpose.msra.mxu0 0.0
    %1114 = vmatprep.subr.mxu0 0.0
    %1115 = vmatpush2.xpose.msra.mxu0 0.0
    %1116 = vmatprep.subr.mxu0 0.0
    %1117 = vmatpush2.xpose.msra.mxu0 0.0
    %1118 = vmatprep.subr.mxu0 0.0
    %1119 = vmatpush2.xpose.msra.mxu0 0.0
    %1120 = vmatprep.subr.mxu0 0.0
    %1121 = vmatpush2.xpose.msra.mxu0 0.0
    %1122 = vmatprep.subr.mxu0 0.0
    %1123 = vmatpush2.xpose.msra.mxu0 0.0
    %1124 = vmatprep.subr.mxu0 0.0
    %1125 = vmatpush2.xpose.msra.mxu0 0.0
    %1126 = vmatprep.mubr.f32.mxu0 0.0
    %1127 = vmatmul.mubr.f32.gmra.mxu0 %v1050
    %v1128 = vpop.f32.mrf.mxu0
    %v1129 = vadd.f32 0.0, %v1128
    %v1130 = vpop.f32.mrf.mxu0
    %1131 = vmatprep.mubr.f32.mxu0 0.0
    %1132 = vmatmul.mubr.f32.gmra.mxu0 %v1052
    %v1133 = vpop.f32.mrf.mxu0
    %v1134 = vadd.f32 0.0, %v1133
    %v1135 = vpop.f32.mrf.mxu0
    %1136 = vmatprep.mubr.f32.mxu0 0.0
    %1137 = vmatmul.mubr.f32.gmra.mxu0 %v1054
    %v1138 = vpop.f32.mrf.mxu0
    %v1139 = vadd.f32 0.0, %v1138
    %v1140 = vpop.f32.mrf.mxu0
    %1141 = vdwg.mxu0
    %v1142 = vmul.f32 %v1129, 0.17677669
    %v1143 = vmul.f32 %v1134, 0.17677669
    %v1144 = vmul.f32 %v1139, 0.17677669
    %v1145 = vadd.f32 %v1142, %v196
    %v1146 = vadd.f32 %v1143, %v196
    %v1147 = vadd.f32 %v1144, %v196
    %v1148 = vsel %vm430, %v1145, -inf
    %1149 = vmax.xlane.f32.xlu0 %v1148
    %v1150 = vpop.xlane.xlu0 %1149
    %v1151 = vsel %vm430, %v1146, -inf
    %1152 = vmax.xlane.f32.xlu0 %v1151
    %v1153 = vpop.xlane.xlu0 %1152
    %v1154 = vsel %vm430, %v1147, -inf
    %1155 = vmax.xlane.f32.xlu0 %v1154
    %v1156 = vpop.xlane.xlu0 %1155
    %v1157 = vsub.f32 %v1145, %v1150
    %v1158 = vsub.f32 %v1146, %v1153
    %v1159 = vsub.f32 %v1147, %v1156
    %v1160 = vmul.f32 %v1157, 1.442695
    %v1161 = vpow.pop %v1160
    %v1162 = vmul.f32 %v1158, 1.442695
    %v1163 = vpow.pop %v1162
    %v1164 = vmul.f32 %v1159, 1.442695
    %v1165 = vpow.pop %v1164
    %v1166 = vsel %vm430, %v1161, 0.0
    %1167 = vadd.xlane.f32.xlu0 %v1166
    %v1168 = vpop.xlane.xlu0 %1167
    %v1169 = vsel %vm430, %v1163, 0.0
    %1170 = vadd.xlane.f32.xlu0 %v1169
    %v1171 = vpop.xlane.xlu0 %1170
    %v1172 = vsel %vm430, %v1165, 0.0
    %1173 = vadd.xlane.f32.xlu0 %v1172
    %v1174 = vpop.xlane.xlu0 %1173
    %v1175 = vrcp.pop %v1168
    %v1176 = vrcp.pop %v1171
    %v1177 = vrcp.pop %v1174
    %v1178 = vmul.f32 %v1161, %v1175
    %v1179 = vmul.f32 %v1163, %v1176
    %v1180 = vmul.f32 %v1165, %v1177
    %1184 = vrot.lane.b32.xlu0 %v290, 96
    %v1185 = vpop.permute.xlu0 %1184
    %1186 = vrot.lane.b32.xlu0 %v296, 96
    %v1187 = vpop.permute.xlu0 %1186
    %1188 = vrot.lane.b32.xlu0 %v302, 96
    %v1189 = vpop.permute.xlu0 %1188
    %v1194 = vsel %vm430, %v1178, 0
    %v1197 = vsel %vm430, %v1179, 0
    %v1200 = vsel %vm430, %v1180, 0
    %1202 = vmatprep.subr.mxu0 0.0
    %1203 = vmatpush1.msra.mxu0 0.0
    %1204 = vmatprep.subr.mxu0 0.0
    %1205 = vmatpush1.msra.mxu0 0.0
    %1206 = vmatprep.subr.mxu0 0.0
    %1207 = vmatpush1.msra.mxu0 0.0
    %1208 = vmatprep.subr.mxu0 0.0
    %1209 = vmatpush1.msra.mxu0 0.0
    %1210 = vmatprep.subr.mxu0 0.0
    %1211 = vmatpush1.msra.mxu0 0.0
    %1212 = vmatprep.subr.mxu0 0.0
    %1213 = vmatpush1.msra.mxu0 0.0
    %1214 = vmatprep.subr.mxu0 0.0
    %1215 = vmatpush1.msra.mxu0 0.0
    %1216 = vmatprep.subr.mxu0 0.0
    %1217 = vmatpush1.msra.mxu0 0.0
    %1218 = vmatprep.subr.mxu0 0.0
    %1219 = vmatpush1.msra.mxu0 0.0
    %1220 = vmatprep.subr.mxu0 0.0
    %1221 = vmatpush1.msra.mxu0 0.0
    %1222 = vmatprep.subr.mxu0 0.0
    %1223 = vmatpush1.msra.mxu0 0.0
    %1224 = vmatprep.subr.mxu0 0.0
    %1225 = vmatpush1.msra.mxu0 0.0
    %1226 = vmatprep.subr.mxu0 0.0
    %1227 = vmatpush1.msra.mxu0 0.0
    %1228 = vmatprep.subr.mxu0 0.0
    %1229 = vmatpush1.msra.mxu0 %v1189
    %1230 = vmatprep.subr.mxu0 0.0
    %1231 = vmatpush1.msra.mxu0 %v1187
    %1232 = vmatprep.subr.mxu0 0.0
    %1233 = vmatpush1.msra.mxu0 %v1185
    %1234 = vmatprep.subr.mxu0 0.0
    %1235 = vmatpush2.msra.mxu0 0.0
    %1236 = vmatprep.subr.mxu0 0.0
    %1237 = vmatpush2.msra.mxu0 0.0
    %1238 = vmatprep.subr.mxu0 0.0
    %1239 = vmatpush2.msra.mxu0 0.0
    %1240 = vmatprep.subr.mxu0 0.0
    %1241 = vmatpush2.msra.mxu0 0.0
    %1242 = vmatprep.subr.mxu0 0.0
    %1243 = vmatpush2.msra.mxu0 0.0
    %1244 = vmatprep.subr.mxu0 0.0
    %1245 = vmatpush2.msra.mxu0 0.0
    %1246 = vmatprep.subr.mxu0 0.0
    %1247 = vmatpush2.msra.mxu0 0.0
    %1248 = vmatprep.subr.mxu0 0.0
    %1249 = vmatpush2.msra.mxu0 0.0
    %1250 = vmatprep.subr.mxu0 0.0
    %1251 = vmatpush2.msra.mxu0 0.0
    %1252 = vmatprep.subr.mxu0 0.0
    %1253 = vmatpush2.msra.mxu0 0.0
    %1254 = vmatprep.subr.mxu0 0.0
    %1255 = vmatpush2.msra.mxu0 0.0
    %1256 = vmatprep.subr.mxu0 0.0
    %1257 = vmatpush2.msra.mxu0 0.0
    %1258 = vmatprep.subr.mxu0 0.0
    %1259 = vmatpush2.msra.mxu0 0.0
    %1260 = vmatprep.subr.mxu0 0.0
    %1261 = vmatpush2.msra.mxu0 0.0
    %1262 = vmatprep.subr.mxu0 0.0
    %1263 = vmatpush2.msra.mxu0 0.0
    %1264 = vmatprep.subr.mxu0 0.0
    %1265 = vmatpush2.msra.mxu0 0.0
    %1266 = vmatprep.mubr.f32.mxu0 0.0
    %1267 = vmatmul.mubr.f32.gmra.mxu0 %v1194
    %v1268 = vpop.f32.mrf.mxu0
    %v1269 = vadd.f32 0.0, %v1268
    %v1270 = vpop.f32.mrf.mxu0
    %1271 = vmatprep.mubr.f32.mxu0 0.0
    %1272 = vmatmul.mubr.f32.gmra.mxu0 %v1197
    %v1273 = vpop.f32.mrf.mxu0
    %v1274 = vadd.f32 0.0, %v1273
    %v1275 = vpop.f32.mrf.mxu0
    %1276 = vmatprep.mubr.f32.mxu0 0.0
    %1277 = vmatmul.mubr.f32.gmra.mxu0 %v1200
    %v1278 = vpop.f32.mrf.mxu0
    %v1279 = vadd.f32 0.0, %v1278
    %v1280 = vpop.f32.mrf.mxu0
    %1281 = vdwg.mxu0
    %v1282 = vadd.f32 %v1035, %v1269
    %v1283 = vadd.f32 %v1036, %v1274
    %v1284 = vadd.f32 %v1037, %v1279
    %1288 = vrot.lane.b32.xlu0 %v306, 96
    %v1289 = vpop.permute.xlu0 %1288
    %1290 = vrot.lane.b32.xlu0 %v312, 96
    %v1291 = vpop.permute.xlu0 %1290
    %1292 = vrot.lane.b32.xlu0 %v318, 96
    %v1293 = vpop.permute.xlu0 %1292
    %v1294 = vsel %vm331, %v306, 0
    %v1296 = vsel %vm331, %v312, 0
    %v1298 = vsel %vm331, %v318, 0
    %v1300 = vsel %vm331, %v1289, 0
    %v1302 = vsel %vm331, %v1291, 0
    %v1304 = vsel %vm331, %v1293, 0
    %1306 = vmatprep.subr.mxu0 0.0
    %1307 = vmatpush1.xpose.msra.mxu0 0.0
    %1308 = vmatprep.subr.mxu0 0.0
    %1309 = vmatpush1.xpose.msra.mxu0 0.0
    %1310 = vmatprep.subr.mxu0 0.0
    %1311 = vmatpush1.xpose.msra.mxu0 0.0
    %1312 = vmatprep.subr.mxu0 0.0
    %1313 = vmatpush1.xpose.msra.mxu0 0.0
    %1314 = vmatprep.subr.mxu0 0.0
    %1315 = vmatpush1.xpose.msra.mxu0 0.0
    %1316 = vmatprep.subr.mxu0 0.0
    %1317 = vmatpush1.xpose.msra.mxu0 0.0
    %1318 = vmatprep.subr.mxu0 0.0
    %1319 = vmatpush1.xpose.msra.mxu0 0.0
    %1320 = vmatprep.subr.mxu0 0.0
    %1321 = vmatpush1.xpose.msra.mxu0 0.0
    %1322 = vmatprep.subr.mxu0 0.0
    %1323 = vmatpush1.xpose.msra.mxu0 0.0
    %1324 = vmatprep.subr.mxu0 0.0
    %1325 = vmatpush1.xpose.msra.mxu0 0.0
    %1326 = vmatprep.subr.mxu0 0.0
    %1327 = vmatpush1.xpose.msra.mxu0 0.0
    %1328 = vmatprep.subr.mxu0 0.0
    %1329 = vmatpush1.xpose.msra.mxu0 0.0
    %1330 = vmatprep.subr.mxu0 0.0
    %1331 = vmatpush1.xpose.msra.mxu0 0.0
    %1332 = vmatprep.subr.mxu0 0.0
    %1333 = vmatpush1.xpose.msra.mxu0 %v1304
    %1334 = vmatprep.subr.mxu0 0.0
    %1335 = vmatpush1.xpose.msra.mxu0 %v1302
    %1336 = vmatprep.subr.mxu0 0.0
    %1337 = vmatpush1.xpose.msra.mxu0 %v1300
    %1338 = vmatprep.subr.mxu0 0.0
    %1339 = vmatpush2.xpose.msra.mxu0 0.0
    %1340 = vmatprep.subr.mxu0 0.0
    %1341 = vmatpush2.xpose.msra.mxu0 0.0
    %1342 = vmatprep.subr.mxu0 0.0
    %1343 = vmatpush2.xpose.msra.mxu0 0.0
    %1344 = vmatprep.subr.mxu0 0.0
    %1345 = vmatpush2.xpose.msra.mxu0 0.0
    %1346 = vmatprep.subr.mxu0 0.0
    %1347 = vmatpush2.xpose.msra.mxu0 0.0
    %1348 = vmatprep.subr.mxu0 0.0
    %1349 = vmatpush2.xpose.msra.mxu0 0.0
    %1350 = vmatprep.subr.mxu0 0.0
    %1351 = vmatpush2.xpose.msra.mxu0 0.0
    %1352 = vmatprep.subr.mxu0 0.0
    %1353 = vmatpush2.xpose.msra.mxu0 0.0
    %1354 = vmatprep.subr.mxu0 0.0
    %1355 = vmatpush2.xpose.msra.mxu0 0.0
    %1356 = vmatprep.subr.mxu0 0.0
    %1357 = vmatpush2.xpose.msra.mxu0 0.0
    %1358 = vmatprep.subr.mxu0 0.0
    %1359 = vmatpush2.xpose.msra.mxu0 0.0
    %1360 = vmatprep.subr.mxu0 0.0
    %1361 = vmatpush2.xpose.msra.mxu0 0.0
    %1362 = vmatprep.subr.mxu0 0.0
    %1363 = vmatpush2.xpose.msra.mxu0 0.0
    %1364 = vmatprep.subr.mxu0 0.0
    %1365 = vmatpush2.xpose.msra.mxu0 0.0
    %1366 = vmatprep.subr.mxu0 0.0
    %1367 = vmatpush2.xpose.msra.mxu0 0.0
    %1368 = vmatprep.subr.mxu0 0.0
    %1369 = vmatpush2.xpose.msra.mxu0 0.0
    %1370 = vmatprep.mubr.f32.mxu0 0.0
    %1371 = vmatmul.mubr.f32.gmra.mxu0 %v1294
    %v1372 = vpop.f32.mrf.mxu0
    %v1373 = vadd.f32 0.0, %v1372
    %v1374 = vpop.f32.mrf.mxu0
    %1375 = vmatprep.mubr.f32.mxu0 0.0
    %1376 = vmatmul.mubr.f32.gmra.mxu0 %v1296
    %v1377 = vpop.f32.mrf.mxu0
    %v1378 = vadd.f32 0.0, %v1377
    %v1379 = vpop.f32.mrf.mxu0
    %1380 = vmatprep.mubr.f32.mxu0 0.0
    %1381 = vmatmul.mubr.f32.gmra.mxu0 %v1298
    %v1382 = vpop.f32.mrf.mxu0
    %v1383 = vadd.f32 0.0, %v1382
    %v1384 = vpop.f32.mrf.mxu0
    %1385 = vdwg.mxu0
    %v1386 = vmul.f32 %v1373, 0.17677669
    %v1387 = vmul.f32 %v1378, 0.17677669
    %v1388 = vmul.f32 %v1383, 0.17677669
    %v1389 = vadd.f32 %v1386, %v196
    %v1390 = vadd.f32 %v1387, %v196
    %v1391 = vadd.f32 %v1388, %v196
    %v1392 = vsel %vm430, %v1389, -inf
    %1393 = vmax.xlane.f32.xlu0 %v1392
    %v1394 = vpop.xlane.xlu0 %1393
    %v1395 = vsel %vm430, %v1390, -inf
    %1396 = vmax.xlane.f32.xlu0 %v1395
    %v1397 = vpop.xlane.xlu0 %1396
    %v1398 = vsel %vm430, %v1391, -inf
    %1399 = vmax.xlane.f32.xlu0 %v1398
    %v1400 = vpop.xlane.xlu0 %1399
    %v1401 = vsub.f32 %v1389, %v1394
    %v1402 = vsub.f32 %v1390, %v1397
    %v1403 = vsub.f32 %v1391, %v1400
    %v1404 = vmul.f32 %v1401, 1.442695
    %v1405 = vpow.pop %v1404
    %v1406 = vmul.f32 %v1402, 1.442695
    %v1407 = vpow.pop %v1406
    %v1408 = vmul.f32 %v1403, 1.442695
    %v1409 = vpow.pop %v1408
    %v1410 = vsel %vm430, %v1405, 0.0
    %1411 = vadd.xlane.f32.xlu0 %v1410
    %v1412 = vpop.xlane.xlu0 %1411
    %v1413 = vsel %vm430, %v1407, 0.0
    %1414 = vadd.xlane.f32.xlu0 %v1413
    %v1415 = vpop.xlane.xlu0 %1414
    %v1416 = vsel %vm430, %v1409, 0.0
    %1417 = vadd.xlane.f32.xlu0 %v1416
    %v1418 = vpop.xlane.xlu0 %1417
    %v1419 = vrcp.pop %v1412
    %v1420 = vrcp.pop %v1415
    %v1421 = vrcp.pop %v1418
    %v1422 = vmul.f32 %v1405, %v1419
    %v1423 = vmul.f32 %v1407, %v1420
    %v1424 = vmul.f32 %v1409, %v1421
    %1425 = vrot.lane.b32.xlu0 %v306, 120
    %v1426 = vpop.permute.xlu0 %1425
    %1427 = vrot.lane.b32.xlu0 %v312, 120
    %v1428 = vpop.permute.xlu0 %1427
    %1429 = vrot.lane.b32.xlu0 %v318, 120
    %v1430 = vpop.permute.xlu0 %1429
    %1431 = vrot.lane.b32.xlu0 %v306, 88
    %v1432 = vpop.permute.xlu0 %1431
    %1433 = vrot.lane.b32.xlu0 %v312, 88
    %v1434 = vpop.permute.xlu0 %1433
    %1435 = vrot.lane.b32.xlu0 %v318, 88
    %v1436 = vpop.permute.xlu0 %1435
    %v1437 = vsel %vm331, %v1426, 0
    %v1439 = vsel %vm331, %v1428, 0
    %v1441 = vsel %vm331, %v1430, 0
    %v1443 = vsel %vm331, %v1432, 0
    %v1445 = vsel %vm331, %v1434, 0
    %v1447 = vsel %vm331, %v1436, 0
    %1449 = vmatprep.subr.mxu0 0.0
    %1450 = vmatpush1.xpose.msra.mxu0 0.0
    %1451 = vmatprep.subr.mxu0 0.0
    %1452 = vmatpush1.xpose.msra.mxu0 0.0
    %1453 = vmatprep.subr.mxu0 0.0
    %1454 = vmatpush1.xpose.msra.mxu0 0.0
    %1455 = vmatprep.subr.mxu0 0.0
    %1456 = vmatpush1.xpose.msra.mxu0 0.0
    %1457 = vmatprep.subr.mxu0 0.0
    %1458 = vmatpush1.xpose.msra.mxu0 0.0
    %1459 = vmatprep.subr.mxu0 0.0
    %1460 = vmatpush1.xpose.msra.mxu0 0.0
    %1461 = vmatprep.subr.mxu0 0.0
    %1462 = vmatpush1.xpose.msra.mxu0 0.0
    %1463 = vmatprep.subr.mxu0 0.0
    %1464 = vmatpush1.xpose.msra.mxu0 0.0
    %1465 = vmatprep.subr.mxu0 0.0
    %1466 = vmatpush1.xpose.msra.mxu0 0.0
    %1467 = vmatprep.subr.mxu0 0.0
    %1468 = vmatpush1.xpose.msra.mxu0 0.0
    %1469 = vmatprep.subr.mxu0 0.0
    %1470 = vmatpush1.xpose.msra.mxu0 0.0
    %1471 = vmatprep.subr.mxu0 0.0
    %1472 = vmatpush1.xpose.msra.mxu0 0.0
    %1473 = vmatprep.subr.mxu0 0.0
    %1474 = vmatpush1.xpose.msra.mxu0 0.0
    %1475 = vmatprep.subr.mxu0 0.0
    %1476 = vmatpush1.xpose.msra.mxu0 %v1447
    %1477 = vmatprep.subr.mxu0 0.0
    %1478 = vmatpush1.xpose.msra.mxu0 %v1445
    %1479 = vmatprep.subr.mxu0 0.0
    %1480 = vmatpush1.xpose.msra.mxu0 %v1443
    %1481 = vmatprep.subr.mxu0 0.0
    %1482 = vmatpush2.xpose.msra.mxu0 0.0
    %1483 = vmatprep.subr.mxu0 0.0
    %1484 = vmatpush2.xpose.msra.mxu0 0.0
    %1485 = vmatprep.subr.mxu0 0.0
    %1486 = vmatpush2.xpose.msra.mxu0 0.0
    %1487 = vmatprep.subr.mxu0 0.0
    %1488 = vmatpush2.xpose.msra.mxu0 0.0
    %1489 = vmatprep.subr.mxu0 0.0
    %1490 = vmatpush2.xpose.msra.mxu0 0.0
    %1491 = vmatprep.subr.mxu0 0.0
    %1492 = vmatpush2.xpose.msra.mxu0 0.0
    %1493 = vmatprep.subr.mxu0 0.0
    %1494 = vmatpush2.xpose.msra.mxu0 0.0
    %1495 = vmatprep.subr.mxu0 0.0
    %1496 = vmatpush2.xpose.msra.mxu0 0.0
    %1497 = vmatprep.subr.mxu0 0.0
    %1498 = vmatpush2.xpose.msra.mxu0 0.0
    %1499 = vmatprep.subr.mxu0 0.0
    %1500 = vmatpush2.xpose.msra.mxu0 0.0
    %1501 = vmatprep.subr.mxu0 0.0
    %1502 = vmatpush2.xpose.msra.mxu0 0.0
    %1503 = vmatprep.subr.mxu0 0.0
    %1504 = vmatpush2.xpose.msra.mxu0 0.0
    %1505 = vmatprep.subr.mxu0 0.0
    %1506 = vmatpush2.xpose.msra.mxu0 0.0
    %1507 = vmatprep.subr.mxu0 0.0
    %1508 = vmatpush2.xpose.msra.mxu0 0.0
    %1509 = vmatprep.subr.mxu0 0.0
    %1510 = vmatpush2.xpose.msra.mxu0 0.0
    %1511 = vmatprep.subr.mxu0 0.0
    %1512 = vmatpush2.xpose.msra.mxu0 0.0
    %1513 = vmatprep.mubr.f32.mxu0 0.0
    %1514 = vmatmul.mubr.f32.gmra.mxu0 %v1437
    %v1515 = vpop.f32.mrf.mxu0
    %v1516 = vadd.f32 0.0, %v1515
    %v1517 = vpop.f32.mrf.mxu0
    %1518 = vmatprep.mubr.f32.mxu0 0.0
    %1519 = vmatmul.mubr.f32.gmra.mxu0 %v1439
    %v1520 = vpop.f32.mrf.mxu0
    %v1521 = vadd.f32 0.0, %v1520
    %v1522 = vpop.f32.mrf.mxu0
    %1523 = vmatprep.mubr.f32.mxu0 0.0
    %1524 = vmatmul.mubr.f32.gmra.mxu0 %v1441
    %v1525 = vpop.f32.mrf.mxu0
    %v1526 = vadd.f32 0.0, %v1525
    %v1527 = vpop.f32.mrf.mxu0
    %1528 = vdwg.mxu0
    %v1529 = vmul.f32 %v1516, 0.17677669
    %v1530 = vmul.f32 %v1521, 0.17677669
    %v1531 = vmul.f32 %v1526, 0.17677669
    %v1532 = vadd.f32 %v1529, %v196
    %v1533 = vadd.f32 %v1530, %v196
    %v1534 = vadd.f32 %v1531, %v196
    %v1535 = vsel %vm430, %v1532, -inf
    %1536 = vmax.xlane.f32.xlu0 %v1535
    %v1537 = vpop.xlane.xlu0 %1536
    %v1538 = vsel %vm430, %v1533, -inf
    %1539 = vmax.xlane.f32.xlu0 %v1538
    %v1540 = vpop.xlane.xlu0 %1539
    %v1541 = vsel %vm430, %v1534, -inf
    %1542 = vmax.xlane.f32.xlu0 %v1541
    %v1543 = vpop.xlane.xlu0 %1542
    %v1544 = vsub.f32 %v1532, %v1537
    %v1545 = vsub.f32 %v1533, %v1540
    %v1546 = vsub.f32 %v1534, %v1543
    %v1547 = vmul.f32 %v1544, 1.442695
    %v1548 = vpow.pop %v1547
    %v1549 = vmul.f32 %v1545, 1.442695
    %v1550 = vpow.pop %v1549
    %v1551 = vmul.f32 %v1546, 1.442695
    %v1552 = vpow.pop %v1551
    %v1553 = vsel %vm430, %v1548, 0.0
    %1554 = vadd.xlane.f32.xlu0 %v1553
    %v1555 = vpop.xlane.xlu0 %1554
    %v1556 = vsel %vm430, %v1550, 0.0
    %1557 = vadd.xlane.f32.xlu0 %v1556
    %v1558 = vpop.xlane.xlu0 %1557
    %v1559 = vsel %vm430, %v1552, 0.0
    %1560 = vadd.xlane.f32.xlu0 %v1559
    %v1561 = vpop.xlane.xlu0 %1560
    %v1562 = vrcp.pop %v1555
    %v1563 = vrcp.pop %v1558
    %v1564 = vrcp.pop %v1561
    %v1565 = vmul.f32 %v1548, %v1562
    %v1566 = vmul.f32 %v1550, %v1563
    %v1567 = vmul.f32 %v1552, %v1564
    %1568 = vrot.lane.b32.xlu0 %v306, 32
    %v1569 = vpop.permute.xlu0 %1568
    %1570 = vrot.lane.b32.xlu0 %v312, 32
    %v1571 = vpop.permute.xlu0 %1570
    %1572 = vrot.lane.b32.xlu0 %v318, 32
    %v1573 = vpop.permute.xlu0 %1572
    %v1578 = vsel %vm430, %v1565, 0
    %v1581 = vsel %vm430, %v1566, 0
    %v1584 = vsel %vm430, %v1567, 0
    %1586 = vmatprep.subr.mxu0 0.0
    %1587 = vmatpush1.msra.mxu0 0.0
    %1588 = vmatprep.subr.mxu0 0.0
    %1589 = vmatpush1.msra.mxu0 0.0
    %1590 = vmatprep.subr.mxu0 0.0
    %1591 = vmatpush1.msra.mxu0 0.0
    %1592 = vmatprep.subr.mxu0 0.0
    %1593 = vmatpush1.msra.mxu0 0.0
    %1594 = vmatprep.subr.mxu0 0.0
    %1595 = vmatpush1.msra.mxu0 0.0
    %1596 = vmatprep.subr.mxu0 0.0
    %1597 = vmatpush1.msra.mxu0 0.0
    %1598 = vmatprep.subr.mxu0 0.0
    %1599 = vmatpush1.msra.mxu0 0.0
    %1600 = vmatprep.subr.mxu0 0.0
    %1601 = vmatpush1.msra.mxu0 0.0
    %1602 = vmatprep.subr.mxu0 0.0
    %1603 = vmatpush1.msra.mxu0 0.0
    %1604 = vmatprep.subr.mxu0 0.0
    %1605 = vmatpush1.msra.mxu0 0.0
    %1606 = vmatprep.subr.mxu0 0.0
    %1607 = vmatpush1.msra.mxu0 0.0
    %1608 = vmatprep.subr.mxu0 0.0
    %1609 = vmatpush1.msra.mxu0 0.0
    %1610 = vmatprep.subr.mxu0 0.0
    %1611 = vmatpush1.msra.mxu0 0.0
    %1612 = vmatprep.subr.mxu0 0.0
    %1613 = vmatpush1.msra.mxu0 %v1573
    %1614 = vmatprep.subr.mxu0 0.0
    %1615 = vmatpush1.msra.mxu0 %v1571
    %1616 = vmatprep.subr.mxu0 0.0
    %1617 = vmatpush1.msra.mxu0 %v1569
    %1618 = vmatprep.subr.mxu0 0.0
    %1619 = vmatpush2.msra.mxu0 0.0
    %1620 = vmatprep.subr.mxu0 0.0
    %1621 = vmatpush2.msra.mxu0 0.0
    %1622 = vmatprep.subr.mxu0 0.0
    %1623 = vmatpush2.msra.mxu0 0.0
    %1624 = vmatprep.subr.mxu0 0.0
    %1625 = vmatpush2.msra.mxu0 0.0
    %1626 = vmatprep.subr.mxu0 0.0
    %1627 = vmatpush2.msra.mxu0 0.0
    %1628 = vmatprep.subr.mxu0 0.0
    %1629 = vmatpush2.msra.mxu0 0.0
    %1630 = vmatprep.subr.mxu0 0.0
    %1631 = vmatpush2.msra.mxu0 0.0
    %1632 = vmatprep.subr.mxu0 0.0
    %1633 = vmatpush2.msra.mxu0 0.0
    %1634 = vmatprep.subr.mxu0 0.0
    %1635 = vmatpush2.msra.mxu0 0.0
    %1636 = vmatprep.subr.mxu0 0.0
    %1637 = vmatpush2.msra.mxu0 0.0
    %1638 = vmatprep.subr.mxu0 0.0
    %1639 = vmatpush2.msra.mxu0 0.0
    %1640 = vmatprep.subr.mxu0 0.0
    %1641 = vmatpush2.msra.mxu0 0.0
    %1642 = vmatprep.subr.mxu0 0.0
    %1643 = vmatpush2.msra.mxu0 0.0
    %1644 = vmatprep.subr.mxu0 0.0
    %1645 = vmatpush2.msra.mxu0 0.0
    %1646 = vmatprep.subr.mxu0 0.0
    %1647 = vmatpush2.msra.mxu0 0.0
    %1648 = vmatprep.subr.mxu0 0.0
    %1649 = vmatpush2.msra.mxu0 0.0
    %1650 = vmatprep.mubr.f32.mxu0 0.0
    %1651 = vmatmul.mubr.f32.gmra.mxu0 %v1578
    %v1652 = vpop.f32.mrf.mxu0
    %v1653 = vadd.f32 0.0, %v1652
    %v1654 = vpop.f32.mrf.mxu0
    %1655 = vmatprep.mubr.f32.mxu0 0.0
    %1656 = vmatmul.mubr.f32.gmra.mxu0 %v1581
    %v1657 = vpop.f32.mrf.mxu0
    %v1658 = vadd.f32 0.0, %v1657
    %v1659 = vpop.f32.mrf.mxu0
    %1660 = vmatprep.mubr.f32.mxu0 0.0
    %1661 = vmatmul.mubr.f32.gmra.mxu0 %v1584
    %v1662 = vpop.f32.mrf.mxu0
    %v1663 = vadd.f32 0.0, %v1662
    %v1664 = vpop.f32.mrf.mxu0
    %1665 = vdwg.mxu0
    %1666 = vrot.lane.b32.xlu0 %v306, 64
    %v1667 = vpop.permute.xlu0 %1666
    %1668 = vrot.lane.b32.xlu0 %v312, 64
    %v1669 = vpop.permute.xlu0 %1668
    %1670 = vrot.lane.b32.xlu0 %v318, 64
    %v1671 = vpop.permute.xlu0 %1670
    %v1676 = vsel %vm430, %v1422, 0
    %v1679 = vsel %vm430, %v1423, 0
    %v1682 = vsel %vm430, %v1424, 0
    %1684 = vmatprep.subr.mxu0 0.0
    %1685 = vmatpush1.msra.mxu0 0.0
    %1686 = vmatprep.subr.mxu0 0.0
    %1687 = vmatpush1.msra.mxu0 0.0
    %1688 = vmatprep.subr.mxu0 0.0
    %1689 = vmatpush1.msra.mxu0 0.0
    %1690 = vmatprep.subr.mxu0 0.0
    %1691 = vmatpush1.msra.mxu0 0.0
    %1692 = vmatprep.subr.mxu0 0.0
    %1693 = vmatpush1.msra.mxu0 0.0
    %1694 = vmatprep.subr.mxu0 0.0
    %1695 = vmatpush1.msra.mxu0 0.0
    %1696 = vmatprep.subr.mxu0 0.0
    %1697 = vmatpush1.msra.mxu0 0.0
    %1698 = vmatprep.subr.mxu0 0.0
    %1699 = vmatpush1.msra.mxu0 0.0
    %1700 = vmatprep.subr.mxu0 0.0
    %1701 = vmatpush1.msra.mxu0 0.0
    %1702 = vmatprep.subr.mxu0 0.0
    %1703 = vmatpush1.msra.mxu0 0.0
    %1704 = vmatprep.subr.mxu0 0.0
    %1705 = vmatpush1.msra.mxu0 0.0
    %1706 = vmatprep.subr.mxu0 0.0
    %1707 = vmatpush1.msra.mxu0 0.0
    %1708 = vmatprep.subr.mxu0 0.0
    %1709 = vmatpush1.msra.mxu0 0.0
    %1710 = vmatprep.subr.mxu0 0.0
    %1711 = vmatpush1.msra.mxu0 %v1671
    %1712 = vmatprep.subr.mxu0 0.0
    %1713 = vmatpush1.msra.mxu0 %v1669
    %1714 = vmatprep.subr.mxu0 0.0
    %1715 = vmatpush1.msra.mxu0 %v1667
    %1716 = vmatprep.subr.mxu0 0.0
    %1717 = vmatpush2.msra.mxu0 0.0
    %1718 = vmatprep.subr.mxu0 0.0
    %1719 = vmatpush2.msra.mxu0 0.0
    %1720 = vmatprep.subr.mxu0 0.0
    %1721 = vmatpush2.msra.mxu0 0.0
    %1722 = vmatprep.subr.mxu0 0.0
    %1723 = vmatpush2.msra.mxu0 0.0
    %1724 = vmatprep.subr.mxu0 0.0
    %1725 = vmatpush2.msra.mxu0 0.0
    %1726 = vmatprep.subr.mxu0 0.0
    %1727 = vmatpush2.msra.mxu0 0.0
    %1728 = vmatprep.subr.mxu0 0.0
    %1729 = vmatpush2.msra.mxu0 0.0
    %1730 = vmatprep.subr.mxu0 0.0
    %1731 = vmatpush2.msra.mxu0 0.0
    %1732 = vmatprep.subr.mxu0 0.0
    %1733 = vmatpush2.msra.mxu0 0.0
    %1734 = vmatprep.subr.mxu0 0.0
    %1735 = vmatpush2.msra.mxu0 0.0
    %1736 = vmatprep.subr.mxu0 0.0
    %1737 = vmatpush2.msra.mxu0 0.0
    %1738 = vmatprep.subr.mxu0 0.0
    %1739 = vmatpush2.msra.mxu0 0.0
    %1740 = vmatprep.subr.mxu0 0.0
    %1741 = vmatpush2.msra.mxu0 0.0
    %1742 = vmatprep.subr.mxu0 0.0
    %1743 = vmatpush2.msra.mxu0 0.0
    %1744 = vmatprep.subr.mxu0 0.0
    %1745 = vmatpush2.msra.mxu0 0.0
    %1746 = vmatprep.subr.mxu0 0.0
    %1747 = vmatpush2.msra.mxu0 0.0
    %1748 = vmatprep.mubr.f32.mxu0 0.0
    %1749 = vmatmul.mubr.f32.gmra.mxu0 %v1676
    %v1750 = vpop.f32.mrf.mxu0
    %v1751 = vadd.f32 %v1653, %v1750
    %v1752 = vpop.f32.mrf.mxu0
    %1753 = vmatprep.mubr.f32.mxu0 0.0
    %1754 = vmatmul.mubr.f32.gmra.mxu0 %v1679
    %v1755 = vpop.f32.mrf.mxu0
    %v1756 = vadd.f32 %v1658, %v1755
    %v1757 = vpop.f32.mrf.mxu0
    %1758 = vmatprep.mubr.f32.mxu0 0.0
    %1759 = vmatmul.mubr.f32.gmra.mxu0 %v1682
    %v1760 = vpop.f32.mrf.mxu0
    %v1761 = vadd.f32 %v1663, %v1760
    %v1762 = vpop.f32.mrf.mxu0
    %1763 = vdwg.mxu0
    %1764 = vrot.lane.b32.xlu0 %v306, 112
    %v1765 = vpop.permute.xlu0 %1764
    %1766 = vrot.lane.b32.xlu0 %v312, 112
    %v1767 = vpop.permute.xlu0 %1766
    %1768 = vrot.lane.b32.xlu0 %v318, 112
    %v1769 = vpop.permute.xlu0 %1768
    %1770 = vrot.lane.b32.xlu0 %v306, 80
    %v1771 = vpop.permute.xlu0 %1770
    %1772 = vrot.lane.b32.xlu0 %v312, 80
    %v1773 = vpop.permute.xlu0 %1772
    %1774 = vrot.lane.b32.xlu0 %v318, 80
    %v1775 = vpop.permute.xlu0 %1774
    %v1776 = vsel %vm331, %v1765, 0
    %v1778 = vsel %vm331, %v1767, 0
    %v1780 = vsel %vm331, %v1769, 0
    %v1782 = vsel %vm331, %v1771, 0
    %v1784 = vsel %vm331, %v1773, 0
    %v1786 = vsel %vm331, %v1775, 0
    %1788 = vmatprep.subr.mxu0 0.0
    %1789 = vmatpush1.xpose.msra.mxu0 0.0
    %1790 = vmatprep.subr.mxu0 0.0
    %1791 = vmatpush1.xpose.msra.mxu0 0.0
    %1792 = vmatprep.subr.mxu0 0.0
    %1793 = vmatpush1.xpose.msra.mxu0 0.0
    %1794 = vmatprep.subr.mxu0 0.0
    %1795 = vmatpush1.xpose.msra.mxu0 0.0
    %1796 = vmatprep.subr.mxu0 0.0
    %1797 = vmatpush1.xpose.msra.mxu0 0.0
    %1798 = vmatprep.subr.mxu0 0.0
    %1799 = vmatpush1.xpose.msra.mxu0 0.0
    %1800 = vmatprep.subr.mxu0 0.0
    %1801 = vmatpush1.xpose.msra.mxu0 0.0
    %1802 = vmatprep.subr.mxu0 0.0
    %1803 = vmatpush1.xpose.msra.mxu0 0.0
    %1804 = vmatprep.subr.mxu0 0.0
    %1805 = vmatpush1.xpose.msra.mxu0 0.0
    %1806 = vmatprep.subr.mxu0 0.0
    %1807 = vmatpush1.xpose.msra.mxu0 0.0
    %1808 = vmatprep.subr.mxu0 0.0
    %1809 = vmatpush1.xpose.msra.mxu0 0.0
    %1810 = vmatprep.subr.mxu0 0.0
    %1811 = vmatpush1.xpose.msra.mxu0 0.0
    %1812 = vmatprep.subr.mxu0 0.0
    %1813 = vmatpush1.xpose.msra.mxu0 0.0
    %1814 = vmatprep.subr.mxu0 0.0
    %1815 = vmatpush1.xpose.msra.mxu0 %v1786
    %1816 = vmatprep.subr.mxu0 0.0
    %1817 = vmatpush1.xpose.msra.mxu0 %v1784
    %1818 = vmatprep.subr.mxu0 0.0
    %1819 = vmatpush1.xpose.msra.mxu0 %v1782
    %1820 = vmatprep.subr.mxu0 0.0
    %1821 = vmatpush2.xpose.msra.mxu0 0.0
    %1822 = vmatprep.subr.mxu0 0.0
    %1823 = vmatpush2.xpose.msra.mxu0 0.0
    %1824 = vmatprep.subr.mxu0 0.0
    %1825 = vmatpush2.xpose.msra.mxu0 0.0
    %1826 = vmatprep.subr.mxu0 0.0
    %1827 = vmatpush2.xpose.msra.mxu0 0.0
    %1828 = vmatprep.subr.mxu0 0.0
    %1829 = vmatpush2.xpose.msra.mxu0 0.0
    %1830 = vmatprep.subr.mxu0 0.0
    %1831 = vmatpush2.xpose.msra.mxu0 0.0
    %1832 = vmatprep.subr.mxu0 0.0
    %1833 = vmatpush2.xpose.msra.mxu0 0.0
    %1834 = vmatprep.subr.mxu0 0.0
    %1835 = vmatpush2.xpose.msra.mxu0 0.0
    %1836 = vmatprep.subr.mxu0 0.0
    %1837 = vmatpush2.xpose.msra.mxu0 0.0
    %1838 = vmatprep.subr.mxu0 0.0
    %1839 = vmatpush2.xpose.msra.mxu0 0.0
    %1840 = vmatprep.subr.mxu0 0.0
    %1841 = vmatpush2.xpose.msra.mxu0 0.0
    %1842 = vmatprep.subr.mxu0 0.0
    %1843 = vmatpush2.xpose.msra.mxu0 0.0
    %1844 = vmatprep.subr.mxu0 0.0
    %1845 = vmatpush2.xpose.msra.mxu0 0.0
    %1846 = vmatprep.subr.mxu0 0.0
    %1847 = vmatpush2.xpose.msra.mxu0 0.0
    %1848 = vmatprep.subr.mxu0 0.0
    %1849 = vmatpush2.xpose.msra.mxu0 0.0
    %1850 = vmatprep.subr.mxu0 0.0
    %1851 = vmatpush2.xpose.msra.mxu0 0.0
    %1852 = vmatprep.mubr.f32.mxu0 0.0
    %1853 = vmatmul.mubr.f32.gmra.mxu0 %v1776
    %v1854 = vpop.f32.mrf.mxu0
    %v1855 = vadd.f32 0.0, %v1854
    %v1856 = vpop.f32.mrf.mxu0
    %1857 = vmatprep.mubr.f32.mxu0 0.0
    %1858 = vmatmul.mubr.f32.gmra.mxu0 %v1778
    %v1859 = vpop.f32.mrf.mxu0
    %v1860 = vadd.f32 0.0, %v1859
    %v1861 = vpop.f32.mrf.mxu0
    %1862 = vmatprep.mubr.f32.mxu0 0.0
    %1863 = vmatmul.mubr.f32.gmra.mxu0 %v1780
    %v1864 = vpop.f32.mrf.mxu0
    %v1865 = vadd.f32 0.0, %v1864
    %v1866 = vpop.f32.mrf.mxu0
    %1867 = vdwg.mxu0
    %v1868 = vmul.f32 %v1855, 0.17677669
    %v1869 = vmul.f32 %v1860, 0.17677669
    %v1870 = vmul.f32 %v1865, 0.17677669
    %v1871 = vadd.f32 %v1868, %v196
    %v1872 = vadd.f32 %v1869, %v196
    %v1873 = vadd.f32 %v1870, %v196
    %v1874 = vsel %vm430, %v1871, -inf
    %1875 = vmax.xlane.f32.xlu0 %v1874
    %v1876 = vpop.xlane.xlu0 %1875
    %v1877 = vsel %vm430, %v1872, -inf
    %1878 = vmax.xlane.f32.xlu0 %v1877
    %v1879 = vpop.xlane.xlu0 %1878
    %v1880 = vsel %vm430, %v1873, -inf
    %1881 = vmax.xlane.f32.xlu0 %v1880
    %v1882 = vpop.xlane.xlu0 %1881
    %v1883 = vsub.f32 %v1871, %v1876
    %v1884 = vsub.f32 %v1872, %v1879
    %v1885 = vsub.f32 %v1873, %v1882
    %v1886 = vmul.f32 %v1883, 1.442695
    %v1887 = vpow.pop %v1886
    %v1888 = vmul.f32 %v1884, 1.442695
    %v1889 = vpow.pop %v1888
    %v1890 = vmul.f32 %v1885, 1.442695
    %v1891 = vpow.pop %v1890
    %v1892 = vsel %vm430, %v1887, 0.0
    %1893 = vadd.xlane.f32.xlu0 %v1892
    %v1894 = vpop.xlane.xlu0 %1893
    %v1895 = vsel %vm430, %v1889, 0.0
    %1896 = vadd.xlane.f32.xlu0 %v1895
    %v1897 = vpop.xlane.xlu0 %1896
    %v1898 = vsel %vm430, %v1891, 0.0
    %1899 = vadd.xlane.f32.xlu0 %v1898
    %v1900 = vpop.xlane.xlu0 %1899
    %v1901 = vrcp.pop %v1894
    %v1902 = vrcp.pop %v1897
    %v1903 = vrcp.pop %v1900
    %v1904 = vmul.f32 %v1887, %v1901
    %v1905 = vmul.f32 %v1889, %v1902
    %v1906 = vmul.f32 %v1891, %v1903
    %v1908 = vsel %vm430, %v1904, 0
    %v1911 = vsel %vm430, %v1905, 0
    %v1914 = vsel %vm430, %v1906, 0
    %1916 = vmatprep.subr.mxu0 0.0
    %1917 = vmatpush1.msra.mxu0 0.0
    %1918 = vmatprep.subr.mxu0 0.0
    %1919 = vmatpush1.msra.mxu0 0.0
    %1920 = vmatprep.subr.mxu0 0.0
    %1921 = vmatpush1.msra.mxu0 0.0
    %1922 = vmatprep.subr.mxu0 0.0
    %1923 = vmatpush1.msra.mxu0 0.0
    %1924 = vmatprep.subr.mxu0 0.0
    %1925 = vmatpush1.msra.mxu0 0.0
    %1926 = vmatprep.subr.mxu0 0.0
    %1927 = vmatpush1.msra.mxu0 0.0
    %1928 = vmatprep.subr.mxu0 0.0
    %1929 = vmatpush1.msra.mxu0 0.0
    %1930 = vmatprep.subr.mxu0 0.0
    %1931 = vmatpush1.msra.mxu0 0.0
    %1932 = vmatprep.subr.mxu0 0.0
    %1933 = vmatpush1.msra.mxu0 0.0
    %1934 = vmatprep.subr.mxu0 0.0
    %1935 = vmatpush1.msra.mxu0 0.0
    %1936 = vmatprep.subr.mxu0 0.0
    %1937 = vmatpush1.msra.mxu0 0.0
    %1938 = vmatprep.subr.mxu0 0.0
    %1939 = vmatpush1.msra.mxu0 0.0
    %1940 = vmatprep.subr.mxu0 0.0
    %1941 = vmatpush1.msra.mxu0 0.0
    %1942 = vmatprep.subr.mxu0 0.0
    %1943 = vmatpush1.msra.mxu0 %v320
    %1944 = vmatprep.subr.mxu0 0.0
    %1945 = vmatpush1.msra.mxu0 %v314
    %1946 = vmatprep.subr.mxu0 0.0
    %1947 = vmatpush1.msra.mxu0 %v308
    %1948 = vmatprep.subr.mxu0 0.0
    %1949 = vmatpush2.msra.mxu0 0.0
    %1950 = vmatprep.subr.mxu0 0.0
    %1951 = vmatpush2.msra.mxu0 0.0
    %1952 = vmatprep.subr.mxu0 0.0
    %1953 = vmatpush2.msra.mxu0 0.0
    %1954 = vmatprep.subr.mxu0 0.0
    %1955 = vmatpush2.msra.mxu0 0.0
    %1956 = vmatprep.subr.mxu0 0.0
    %1957 = vmatpush2.msra.mxu0 0.0
    %1958 = vmatprep.subr.mxu0 0.0
    %1959 = vmatpush2.msra.mxu0 0.0
    %1960 = vmatprep.subr.mxu0 0.0
    %1961 = vmatpush2.msra.mxu0 0.0
    %1962 = vmatprep.subr.mxu0 0.0
    %1963 = vmatpush2.msra.mxu0 0.0
    %1964 = vmatprep.subr.mxu0 0.0
    %1965 = vmatpush2.msra.mxu0 0.0
    %1966 = vmatprep.subr.mxu0 0.0
    %1967 = vmatpush2.msra.mxu0 0.0
    %1968 = vmatprep.subr.mxu0 0.0
    %1969 = vmatpush2.msra.mxu0 0.0
    %1970 = vmatprep.subr.mxu0 0.0
    %1971 = vmatpush2.msra.mxu0 0.0
    %1972 = vmatprep.subr.mxu0 0.0
    %1973 = vmatpush2.msra.mxu0 0.0
    %1974 = vmatprep.subr.mxu0 0.0
    %1975 = vmatpush2.msra.mxu0 0.0
    %1976 = vmatprep.subr.mxu0 0.0
    %1977 = vmatpush2.msra.mxu0 0.0
    %1978 = vmatprep.subr.mxu0 0.0
    %1979 = vmatpush2.msra.mxu0 0.0
    %1980 = vmatprep.mubr.f32.mxu0 0.0
    %1981 = vmatmul.mubr.f32.gmra.mxu0 %v1908
    %v1982 = vpop.f32.mrf.mxu0
    %v1983 = vadd.f32 0.0, %v1982
    %v1984 = vpop.f32.mrf.mxu0
    %1985 = vmatprep.mubr.f32.mxu0 0.0
    %1986 = vmatmul.mubr.f32.gmra.mxu0 %v1911
    %v1987 = vpop.f32.mrf.mxu0
    %v1988 = vadd.f32 0.0, %v1987
    %v1989 = vpop.f32.mrf.mxu0
    %1990 = vmatprep.mubr.f32.mxu0 0.0
    %1991 = vmatmul.mubr.f32.gmra.mxu0 %v1914
    %v1992 = vpop.f32.mrf.mxu0
    %v1993 = vadd.f32 0.0, %v1992
    %v1994 = vpop.f32.mrf.mxu0
    %1995 = vdwg.mxu0
    %v1996 = vadd.f32 %v1751, %v1983
    %v1997 = vadd.f32 %v1756, %v1988
    %v1998 = vadd.f32 %v1761, %v1993
    %1999 = vrot.lane.b32.xlu0 %v306, 104
    %v2000 = vpop.permute.xlu0 %1999
    %2001 = vrot.lane.b32.xlu0 %v312, 104
    %v2002 = vpop.permute.xlu0 %2001
    %2003 = vrot.lane.b32.xlu0 %v318, 104
    %v2004 = vpop.permute.xlu0 %2003
    %2005 = vrot.lane.b32.xlu0 %v306, 72
    %v2006 = vpop.permute.xlu0 %2005
    %2007 = vrot.lane.b32.xlu0 %v312, 72
    %v2008 = vpop.permute.xlu0 %2007
    %2009 = vrot.lane.b32.xlu0 %v318, 72
    %v2010 = vpop.permute.xlu0 %2009
    %v2011 = vsel %vm331, %v2000, 0
    %v2013 = vsel %vm331, %v2002, 0
    %v2015 = vsel %vm331, %v2004, 0
    %v2017 = vsel %vm331, %v2006, 0
    %v2019 = vsel %vm331, %v2008, 0
    %v2021 = vsel %vm331, %v2010, 0
    %2023 = vmatprep.subr.mxu0 0.0
    %2024 = vmatpush1.xpose.msra.mxu0 0.0
    %2025 = vmatprep.subr.mxu0 0.0
    %2026 = vmatpush1.xpose.msra.mxu0 0.0
    %2027 = vmatprep.subr.mxu0 0.0
    %2028 = vmatpush1.xpose.msra.mxu0 0.0
    %2029 = vmatprep.subr.mxu0 0.0
    %2030 = vmatpush1.xpose.msra.mxu0 0.0
    %2031 = vmatprep.subr.mxu0 0.0
    %2032 = vmatpush1.xpose.msra.mxu0 0.0
    %2033 = vmatprep.subr.mxu0 0.0
    %2034 = vmatpush1.xpose.msra.mxu0 0.0
    %2035 = vmatprep.subr.mxu0 0.0
    %2036 = vmatpush1.xpose.msra.mxu0 0.0
    %2037 = vmatprep.subr.mxu0 0.0
    %2038 = vmatpush1.xpose.msra.mxu0 0.0
    %2039 = vmatprep.subr.mxu0 0.0
    %2040 = vmatpush1.xpose.msra.mxu0 0.0
    %2041 = vmatprep.subr.mxu0 0.0
    %2042 = vmatpush1.xpose.msra.mxu0 0.0
    %2043 = vmatprep.subr.mxu0 0.0
    %2044 = vmatpush1.xpose.msra.mxu0 0.0
    %2045 = vmatprep.subr.mxu0 0.0
    %2046 = vmatpush1.xpose.msra.mxu0 0.0
    %2047 = vmatprep.subr.mxu0 0.0
    %2048 = vmatpush1.xpose.msra.mxu0 0.0
    %2049 = vmatprep.subr.mxu0 0.0
    %2050 = vmatpush1.xpose.msra.mxu0 %v2021
    %2051 = vmatprep.subr.mxu0 0.0
    %2052 = vmatpush1.xpose.msra.mxu0 %v2019
    %2053 = vmatprep.subr.mxu0 0.0
    %2054 = vmatpush1.xpose.msra.mxu0 %v2017
    %2055 = vmatprep.subr.mxu0 0.0
    %2056 = vmatpush2.xpose.msra.mxu0 0.0
    %2057 = vmatprep.subr.mxu0 0.0
    %2058 = vmatpush2.xpose.msra.mxu0 0.0
    %2059 = vmatprep.subr.mxu0 0.0
    %2060 = vmatpush2.xpose.msra.mxu0 0.0
    %2061 = vmatprep.subr.mxu0 0.0
    %2062 = vmatpush2.xpose.msra.mxu0 0.0
    %2063 = vmatprep.subr.mxu0 0.0
    %2064 = vmatpush2.xpose.msra.mxu0 0.0
    %2065 = vmatprep.subr.mxu0 0.0
    %2066 = vmatpush2.xpose.msra.mxu0 0.0
    %2067 = vmatprep.subr.mxu0 0.0
    %2068 = vmatpush2.xpose.msra.mxu0 0.0
    %2069 = vmatprep.subr.mxu0 0.0
    %2070 = vmatpush2.xpose.msra.mxu0 0.0
    %2071 = vmatprep.subr.mxu0 0.0
    %2072 = vmatpush2.xpose.msra.mxu0 0.0
    %2073 = vmatprep.subr.mxu0 0.0
    %2074 = vmatpush2.xpose.msra.mxu0 0.0
    %2075 = vmatprep.subr.mxu0 0.0
    %2076 = vmatpush2.xpose.msra.mxu0 0.0
    %2077 = vmatprep.subr.mxu0 0.0
    %2078 = vmatpush2.xpose.msra.mxu0 0.0
    %2079 = vmatprep.subr.mxu0 0.0
    %2080 = vmatpush2.xpose.msra.mxu0 0.0
    %2081 = vmatprep.subr.mxu0 0.0
    %2082 = vmatpush2.xpose.msra.mxu0 0.0
    %2083 = vmatprep.subr.mxu0 0.0
    %2084 = vmatpush2.xpose.msra.mxu0 0.0
    %2085 = vmatprep.subr.mxu0 0.0
    %2086 = vmatpush2.xpose.msra.mxu0 0.0
    %2087 = vmatprep.mubr.f32.mxu0 0.0
    %2088 = vmatmul.mubr.f32.gmra.mxu0 %v2011
    %v2089 = vpop.f32.mrf.mxu0
    %v2090 = vadd.f32 0.0, %v2089
    %v2091 = vpop.f32.mrf.mxu0
    %2092 = vmatprep.mubr.f32.mxu0 0.0
    %2093 = vmatmul.mubr.f32.gmra.mxu0 %v2013
    %v2094 = vpop.f32.mrf.mxu0
    %v2095 = vadd.f32 0.0, %v2094
    %v2096 = vpop.f32.mrf.mxu0
    %2097 = vmatprep.mubr.f32.mxu0 0.0
    %2098 = vmatmul.mubr.f32.gmra.mxu0 %v2015
    %v2099 = vpop.f32.mrf.mxu0
    %v2100 = vadd.f32 0.0, %v2099
    %v2101 = vpop.f32.mrf.mxu0
    %2102 = vdwg.mxu0
    %v2103 = vmul.f32 %v2090, 0.17677669
    %v2104 = vmul.f32 %v2095, 0.17677669
    %v2105 = vmul.f32 %v2100, 0.17677669
    %v2106 = vadd.f32 %v2103, %v196
    %v2107 = vadd.f32 %v2104, %v196
    %v2108 = vadd.f32 %v2105, %v196
    %v2109 = vsel %vm430, %v2106, -inf
    %2110 = vmax.xlane.f32.xlu0 %v2109
    %v2111 = vpop.xlane.xlu0 %2110
    %v2112 = vsel %vm430, %v2107, -inf
    %2113 = vmax.xlane.f32.xlu0 %v2112
    %v2114 = vpop.xlane.xlu0 %2113
    %v2115 = vsel %vm430, %v2108, -inf
    %2116 = vmax.xlane.f32.xlu0 %v2115
    %v2117 = vpop.xlane.xlu0 %2116
    %v2118 = vsub.f32 %v2106, %v2111
    %v2119 = vsub.f32 %v2107, %v2114
    %v2120 = vsub.f32 %v2108, %v2117
    %v2121 = vmul.f32 %v2118, 1.442695
    %v2122 = vpow.pop %v2121
    %v2123 = vmul.f32 %v2119, 1.442695
    %v2124 = vpow.pop %v2123
    %v2125 = vmul.f32 %v2120, 1.442695
    %v2126 = vpow.pop %v2125
    %v2127 = vsel %vm430, %v2122, 0.0
    %2128 = vadd.xlane.f32.xlu0 %v2127
    %v2129 = vpop.xlane.xlu0 %2128
    %v2130 = vsel %vm430, %v2124, 0.0
    %2131 = vadd.xlane.f32.xlu0 %v2130
    %v2132 = vpop.xlane.xlu0 %2131
    %v2133 = vsel %vm430, %v2126, 0.0
    %2134 = vadd.xlane.f32.xlu0 %v2133
    %v2135 = vpop.xlane.xlu0 %2134
    %v2136 = vrcp.pop %v2129
    %v2137 = vrcp.pop %v2132
    %v2138 = vrcp.pop %v2135
    %v2139 = vmul.f32 %v2122, %v2136
    %v2140 = vmul.f32 %v2124, %v2137
    %v2141 = vmul.f32 %v2126, %v2138
    %2145 = vrot.lane.b32.xlu0 %v308, 96
    %v2146 = vpop.permute.xlu0 %2145
    %2147 = vrot.lane.b32.xlu0 %v314, 96
    %v2148 = vpop.permute.xlu0 %2147
    %2149 = vrot.lane.b32.xlu0 %v320, 96
    %v2150 = vpop.permute.xlu0 %2149
    %v2155 = vsel %vm430, %v2139, 0
    %v2158 = vsel %vm430, %v2140, 0
    %v2161 = vsel %vm430, %v2141, 0
    %2163 = vmatprep.subr.mxu0 0.0
    %2164 = vmatpush1.msra.mxu0 0.0
    %2165 = vmatprep.subr.mxu0 0.0
    %2166 = vmatpush1.msra.mxu0 0.0
    %2167 = vmatprep.subr.mxu0 0.0
    %2168 = vmatpush1.msra.mxu0 0.0
    %2169 = vmatprep.subr.mxu0 0.0
    %2170 = vmatpush1.msra.mxu0 0.0
    %2171 = vmatprep.subr.mxu0 0.0
    %2172 = vmatpush1.msra.mxu0 0.0
    %2173 = vmatprep.subr.mxu0 0.0
    %2174 = vmatpush1.msra.mxu0 0.0
    %2175 = vmatprep.subr.mxu0 0.0
    %2176 = vmatpush1.msra.mxu0 0.0
    %2177 = vmatprep.subr.mxu0 0.0
    %2178 = vmatpush1.msra.mxu0 0.0
    %2179 = vmatprep.subr.mxu0 0.0
    %2180 = vmatpush1.msra.mxu0 0.0
    %2181 = vmatprep.subr.mxu0 0.0
    %2182 = vmatpush1.msra.mxu0 0.0
    %2183 = vmatprep.subr.mxu0 0.0
    %2184 = vmatpush1.msra.mxu0 0.0
    %2185 = vmatprep.subr.mxu0 0.0
    %2186 = vmatpush1.msra.mxu0 0.0
    %2187 = vmatprep.subr.mxu0 0.0
    %2188 = vmatpush1.msra.mxu0 0.0
    %2189 = vmatprep.subr.mxu0 0.0
    %2190 = vmatpush1.msra.mxu0 %v2150
    %2191 = vmatprep.subr.mxu0 0.0
    %2192 = vmatpush1.msra.mxu0 %v2148
    %2193 = vmatprep.subr.mxu0 0.0
    %2194 = vmatpush1.msra.mxu0 %v2146
    %2195 = vmatprep.subr.mxu0 0.0
    %2196 = vmatpush2.msra.mxu0 0.0
    %2197 = vmatprep.subr.mxu0 0.0
    %2198 = vmatpush2.msra.mxu0 0.0
    %2199 = vmatprep.subr.mxu0 0.0
    %2200 = vmatpush2.msra.mxu0 0.0
    %2201 = vmatprep.subr.mxu0 0.0
    %2202 = vmatpush2.msra.mxu0 0.0
    %2203 = vmatprep.subr.mxu0 0.0
    %2204 = vmatpush2.msra.mxu0 0.0
    %2205 = vmatprep.subr.mxu0 0.0
    %2206 = vmatpush2.msra.mxu0 0.0
    %2207 = vmatprep.subr.mxu0 0.0
    %2208 = vmatpush2.msra.mxu0 0.0
    %2209 = vmatprep.subr.mxu0 0.0
    %2210 = vmatpush2.msra.mxu0 0.0
    %2211 = vmatprep.subr.mxu0 0.0
    %2212 = vmatpush2.msra.mxu0 0.0
    %2213 = vmatprep.subr.mxu0 0.0
    %2214 = vmatpush2.msra.mxu0 0.0
    %2215 = vmatprep.subr.mxu0 0.0
    %2216 = vmatpush2.msra.mxu0 0.0
    %2217 = vmatprep.subr.mxu0 0.0
    %2218 = vmatpush2.msra.mxu0 0.0
    %2219 = vmatprep.subr.mxu0 0.0
    %2220 = vmatpush2.msra.mxu0 0.0
    %2221 = vmatprep.subr.mxu0 0.0
    %2222 = vmatpush2.msra.mxu0 0.0
    %2223 = vmatprep.subr.mxu0 0.0
    %2224 = vmatpush2.msra.mxu0 0.0
    %2225 = vmatprep.subr.mxu0 0.0
    %2226 = vmatpush2.msra.mxu0 0.0
    %2227 = vmatprep.mubr.f32.mxu0 0.0
    %2228 = vmatmul.mubr.f32.gmra.mxu0 %v2155
    %v2229 = vpop.f32.mrf.mxu0
    %v2230 = vadd.f32 0.0, %v2229
    %v2231 = vpop.f32.mrf.mxu0
    %2232 = vmatprep.mubr.f32.mxu0 0.0
    %2233 = vmatmul.mubr.f32.gmra.mxu0 %v2158
    %v2234 = vpop.f32.mrf.mxu0
    %v2235 = vadd.f32 0.0, %v2234
    %v2236 = vpop.f32.mrf.mxu0
    %2237 = vmatprep.mubr.f32.mxu0 0.0
    %2238 = vmatmul.mubr.f32.gmra.mxu0 %v2161
    %v2239 = vpop.f32.mrf.mxu0
    %v2240 = vadd.f32 0.0, %v2239
    %v2241 = vpop.f32.mrf.mxu0
    %2242 = vdwg.mxu0
    %v2243 = vadd.f32 %v1996, %v2230
    %v2244 = vadd.f32 %v1997, %v2235
    %v2245 = vadd.f32 %v1998, %v2240
    %v2246 = vld [vmem:[%s6] sm:$0x1]
    %v2248 = vlaneseq
    %v2249 = vshrl.u32 %v2248, 7
    %v2250 = vsub.s32 0, %v2249
    %v2251 = vrot.slane %v2246, %v2250
    %v2253 = vadd.f32 %v1282, %v2251
    %v2254 = vadd.f32 %v1283, %v2251
    %v2255 = vadd.f32 %v1284, %v2251
    %v2256 = vadd.f32 %v2243, %v2251
    %v2257 = vadd.f32 %v2244, %v2251
    %v2258 = vadd.f32 %v2245, %v2251
    %v2259 = vadd.f32 %v2253, %v189
    %v2260 = vadd.f32 %v2254, %v190
    %v2261 = vadd.f32 %v2255, %v188
    %v2262 = vadd.f32 %v2256, %v191
    %v2263 = vadd.f32 %v2257, %v192
    %v2264 = vadd.f32 %v2258, %v188
    %v2265 = vld [vmem:[%s7] sm:$0x1]
    %v2266 = vld [vmem:[%s8] sm:$0x1]
    %v2267 = vsel %vm205, %v2259, 0.0
    %2268 = vadd.xlane.f32.xlu0 %v2267
    %v2269 = vpop.xlane.xlu0 %2268
    %v2270 = vsel %vm205, %v2260, 0.0
    %2271 = vadd.xlane.f32.xlu0 %v2270
    %v2272 = vpop.xlane.xlu0 %2271
    %v2273 = vsel %vm205, %v2261, 0.0
    %2274 = vadd.xlane.f32.xlu0 %v2273
    %v2275 = vpop.xlane.xlu0 %2274
    %v2276 = vsel %vm205, %v2262, 0.0
    %2277 = vadd.xlane.f32.xlu0 %v2276
    %v2278 = vpop.xlane.xlu0 %2277
    %v2279 = vsel %vm205, %v2263, 0.0
    %2280 = vadd.xlane.f32.xlu0 %v2279
    %v2281 = vpop.xlane.xlu0 %2280
    %v2282 = vsel %vm205, %v2264, 0.0
    %2283 = vadd.xlane.f32.xlu0 %v2282
    %v2284 = vpop.xlane.xlu0 %2283
    %v2285 = vrcp.pop 32.0
    %v2286 = vmul.f32 %v2269, %v2285
    %v2287 = vmul.f32 %v2272, %v2285
    %v2288 = vmul.f32 %v2275, %v2285
    %v2289 = vmul.f32 %v2278, %v2285
    %v2290 = vmul.f32 %v2281, %v2285
    %v2291 = vmul.f32 %v2284, %v2285
    %v2292 = vsub.f32 %v2259, %v2286
    %v2293 = vsub.f32 %v2260, %v2287
    %v2294 = vsub.f32 %v2261, %v2288
    %v2295 = vsub.f32 %v2262, %v2289
    %v2296 = vsub.f32 %v2263, %v2290
    %v2297 = vsub.f32 %v2264, %v2291
    %v2298 = vmul.f32 %v2292, %v2292
    %v2299 = vmul.f32 %v2293, %v2293
    %v2300 = vmul.f32 %v2294, %v2294
    %v2301 = vmul.f32 %v2295, %v2295
    %v2302 = vmul.f32 %v2296, %v2296
    %v2303 = vmul.f32 %v2297, %v2297
    %v2304 = vsel %vm205, %v2298, 0.0
    %2305 = vadd.xlane.f32.xlu0 %v2304
    %v2306 = vpop.xlane.xlu0 %2305
    %v2307 = vsel %vm205, %v2299, 0.0
    %2308 = vadd.xlane.f32.xlu0 %v2307
    %v2309 = vpop.xlane.xlu0 %2308
    %v2310 = vsel %vm205, %v2300, 0.0
    %2311 = vadd.xlane.f32.xlu0 %v2310
    %v2312 = vpop.xlane.xlu0 %2311
    %v2313 = vsel %vm205, %v2301, 0.0
    %2314 = vadd.xlane.f32.xlu0 %v2313
    %v2315 = vpop.xlane.xlu0 %2314
    %v2316 = vsel %vm205, %v2302, 0.0
    %2317 = vadd.xlane.f32.xlu0 %v2316
    %v2318 = vpop.xlane.xlu0 %2317
    %v2319 = vsel %vm205, %v2303, 0.0
    %2320 = vadd.xlane.f32.xlu0 %v2319
    %v2321 = vpop.xlane.xlu0 %2320
    %v2322 = vmul.f32 %v2306, %v2285
    %v2323 = vmul.f32 %v2309, %v2285
    %v2324 = vmul.f32 %v2312, %v2285
    %v2325 = vmul.f32 %v2315, %v2285
    %v2326 = vmul.f32 %v2318, %v2285
    %v2327 = vmul.f32 %v2321, %v2285
    %v2328 = vadd.f32 %v2322, 1e-05
    %v2329 = vadd.f32 %v2323, 1e-05
    %v2330 = vadd.f32 %v2324, 1e-05
    %v2331 = vadd.f32 %v2325, 1e-05
    %v2332 = vadd.f32 %v2326, 1e-05
    %v2333 = vadd.f32 %v2327, 1e-05
    %v2334 = vrsqrt.pop %v2328
    %v2335 = vrsqrt.pop %v2329
    %v2336 = vrsqrt.pop %v2330
    %v2337 = vrsqrt.pop %v2331
    %v2338 = vrsqrt.pop %v2332
    %v2339 = vrsqrt.pop %v2333
    %v2340 = vmul.f32 %v2292, %v2334
    %v2341 = vmul.f32 %v2293, %v2335
    %v2342 = vmul.f32 %v2294, %v2336
    %v2343 = vmul.f32 %v2295, %v2337
    %v2344 = vmul.f32 %v2296, %v2338
    %v2345 = vmul.f32 %v2297, %v2339
    %v2347 = vlaneseq
    %v2348 = vshrl.u32 %v2347, 7
    %v2349 = vsub.s32 0, %v2348
    %v2350 = vrot.slane %v2265, %v2349
    %v2352 = vmul.f32 %v2340, %v2350
    %v2353 = vmul.f32 %v2341, %v2350
    %v2354 = vmul.f32 %v2342, %v2350
    %v2355 = vmul.f32 %v2343, %v2350
    %v2356 = vmul.f32 %v2344, %v2350
    %v2357 = vmul.f32 %v2345, %v2350
    %v2359 = vlaneseq
    %v2360 = vshrl.u32 %v2359, 7
    %v2361 = vsub.s32 0, %v2360
    %v2362 = vrot.slane %v2266, %v2361
    %v2364 = vadd.f32 %v2352, %v2362
    %v2365 = vadd.f32 %v2353, %v2362
    %v2366 = vadd.f32 %v2354, %v2362
    %v2367 = vadd.f32 %v2355, %v2362
    %v2368 = vadd.f32 %v2356, %v2362
    %v2369 = vadd.f32 %v2357, %v2362
    %v2370 = vld [vmem:[%s9] sm:$0xff]
    %v2371 = vld [vmem:[%s9 + $0x8] sm:$0xff]
    %v2372 = vld [vmem:[%s9 + $0x10] sm:$0xff]
    %v2373 = vld [vmem:[%s9 + $0x18] sm:$0xff]
    %v2374 = vld [vmem:[%s10] sm:$0x1]
    %v2376 = vlaneseq
    %v2377 = vshrl.u32 %v2376, 7
    %v2378 = vsub.s32 0, %v2377
    %v2379 = vrot.slane %v2374, %v2378
    %v2382 = vsel %vm205, %v2364, 0
    %v2385 = vsel %vm205, %v2365, 0
    %v2388 = vsel %vm205, %v2366, 0
    %v2391 = vsel %vm205, %v2367, 0
    %v2394 = vsel %vm205, %v2368, 0
    %v2397 = vsel %vm205, %v2369, 0
    %2399 = vmatprep.subr.mxu0 0.0
    %2400 = vmatpush1.msra.mxu0 0.0
    %2401 = vmatprep.subr.mxu0 0.0
    %2402 = vmatpush1.msra.mxu0 0.0
    %2403 = vmatprep.subr.mxu0 0.0
    %2404 = vmatpush1.msra.mxu0 0.0
    %2405 = vmatprep.subr.mxu0 0.0
    %2406 = vmatpush1.msra.mxu0 0.0
    %2407 = vmatprep.subr.mxu0 0.0
    %2408 = vmatpush1.msra.mxu0 0.0
    %2409 = vmatprep.subr.mxu0 0.0
    %2410 = vmatpush1.msra.mxu0 0.0
    %2411 = vmatprep.subr.mxu0 0.0
    %2412 = vmatpush1.msra.mxu0 0.0
    %2413 = vmatprep.subr.mxu0 0.0
    %2414 = vmatpush1.msra.mxu0 0.0
    %2415 = vmatprep.subr.mxu0 0.0
    %2416 = vmatpush1.msra.mxu0 0.0
    %2417 = vmatprep.subr.mxu0 0.0
    %2418 = vmatpush1.msra.mxu0 0.0
    %2419 = vmatprep.subr.mxu0 0.0
    %2420 = vmatpush1.msra.mxu0 0.0
    %2421 = vmatprep.subr.mxu0 0.0
    %2422 = vmatpush1.msra.mxu0 0.0
    %2423 = vmatprep.subr.mxu0 0.0
    %2424 = vmatpush1.msra.mxu0 %v2373
    %2425 = vmatprep.subr.mxu0 0.0
    %2426 = vmatpush1.msra.mxu0 %v2372
    %2427 = vmatprep.subr.mxu0 0.0
    %2428 = vmatpush1.msra.mxu0 %v2371
    %2429 = vmatprep.subr.mxu0 0.0
    %2430 = vmatpush1.msra.mxu0 %v2370
    %2431 = vmatprep.subr.mxu0 0.0
    %2432 = vmatpush2.msra.mxu0 0.0
    %2433 = vmatprep.subr.mxu0 0.0
    %2434 = vmatpush2.msra.mxu0 0.0
    %2435 = vmatprep.subr.mxu0 0.0
    %2436 = vmatpush2.msra.mxu0 0.0
    %2437 = vmatprep.subr.mxu0 0.0
    %2438 = vmatpush2.msra.mxu0 0.0
    %2439 = vmatprep.subr.mxu0 0.0
    %2440 = vmatpush2.msra.mxu0 0.0
    %2441 = vmatprep.subr.mxu0 0.0
    %2442 = vmatpush2.msra.mxu0 0.0
    %2443 = vmatprep.subr.mxu0 0.0
    %2444 = vmatpush2.msra.mxu0 0.0
    %2445 = vmatprep.subr.mxu0 0.0
    %2446 = vmatpush2.msra.mxu0 0.0
    %2447 = vmatprep.subr.mxu0 0.0
    %2448 = vmatpush2.msra.mxu0 0.0
    %2449 = vmatprep.subr.mxu0 0.0
    %2450 = vmatpush2.msra.mxu0 0.0
    %2451 = vmatprep.subr.mxu0 0.0
    %2452 = vmatpush2.msra.mxu0 0.0
    %2453 = vmatprep.subr.mxu0 0.0
    %2454 = vmatpush2.msra.mxu0 0.0
    %2455 = vmatprep.subr.mxu0 0.0
    %2456 = vmatpush2.msra.mxu0 0.0
    %2457 = vmatprep.subr.mxu0 0.0
    %2458 = vmatpush2.msra.mxu0 0.0
    %2459 = vmatprep.subr.mxu0 0.0
    %2460 = vmatpush2.msra.mxu0 0.0
    %2461 = vmatprep.subr.mxu0 0.0
    %2462 = vmatpush2.msra.mxu0 0.0
    %2463 = vmatprep.mubr.f32.mxu0 0.0
    %2464 = vmatmul.mubr.f32.gmra.mxu0 %v2382
    %v2465 = vpop.f32.mrf.mxu0
    %v2466 = vadd.f32 %v2379, %v2465
    %v2467 = vpop.f32.mrf.mxu0
    %2468 = vmatprep.mubr.f32.mxu0 0.0
    %2469 = vmatmul.mubr.f32.gmra.mxu0 %v2385
    %v2470 = vpop.f32.mrf.mxu0
    %v2471 = vadd.f32 %v2379, %v2470
    %v2472 = vpop.f32.mrf.mxu0
    %2473 = vmatprep.mubr.f32.mxu0 0.0
    %2474 = vmatmul.mubr.f32.gmra.mxu0 %v2388
    %v2475 = vpop.f32.mrf.mxu0
    %v2476 = vadd.f32 %v2379, %v2475
    %v2477 = vpop.f32.mrf.mxu0
    %2478 = vmatprep.mubr.f32.mxu0 0.0
    %2479 = vmatmul.mubr.f32.gmra.mxu0 %v2391
    %v2480 = vpop.f32.mrf.mxu0
    %v2481 = vadd.f32 %v2379, %v2480
    %v2482 = vpop.f32.mrf.mxu0
    %2483 = vmatprep.mubr.f32.mxu0 0.0
    %2484 = vmatmul.mubr.f32.gmra.mxu0 %v2394
    %v2485 = vpop.f32.mrf.mxu0
    %v2486 = vadd.f32 %v2379, %v2485
    %v2487 = vpop.f32.mrf.mxu0
    %2488 = vmatprep.mubr.f32.mxu0 0.0
    %2489 = vmatmul.mubr.f32.gmra.mxu0 %v2397
    %v2490 = vpop.f32.mrf.mxu0
    %v2491 = vadd.f32 %v2379, %v2490
    %v2492 = vpop.f32.mrf.mxu0
    %2493 = vdwg.mxu0
    %v2494 = vmax.f32 %v2466, 0.0
    %v2495 = vmax.f32 %v2471, 0.0
    %v2496 = vmax.f32 %v2476, 0.0
    %v2497 = vmax.f32 %v2481, 0.0
    %v2498 = vmax.f32 %v2486, 0.0
    %v2499 = vmax.f32 %v2491, 0.0
    %v2500 = vld [vmem:[%s11] sm:$0xff]
    %v2501 = vld [vmem:[%s11 + $0x8] sm:$0xff]
    %v2502 = vld [vmem:[%s11 + $0x10] sm:$0xff]
    %v2503 = vld [vmem:[%s11 + $0x18] sm:$0xff]
    %v2504 = vld [vmem:[%s11 + $0x20] sm:$0xff]
    %v2505 = vld [vmem:[%s11 + $0x28] sm:$0xff]
    %v2506 = vld [vmem:[%s11 + $0x30] sm:$0xff]
    %v2507 = vld [vmem:[%s11 + $0x38] sm:$0xff]
    %v2508 = vld [vmem:[%s11 + $0x40] sm:$0xff]
    %v2509 = vld [vmem:[%s11 + $0x48] sm:$0xff]
    %v2510 = vld [vmem:[%s11 + $0x50] sm:$0xff]
    %v2511 = vld [vmem:[%s11 + $0x58] sm:$0xff]
    %v2512 = vld [vmem:[%s11 + $0x60] sm:$0xff]
    %v2513 = vld [vmem:[%s11 + $0x68] sm:$0xff]
    %v2514 = vld [vmem:[%s11 + $0x70] sm:$0xff]
    %v2515 = vld [vmem:[%s11 + $0x78] sm:$0xff]
    %v2516 = vld [vmem:[%s12] sm:$0x1]
    %v2518 = vlaneseq
    %v2519 = vshrl.u32 %v2518, 7
    %v2520 = vsub.s32 0, %v2519
    %v2521 = vrot.slane %v2516, %v2520
    %2523 = vmatprep.subr.mxu0 0.0
    %2524 = vmatpush1.msra.mxu0 %v2515
    %2525 = vmatprep.subr.mxu0 0.0
    %2526 = vmatpush1.msra.mxu0 %v2514
    %2527 = vmatprep.subr.mxu0 0.0
    %2528 = vmatpush1.msra.mxu0 %v2513
    %2529 = vmatprep.subr.mxu0 0.0
    %2530 = vmatpush1.msra.mxu0 %v2512
    %2531 = vmatprep.subr.mxu0 0.0
    %2532 = vmatpush1.msra.mxu0 %v2511
    %2533 = vmatprep.subr.mxu0 0.0
    %2534 = vmatpush1.msra.mxu0 %v2510
    %2535 = vmatprep.subr.mxu0 0.0
    %2536 = vmatpush1.msra.mxu0 %v2509
    %2537 = vmatprep.subr.mxu0 0.0
    %2538 = vmatpush1.msra.mxu0 %v2508
    %2539 = vmatprep.subr.mxu0 0.0
    %2540 = vmatpush1.msra.mxu0 %v2507
    %2541 = vmatprep.subr.mxu0 0.0
    %2542 = vmatpush1.msra.mxu0 %v2506
    %2543 = vmatprep.subr.mxu0 0.0
    %2544 = vmatpush1.msra.mxu0 %v2505
    %2545 = vmatprep.subr.mxu0 0.0
    %2546 = vmatpush1.msra.mxu0 %v2504
    %2547 = vmatprep.subr.mxu0 0.0
    %2548 = vmatpush1.msra.mxu0 %v2503
    %2549 = vmatprep.subr.mxu0 0.0
    %2550 = vmatpush1.msra.mxu0 %v2502
    %2551 = vmatprep.subr.mxu0 0.0
    %2552 = vmatpush1.msra.mxu0 %v2501
    %2553 = vmatprep.subr.mxu0 0.0
    %2554 = vmatpush1.msra.mxu0 %v2500
    %2555 = vmatprep.subr.mxu0 0.0
    %2556 = vmatpush2.msra.mxu0 0.0
    %2557 = vmatprep.subr.mxu0 0.0
    %2558 = vmatpush2.msra.mxu0 0.0
    %2559 = vmatprep.subr.mxu0 0.0
    %2560 = vmatpush2.msra.mxu0 0.0
    %2561 = vmatprep.subr.mxu0 0.0
    %2562 = vmatpush2.msra.mxu0 0.0
    %2563 = vmatprep.subr.mxu0 0.0
    %2564 = vmatpush2.msra.mxu0 0.0
    %2565 = vmatprep.subr.mxu0 0.0
    %2566 = vmatpush2.msra.mxu0 0.0
    %2567 = vmatprep.subr.mxu0 0.0
    %2568 = vmatpush2.msra.mxu0 0.0
    %2569 = vmatprep.subr.mxu0 0.0
    %2570 = vmatpush2.msra.mxu0 0.0
    %2571 = vmatprep.subr.mxu0 0.0
    %2572 = vmatpush2.msra.mxu0 0.0
    %2573 = vmatprep.subr.mxu0 0.0
    %2574 = vmatpush2.msra.mxu0 0.0
    %2575 = vmatprep.subr.mxu0 0.0
    %2576 = vmatpush2.msra.mxu0 0.0
    %2577 = vmatprep.subr.mxu0 0.0
    %2578 = vmatpush2.msra.mxu0 0.0
    %2579 = vmatprep.subr.mxu0 0.0
    %2580 = vmatpush2.msra.mxu0 0.0
    %2581 = vmatprep.subr.mxu0 0.0
    %2582 = vmatpush2.msra.mxu0 0.0
    %2583 = vmatprep.subr.mxu0 0.0
    %2584 = vmatpush2.msra.mxu0 0.0
    %2585 = vmatprep.subr.mxu0 0.0
    %2586 = vmatpush2.msra.mxu0 0.0
    %2587 = vmatprep.mubr.f32.mxu0 0.0
    %2588 = vmatmul.mubr.f32.gmra.mxu0 %v2494
    %v2589 = vpop.f32.mrf.mxu0
    %v2590 = vadd.f32 %v2521, %v2589
    %v2591 = vpop.f32.mrf.mxu0
    %2592 = vmatprep.mubr.f32.mxu0 0.0
    %2593 = vmatmul.mubr.f32.gmra.mxu0 %v2495
    %v2594 = vpop.f32.mrf.mxu0
    %v2595 = vadd.f32 %v2521, %v2594
    %v2596 = vpop.f32.mrf.mxu0
    %2597 = vmatprep.mubr.f32.mxu0 0.0
    %2598 = vmatmul.mubr.f32.gmra.mxu0 %v2496
    %v2599 = vpop.f32.mrf.mxu0
    %v2600 = vadd.f32 %v2521, %v2599
    %v2601 = vpop.f32.mrf.mxu0
    %2602 = vmatprep.mubr.f32.mxu0 0.0
    %2603 = vmatmul.mubr.f32.gmra.mxu0 %v2497
    %v2604 = vpop.f32.mrf.mxu0
    %v2605 = vadd.f32 %v2521, %v2604
    %v2606 = vpop.f32.mrf.mxu0
    %2607 = vmatprep.mubr.f32.mxu0 0.0
    %2608 = vmatmul.mubr.f32.gmra.mxu0 %v2498
    %v2609 = vpop.f32.mrf.mxu0
    %v2610 = vadd.f32 %v2521, %v2609
    %v2611 = vpop.f32.mrf.mxu0
    %2612 = vmatprep.mubr.f32.mxu0 0.0
    %2613 = vmatmul.mubr.f32.gmra.mxu0 %v2499
    %v2614 = vpop.f32.mrf.mxu0
    %v2615 = vadd.f32 %v2521, %v2614
    %v2616 = vpop.f32.mrf.mxu0
    %2617 = vdwg.mxu0
    %v2618 = vadd.f32 %v2590, %v2364
    %v2619 = vadd.f32 %v2595, %v2365
    %v2620 = vadd.f32 %v2600, %v2366
    %v2621 = vadd.f32 %v2605, %v2367
    %v2622 = vadd.f32 %v2610, %v2368
    %v2623 = vadd.f32 %v2615, %v2369
    %v2624 = vld [vmem:[%s13] sm:$0x1]
    %v2625 = vld [vmem:[%s14] sm:$0x1]
    %v2626 = vsel %vm205, %v2618, 0.0
    %2627 = vadd.xlane.f32.xlu0 %v2626
    %v2628 = vpop.xlane.xlu0 %2627
    %v2629 = vsel %vm205, %v2619, 0.0
    %2630 = vadd.xlane.f32.xlu0 %v2629
    %v2631 = vpop.xlane.xlu0 %2630
    %v2632 = vsel %vm205, %v2620, 0.0
    %2633 = vadd.xlane.f32.xlu0 %v2632
    %v2634 = vpop.xlane.xlu0 %2633
    %v2635 = vsel %vm205, %v2621, 0.0
    %2636 = vadd.xlane.f32.xlu0 %v2635
    %v2637 = vpop.xlane.xlu0 %2636
    %v2638 = vsel %vm205, %v2622, 0.0
    %2639 = vadd.xlane.f32.xlu0 %v2638
    %v2640 = vpop.xlane.xlu0 %2639
    %v2641 = vsel %vm205, %v2623, 0.0
    %2642 = vadd.xlane.f32.xlu0 %v2641
    %v2643 = vpop.xlane.xlu0 %2642
    %v2644 = vmul.f32 %v2628, %v2285
    %v2645 = vmul.f32 %v2631, %v2285
    %v2646 = vmul.f32 %v2634, %v2285
    %v2647 = vmul.f32 %v2637, %v2285
    %v2648 = vmul.f32 %v2640, %v2285
    %v2649 = vmul.f32 %v2643, %v2285
    %v2650 = vsub.f32 %v2618, %v2644
    %v2651 = vsub.f32 %v2619, %v2645
    %v2652 = vsub.f32 %v2620, %v2646
    %v2653 = vsub.f32 %v2621, %v2647
    %v2654 = vsub.f32 %v2622, %v2648
    %v2655 = vsub.f32 %v2623, %v2649
    %v2656 = vmul.f32 %v2650, %v2650
    %v2657 = vmul.f32 %v2651, %v2651
    %v2658 = vmul.f32 %v2652, %v2652
    %v2659 = vmul.f32 %v2653, %v2653
    %v2660 = vmul.f32 %v2654, %v2654
    %v2661 = vmul.f32 %v2655, %v2655
    %v2662 = vsel %vm205, %v2656, 0.0
    %2663 = vadd.xlane.f32.xlu0 %v2662
    %v2664 = vpop.xlane.xlu0 %2663
    %v2665 = vsel %vm205, %v2657, 0.0
    %2666 = vadd.xlane.f32.xlu0 %v2665
    %v2667 = vpop.xlane.xlu0 %2666
    %v2668 = vsel %vm205, %v2658, 0.0
    %2669 = vadd.xlane.f32.xlu0 %v2668
    %v2670 = vpop.xlane.xlu0 %2669
    %v2671 = vsel %vm205, %v2659, 0.0
    %2672 = vadd.xlane.f32.xlu0 %v2671
    %v2673 = vpop.xlane.xlu0 %2672
    %v2674 = vsel %vm205, %v2660, 0.0
    %2675 = vadd.xlane.f32.xlu0 %v2674
    %v2676 = vpop.xlane.xlu0 %2675
    %v2677 = vsel %vm205, %v2661, 0.0
    %2678 = vadd.xlane.f32.xlu0 %v2677
    %v2679 = vpop.xlane.xlu0 %2678
    %v2680 = vmul.f32 %v2664, %v2285
    %v2681 = vmul.f32 %v2667, %v2285
    %v2682 = vmul.f32 %v2670, %v2285
    %v2683 = vmul.f32 %v2673, %v2285
    %v2684 = vmul.f32 %v2676, %v2285
    %v2685 = vmul.f32 %v2679, %v2285
    %v2686 = vadd.f32 %v2680, 1e-05
    %v2687 = vadd.f32 %v2681, 1e-05
    %v2688 = vadd.f32 %v2682, 1e-05
    %v2689 = vadd.f32 %v2683, 1e-05
    %v2690 = vadd.f32 %v2684, 1e-05
    %v2691 = vadd.f32 %v2685, 1e-05
    %v2692 = vrsqrt.pop %v2686
    %v2693 = vrsqrt.pop %v2687
    %v2694 = vrsqrt.pop %v2688
    %v2695 = vrsqrt.pop %v2689
    %v2696 = vrsqrt.pop %v2690
    %v2697 = vrsqrt.pop %v2691
    %v2698 = vmul.f32 %v2650, %v2692
    %v2699 = vmul.f32 %v2651, %v2693
    %v2700 = vmul.f32 %v2652, %v2694
    %v2701 = vmul.f32 %v2653, %v2695
    %v2702 = vmul.f32 %v2654, %v2696
    %v2703 = vmul.f32 %v2655, %v2697
    %v2705 = vlaneseq
    %v2706 = vshrl.u32 %v2705, 7
    %v2707 = vsub.s32 0, %v2706
    %v2708 = vrot.slane %v2624, %v2707
    %v2710 = vmul.f32 %v2698, %v2708
    %v2711 = vmul.f32 %v2699, %v2708
    %v2712 = vmul.f32 %v2700, %v2708
    %v2713 = vmul.f32 %v2701, %v2708
    %v2714 = vmul.f32 %v2702, %v2708
    %v2715 = vmul.f32 %v2703, %v2708
    %v2717 = vlaneseq
    %v2718 = vshrl.u32 %v2717, 7
    %v2719 = vsub.s32 0, %v2718
    %v2720 = vrot.slane %v2625, %v2719
    %v2722 = vadd.f32 %v2710, %v2720
    %v2723 = vadd.f32 %v2711, %v2720
    %v2724 = vadd.f32 %v2712, %v2720
    %v2725 = vadd.f32 %v2713, %v2720
    %v2726 = vadd.f32 %v2714, %v2720
    %v2727 = vadd.f32 %v2715, %v2720
    %s2728 = scalar_lea.vmem %s5, 64
    %v2729 = vld [vmem:[%s2728] sm:$0xff]
    %v2730 = vld [vmem:[%s2728 + $0x8] sm:$0xff]
    %v2731 = vld [vmem:[%s2728 + $0x10] sm:$0xff]
    %v2732 = vld [vmem:[%s2728 + $0x18] sm:$0xff]
    %v2733 = vld [vmem:[%s2728 + $0x20] sm:$0xff]
    %v2734 = vld [vmem:[%s2728 + $0x28] sm:$0xff]
    %v2735 = vld [vmem:[%s2728 + $0x30] sm:$0xff]
    %v2736 = vld [vmem:[%s2728 + $0x38] sm:$0xff]
    %v2738 = vsel %vm205, %v2722, 0
    %v2741 = vsel %vm205, %v2723, 0
    %v2744 = vsel %vm205, %v2724, 0
    %v2747 = vsel %vm205, %v2725, 0
    %v2750 = vsel %vm205, %v2726, 0
    %v2753 = vsel %vm205, %v2727, 0
    %2755 = vmatprep.subr.mxu0 0.0
    %2756 = vmatpush1.msra.mxu0 0.0
    %2757 = vmatprep.subr.mxu0 0.0
    %2758 = vmatpush1.msra.mxu0 0.0
    %2759 = vmatprep.subr.mxu0 0.0
    %2760 = vmatpush1.msra.mxu0 0.0
    %2761 = vmatprep.subr.mxu0 0.0
    %2762 = vmatpush1.msra.mxu0 0.0
    %2763 = vmatprep.subr.mxu0 0.0
    %2764 = vmatpush1.msra.mxu0 0.0
    %2765 = vmatprep.subr.mxu0 0.0
    %2766 = vmatpush1.msra.mxu0 0.0
    %2767 = vmatprep.subr.mxu0 0.0
    %2768 = vmatpush1.msra.mxu0 0.0
    %2769 = vmatprep.subr.mxu0 0.0
    %2770 = vmatpush1.msra.mxu0 0.0
    %2771 = vmatprep.subr.mxu0 0.0
    %2772 = vmatpush1.msra.mxu0 0.0
    %2773 = vmatprep.subr.mxu0 0.0
    %2774 = vmatpush1.msra.mxu0 0.0
    %2775 = vmatprep.subr.mxu0 0.0
    %2776 = vmatpush1.msra.mxu0 0.0
    %2777 = vmatprep.subr.mxu0 0.0
    %2778 = vmatpush1.msra.mxu0 0.0
    %2779 = vmatprep.subr.mxu0 %v2736
    %2780 = vmatpush1.msra.mxu0 %v2735
    %2781 = vmatprep.subr.mxu0 %v2734
    %2782 = vmatpush1.msra.mxu0 %v2733
    %2783 = vmatprep.subr.mxu0 %v2732
    %2784 = vmatpush1.msra.mxu0 %v2731
    %2785 = vmatprep.subr.mxu0 %v2730
    %2786 = vmatpush1.msra.mxu0 %v2729
    %2787 = vmatprep.subr.mxu0 0.0
    %2788 = vmatpush2.msra.mxu0 0.0
    %2789 = vmatprep.subr.mxu0 0.0
    %2790 = vmatpush2.msra.mxu0 0.0
    %2791 = vmatprep.subr.mxu0 0.0
    %2792 = vmatpush2.msra.mxu0 0.0
    %2793 = vmatprep.subr.mxu0 0.0
    %2794 = vmatpush2.msra.mxu0 0.0
    %2795 = vmatprep.subr.mxu0 0.0
    %2796 = vmatpush2.msra.mxu0 0.0
    %2797 = vmatprep.subr.mxu0 0.0
    %2798 = vmatpush2.msra.mxu0 0.0
    %2799 = vmatprep.subr.mxu0 0.0
    %2800 = vmatpush2.msra.mxu0 0.0
    %2801 = vmatprep.subr.mxu0 0.0
    %2802 = vmatpush2.msra.mxu0 0.0
    %2803 = vmatprep.subr.mxu0 0.0
    %2804 = vmatpush2.msra.mxu0 0.0
    %2805 = vmatprep.subr.mxu0 0.0
    %2806 = vmatpush2.msra.mxu0 0.0
    %2807 = vmatprep.subr.mxu0 0.0
    %2808 = vmatpush2.msra.mxu0 0.0
    %2809 = vmatprep.subr.mxu0 0.0
    %2810 = vmatpush2.msra.mxu0 0.0
    %2811 = vmatprep.subr.mxu0 0.0
    %2812 = vmatpush2.msra.mxu0 0.0
    %2813 = vmatprep.subr.mxu0 0.0
    %2814 = vmatpush2.msra.mxu0 0.0
    %2815 = vmatprep.subr.mxu0 0.0
    %2816 = vmatpush2.msra.mxu0 0.0
    %2817 = vmatprep.subr.mxu0 0.0
    %2818 = vmatpush2.msra.mxu0 0.0
    %2819 = vmatprep.mubr.f32.mxu0 0.0
    %2820 = vmatmul.mubr.f32.gmra.mxu0 %v2738
    %v2821 = vpop.f32.mrf.mxu0
    %v2822 = vadd.f32 0.0, %v2821
    %v2823 = vpop.f32.mrf.mxu0
    %v2824 = vadd.f32 0.0, %v2823
    %2825 = vmatprep.mubr.f32.mxu0 0.0
    %2826 = vmatmul.mubr.f32.gmra.mxu0 %v2741
    %v2827 = vpop.f32.mrf.mxu0
    %v2828 = vadd.f32 0.0, %v2827
    %v2829 = vpop.f32.mrf.mxu0
    %v2830 = vadd.f32 0.0, %v2829
    %2831 = vmatprep.mubr.f32.mxu0 0.0
    %2832 = vmatmul.mubr.f32.gmra.mxu0 %v2744
    %v2833 = vpop.f32.mrf.mxu0
    %v2834 = vadd.f32 0.0, %v2833
    %v2835 = vpop.f32.mrf.mxu0
    %v2836 = vadd.f32 0.0, %v2835
    %2837 = vmatprep.mubr.f32.mxu0 0.0
    %2838 = vmatmul.mubr.f32.gmra.mxu0 %v2747
    %v2839 = vpop.f32.mrf.mxu0
    %v2840 = vadd.f32 0.0, %v2839
    %v2841 = vpop.f32.mrf.mxu0
    %v2842 = vadd.f32 0.0, %v2841
    %2843 = vmatprep.mubr.f32.mxu0 0.0
    %2844 = vmatmul.mubr.f32.gmra.mxu0 %v2750
    %v2845 = vpop.f32.mrf.mxu0
    %v2846 = vadd.f32 0.0, %v2845
    %v2847 = vpop.f32.mrf.mxu0
    %v2848 = vadd.f32 0.0, %v2847
    %2849 = vmatprep.mubr.f32.mxu0 0.0
    %2850 = vmatmul.mubr.f32.gmra.mxu0 %v2753
    %v2851 = vpop.f32.mrf.mxu0
    %v2852 = vadd.f32 0.0, %v2851
    %v2853 = vpop.f32.mrf.mxu0
    %v2854 = vadd.f32 0.0, %v2853
    %2855 = vdwg.mxu0
    %2859 = vrot.lane.b32.xlu0 %v2822, 96
    %v2860 = vpop.permute.xlu0 %2859
    %2861 = vrot.lane.b32.xlu0 %v2828, 96
    %v2862 = vpop.permute.xlu0 %2861
    %2863 = vrot.lane.b32.xlu0 %v2834, 96
    %v2864 = vpop.permute.xlu0 %2863
    %v2865 = vsel %vm331, %v2822, 0
    %v2867 = vsel %vm331, %v2828, 0
    %v2869 = vsel %vm331, %v2834, 0
    %v2871 = vsel %vm331, %v2860, 0
    %v2873 = vsel %vm331, %v2862, 0
    %v2875 = vsel %vm331, %v2864, 0
    %2877 = vmatprep.subr.mxu0 0.0
    %2878 = vmatpush1.xpose.msra.mxu0 0.0
    %2879 = vmatprep.subr.mxu0 0.0
    %2880 = vmatpush1.xpose.msra.mxu0 0.0
    %2881 = vmatprep.subr.mxu0 0.0
    %2882 = vmatpush1.xpose.msra.mxu0 0.0
    %2883 = vmatprep.subr.mxu0 0.0
    %2884 = vmatpush1.xpose.msra.mxu0 0.0
    %2885 = vmatprep.subr.mxu0 0.0
    %2886 = vmatpush1.xpose.msra.mxu0 0.0
    %2887 = vmatprep.subr.mxu0 0.0
    %2888 = vmatpush1.xpose.msra.mxu0 0.0
    %2889 = vmatprep.subr.mxu0 0.0
    %2890 = vmatpush1.xpose.msra.mxu0 0.0
    %2891 = vmatprep.subr.mxu0 0.0
    %2892 = vmatpush1.xpose.msra.mxu0 0.0
    %2893 = vmatprep.subr.mxu0 0.0
    %2894 = vmatpush1.xpose.msra.mxu0 0.0
    %2895 = vmatprep.subr.mxu0 0.0
    %2896 = vmatpush1.xpose.msra.mxu0 0.0
    %2897 = vmatprep.subr.mxu0 0.0
    %2898 = vmatpush1.xpose.msra.mxu0 0.0
    %2899 = vmatprep.subr.mxu0 0.0
    %2900 = vmatpush1.xpose.msra.mxu0 0.0
    %2901 = vmatprep.subr.mxu0 0.0
    %2902 = vmatpush1.xpose.msra.mxu0 0.0
    %2903 = vmatprep.subr.mxu0 0.0
    %2904 = vmatpush1.xpose.msra.mxu0 %v2875
    %2905 = vmatprep.subr.mxu0 0.0
    %2906 = vmatpush1.xpose.msra.mxu0 %v2873
    %2907 = vmatprep.subr.mxu0 0.0
    %2908 = vmatpush1.xpose.msra.mxu0 %v2871
    %2909 = vmatprep.subr.mxu0 0.0
    %2910 = vmatpush2.xpose.msra.mxu0 0.0
    %2911 = vmatprep.subr.mxu0 0.0
    %2912 = vmatpush2.xpose.msra.mxu0 0.0
    %2913 = vmatprep.subr.mxu0 0.0
    %2914 = vmatpush2.xpose.msra.mxu0 0.0
    %2915 = vmatprep.subr.mxu0 0.0
    %2916 = vmatpush2.xpose.msra.mxu0 0.0
    %2917 = vmatprep.subr.mxu0 0.0
    %2918 = vmatpush2.xpose.msra.mxu0 0.0
    %2919 = vmatprep.subr.mxu0 0.0
    %2920 = vmatpush2.xpose.msra.mxu0 0.0
    %2921 = vmatprep.subr.mxu0 0.0
    %2922 = vmatpush2.xpose.msra.mxu0 0.0
    %2923 = vmatprep.subr.mxu0 0.0
    %2924 = vmatpush2.xpose.msra.mxu0 0.0
    %2925 = vmatprep.subr.mxu0 0.0
    %2926 = vmatpush2.xpose.msra.mxu0 0.0
    %2927 = vmatprep.subr.mxu0 0.0
    %2928 = vmatpush2.xpose.msra.mxu0 0.0
    %2929 = vmatprep.subr.mxu0 0.0
    %2930 = vmatpush2.xpose.msra.mxu0 0.0
    %2931 = vmatprep.subr.mxu0 0.0
    %2932 = vmatpush2.xpose.msra.mxu0 0.0
    %2933 = vmatprep.subr.mxu0 0.0
    %2934 = vmatpush2.xpose.msra.mxu0 0.0
    %2935 = vmatprep.subr.mxu0 0.0
    %2936 = vmatpush2.xpose.msra.mxu0 0.0
    %2937 = vmatprep.subr.mxu0 0.0
    %2938 = vmatpush2.xpose.msra.mxu0 0.0
    %2939 = vmatprep.subr.mxu0 0.0
    %2940 = vmatpush2.xpose.msra.mxu0 0.0
    %2941 = vmatprep.mubr.f32.mxu0 0.0
    %2942 = vmatmul.mubr.f32.gmra.mxu0 %v2865
    %v2943 = vpop.f32.mrf.mxu0
    %v2944 = vadd.f32 0.0, %v2943
    %v2945 = vpop.f32.mrf.mxu0
    %2946 = vmatprep.mubr.f32.mxu0 0.0
    %2947 = vmatmul.mubr.f32.gmra.mxu0 %v2867
    %v2948 = vpop.f32.mrf.mxu0
    %v2949 = vadd.f32 0.0, %v2948
    %v2950 = vpop.f32.mrf.mxu0
    %2951 = vmatprep.mubr.f32.mxu0 0.0
    %2952 = vmatmul.mubr.f32.gmra.mxu0 %v2869
    %v2953 = vpop.f32.mrf.mxu0
    %v2954 = vadd.f32 0.0, %v2953
    %v2955 = vpop.f32.mrf.mxu0
    %2956 = vdwg.mxu0
    %v2957 = vmul.f32 %v2944, 0.17677669
    %v2958 = vmul.f32 %v2949, 0.17677669
    %v2959 = vmul.f32 %v2954, 0.17677669
    %v2960 = vadd.f32 %v2957, %v196
    %v2961 = vadd.f32 %v2958, %v196
    %v2962 = vadd.f32 %v2959, %v196
    %v2963 = vsel %vm430, %v2960, -inf
    %2964 = vmax.xlane.f32.xlu0 %v2963
    %v2965 = vpop.xlane.xlu0 %2964
    %v2966 = vsel %vm430, %v2961, -inf
    %2967 = vmax.xlane.f32.xlu0 %v2966
    %v2968 = vpop.xlane.xlu0 %2967
    %v2969 = vsel %vm430, %v2962, -inf
    %2970 = vmax.xlane.f32.xlu0 %v2969
    %v2971 = vpop.xlane.xlu0 %2970
    %v2972 = vsub.f32 %v2960, %v2965
    %v2973 = vsub.f32 %v2961, %v2968
    %v2974 = vsub.f32 %v2962, %v2971
    %v2975 = vmul.f32 %v2972, 1.442695
    %v2976 = vpow.pop %v2975
    %v2977 = vmul.f32 %v2973, 1.442695
    %v2978 = vpow.pop %v2977
    %v2979 = vmul.f32 %v2974, 1.442695
    %v2980 = vpow.pop %v2979
    %v2981 = vsel %vm430, %v2976, 0.0
    %2982 = vadd.xlane.f32.xlu0 %v2981
    %v2983 = vpop.xlane.xlu0 %2982
    %v2984 = vsel %vm430, %v2978, 0.0
    %2985 = vadd.xlane.f32.xlu0 %v2984
    %v2986 = vpop.xlane.xlu0 %2985
    %v2987 = vsel %vm430, %v2980, 0.0
    %2988 = vadd.xlane.f32.xlu0 %v2987
    %v2989 = vpop.xlane.xlu0 %2988
    %v2990 = vrcp.pop %v2983
    %v2991 = vrcp.pop %v2986
    %v2992 = vrcp.pop %v2989
    %v2993 = vmul.f32 %v2976, %v2990
    %v2994 = vmul.f32 %v2978, %v2991
    %v2995 = vmul.f32 %v2980, %v2992
    %2996 = vrot.lane.b32.xlu0 %v2822, 120
    %v2997 = vpop.permute.xlu0 %2996
    %2998 = vrot.lane.b32.xlu0 %v2828, 120
    %v2999 = vpop.permute.xlu0 %2998
    %3000 = vrot.lane.b32.xlu0 %v2834, 120
    %v3001 = vpop.permute.xlu0 %3000
    %3002 = vrot.lane.b32.xlu0 %v2822, 88
    %v3003 = vpop.permute.xlu0 %3002
    %3004 = vrot.lane.b32.xlu0 %v2828, 88
    %v3005 = vpop.permute.xlu0 %3004
    %3006 = vrot.lane.b32.xlu0 %v2834, 88
    %v3007 = vpop.permute.xlu0 %3006
    %v3008 = vsel %vm331, %v2997, 0
    %v3010 = vsel %vm331, %v2999, 0
    %v3012 = vsel %vm331, %v3001, 0
    %v3014 = vsel %vm331, %v3003, 0
    %v3016 = vsel %vm331, %v3005, 0
    %v3018 = vsel %vm331, %v3007, 0
    %3020 = vmatprep.subr.mxu0 0.0
    %3021 = vmatpush1.xpose.msra.mxu0 0.0
    %3022 = vmatprep.subr.mxu0 0.0
    %3023 = vmatpush1.xpose.msra.mxu0 0.0
    %3024 = vmatprep.subr.mxu0 0.0
    %3025 = vmatpush1.xpose.msra.mxu0 0.0
    %3026 = vmatprep.subr.mxu0 0.0
    %3027 = vmatpush1.xpose.msra.mxu0 0.0
    %3028 = vmatprep.subr.mxu0 0.0
    %3029 = vmatpush1.xpose.msra.mxu0 0.0
    %3030 = vmatprep.subr.mxu0 0.0
    %3031 = vmatpush1.xpose.msra.mxu0 0.0
    %3032 = vmatprep.subr.mxu0 0.0
    %3033 = vmatpush1.xpose.msra.mxu0 0.0
    %3034 = vmatprep.subr.mxu0 0.0
    %3035 = vmatpush1.xpose.msra.mxu0 0.0
    %3036 = vmatprep.subr.mxu0 0.0
    %3037 = vmatpush1.xpose.msra.mxu0 0.0
    %3038 = vmatprep.subr.mxu0 0.0
    %3039 = vmatpush1.xpose.msra.mxu0 0.0
    %3040 = vmatprep.subr.mxu0 0.0
    %3041 = vmatpush1.xpose.msra.mxu0 0.0
    %3042 = vmatprep.subr.mxu0 0.0
    %3043 = vmatpush1.xpose.msra.mxu0 0.0
    %3044 = vmatprep.subr.mxu0 0.0
    %3045 = vmatpush1.xpose.msra.mxu0 0.0
    %3046 = vmatprep.subr.mxu0 0.0
    %3047 = vmatpush1.xpose.msra.mxu0 %v3018
    %3048 = vmatprep.subr.mxu0 0.0
    %3049 = vmatpush1.xpose.msra.mxu0 %v3016
    %3050 = vmatprep.subr.mxu0 0.0
    %3051 = vmatpush1.xpose.msra.mxu0 %v3014
    %3052 = vmatprep.subr.mxu0 0.0
    %3053 = vmatpush2.xpose.msra.mxu0 0.0
    %3054 = vmatprep.subr.mxu0 0.0
    %3055 = vmatpush2.xpose.msra.mxu0 0.0
    %3056 = vmatprep.subr.mxu0 0.0
    %3057 = vmatpush2.xpose.msra.mxu0 0.0
    %3058 = vmatprep.subr.mxu0 0.0
    %3059 = vmatpush2.xpose.msra.mxu0 0.0
    %3060 = vmatprep.subr.mxu0 0.0
    %3061 = vmatpush2.xpose.msra.mxu0 0.0
    %3062 = vmatprep.subr.mxu0 0.0
    %3063 = vmatpush2.xpose.msra.mxu0 0.0
    %3064 = vmatprep.subr.mxu0 0.0
    %3065 = vmatpush2.xpose.msra.mxu0 0.0
    %3066 = vmatprep.subr.mxu0 0.0
    %3067 = vmatpush2.xpose.msra.mxu0 0.0
    %3068 = vmatprep.subr.mxu0 0.0
    %3069 = vmatpush2.xpose.msra.mxu0 0.0
    %3070 = vmatprep.subr.mxu0 0.0
    %3071 = vmatpush2.xpose.msra.mxu0 0.0
    %3072 = vmatprep.subr.mxu0 0.0
    %3073 = vmatpush2.xpose.msra.mxu0 0.0
    %3074 = vmatprep.subr.mxu0 0.0
    %3075 = vmatpush2.xpose.msra.mxu0 0.0
    %3076 = vmatprep.subr.mxu0 0.0
    %3077 = vmatpush2.xpose.msra.mxu0 0.0
    %3078 = vmatprep.subr.mxu0 0.0
    %3079 = vmatpush2.xpose.msra.mxu0 0.0
    %3080 = vmatprep.subr.mxu0 0.0
    %3081 = vmatpush2.xpose.msra.mxu0 0.0
    %3082 = vmatprep.subr.mxu0 0.0
    %3083 = vmatpush2.xpose.msra.mxu0 0.0
    %3084 = vmatprep.mubr.f32.mxu0 0.0
    %3085 = vmatmul.mubr.f32.gmra.mxu0 %v3008
    %v3086 = vpop.f32.mrf.mxu0
    %v3087 = vadd.f32 0.0, %v3086
    %v3088 = vpop.f32.mrf.mxu0
    %3089 = vmatprep.mubr.f32.mxu0 0.0
    %3090 = vmatmul.mubr.f32.gmra.mxu0 %v3010
    %v3091 = vpop.f32.mrf.mxu0
    %v3092 = vadd.f32 0.0, %v3091
    %v3093 = vpop.f32.mrf.mxu0
    %3094 = vmatprep.mubr.f32.mxu0 0.0
    %3095 = vmatmul.mubr.f32.gmra.mxu0 %v3012
    %v3096 = vpop.f32.mrf.mxu0
    %v3097 = vadd.f32 0.0, %v3096
    %v3098 = vpop.f32.mrf.mxu0
    %3099 = vdwg.mxu0
    %v3100 = vmul.f32 %v3087, 0.17677669
    %v3101 = vmul.f32 %v3092, 0.17677669
    %v3102 = vmul.f32 %v3097, 0.17677669
    %v3103 = vadd.f32 %v3100, %v196
    %v3104 = vadd.f32 %v3101, %v196
    %v3105 = vadd.f32 %v3102, %v196
    %v3106 = vsel %vm430, %v3103, -inf
    %3107 = vmax.xlane.f32.xlu0 %v3106
    %v3108 = vpop.xlane.xlu0 %3107
    %v3109 = vsel %vm430, %v3104, -inf
    %3110 = vmax.xlane.f32.xlu0 %v3109
    %v3111 = vpop.xlane.xlu0 %3110
    %v3112 = vsel %vm430, %v3105, -inf
    %3113 = vmax.xlane.f32.xlu0 %v3112
    %v3114 = vpop.xlane.xlu0 %3113
    %v3115 = vsub.f32 %v3103, %v3108
    %v3116 = vsub.f32 %v3104, %v3111
    %v3117 = vsub.f32 %v3105, %v3114
    %v3118 = vmul.f32 %v3115, 1.442695
    %v3119 = vpow.pop %v3118
    %v3120 = vmul.f32 %v3116, 1.442695
    %v3121 = vpow.pop %v3120
    %v3122 = vmul.f32 %v3117, 1.442695
    %v3123 = vpow.pop %v3122
    %v3124 = vsel %vm430, %v3119, 0.0
    %3125 = vadd.xlane.f32.xlu0 %v3124
    %v3126 = vpop.xlane.xlu0 %3125
    %v3127 = vsel %vm430, %v3121, 0.0
    %3128 = vadd.xlane.f32.xlu0 %v3127
    %v3129 = vpop.xlane.xlu0 %3128
    %v3130 = vsel %vm430, %v3123, 0.0
    %3131 = vadd.xlane.f32.xlu0 %v3130
    %v3132 = vpop.xlane.xlu0 %3131
    %v3133 = vrcp.pop %v3126
    %v3134 = vrcp.pop %v3129
    %v3135 = vrcp.pop %v3132
    %v3136 = vmul.f32 %v3119, %v3133
    %v3137 = vmul.f32 %v3121, %v3134
    %v3138 = vmul.f32 %v3123, %v3135
    %3139 = vrot.lane.b32.xlu0 %v2822, 32
    %v3140 = vpop.permute.xlu0 %3139
    %3141 = vrot.lane.b32.xlu0 %v2828, 32
    %v3142 = vpop.permute.xlu0 %3141
    %3143 = vrot.lane.b32.xlu0 %v2834, 32
    %v3144 = vpop.permute.xlu0 %3143
    %v3149 = vsel %vm430, %v3136, 0
    %v3152 = vsel %vm430, %v3137, 0
    %v3155 = vsel %vm430, %v3138, 0
    %3157 = vmatprep.subr.mxu0 0.0
    %3158 = vmatpush1.msra.mxu0 0.0
    %3159 = vmatprep.subr.mxu0 0.0
    %3160 = vmatpush1.msra.mxu0 0.0
    %3161 = vmatprep.subr.mxu0 0.0
    %3162 = vmatpush1.msra.mxu0 0.0
    %3163 = vmatprep.subr.mxu0 0.0
    %3164 = vmatpush1.msra.mxu0 0.0
    %3165 = vmatprep.subr.mxu0 0.0
    %3166 = vmatpush1.msra.mxu0 0.0
    %3167 = vmatprep.subr.mxu0 0.0
    %3168 = vmatpush1.msra.mxu0 0.0
    %3169 = vmatprep.subr.mxu0 0.0
    %3170 = vmatpush1.msra.mxu0 0.0
    %3171 = vmatprep.subr.mxu0 0.0
    %3172 = vmatpush1.msra.mxu0 0.0
    %3173 = vmatprep.subr.mxu0 0.0
    %3174 = vmatpush1.msra.mxu0 0.0
    %3175 = vmatprep.subr.mxu0 0.0
    %3176 = vmatpush1.msra.mxu0 0.0
    %3177 = vmatprep.subr.mxu0 0.0
    %3178 = vmatpush1.msra.mxu0 0.0
    %3179 = vmatprep.subr.mxu0 0.0
    %3180 = vmatpush1.msra.mxu0 0.0
    %3181 = vmatprep.subr.mxu0 0.0
    %3182 = vmatpush1.msra.mxu0 0.0
    %3183 = vmatprep.subr.mxu0 0.0
    %3184 = vmatpush1.msra.mxu0 %v3144
    %3185 = vmatprep.subr.mxu0 0.0
    %3186 = vmatpush1.msra.mxu0 %v3142
    %3187 = vmatprep.subr.mxu0 0.0
    %3188 = vmatpush1.msra.mxu0 %v3140
    %3189 = vmatprep.subr.mxu0 0.0
    %3190 = vmatpush2.msra.mxu0 0.0
    %3191 = vmatprep.subr.mxu0 0.0
    %3192 = vmatpush2.msra.mxu0 0.0
    %3193 = vmatprep.subr.mxu0 0.0
    %3194 = vmatpush2.msra.mxu0 0.0
    %3195 = vmatprep.subr.mxu0 0.0
    %3196 = vmatpush2.msra.mxu0 0.0
    %3197 = vmatprep.subr.mxu0 0.0
    %3198 = vmatpush2.msra.mxu0 0.0
    %3199 = vmatprep.subr.mxu0 0.0
    %3200 = vmatpush2.msra.mxu0 0.0
    %3201 = vmatprep.subr.mxu0 0.0
    %3202 = vmatpush2.msra.mxu0 0.0
    %3203 = vmatprep.subr.mxu0 0.0
    %3204 = vmatpush2.msra.mxu0 0.0
    %3205 = vmatprep.subr.mxu0 0.0
    %3206 = vmatpush2.msra.mxu0 0.0
    %3207 = vmatprep.subr.mxu0 0.0
    %3208 = vmatpush2.msra.mxu0 0.0
    %3209 = vmatprep.subr.mxu0 0.0
    %3210 = vmatpush2.msra.mxu0 0.0
    %3211 = vmatprep.subr.mxu0 0.0
    %3212 = vmatpush2.msra.mxu0 0.0
    %3213 = vmatprep.subr.mxu0 0.0
    %3214 = vmatpush2.msra.mxu0 0.0
    %3215 = vmatprep.subr.mxu0 0.0
    %3216 = vmatpush2.msra.mxu0 0.0
    %3217 = vmatprep.subr.mxu0 0.0
    %3218 = vmatpush2.msra.mxu0 0.0
    %3219 = vmatprep.subr.mxu0 0.0
    %3220 = vmatpush2.msra.mxu0 0.0
    %3221 = vmatprep.mubr.f32.mxu0 0.0
    %3222 = vmatmul.mubr.f32.gmra.mxu0 %v3149
    %v3223 = vpop.f32.mrf.mxu0
    %v3224 = vadd.f32 0.0, %v3223
    %v3225 = vpop.f32.mrf.mxu0
    %3226 = vmatprep.mubr.f32.mxu0 0.0
    %3227 = vmatmul.mubr.f32.gmra.mxu0 %v3152
    %v3228 = vpop.f32.mrf.mxu0
    %v3229 = vadd.f32 0.0, %v3228
    %v3230 = vpop.f32.mrf.mxu0
    %3231 = vmatprep.mubr.f32.mxu0 0.0
    %3232 = vmatmul.mubr.f32.gmra.mxu0 %v3155
    %v3233 = vpop.f32.mrf.mxu0
    %v3234 = vadd.f32 0.0, %v3233
    %v3235 = vpop.f32.mrf.mxu0
    %3236 = vdwg.mxu0
    %3237 = vrot.lane.b32.xlu0 %v2822, 64
    %v3238 = vpop.permute.xlu0 %3237
    %3239 = vrot.lane.b32.xlu0 %v2828, 64
    %v3240 = vpop.permute.xlu0 %3239
    %3241 = vrot.lane.b32.xlu0 %v2834, 64
    %v3242 = vpop.permute.xlu0 %3241
    %v3247 = vsel %vm430, %v2993, 0
    %v3250 = vsel %vm430, %v2994, 0
    %v3253 = vsel %vm430, %v2995, 0
    %3255 = vmatprep.subr.mxu0 0.0
    %3256 = vmatpush1.msra.mxu0 0.0
    %3257 = vmatprep.subr.mxu0 0.0
    %3258 = vmatpush1.msra.mxu0 0.0
    %3259 = vmatprep.subr.mxu0 0.0
    %3260 = vmatpush1.msra.mxu0 0.0
    %3261 = vmatprep.subr.mxu0 0.0
    %3262 = vmatpush1.msra.mxu0 0.0
    %3263 = vmatprep.subr.mxu0 0.0
    %3264 = vmatpush1.msra.mxu0 0.0
    %3265 = vmatprep.subr.mxu0 0.0
    %3266 = vmatpush1.msra.mxu0 0.0
    %3267 = vmatprep.subr.mxu0 0.0
    %3268 = vmatpush1.msra.mxu0 0.0
    %3269 = vmatprep.subr.mxu0 0.0
    %3270 = vmatpush1.msra.mxu0 0.0
    %3271 = vmatprep.subr.mxu0 0.0
    %3272 = vmatpush1.msra.mxu0 0.0
    %3273 = vmatprep.subr.mxu0 0.0
    %3274 = vmatpush1.msra.mxu0 0.0
    %3275 = vmatprep.subr.mxu0 0.0
    %3276 = vmatpush1.msra.mxu0 0.0
    %3277 = vmatprep.subr.mxu0 0.0
    %3278 = vmatpush1.msra.mxu0 0.0
    %3279 = vmatprep.subr.mxu0 0.0
    %3280 = vmatpush1.msra.mxu0 0.0
    %3281 = vmatprep.subr.mxu0 0.0
    %3282 = vmatpush1.msra.mxu0 %v3242
    %3283 = vmatprep.subr.mxu0 0.0
    %3284 = vmatpush1.msra.mxu0 %v3240
    %3285 = vmatprep.subr.mxu0 0.0
    %3286 = vmatpush1.msra.mxu0 %v3238
    %3287 = vmatprep.subr.mxu0 0.0
    %3288 = vmatpush2.msra.mxu0 0.0
    %3289 = vmatprep.subr.mxu0 0.0
    %3290 = vmatpush2.msra.mxu0 0.0
    %3291 = vmatprep.subr.mxu0 0.0
    %3292 = vmatpush2.msra.mxu0 0.0
    %3293 = vmatprep.subr.mxu0 0.0
    %3294 = vmatpush2.msra.mxu0 0.0
    %3295 = vmatprep.subr.mxu0 0.0
    %3296 = vmatpush2.msra.mxu0 0.0
    %3297 = vmatprep.subr.mxu0 0.0
    %3298 = vmatpush2.msra.mxu0 0.0
    %3299 = vmatprep.subr.mxu0 0.0
    %3300 = vmatpush2.msra.mxu0 0.0
    %3301 = vmatprep.subr.mxu0 0.0
    %3302 = vmatpush2.msra.mxu0 0.0
    %3303 = vmatprep.subr.mxu0 0.0
    %3304 = vmatpush2.msra.mxu0 0.0
    %3305 = vmatprep.subr.mxu0 0.0
    %3306 = vmatpush2.msra.mxu0 0.0
    %3307 = vmatprep.subr.mxu0 0.0
    %3308 = vmatpush2.msra.mxu0 0.0
    %3309 = vmatprep.subr.mxu0 0.0
    %3310 = vmatpush2.msra.mxu0 0.0
    %3311 = vmatprep.subr.mxu0 0.0
    %3312 = vmatpush2.msra.mxu0 0.0
    %3313 = vmatprep.subr.mxu0 0.0
    %3314 = vmatpush2.msra.mxu0 0.0
    %3315 = vmatprep.subr.mxu0 0.0
    %3316 = vmatpush2.msra.mxu0 0.0
    %3317 = vmatprep.subr.mxu0 0.0
    %3318 = vmatpush2.msra.mxu0 0.0
    %3319 = vmatprep.mubr.f32.mxu0 0.0
    %3320 = vmatmul.mubr.f32.gmra.mxu0 %v3247
    %v3321 = vpop.f32.mrf.mxu0
    %v3322 = vadd.f32 %v3224, %v3321
    %v3323 = vpop.f32.mrf.mxu0
    %3324 = vmatprep.mubr.f32.mxu0 0.0
    %3325 = vmatmul.mubr.f32.gmra.mxu0 %v3250
    %v3326 = vpop.f32.mrf.mxu0
    %v3327 = vadd.f32 %v3229, %v3326
    %v3328 = vpop.f32.mrf.mxu0
    %3329 = vmatprep.mubr.f32.mxu0 0.0
    %3330 = vmatmul.mubr.f32.gmra.mxu0 %v3253
    %v3331 = vpop.f32.mrf.mxu0
    %v3332 = vadd.f32 %v3234, %v3331
    %v3333 = vpop.f32.mrf.mxu0
    %3334 = vdwg.mxu0
    %3335 = vrot.lane.b32.xlu0 %v2822, 112
    %v3336 = vpop.permute.xlu0 %3335
    %3337 = vrot.lane.b32.xlu0 %v2828, 112
    %v3338 = vpop.permute.xlu0 %3337
    %3339 = vrot.lane.b32.xlu0 %v2834, 112
    %v3340 = vpop.permute.xlu0 %3339
    %3341 = vrot.lane.b32.xlu0 %v2822, 80
    %v3342 = vpop.permute.xlu0 %3341
    %3343 = vrot.lane.b32.xlu0 %v2828, 80
    %v3344 = vpop.permute.xlu0 %3343
    %3345 = vrot.lane.b32.xlu0 %v2834, 80
    %v3346 = vpop.permute.xlu0 %3345
    %v3347 = vsel %vm331, %v3336, 0
    %v3349 = vsel %vm331, %v3338, 0
    %v3351 = vsel %vm331, %v3340, 0
    %v3353 = vsel %vm331, %v3342, 0
    %v3355 = vsel %vm331, %v3344, 0
    %v3357 = vsel %vm331, %v3346, 0
    %3359 = vmatprep.subr.mxu0 0.0
    %3360 = vmatpush1.xpose.msra.mxu0 0.0
    %3361 = vmatprep.subr.mxu0 0.0
    %3362 = vmatpush1.xpose.msra.mxu0 0.0
    %3363 = vmatprep.subr.mxu0 0.0
    %3364 = vmatpush1.xpose.msra.mxu0 0.0
    %3365 = vmatprep.subr.mxu0 0.0
    %3366 = vmatpush1.xpose.msra.mxu0 0.0
    %3367 = vmatprep.subr.mxu0 0.0
    %3368 = vmatpush1.xpose.msra.mxu0 0.0
    %3369 = vmatprep.subr.mxu0 0.0
    %3370 = vmatpush1.xpose.msra.mxu0 0.0
    %3371 = vmatprep.subr.mxu0 0.0
    %3372 = vmatpush1.xpose.msra.mxu0 0.0
    %3373 = vmatprep.subr.mxu0 0.0
    %3374 = vmatpush1.xpose.msra.mxu0 0.0
    %3375 = vmatprep.subr.mxu0 0.0
    %3376 = vmatpush1.xpose.msra.mxu0 0.0
    %3377 = vmatprep.subr.mxu0 0.0
    %3378 = vmatpush1.xpose.msra.mxu0 0.0
    %3379 = vmatprep.subr.mxu0 0.0
    %3380 = vmatpush1.xpose.msra.mxu0 0.0
    %3381 = vmatprep.subr.mxu0 0.0
    %3382 = vmatpush1.xpose.msra.mxu0 0.0
    %3383 = vmatprep.subr.mxu0 0.0
    %3384 = vmatpush1.xpose.msra.mxu0 0.0
    %3385 = vmatprep.subr.mxu0 0.0
    %3386 = vmatpush1.xpose.msra.mxu0 %v3357
    %3387 = vmatprep.subr.mxu0 0.0
    %3388 = vmatpush1.xpose.msra.mxu0 %v3355
    %3389 = vmatprep.subr.mxu0 0.0
    %3390 = vmatpush1.xpose.msra.mxu0 %v3353
    %3391 = vmatprep.subr.mxu0 0.0
    %3392 = vmatpush2.xpose.msra.mxu0 0.0
    %3393 = vmatprep.subr.mxu0 0.0
    %3394 = vmatpush2.xpose.msra.mxu0 0.0
    %3395 = vmatprep.subr.mxu0 0.0
    %3396 = vmatpush2.xpose.msra.mxu0 0.0
    %3397 = vmatprep.subr.mxu0 0.0
    %3398 = vmatpush2.xpose.msra.mxu0 0.0
    %3399 = vmatprep.subr.mxu0 0.0
    %3400 = vmatpush2.xpose.msra.mxu0 0.0
    %3401 = vmatprep.subr.mxu0 0.0
    %3402 = vmatpush2.xpose.msra.mxu0 0.0
    %3403 = vmatprep.subr.mxu0 0.0
    %3404 = vmatpush2.xpose.msra.mxu0 0.0
    %3405 = vmatprep.subr.mxu0 0.0
    %3406 = vmatpush2.xpose.msra.mxu0 0.0
    %3407 = vmatprep.subr.mxu0 0.0
    %3408 = vmatpush2.xpose.msra.mxu0 0.0
    %3409 = vmatprep.subr.mxu0 0.0
    %3410 = vmatpush2.xpose.msra.mxu0 0.0
    %3411 = vmatprep.subr.mxu0 0.0
    %3412 = vmatpush2.xpose.msra.mxu0 0.0
    %3413 = vmatprep.subr.mxu0 0.0
    %3414 = vmatpush2.xpose.msra.mxu0 0.0
    %3415 = vmatprep.subr.mxu0 0.0
    %3416 = vmatpush2.xpose.msra.mxu0 0.0
    %3417 = vmatprep.subr.mxu0 0.0
    %3418 = vmatpush2.xpose.msra.mxu0 0.0
    %3419 = vmatprep.subr.mxu0 0.0
    %3420 = vmatpush2.xpose.msra.mxu0 0.0
    %3421 = vmatprep.subr.mxu0 0.0
    %3422 = vmatpush2.xpose.msra.mxu0 0.0
    %3423 = vmatprep.mubr.f32.mxu0 0.0
    %3424 = vmatmul.mubr.f32.gmra.mxu0 %v3347
    %v3425 = vpop.f32.mrf.mxu0
    %v3426 = vadd.f32 0.0, %v3425
    %v3427 = vpop.f32.mrf.mxu0
    %3428 = vmatprep.mubr.f32.mxu0 0.0
    %3429 = vmatmul.mubr.f32.gmra.mxu0 %v3349
    %v3430 = vpop.f32.mrf.mxu0
    %v3431 = vadd.f32 0.0, %v3430
    %v3432 = vpop.f32.mrf.mxu0
    %3433 = vmatprep.mubr.f32.mxu0 0.0
    %3434 = vmatmul.mubr.f32.gmra.mxu0 %v3351
    %v3435 = vpop.f32.mrf.mxu0
    %v3436 = vadd.f32 0.0, %v3435
    %v3437 = vpop.f32.mrf.mxu0
    %3438 = vdwg.mxu0
    %v3439 = vmul.f32 %v3426, 0.17677669
    %v3440 = vmul.f32 %v3431, 0.17677669
    %v3441 = vmul.f32 %v3436, 0.17677669
    %v3442 = vadd.f32 %v3439, %v196
    %v3443 = vadd.f32 %v3440, %v196
    %v3444 = vadd.f32 %v3441, %v196
    %v3445 = vsel %vm430, %v3442, -inf
    %3446 = vmax.xlane.f32.xlu0 %v3445
    %v3447 = vpop.xlane.xlu0 %3446
    %v3448 = vsel %vm430, %v3443, -inf
    %3449 = vmax.xlane.f32.xlu0 %v3448
    %v3450 = vpop.xlane.xlu0 %3449
    %v3451 = vsel %vm430, %v3444, -inf
    %3452 = vmax.xlane.f32.xlu0 %v3451
    %v3453 = vpop.xlane.xlu0 %3452
    %v3454 = vsub.f32 %v3442, %v3447
    %v3455 = vsub.f32 %v3443, %v3450
    %v3456 = vsub.f32 %v3444, %v3453
    %v3457 = vmul.f32 %v3454, 1.442695
    %v3458 = vpow.pop %v3457
    %v3459 = vmul.f32 %v3455, 1.442695
    %v3460 = vpow.pop %v3459
    %v3461 = vmul.f32 %v3456, 1.442695
    %v3462 = vpow.pop %v3461
    %v3463 = vsel %vm430, %v3458, 0.0
    %3464 = vadd.xlane.f32.xlu0 %v3463
    %v3465 = vpop.xlane.xlu0 %3464
    %v3466 = vsel %vm430, %v3460, 0.0
    %3467 = vadd.xlane.f32.xlu0 %v3466
    %v3468 = vpop.xlane.xlu0 %3467
    %v3469 = vsel %vm430, %v3462, 0.0
    %3470 = vadd.xlane.f32.xlu0 %v3469
    %v3471 = vpop.xlane.xlu0 %3470
    %v3472 = vrcp.pop %v3465
    %v3473 = vrcp.pop %v3468
    %v3474 = vrcp.pop %v3471
    %v3475 = vmul.f32 %v3458, %v3472
    %v3476 = vmul.f32 %v3460, %v3473
    %v3477 = vmul.f32 %v3462, %v3474
    %v3479 = vsel %vm430, %v3475, 0
    %v3482 = vsel %vm430, %v3476, 0
    %v3485 = vsel %vm430, %v3477, 0
    %3487 = vmatprep.subr.mxu0 0.0
    %3488 = vmatpush1.msra.mxu0 0.0
    %3489 = vmatprep.subr.mxu0 0.0
    %3490 = vmatpush1.msra.mxu0 0.0
    %3491 = vmatprep.subr.mxu0 0.0
    %3492 = vmatpush1.msra.mxu0 0.0
    %3493 = vmatprep.subr.mxu0 0.0
    %3494 = vmatpush1.msra.mxu0 0.0
    %3495 = vmatprep.subr.mxu0 0.0
    %3496 = vmatpush1.msra.mxu0 0.0
    %3497 = vmatprep.subr.mxu0 0.0
    %3498 = vmatpush1.msra.mxu0 0.0
    %3499 = vmatprep.subr.mxu0 0.0
    %3500 = vmatpush1.msra.mxu0 0.0
    %3501 = vmatprep.subr.mxu0 0.0
    %3502 = vmatpush1.msra.mxu0 0.0
    %3503 = vmatprep.subr.mxu0 0.0
    %3504 = vmatpush1.msra.mxu0 0.0
    %3505 = vmatprep.subr.mxu0 0.0
    %3506 = vmatpush1.msra.mxu0 0.0
    %3507 = vmatprep.subr.mxu0 0.0
    %3508 = vmatpush1.msra.mxu0 0.0
    %3509 = vmatprep.subr.mxu0 0.0
    %3510 = vmatpush1.msra.mxu0 0.0
    %3511 = vmatprep.subr.mxu0 0.0
    %3512 = vmatpush1.msra.mxu0 0.0
    %3513 = vmatprep.subr.mxu0 0.0
    %3514 = vmatpush1.msra.mxu0 %v2836
    %3515 = vmatprep.subr.mxu0 0.0
    %3516 = vmatpush1.msra.mxu0 %v2830
    %3517 = vmatprep.subr.mxu0 0.0
    %3518 = vmatpush1.msra.mxu0 %v2824
    %3519 = vmatprep.subr.mxu0 0.0
    %3520 = vmatpush2.msra.mxu0 0.0
    %3521 = vmatprep.subr.mxu0 0.0
    %3522 = vmatpush2.msra.mxu0 0.0
    %3523 = vmatprep.subr.mxu0 0.0
    %3524 = vmatpush2.msra.mxu0 0.0
    %3525 = vmatprep.subr.mxu0 0.0
    %3526 = vmatpush2.msra.mxu0 0.0
    %3527 = vmatprep.subr.mxu0 0.0
    %3528 = vmatpush2.msra.mxu0 0.0
    %3529 = vmatprep.subr.mxu0 0.0
    %3530 = vmatpush2.msra.mxu0 0.0
    %3531 = vmatprep.subr.mxu0 0.0
    %3532 = vmatpush2.msra.mxu0 0.0
    %3533 = vmatprep.subr.mxu0 0.0
    %3534 = vmatpush2.msra.mxu0 0.0
    %3535 = vmatprep.subr.mxu0 0.0
    %3536 = vmatpush2.msra.mxu0 0.0
    %3537 = vmatprep.subr.mxu0 0.0
    %3538 = vmatpush2.msra.mxu0 0.0
    %3539 = vmatprep.subr.mxu0 0.0
    %3540 = vmatpush2.msra.mxu0 0.0
    %3541 = vmatprep.subr.mxu0 0.0
    %3542 = vmatpush2.msra.mxu0 0.0
    %3543 = vmatprep.subr.mxu0 0.0
    %3544 = vmatpush2.msra.mxu0 0.0
    %3545 = vmatprep.subr.mxu0 0.0
    %3546 = vmatpush2.msra.mxu0 0.0
    %3547 = vmatprep.subr.mxu0 0.0
    %3548 = vmatpush2.msra.mxu0 0.0
    %3549 = vmatprep.subr.mxu0 0.0
    %3550 = vmatpush2.msra.mxu0 0.0
    %3551 = vmatprep.mubr.f32.mxu0 0.0
    %3552 = vmatmul.mubr.f32.gmra.mxu0 %v3479
    %v3553 = vpop.f32.mrf.mxu0
    %v3554 = vadd.f32 0.0, %v3553
    %v3555 = vpop.f32.mrf.mxu0
    %3556 = vmatprep.mubr.f32.mxu0 0.0
    %3557 = vmatmul.mubr.f32.gmra.mxu0 %v3482
    %v3558 = vpop.f32.mrf.mxu0
    %v3559 = vadd.f32 0.0, %v3558
    %v3560 = vpop.f32.mrf.mxu0
    %3561 = vmatprep.mubr.f32.mxu0 0.0
    %3562 = vmatmul.mubr.f32.gmra.mxu0 %v3485
    %v3563 = vpop.f32.mrf.mxu0
    %v3564 = vadd.f32 0.0, %v3563
    %v3565 = vpop.f32.mrf.mxu0
    %3566 = vdwg.mxu0
    %v3567 = vadd.f32 %v3322, %v3554
    %v3568 = vadd.f32 %v3327, %v3559
    %v3569 = vadd.f32 %v3332, %v3564
    %3570 = vrot.lane.b32.xlu0 %v2822, 104
    %v3571 = vpop.permute.xlu0 %3570
    %3572 = vrot.lane.b32.xlu0 %v2828, 104
    %v3573 = vpop.permute.xlu0 %3572
    %3574 = vrot.lane.b32.xlu0 %v2834, 104
    %v3575 = vpop.permute.xlu0 %3574
    %3576 = vrot.lane.b32.xlu0 %v2822, 72
    %v3577 = vpop.permute.xlu0 %3576
    %3578 = vrot.lane.b32.xlu0 %v2828, 72
    %v3579 = vpop.permute.xlu0 %3578
    %3580 = vrot.lane.b32.xlu0 %v2834, 72
    %v3581 = vpop.permute.xlu0 %3580
    %v3582 = vsel %vm331, %v3571, 0
    %v3584 = vsel %vm331, %v3573, 0
    %v3586 = vsel %vm331, %v3575, 0
    %v3588 = vsel %vm331, %v3577, 0
    %v3590 = vsel %vm331, %v3579, 0
    %v3592 = vsel %vm331, %v3581, 0
    %3594 = vmatprep.subr.mxu0 0.0
    %3595 = vmatpush1.xpose.msra.mxu0 0.0
    %3596 = vmatprep.subr.mxu0 0.0
    %3597 = vmatpush1.xpose.msra.mxu0 0.0
    %3598 = vmatprep.subr.mxu0 0.0
    %3599 = vmatpush1.xpose.msra.mxu0 0.0
    %3600 = vmatprep.subr.mxu0 0.0
    %3601 = vmatpush1.xpose.msra.mxu0 0.0
    %3602 = vmatprep.subr.mxu0 0.0
    %3603 = vmatpush1.xpose.msra.mxu0 0.0
    %3604 = vmatprep.subr.mxu0 0.0
    %3605 = vmatpush1.xpose.msra.mxu0 0.0
    %3606 = vmatprep.subr.mxu0 0.0
    %3607 = vmatpush1.xpose.msra.mxu0 0.0
    %3608 = vmatprep.subr.mxu0 0.0
    %3609 = vmatpush1.xpose.msra.mxu0 0.0
    %3610 = vmatprep.subr.mxu0 0.0
    %3611 = vmatpush1.xpose.msra.mxu0 0.0
    %3612 = vmatprep.subr.mxu0 0.0
    %3613 = vmatpush1.xpose.msra.mxu0 0.0
    %3614 = vmatprep.subr.mxu0 0.0
    %3615 = vmatpush1.xpose.msra.mxu0 0.0
    %3616 = vmatprep.subr.mxu0 0.0
    %3617 = vmatpush1.xpose.msra.mxu0 0.0
    %3618 = vmatprep.subr.mxu0 0.0
    %3619 = vmatpush1.xpose.msra.mxu0 0.0
    %3620 = vmatprep.subr.mxu0 0.0
    %3621 = vmatpush1.xpose.msra.mxu0 %v3592
    %3622 = vmatprep.subr.mxu0 0.0
    %3623 = vmatpush1.xpose.msra.mxu0 %v3590
    %3624 = vmatprep.subr.mxu0 0.0
    %3625 = vmatpush1.xpose.msra.mxu0 %v3588
    %3626 = vmatprep.subr.mxu0 0.0
    %3627 = vmatpush2.xpose.msra.mxu0 0.0
    %3628 = vmatprep.subr.mxu0 0.0
    %3629 = vmatpush2.xpose.msra.mxu0 0.0
    %3630 = vmatprep.subr.mxu0 0.0
    %3631 = vmatpush2.xpose.msra.mxu0 0.0
    %3632 = vmatprep.subr.mxu0 0.0
    %3633 = vmatpush2.xpose.msra.mxu0 0.0
    %3634 = vmatprep.subr.mxu0 0.0
    %3635 = vmatpush2.xpose.msra.mxu0 0.0
    %3636 = vmatprep.subr.mxu0 0.0
    %3637 = vmatpush2.xpose.msra.mxu0 0.0
    %3638 = vmatprep.subr.mxu0 0.0
    %3639 = vmatpush2.xpose.msra.mxu0 0.0
    %3640 = vmatprep.subr.mxu0 0.0
    %3641 = vmatpush2.xpose.msra.mxu0 0.0
    %3642 = vmatprep.subr.mxu0 0.0
    %3643 = vmatpush2.xpose.msra.mxu0 0.0
    %3644 = vmatprep.subr.mxu0 0.0
    %3645 = vmatpush2.xpose.msra.mxu0 0.0
    %3646 = vmatprep.subr.mxu0 0.0
    %3647 = vmatpush2.xpose.msra.mxu0 0.0
    %3648 = vmatprep.subr.mxu0 0.0
    %3649 = vmatpush2.xpose.msra.mxu0 0.0
    %3650 = vmatprep.subr.mxu0 0.0
    %3651 = vmatpush2.xpose.msra.mxu0 0.0
    %3652 = vmatprep.subr.mxu0 0.0
    %3653 = vmatpush2.xpose.msra.mxu0 0.0
    %3654 = vmatprep.subr.mxu0 0.0
    %3655 = vmatpush2.xpose.msra.mxu0 0.0
    %3656 = vmatprep.subr.mxu0 0.0
    %3657 = vmatpush2.xpose.msra.mxu0 0.0
    %3658 = vmatprep.mubr.f32.mxu0 0.0
    %3659 = vmatmul.mubr.f32.gmra.mxu0 %v3582
    %v3660 = vpop.f32.mrf.mxu0
    %v3661 = vadd.f32 0.0, %v3660
    %v3662 = vpop.f32.mrf.mxu0
    %3663 = vmatprep.mubr.f32.mxu0 0.0
    %3664 = vmatmul.mubr.f32.gmra.mxu0 %v3584
    %v3665 = vpop.f32.mrf.mxu0
    %v3666 = vadd.f32 0.0, %v3665
    %v3667 = vpop.f32.mrf.mxu0
    %3668 = vmatprep.mubr.f32.mxu0 0.0
    %3669 = vmatmul.mubr.f32.gmra.mxu0 %v3586
    %v3670 = vpop.f32.mrf.mxu0
    %v3671 = vadd.f32 0.0, %v3670
    %v3672 = vpop.f32.mrf.mxu0
    %3673 = vdwg.mxu0
    %v3674 = vmul.f32 %v3661, 0.17677669
    %v3675 = vmul.f32 %v3666, 0.17677669
    %v3676 = vmul.f32 %v3671, 0.17677669
    %v3677 = vadd.f32 %v3674, %v196
    %v3678 = vadd.f32 %v3675, %v196
    %v3679 = vadd.f32 %v3676, %v196
    %v3680 = vsel %vm430, %v3677, -inf
    %3681 = vmax.xlane.f32.xlu0 %v3680
    %v3682 = vpop.xlane.xlu0 %3681
    %v3683 = vsel %vm430, %v3678, -inf
    %3684 = vmax.xlane.f32.xlu0 %v3683
    %v3685 = vpop.xlane.xlu0 %3684
    %v3686 = vsel %vm430, %v3679, -inf
    %3687 = vmax.xlane.f32.xlu0 %v3686
    %v3688 = vpop.xlane.xlu0 %3687
    %v3689 = vsub.f32 %v3677, %v3682
    %v3690 = vsub.f32 %v3678, %v3685
    %v3691 = vsub.f32 %v3679, %v3688
    %v3692 = vmul.f32 %v3689, 1.442695
    %v3693 = vpow.pop %v3692
    %v3694 = vmul.f32 %v3690, 1.442695
    %v3695 = vpow.pop %v3694
    %v3696 = vmul.f32 %v3691, 1.442695
    %v3697 = vpow.pop %v3696
    %v3698 = vsel %vm430, %v3693, 0.0
    %3699 = vadd.xlane.f32.xlu0 %v3698
    %v3700 = vpop.xlane.xlu0 %3699
    %v3701 = vsel %vm430, %v3695, 0.0
    %3702 = vadd.xlane.f32.xlu0 %v3701
    %v3703 = vpop.xlane.xlu0 %3702
    %v3704 = vsel %vm430, %v3697, 0.0
    %3705 = vadd.xlane.f32.xlu0 %v3704
    %v3706 = vpop.xlane.xlu0 %3705
    %v3707 = vrcp.pop %v3700
    %v3708 = vrcp.pop %v3703
    %v3709 = vrcp.pop %v3706
    %v3710 = vmul.f32 %v3693, %v3707
    %v3711 = vmul.f32 %v3695, %v3708
    %v3712 = vmul.f32 %v3697, %v3709
    %3716 = vrot.lane.b32.xlu0 %v2824, 96
    %v3717 = vpop.permute.xlu0 %3716
    %3718 = vrot.lane.b32.xlu0 %v2830, 96
    %v3719 = vpop.permute.xlu0 %3718
    %3720 = vrot.lane.b32.xlu0 %v2836, 96
    %v3721 = vpop.permute.xlu0 %3720
    %v3726 = vsel %vm430, %v3710, 0
    %v3729 = vsel %vm430, %v3711, 0
    %v3732 = vsel %vm430, %v3712, 0
    %3734 = vmatprep.subr.mxu0 0.0
    %3735 = vmatpush1.msra.mxu0 0.0
    %3736 = vmatprep.subr.mxu0 0.0
    %3737 = vmatpush1.msra.mxu0 0.0
    %3738 = vmatprep.subr.mxu0 0.0
    %3739 = vmatpush1.msra.mxu0 0.0
    %3740 = vmatprep.subr.mxu0 0.0
    %3741 = vmatpush1.msra.mxu0 0.0
    %3742 = vmatprep.subr.mxu0 0.0
    %3743 = vmatpush1.msra.mxu0 0.0
    %3744 = vmatprep.subr.mxu0 0.0
    %3745 = vmatpush1.msra.mxu0 0.0
    %3746 = vmatprep.subr.mxu0 0.0
    %3747 = vmatpush1.msra.mxu0 0.0
    %3748 = vmatprep.subr.mxu0 0.0
    %3749 = vmatpush1.msra.mxu0 0.0
    %3750 = vmatprep.subr.mxu0 0.0
    %3751 = vmatpush1.msra.mxu0 0.0
    %3752 = vmatprep.subr.mxu0 0.0
    %3753 = vmatpush1.msra.mxu0 0.0
    %3754 = vmatprep.subr.mxu0 0.0
    %3755 = vmatpush1.msra.mxu0 0.0
    %3756 = vmatprep.subr.mxu0 0.0
    %3757 = vmatpush1.msra.mxu0 0.0
    %3758 = vmatprep.subr.mxu0 0.0
    %3759 = vmatpush1.msra.mxu0 0.0
    %3760 = vmatprep.subr.mxu0 0.0
    %3761 = vmatpush1.msra.mxu0 %v3721
    %3762 = vmatprep.subr.mxu0 0.0
    %3763 = vmatpush1.msra.mxu0 %v3719
    %3764 = vmatprep.subr.mxu0 0.0
    %3765 = vmatpush1.msra.mxu0 %v3717
    %3766 = vmatprep.subr.mxu0 0.0
    %3767 = vmatpush2.msra.mxu0 0.0
    %3768 = vmatprep.subr.mxu0 0.0
    %3769 = vmatpush2.msra.mxu0 0.0
    %3770 = vmatprep.subr.mxu0 0.0
    %3771 = vmatpush2.msra.mxu0 0.0
    %3772 = vmatprep.subr.mxu0 0.0
    %3773 = vmatpush2.msra.mxu0 0.0
    %3774 = vmatprep.subr.mxu0 0.0
    %3775 = vmatpush2.msra.mxu0 0.0
    %3776 = vmatprep.subr.mxu0 0.0
    %3777 = vmatpush2.msra.mxu0 0.0
    %3778 = vmatprep.subr.mxu0 0.0
    %3779 = vmatpush2.msra.mxu0 0.0
    %3780 = vmatprep.subr.mxu0 0.0
    %3781 = vmatpush2.msra.mxu0 0.0
    %3782 = vmatprep.subr.mxu0 0.0
    %3783 = vmatpush2.msra.mxu0 0.0
    %3784 = vmatprep.subr.mxu0 0.0
    %3785 = vmatpush2.msra.mxu0 0.0
    %3786 = vmatprep.subr.mxu0 0.0
    %3787 = vmatpush2.msra.mxu0 0.0
    %3788 = vmatprep.subr.mxu0 0.0
    %3789 = vmatpush2.msra.mxu0 0.0
    %3790 = vmatprep.subr.mxu0 0.0
    %3791 = vmatpush2.msra.mxu0 0.0
    %3792 = vmatprep.subr.mxu0 0.0
    %3793 = vmatpush2.msra.mxu0 0.0
    %3794 = vmatprep.subr.mxu0 0.0
    %3795 = vmatpush2.msra.mxu0 0.0
    %3796 = vmatprep.subr.mxu0 0.0
    %3797 = vmatpush2.msra.mxu0 0.0
    %3798 = vmatprep.mubr.f32.mxu0 0.0
    %3799 = vmatmul.mubr.f32.gmra.mxu0 %v3726
    %v3800 = vpop.f32.mrf.mxu0
    %v3801 = vadd.f32 0.0, %v3800
    %v3802 = vpop.f32.mrf.mxu0
    %3803 = vmatprep.mubr.f32.mxu0 0.0
    %3804 = vmatmul.mubr.f32.gmra.mxu0 %v3729
    %v3805 = vpop.f32.mrf.mxu0
    %v3806 = vadd.f32 0.0, %v3805
    %v3807 = vpop.f32.mrf.mxu0
    %3808 = vmatprep.mubr.f32.mxu0 0.0
    %3809 = vmatmul.mubr.f32.gmra.mxu0 %v3732
    %v3810 = vpop.f32.mrf.mxu0
    %v3811 = vadd.f32 0.0, %v3810
    %v3812 = vpop.f32.mrf.mxu0
    %3813 = vdwg.mxu0
    %v3814 = vadd.f32 %v3567, %v3801
    %v3815 = vadd.f32 %v3568, %v3806
    %v3816 = vadd.f32 %v3569, %v3811
    %3820 = vrot.lane.b32.xlu0 %v2840, 96
    %v3821 = vpop.permute.xlu0 %3820
    %3822 = vrot.lane.b32.xlu0 %v2846, 96
    %v3823 = vpop.permute.xlu0 %3822
    %3824 = vrot.lane.b32.xlu0 %v2852, 96
    %v3825 = vpop.permute.xlu0 %3824
    %v3826 = vsel %vm331, %v2840, 0
    %v3828 = vsel %vm331, %v2846, 0
    %v3830 = vsel %vm331, %v2852, 0
    %v3832 = vsel %vm331, %v3821, 0
    %v3834 = vsel %vm331, %v3823, 0
    %v3836 = vsel %vm331, %v3825, 0
    %3838 = vmatprep.subr.mxu0 0.0
    %3839 = vmatpush1.xpose.msra.mxu0 0.0
    %3840 = vmatprep.subr.mxu0 0.0
    %3841 = vmatpush1.xpose.msra.mxu0 0.0
    %3842 = vmatprep.subr.mxu0 0.0
    %3843 = vmatpush1.xpose.msra.mxu0 0.0
    %3844 = vmatprep.subr.mxu0 0.0
    %3845 = vmatpush1.xpose.msra.mxu0 0.0
    %3846 = vmatprep.subr.mxu0 0.0
    %3847 = vmatpush1.xpose.msra.mxu0 0.0
    %3848 = vmatprep.subr.mxu0 0.0
    %3849 = vmatpush1.xpose.msra.mxu0 0.0
    %3850 = vmatprep.subr.mxu0 0.0
    %3851 = vmatpush1.xpose.msra.mxu0 0.0
    %3852 = vmatprep.subr.mxu0 0.0
    %3853 = vmatpush1.xpose.msra.mxu0 0.0
    %3854 = vmatprep.subr.mxu0 0.0
    %3855 = vmatpush1.xpose.msra.mxu0 0.0
    %3856 = vmatprep.subr.mxu0 0.0
    %3857 = vmatpush1.xpose.msra.mxu0 0.0
    %3858 = vmatprep.subr.mxu0 0.0
    %3859 = vmatpush1.xpose.msra.mxu0 0.0
    %3860 = vmatprep.subr.mxu0 0.0
    %3861 = vmatpush1.xpose.msra.mxu0 0.0
    %3862 = vmatprep.subr.mxu0 0.0
    %3863 = vmatpush1.xpose.msra.mxu0 0.0
    %3864 = vmatprep.subr.mxu0 0.0
    %3865 = vmatpush1.xpose.msra.mxu0 %v3836
    %3866 = vmatprep.subr.mxu0 0.0
    %3867 = vmatpush1.xpose.msra.mxu0 %v3834
    %3868 = vmatprep.subr.mxu0 0.0
    %3869 = vmatpush1.xpose.msra.mxu0 %v3832
    %3870 = vmatprep.subr.mxu0 0.0
    %3871 = vmatpush2.xpose.msra.mxu0 0.0
    %3872 = vmatprep.subr.mxu0 0.0
    %3873 = vmatpush2.xpose.msra.mxu0 0.0
    %3874 = vmatprep.subr.mxu0 0.0
    %3875 = vmatpush2.xpose.msra.mxu0 0.0
    %3876 = vmatprep.subr.mxu0 0.0
    %3877 = vmatpush2.xpose.msra.mxu0 0.0
    %3878 = vmatprep.subr.mxu0 0.0
    %3879 = vmatpush2.xpose.msra.mxu0 0.0
    %3880 = vmatprep.subr.mxu0 0.0
    %3881 = vmatpush2.xpose.msra.mxu0 0.0
    %3882 = vmatprep.subr.mxu0 0.0
    %3883 = vmatpush2.xpose.msra.mxu0 0.0
    %3884 = vmatprep.subr.mxu0 0.0
    %3885 = vmatpush2.xpose.msra.mxu0 0.0
    %3886 = vmatprep.subr.mxu0 0.0
    %3887 = vmatpush2.xpose.msra.mxu0 0.0
    %3888 = vmatprep.subr.mxu0 0.0
    %3889 = vmatpush2.xpose.msra.mxu0 0.0
    %3890 = vmatprep.subr.mxu0 0.0
    %3891 = vmatpush2.xpose.msra.mxu0 0.0
    %3892 = vmatprep.subr.mxu0 0.0
    %3893 = vmatpush2.xpose.msra.mxu0 0.0
    %3894 = vmatprep.subr.mxu0 0.0
    %3895 = vmatpush2.xpose.msra.mxu0 0.0
    %3896 = vmatprep.subr.mxu0 0.0
    %3897 = vmatpush2.xpose.msra.mxu0 0.0
    %3898 = vmatprep.subr.mxu0 0.0
    %3899 = vmatpush2.xpose.msra.mxu0 0.0
    %3900 = vmatprep.subr.mxu0 0.0
    %3901 = vmatpush2.xpose.msra.mxu0 0.0
    %3902 = vmatprep.mubr.f32.mxu0 0.0
    %3903 = vmatmul.mubr.f32.gmra.mxu0 %v3826
    %v3904 = vpop.f32.mrf.mxu0
    %v3905 = vadd.f32 0.0, %v3904
    %v3906 = vpop.f32.mrf.mxu0
    %3907 = vmatprep.mubr.f32.mxu0 0.0
    %3908 = vmatmul.mubr.f32.gmra.mxu0 %v3828
    %v3909 = vpop.f32.mrf.mxu0
    %v3910 = vadd.f32 0.0, %v3909
    %v3911 = vpop.f32.mrf.mxu0
    %3912 = vmatprep.mubr.f32.mxu0 0.0
    %3913 = vmatmul.mubr.f32.gmra.mxu0 %v3830
    %v3914 = vpop.f32.mrf.mxu0
    %v3915 = vadd.f32 0.0, %v3914
    %v3916 = vpop.f32.mrf.mxu0
    %3917 = vdwg.mxu0
    %v3918 = vmul.f32 %v3905, 0.17677669
    %v3919 = vmul.f32 %v3910, 0.17677669
    %v3920 = vmul.f32 %v3915, 0.17677669
    %v3921 = vadd.f32 %v3918, %v196
    %v3922 = vadd.f32 %v3919, %v196
    %v3923 = vadd.f32 %v3920, %v196
    %v3924 = vsel %vm430, %v3921, -inf
    %3925 = vmax.xlane.f32.xlu0 %v3924
    %v3926 = vpop.xlane.xlu0 %3925
    %v3927 = vsel %vm430, %v3922, -inf
    %3928 = vmax.xlane.f32.xlu0 %v3927
    %v3929 = vpop.xlane.xlu0 %3928
    %v3930 = vsel %vm430, %v3923, -inf
    %3931 = vmax.xlane.f32.xlu0 %v3930
    %v3932 = vpop.xlane.xlu0 %3931
    %v3933 = vsub.f32 %v3921, %v3926
    %v3934 = vsub.f32 %v3922, %v3929
    %v3935 = vsub.f32 %v3923, %v3932
    %v3936 = vmul.f32 %v3933, 1.442695
    %v3937 = vpow.pop %v3936
    %v3938 = vmul.f32 %v3934, 1.442695
    %v3939 = vpow.pop %v3938
    %v3940 = vmul.f32 %v3935, 1.442695
    %v3941 = vpow.pop %v3940
    %v3942 = vsel %vm430, %v3937, 0.0
    %3943 = vadd.xlane.f32.xlu0 %v3942
    %v3944 = vpop.xlane.xlu0 %3943
    %v3945 = vsel %vm430, %v3939, 0.0
    %3946 = vadd.xlane.f32.xlu0 %v3945
    %v3947 = vpop.xlane.xlu0 %3946
    %v3948 = vsel %vm430, %v3941, 0.0
    %3949 = vadd.xlane.f32.xlu0 %v3948
    %v3950 = vpop.xlane.xlu0 %3949
    %v3951 = vrcp.pop %v3944
    %v3952 = vrcp.pop %v3947
    %v3953 = vrcp.pop %v3950
    %v3954 = vmul.f32 %v3937, %v3951
    %v3955 = vmul.f32 %v3939, %v3952
    %v3956 = vmul.f32 %v3941, %v3953
    %3957 = vrot.lane.b32.xlu0 %v2840, 120
    %v3958 = vpop.permute.xlu0 %3957
    %3959 = vrot.lane.b32.xlu0 %v2846, 120
    %v3960 = vpop.permute.xlu0 %3959
    %3961 = vrot.lane.b32.xlu0 %v2852, 120
    %v3962 = vpop.permute.xlu0 %3961
    %3963 = vrot.lane.b32.xlu0 %v2840, 88
    %v3964 = vpop.permute.xlu0 %3963
    %3965 = vrot.lane.b32.xlu0 %v2846, 88
    %v3966 = vpop.permute.xlu0 %3965
    %3967 = vrot.lane.b32.xlu0 %v2852, 88
    %v3968 = vpop.permute.xlu0 %3967
    %v3969 = vsel %vm331, %v3958, 0
    %v3971 = vsel %vm331, %v3960, 0
    %v3973 = vsel %vm331, %v3962, 0
    %v3975 = vsel %vm331, %v3964, 0
    %v3977 = vsel %vm331, %v3966, 0
    %v3979 = vsel %vm331, %v3968, 0
    %3981 = vmatprep.subr.mxu0 0.0
    %3982 = vmatpush1.xpose.msra.mxu0 0.0
    %3983 = vmatprep.subr.mxu0 0.0
    %3984 = vmatpush1.xpose.msra.mxu0 0.0
    %3985 = vmatprep.subr.mxu0 0.0
    %3986 = vmatpush1.xpose.msra.mxu0 0.0
    %3987 = vmatprep.subr.mxu0 0.0
    %3988 = vmatpush1.xpose.msra.mxu0 0.0
    %3989 = vmatprep.subr.mxu0 0.0
    %3990 = vmatpush1.xpose.msra.mxu0 0.0
    %3991 = vmatprep.subr.mxu0 0.0
    %3992 = vmatpush1.xpose.msra.mxu0 0.0
    %3993 = vmatprep.subr.mxu0 0.0
    %3994 = vmatpush1.xpose.msra.mxu0 0.0
    %3995 = vmatprep.subr.mxu0 0.0
    %3996 = vmatpush1.xpose.msra.mxu0 0.0
    %3997 = vmatprep.subr.mxu0 0.0
    %3998 = vmatpush1.xpose.msra.mxu0 0.0
    %3999 = vmatprep.subr.mxu0 0.0
    %4000 = vmatpush1.xpose.msra.mxu0 0.0
    %4001 = vmatprep.subr.mxu0 0.0
    %4002 = vmatpush1.xpose.msra.mxu0 0.0
    %4003 = vmatprep.subr.mxu0 0.0
    %4004 = vmatpush1.xpose.msra.mxu0 0.0
    %4005 = vmatprep.subr.mxu0 0.0
    %4006 = vmatpush1.xpose.msra.mxu0 0.0
    %4007 = vmatprep.subr.mxu0 0.0
    %4008 = vmatpush1.xpose.msra.mxu0 %v3979
    %4009 = vmatprep.subr.mxu0 0.0
    %4010 = vmatpush1.xpose.msra.mxu0 %v3977
    %4011 = vmatprep.subr.mxu0 0.0
    %4012 = vmatpush1.xpose.msra.mxu0 %v3975
    %4013 = vmatprep.subr.mxu0 0.0
    %4014 = vmatpush2.xpose.msra.mxu0 0.0
    %4015 = vmatprep.subr.mxu0 0.0
    %4016 = vmatpush2.xpose.msra.mxu0 0.0
    %4017 = vmatprep.subr.mxu0 0.0
    %4018 = vmatpush2.xpose.msra.mxu0 0.0
    %4019 = vmatprep.subr.mxu0 0.0
    %4020 = vmatpush2.xpose.msra.mxu0 0.0
    %4021 = vmatprep.subr.mxu0 0.0
    %4022 = vmatpush2.xpose.msra.mxu0 0.0
    %4023 = vmatprep.subr.mxu0 0.0
    %4024 = vmatpush2.xpose.msra.mxu0 0.0
    %4025 = vmatprep.subr.mxu0 0.0
    %4026 = vmatpush2.xpose.msra.mxu0 0.0
    %4027 = vmatprep.subr.mxu0 0.0
    %4028 = vmatpush2.xpose.msra.mxu0 0.0
    %4029 = vmatprep.subr.mxu0 0.0
    %4030 = vmatpush2.xpose.msra.mxu0 0.0
    %4031 = vmatprep.subr.mxu0 0.0
    %4032 = vmatpush2.xpose.msra.mxu0 0.0
    %4033 = vmatprep.subr.mxu0 0.0
    %4034 = vmatpush2.xpose.msra.mxu0 0.0
    %4035 = vmatprep.subr.mxu0 0.0
    %4036 = vmatpush2.xpose.msra.mxu0 0.0
    %4037 = vmatprep.subr.mxu0 0.0
    %4038 = vmatpush2.xpose.msra.mxu0 0.0
    %4039 = vmatprep.subr.mxu0 0.0
    %4040 = vmatpush2.xpose.msra.mxu0 0.0
    %4041 = vmatprep.subr.mxu0 0.0
    %4042 = vmatpush2.xpose.msra.mxu0 0.0
    %4043 = vmatprep.subr.mxu0 0.0
    %4044 = vmatpush2.xpose.msra.mxu0 0.0
    %4045 = vmatprep.mubr.f32.mxu0 0.0
    %4046 = vmatmul.mubr.f32.gmra.mxu0 %v3969
    %v4047 = vpop.f32.mrf.mxu0
    %v4048 = vadd.f32 0.0, %v4047
    %v4049 = vpop.f32.mrf.mxu0
    %4050 = vmatprep.mubr.f32.mxu0 0.0
    %4051 = vmatmul.mubr.f32.gmra.mxu0 %v3971
    %v4052 = vpop.f32.mrf.mxu0
    %v4053 = vadd.f32 0.0, %v4052
    %v4054 = vpop.f32.mrf.mxu0
    %4055 = vmatprep.mubr.f32.mxu0 0.0
    %4056 = vmatmul.mubr.f32.gmra.mxu0 %v3973
    %v4057 = vpop.f32.mrf.mxu0
    %v4058 = vadd.f32 0.0, %v4057
    %v4059 = vpop.f32.mrf.mxu0
    %4060 = vdwg.mxu0
    %v4061 = vmul.f32 %v4048, 0.17677669
    %v4062 = vmul.f32 %v4053, 0.17677669
    %v4063 = vmul.f32 %v4058, 0.17677669
    %v4064 = vadd.f32 %v4061, %v196
    %v4065 = vadd.f32 %v4062, %v196
    %v4066 = vadd.f32 %v4063, %v196
    %v4067 = vsel %vm430, %v4064, -inf
    %4068 = vmax.xlane.f32.xlu0 %v4067
    %v4069 = vpop.xlane.xlu0 %4068
    %v4070 = vsel %vm430, %v4065, -inf
    %4071 = vmax.xlane.f32.xlu0 %v4070
    %v4072 = vpop.xlane.xlu0 %4071
    %v4073 = vsel %vm430, %v4066, -inf
    %4074 = vmax.xlane.f32.xlu0 %v4073
    %v4075 = vpop.xlane.xlu0 %4074
    %v4076 = vsub.f32 %v4064, %v4069
    %v4077 = vsub.f32 %v4065, %v4072
    %v4078 = vsub.f32 %v4066, %v4075
    %v4079 = vmul.f32 %v4076, 1.442695
    %v4080 = vpow.pop %v4079
    %v4081 = vmul.f32 %v4077, 1.442695
    %v4082 = vpow.pop %v4081
    %v4083 = vmul.f32 %v4078, 1.442695
    %v4084 = vpow.pop %v4083
    %v4085 = vsel %vm430, %v4080, 0.0
    %4086 = vadd.xlane.f32.xlu0 %v4085
    %v4087 = vpop.xlane.xlu0 %4086
    %v4088 = vsel %vm430, %v4082, 0.0
    %4089 = vadd.xlane.f32.xlu0 %v4088
    %v4090 = vpop.xlane.xlu0 %4089
    %v4091 = vsel %vm430, %v4084, 0.0
    %4092 = vadd.xlane.f32.xlu0 %v4091
    %v4093 = vpop.xlane.xlu0 %4092
    %v4094 = vrcp.pop %v4087
    %v4095 = vrcp.pop %v4090
    %v4096 = vrcp.pop %v4093
    %v4097 = vmul.f32 %v4080, %v4094
    %v4098 = vmul.f32 %v4082, %v4095
    %v4099 = vmul.f32 %v4084, %v4096
    %4100 = vrot.lane.b32.xlu0 %v2840, 32
    %v4101 = vpop.permute.xlu0 %4100
    %4102 = vrot.lane.b32.xlu0 %v2846, 32
    %v4103 = vpop.permute.xlu0 %4102
    %4104 = vrot.lane.b32.xlu0 %v2852, 32
    %v4105 = vpop.permute.xlu0 %4104
    %v4110 = vsel %vm430, %v4097, 0
    %v4113 = vsel %vm430, %v4098, 0
    %v4116 = vsel %vm430, %v4099, 0
    %4118 = vmatprep.subr.mxu0 0.0
    %4119 = vmatpush1.msra.mxu0 0.0
    %4120 = vmatprep.subr.mxu0 0.0
    %4121 = vmatpush1.msra.mxu0 0.0
    %4122 = vmatprep.subr.mxu0 0.0
    %4123 = vmatpush1.msra.mxu0 0.0
    %4124 = vmatprep.subr.mxu0 0.0
    %4125 = vmatpush1.msra.mxu0 0.0
    %4126 = vmatprep.subr.mxu0 0.0
    %4127 = vmatpush1.msra.mxu0 0.0
    %4128 = vmatprep.subr.mxu0 0.0
    %4129 = vmatpush1.msra.mxu0 0.0
    %4130 = vmatprep.subr.mxu0 0.0
    %4131 = vmatpush1.msra.mxu0 0.0
    %4132 = vmatprep.subr.mxu0 0.0
    %4133 = vmatpush1.msra.mxu0 0.0
    %4134 = vmatprep.subr.mxu0 0.0
    %4135 = vmatpush1.msra.mxu0 0.0
    %4136 = vmatprep.subr.mxu0 0.0
    %4137 = vmatpush1.msra.mxu0 0.0
    %4138 = vmatprep.subr.mxu0 0.0
    %4139 = vmatpush1.msra.mxu0 0.0
    %4140 = vmatprep.subr.mxu0 0.0
    %4141 = vmatpush1.msra.mxu0 0.0
    %4142 = vmatprep.subr.mxu0 0.0
    %4143 = vmatpush1.msra.mxu0 0.0
    %4144 = vmatprep.subr.mxu0 0.0
    %4145 = vmatpush1.msra.mxu0 %v4105
    %4146 = vmatprep.subr.mxu0 0.0
    %4147 = vmatpush1.msra.mxu0 %v4103
    %4148 = vmatprep.subr.mxu0 0.0
    %4149 = vmatpush1.msra.mxu0 %v4101
    %4150 = vmatprep.subr.mxu0 0.0
    %4151 = vmatpush2.msra.mxu0 0.0
    %4152 = vmatprep.subr.mxu0 0.0
    %4153 = vmatpush2.msra.mxu0 0.0
    %4154 = vmatprep.subr.mxu0 0.0
    %4155 = vmatpush2.msra.mxu0 0.0
    %4156 = vmatprep.subr.mxu0 0.0
    %4157 = vmatpush2.msra.mxu0 0.0
    %4158 = vmatprep.subr.mxu0 0.0
    %4159 = vmatpush2.msra.mxu0 0.0
    %4160 = vmatprep.subr.mxu0 0.0
    %4161 = vmatpush2.msra.mxu0 0.0
    %4162 = vmatprep.subr.mxu0 0.0
    %4163 = vmatpush2.msra.mxu0 0.0
    %4164 = vmatprep.subr.mxu0 0.0
    %4165 = vmatpush2.msra.mxu0 0.0
    %4166 = vmatprep.subr.mxu0 0.0
    %4167 = vmatpush2.msra.mxu0 0.0
    %4168 = vmatprep.subr.mxu0 0.0
    %4169 = vmatpush2.msra.mxu0 0.0
    %4170 = vmatprep.subr.mxu0 0.0
    %4171 = vmatpush2.msra.mxu0 0.0
    %4172 = vmatprep.subr.mxu0 0.0
    %4173 = vmatpush2.msra.mxu0 0.0
    %4174 = vmatprep.subr.mxu0 0.0
    %4175 = vmatpush2.msra.mxu0 0.0
    %4176 = vmatprep.subr.mxu0 0.0
    %4177 = vmatpush2.msra.mxu0 0.0
    %4178 = vmatprep.subr.mxu0 0.0
    %4179 = vmatpush2.msra.mxu0 0.0
    %4180 = vmatprep.subr.mxu0 0.0
    %4181 = vmatpush2.msra.mxu0 0.0
    %4182 = vmatprep.mubr.f32.mxu0 0.0
    %4183 = vmatmul.mubr.f32.gmra.mxu0 %v4110
    %v4184 = vpop.f32.mrf.mxu0
    %v4185 = vadd.f32 0.0, %v4184
    %v4186 = vpop.f32.mrf.mxu0
    %4187 = vmatprep.mubr.f32.mxu0 0.0
    %4188 = vmatmul.mubr.f32.gmra.mxu0 %v4113
    %v4189 = vpop.f32.mrf.mxu0
    %v4190 = vadd.f32 0.0, %v4189
    %v4191 = vpop.f32.mrf.mxu0
    %4192 = vmatprep.mubr.f32.mxu0 0.0
    %4193 = vmatmul.mubr.f32.gmra.mxu0 %v4116
    %v4194 = vpop.f32.mrf.mxu0
    %v4195 = vadd.f32 0.0, %v4194
    %v4196 = vpop.f32.mrf.mxu0
    %4197 = vdwg.mxu0
    %4198 = vrot.lane.b32.xlu0 %v2840, 64
    %v4199 = vpop.permute.xlu0 %4198
    %4200 = vrot.lane.b32.xlu0 %v2846, 64
    %v4201 = vpop.permute.xlu0 %4200
    %4202 = vrot.lane.b32.xlu0 %v2852, 64
    %v4203 = vpop.permute.xlu0 %4202
    %v4208 = vsel %vm430, %v3954, 0
    %v4211 = vsel %vm430, %v3955, 0
    %v4214 = vsel %vm430, %v3956, 0
    %4216 = vmatprep.subr.mxu0 0.0
    %4217 = vmatpush1.msra.mxu0 0.0
    %4218 = vmatprep.subr.mxu0 0.0
    %4219 = vmatpush1.msra.mxu0 0.0
    %4220 = vmatprep.subr.mxu0 0.0
    %4221 = vmatpush1.msra.mxu0 0.0
    %4222 = vmatprep.subr.mxu0 0.0
    %4223 = vmatpush1.msra.mxu0 0.0
    %4224 = vmatprep.subr.mxu0 0.0
    %4225 = vmatpush1.msra.mxu0 0.0
    %4226 = vmatprep.subr.mxu0 0.0
    %4227 = vmatpush1.msra.mxu0 0.0
    %4228 = vmatprep.subr.mxu0 0.0
    %4229 = vmatpush1.msra.mxu0 0.0
    %4230 = vmatprep.subr.mxu0 0.0
    %4231 = vmatpush1.msra.mxu0 0.0
    %4232 = vmatprep.subr.mxu0 0.0
    %4233 = vmatpush1.msra.mxu0 0.0
    %4234 = vmatprep.subr.mxu0 0.0
    %4235 = vmatpush1.msra.mxu0 0.0
    %4236 = vmatprep.subr.mxu0 0.0
    %4237 = vmatpush1.msra.mxu0 0.0
    %4238 = vmatprep.subr.mxu0 0.0
    %4239 = vmatpush1.msra.mxu0 0.0
    %4240 = vmatprep.subr.mxu0 0.0
    %4241 = vmatpush1.msra.mxu0 0.0
    %4242 = vmatprep.subr.mxu0 0.0
    %4243 = vmatpush1.msra.mxu0 %v4203
    %4244 = vmatprep.subr.mxu0 0.0
    %4245 = vmatpush1.msra.mxu0 %v4201
    %4246 = vmatprep.subr.mxu0 0.0
    %4247 = vmatpush1.msra.mxu0 %v4199
    %4248 = vmatprep.subr.mxu0 0.0
    %4249 = vmatpush2.msra.mxu0 0.0
    %4250 = vmatprep.subr.mxu0 0.0
    %4251 = vmatpush2.msra.mxu0 0.0
    %4252 = vmatprep.subr.mxu0 0.0
    %4253 = vmatpush2.msra.mxu0 0.0
    %4254 = vmatprep.subr.mxu0 0.0
    %4255 = vmatpush2.msra.mxu0 0.0
    %4256 = vmatprep.subr.mxu0 0.0
    %4257 = vmatpush2.msra.mxu0 0.0
    %4258 = vmatprep.subr.mxu0 0.0
    %4259 = vmatpush2.msra.mxu0 0.0
    %4260 = vmatprep.subr.mxu0 0.0
    %4261 = vmatpush2.msra.mxu0 0.0
    %4262 = vmatprep.subr.mxu0 0.0
    %4263 = vmatpush2.msra.mxu0 0.0
    %4264 = vmatprep.subr.mxu0 0.0
    %4265 = vmatpush2.msra.mxu0 0.0
    %4266 = vmatprep.subr.mxu0 0.0
    %4267 = vmatpush2.msra.mxu0 0.0
    %4268 = vmatprep.subr.mxu0 0.0
    %4269 = vmatpush2.msra.mxu0 0.0
    %4270 = vmatprep.subr.mxu0 0.0
    %4271 = vmatpush2.msra.mxu0 0.0
    %4272 = vmatprep.subr.mxu0 0.0
    %4273 = vmatpush2.msra.mxu0 0.0
    %4274 = vmatprep.subr.mxu0 0.0
    %4275 = vmatpush2.msra.mxu0 0.0
    %4276 = vmatprep.subr.mxu0 0.0
    %4277 = vmatpush2.msra.mxu0 0.0
    %4278 = vmatprep.subr.mxu0 0.0
    %4279 = vmatpush2.msra.mxu0 0.0
    %4280 = vmatprep.mubr.f32.mxu0 0.0
    %4281 = vmatmul.mubr.f32.gmra.mxu0 %v4208
    %v4282 = vpop.f32.mrf.mxu0
    %v4283 = vadd.f32 %v4185, %v4282
    %v4284 = vpop.f32.mrf.mxu0
    %4285 = vmatprep.mubr.f32.mxu0 0.0
    %4286 = vmatmul.mubr.f32.gmra.mxu0 %v4211
    %v4287 = vpop.f32.mrf.mxu0
    %v4288 = vadd.f32 %v4190, %v4287
    %v4289 = vpop.f32.mrf.mxu0
    %4290 = vmatprep.mubr.f32.mxu0 0.0
    %4291 = vmatmul.mubr.f32.gmra.mxu0 %v4214
    %v4292 = vpop.f32.mrf.mxu0
    %v4293 = vadd.f32 %v4195, %v4292
    %v4294 = vpop.f32.mrf.mxu0
    %4295 = vdwg.mxu0
    %4296 = vrot.lane.b32.xlu0 %v2840, 112
    %v4297 = vpop.permute.xlu0 %4296
    %4298 = vrot.lane.b32.xlu0 %v2846, 112
    %v4299 = vpop.permute.xlu0 %4298
    %4300 = vrot.lane.b32.xlu0 %v2852, 112
    %v4301 = vpop.permute.xlu0 %4300
    %4302 = vrot.lane.b32.xlu0 %v2840, 80
    %v4303 = vpop.permute.xlu0 %4302
    %4304 = vrot.lane.b32.xlu0 %v2846, 80
    %v4305 = vpop.permute.xlu0 %4304
    %4306 = vrot.lane.b32.xlu0 %v2852, 80
    %v4307 = vpop.permute.xlu0 %4306
    %v4308 = vsel %vm331, %v4297, 0
    %v4310 = vsel %vm331, %v4299, 0
    %v4312 = vsel %vm331, %v4301, 0
    %v4314 = vsel %vm331, %v4303, 0
    %v4316 = vsel %vm331, %v4305, 0
    %v4318 = vsel %vm331, %v4307, 0
    %4320 = vmatprep.subr.mxu0 0.0
    %4321 = vmatpush1.xpose.msra.mxu0 0.0
    %4322 = vmatprep.subr.mxu0 0.0
    %4323 = vmatpush1.xpose.msra.mxu0 0.0
    %4324 = vmatprep.subr.mxu0 0.0
    %4325 = vmatpush1.xpose.msra.mxu0 0.0
    %4326 = vmatprep.subr.mxu0 0.0
    %4327 = vmatpush1.xpose.msra.mxu0 0.0
    %4328 = vmatprep.subr.mxu0 0.0
    %4329 = vmatpush1.xpose.msra.mxu0 0.0
    %4330 = vmatprep.subr.mxu0 0.0
    %4331 = vmatpush1.xpose.msra.mxu0 0.0
    %4332 = vmatprep.subr.mxu0 0.0
    %4333 = vmatpush1.xpose.msra.mxu0 0.0
    %4334 = vmatprep.subr.mxu0 0.0
    %4335 = vmatpush1.xpose.msra.mxu0 0.0
    %4336 = vmatprep.subr.mxu0 0.0
    %4337 = vmatpush1.xpose.msra.mxu0 0.0
    %4338 = vmatprep.subr.mxu0 0.0
    %4339 = vmatpush1.xpose.msra.mxu0 0.0
    %4340 = vmatprep.subr.mxu0 0.0
    %4341 = vmatpush1.xpose.msra.mxu0 0.0
    %4342 = vmatprep.subr.mxu0 0.0
    %4343 = vmatpush1.xpose.msra.mxu0 0.0
    %4344 = vmatprep.subr.mxu0 0.0
    %4345 = vmatpush1.xpose.msra.mxu0 0.0
    %4346 = vmatprep.subr.mxu0 0.0
    %4347 = vmatpush1.xpose.msra.mxu0 %v4318
    %4348 = vmatprep.subr.mxu0 0.0
    %4349 = vmatpush1.xpose.msra.mxu0 %v4316
    %4350 = vmatprep.subr.mxu0 0.0
    %4351 = vmatpush1.xpose.msra.mxu0 %v4314
    %4352 = vmatprep.subr.mxu0 0.0
    %4353 = vmatpush2.xpose.msra.mxu0 0.0
    %4354 = vmatprep.subr.mxu0 0.0
    %4355 = vmatpush2.xpose.msra.mxu0 0.0
    %4356 = vmatprep.subr.mxu0 0.0
    %4357 = vmatpush2.xpose.msra.mxu0 0.0
    %4358 = vmatprep.subr.mxu0 0.0
    %4359 = vmatpush2.xpose.msra.mxu0 0.0
    %4360 = vmatprep.subr.mxu0 0.0
    %4361 = vmatpush2.xpose.msra.mxu0 0.0
    %4362 = vmatprep.subr.mxu0 0.0
    %4363 = vmatpush2.xpose.msra.mxu0 0.0
    %4364 = vmatprep.subr.mxu0 0.0
    %4365 = vmatpush2.xpose.msra.mxu0 0.0
    %4366 = vmatprep.subr.mxu0 0.0
    %4367 = vmatpush2.xpose.msra.mxu0 0.0
    %4368 = vmatprep.subr.mxu0 0.0
    %4369 = vmatpush2.xpose.msra.mxu0 0.0
    %4370 = vmatprep.subr.mxu0 0.0
    %4371 = vmatpush2.xpose.msra.mxu0 0.0
    %4372 = vmatprep.subr.mxu0 0.0
    %4373 = vmatpush2.xpose.msra.mxu0 0.0
    %4374 = vmatprep.subr.mxu0 0.0
    %4375 = vmatpush2.xpose.msra.mxu0 0.0
    %4376 = vmatprep.subr.mxu0 0.0
    %4377 = vmatpush2.xpose.msra.mxu0 0.0
    %4378 = vmatprep.subr.mxu0 0.0
    %4379 = vmatpush2.xpose.msra.mxu0 0.0
    %4380 = vmatprep.subr.mxu0 0.0
    %4381 = vmatpush2.xpose.msra.mxu0 0.0
    %4382 = vmatprep.subr.mxu0 0.0
    %4383 = vmatpush2.xpose.msra.mxu0 0.0
    %4384 = vmatprep.mubr.f32.mxu0 0.0
    %4385 = vmatmul.mubr.f32.gmra.mxu0 %v4308
    %v4386 = vpop.f32.mrf.mxu0
    %v4387 = vadd.f32 0.0, %v4386
    %v4388 = vpop.f32.mrf.mxu0
    %4389 = vmatprep.mubr.f32.mxu0 0.0
    %4390 = vmatmul.mubr.f32.gmra.mxu0 %v4310
    %v4391 = vpop.f32.mrf.mxu0
    %v4392 = vadd.f32 0.0, %v4391
    %v4393 = vpop.f32.mrf.mxu0
    %4394 = vmatprep.mubr.f32.mxu0 0.0
    %4395 = vmatmul.mubr.f32.gmra.mxu0 %v4312
    %v4396 = vpop.f32.mrf.mxu0
    %v4397 = vadd.f32 0.0, %v4396
    %v4398 = vpop.f32.mrf.mxu0
    %4399 = vdwg.mxu0
    %v4400 = vmul.f32 %v4387, 0.17677669
    %v4401 = vmul.f32 %v4392, 0.17677669
    %v4402 = vmul.f32 %v4397, 0.17677669
    %v4403 = vadd.f32 %v4400, %v196
    %v4404 = vadd.f32 %v4401, %v196
    %v4405 = vadd.f32 %v4402, %v196
    %v4406 = vsel %vm430, %v4403, -inf
    %4407 = vmax.xlane.f32.xlu0 %v4406
    %v4408 = vpop.xlane.xlu0 %4407
    %v4409 = vsel %vm430, %v4404, -inf
    %4410 = vmax.xlane.f32.xlu0 %v4409
    %v4411 = vpop.xlane.xlu0 %4410
    %v4412 = vsel %vm430, %v4405, -inf
    %4413 = vmax.xlane.f32.xlu0 %v4412
    %v4414 = vpop.xlane.xlu0 %4413
    %v4415 = vsub.f32 %v4403, %v4408
    %v4416 = vsub.f32 %v4404, %v4411
    %v4417 = vsub.f32 %v4405, %v4414
    %v4418 = vmul.f32 %v4415, 1.442695
    %v4419 = vpow.pop %v4418
    %v4420 = vmul.f32 %v4416, 1.442695
    %v4421 = vpow.pop %v4420
    %v4422 = vmul.f32 %v4417, 1.442695
    %v4423 = vpow.pop %v4422
    %v4424 = vsel %vm430, %v4419, 0.0
    %4425 = vadd.xlane.f32.xlu0 %v4424
    %v4426 = vpop.xlane.xlu0 %4425
    %v4427 = vsel %vm430, %v4421, 0.0
    %4428 = vadd.xlane.f32.xlu0 %v4427
    %v4429 = vpop.xlane.xlu0 %4428
    %v4430 = vsel %vm430, %v4423, 0.0
    %4431 = vadd.xlane.f32.xlu0 %v4430
    %v4432 = vpop.xlane.xlu0 %4431
    %v4433 = vrcp.pop %v4426
    %v4434 = vrcp.pop %v4429
    %v4435 = vrcp.pop %v4432
    %v4436 = vmul.f32 %v4419, %v4433
    %v4437 = vmul.f32 %v4421, %v4434
    %v4438 = vmul.f32 %v4423, %v4435
    %v4440 = vsel %vm430, %v4436, 0
    %v4443 = vsel %vm430, %v4437, 0
    %v4446 = vsel %vm430, %v4438, 0
    %4448 = vmatprep.subr.mxu0 0.0
    %4449 = vmatpush1.msra.mxu0 0.0
    %4450 = vmatprep.subr.mxu0 0.0
    %4451 = vmatpush1.msra.mxu0 0.0
    %4452 = vmatprep.subr.mxu0 0.0
    %4453 = vmatpush1.msra.mxu0 0.0
    %4454 = vmatprep.subr.mxu0 0.0
    %4455 = vmatpush1.msra.mxu0 0.0
    %4456 = vmatprep.subr.mxu0 0.0
    %4457 = vmatpush1.msra.mxu0 0.0
    %4458 = vmatprep.subr.mxu0 0.0
    %4459 = vmatpush1.msra.mxu0 0.0
    %4460 = vmatprep.subr.mxu0 0.0
    %4461 = vmatpush1.msra.mxu0 0.0
    %4462 = vmatprep.subr.mxu0 0.0
    %4463 = vmatpush1.msra.mxu0 0.0
    %4464 = vmatprep.subr.mxu0 0.0
    %4465 = vmatpush1.msra.mxu0 0.0
    %4466 = vmatprep.subr.mxu0 0.0
    %4467 = vmatpush1.msra.mxu0 0.0
    %4468 = vmatprep.subr.mxu0 0.0
    %4469 = vmatpush1.msra.mxu0 0.0
    %4470 = vmatprep.subr.mxu0 0.0
    %4471 = vmatpush1.msra.mxu0 0.0
    %4472 = vmatprep.subr.mxu0 0.0
    %4473 = vmatpush1.msra.mxu0 0.0
    %4474 = vmatprep.subr.mxu0 0.0
    %4475 = vmatpush1.msra.mxu0 %v2854
    %4476 = vmatprep.subr.mxu0 0.0
    %4477 = vmatpush1.msra.mxu0 %v2848
    %4478 = vmatprep.subr.mxu0 0.0
    %4479 = vmatpush1.msra.mxu0 %v2842
    %4480 = vmatprep.subr.mxu0 0.0
    %4481 = vmatpush2.msra.mxu0 0.0
    %4482 = vmatprep.subr.mxu0 0.0
    %4483 = vmatpush2.msra.mxu0 0.0
    %4484 = vmatprep.subr.mxu0 0.0
    %4485 = vmatpush2.msra.mxu0 0.0
    %4486 = vmatprep.subr.mxu0 0.0
    %4487 = vmatpush2.msra.mxu0 0.0
    %4488 = vmatprep.subr.mxu0 0.0
    %4489 = vmatpush2.msra.mxu0 0.0
    %4490 = vmatprep.subr.mxu0 0.0
    %4491 = vmatpush2.msra.mxu0 0.0
    %4492 = vmatprep.subr.mxu0 0.0
    %4493 = vmatpush2.msra.mxu0 0.0
    %4494 = vmatprep.subr.mxu0 0.0
    %4495 = vmatpush2.msra.mxu0 0.0
    %4496 = vmatprep.subr.mxu0 0.0
    %4497 = vmatpush2.msra.mxu0 0.0
    %4498 = vmatprep.subr.mxu0 0.0
    %4499 = vmatpush2.msra.mxu0 0.0
    %4500 = vmatprep.subr.mxu0 0.0
    %4501 = vmatpush2.msra.mxu0 0.0
    %4502 = vmatprep.subr.mxu0 0.0
    %4503 = vmatpush2.msra.mxu0 0.0
    %4504 = vmatprep.subr.mxu0 0.0
    %4505 = vmatpush2.msra.mxu0 0.0
    %4506 = vmatprep.subr.mxu0 0.0
    %4507 = vmatpush2.msra.mxu0 0.0
    %4508 = vmatprep.subr.mxu0 0.0
    %4509 = vmatpush2.msra.mxu0 0.0
    %4510 = vmatprep.subr.mxu0 0.0
    %4511 = vmatpush2.msra.mxu0 0.0
    %4512 = vmatprep.mubr.f32.mxu0 0.0
    %4513 = vmatmul.mubr.f32.gmra.mxu0 %v4440
    %v4514 = vpop.f32.mrf.mxu0
    %v4515 = vadd.f32 0.0, %v4514
    %v4516 = vpop.f32.mrf.mxu0
    %4517 = vmatprep.mubr.f32.mxu0 0.0
    %4518 = vmatmul.mubr.f32.gmra.mxu0 %v4443
    %v4519 = vpop.f32.mrf.mxu0
    %v4520 = vadd.f32 0.0, %v4519
    %v4521 = vpop.f32.mrf.mxu0
    %4522 = vmatprep.mubr.f32.mxu0 0.0
    %4523 = vmatmul.mubr.f32.gmra.mxu0 %v4446
    %v4524 = vpop.f32.mrf.mxu0
    %v4525 = vadd.f32 0.0, %v4524
    %v4526 = vpop.f32.mrf.mxu0
    %4527 = vdwg.mxu0
    %v4528 = vadd.f32 %v4283, %v4515
    %v4529 = vadd.f32 %v4288, %v4520
    %v4530 = vadd.f32 %v4293, %v4525
    %4531 = vrot.lane.b32.xlu0 %v2840, 104
    %v4532 = vpop.permute.xlu0 %4531
    %4533 = vrot.lane.b32.xlu0 %v2846, 104
    %v4534 = vpop.permute.xlu0 %4533
    %4535 = vrot.lane.b32.xlu0 %v2852, 104
    %v4536 = vpop.permute.xlu0 %4535
    %4537 = vrot.lane.b32.xlu0 %v2840, 72
    %v4538 = vpop.permute.xlu0 %4537
    %4539 = vrot.lane.b32.xlu0 %v2846, 72
    %v4540 = vpop.permute.xlu0 %4539
    %4541 = vrot.lane.b32.xlu0 %v2852, 72
    %v4542 = vpop.permute.xlu0 %4541
    %v4543 = vsel %vm331, %v4532, 0
    %v4545 = vsel %vm331, %v4534, 0
    %v4547 = vsel %vm331, %v4536, 0
    %v4549 = vsel %vm331, %v4538, 0
    %v4551 = vsel %vm331, %v4540, 0
    %v4553 = vsel %vm331, %v4542, 0
    %4555 = vmatprep.subr.mxu0 0.0
    %4556 = vmatpush1.xpose.msra.mxu0 0.0
    %4557 = vmatprep.subr.mxu0 0.0
    %4558 = vmatpush1.xpose.msra.mxu0 0.0
    %4559 = vmatprep.subr.mxu0 0.0
    %4560 = vmatpush1.xpose.msra.mxu0 0.0
    %4561 = vmatprep.subr.mxu0 0.0
    %4562 = vmatpush1.xpose.msra.mxu0 0.0
    %4563 = vmatprep.subr.mxu0 0.0
    %4564 = vmatpush1.xpose.msra.mxu0 0.0
    %4565 = vmatprep.subr.mxu0 0.0
    %4566 = vmatpush1.xpose.msra.mxu0 0.0
    %4567 = vmatprep.subr.mxu0 0.0
    %4568 = vmatpush1.xpose.msra.mxu0 0.0
    %4569 = vmatprep.subr.mxu0 0.0
    %4570 = vmatpush1.xpose.msra.mxu0 0.0
    %4571 = vmatprep.subr.mxu0 0.0
    %4572 = vmatpush1.xpose.msra.mxu0 0.0
    %4573 = vmatprep.subr.mxu0 0.0
    %4574 = vmatpush1.xpose.msra.mxu0 0.0
    %4575 = vmatprep.subr.mxu0 0.0
    %4576 = vmatpush1.xpose.msra.mxu0 0.0
    %4577 = vmatprep.subr.mxu0 0.0
    %4578 = vmatpush1.xpose.msra.mxu0 0.0
    %4579 = vmatprep.subr.mxu0 0.0
    %4580 = vmatpush1.xpose.msra.mxu0 0.0
    %4581 = vmatprep.subr.mxu0 0.0
    %4582 = vmatpush1.xpose.msra.mxu0 %v4553
    %4583 = vmatprep.subr.mxu0 0.0
    %4584 = vmatpush1.xpose.msra.mxu0 %v4551
    %4585 = vmatprep.subr.mxu0 0.0
    %4586 = vmatpush1.xpose.msra.mxu0 %v4549
    %4587 = vmatprep.subr.mxu0 0.0
    %4588 = vmatpush2.xpose.msra.mxu0 0.0
    %4589 = vmatprep.subr.mxu0 0.0
    %4590 = vmatpush2.xpose.msra.mxu0 0.0
    %4591 = vmatprep.subr.mxu0 0.0
    %4592 = vmatpush2.xpose.msra.mxu0 0.0
    %4593 = vmatprep.subr.mxu0 0.0
    %4594 = vmatpush2.xpose.msra.mxu0 0.0
    %4595 = vmatprep.subr.mxu0 0.0
    %4596 = vmatpush2.xpose.msra.mxu0 0.0
    %4597 = vmatprep.subr.mxu0 0.0
    %4598 = vmatpush2.xpose.msra.mxu0 0.0
    %4599 = vmatprep.subr.mxu0 0.0
    %4600 = vmatpush2.xpose.msra.mxu0 0.0
    %4601 = vmatprep.subr.mxu0 0.0
    %4602 = vmatpush2.xpose.msra.mxu0 0.0
    %4603 = vmatprep.subr.mxu0 0.0
    %4604 = vmatpush2.xpose.msra.mxu0 0.0
    %4605 = vmatprep.subr.mxu0 0.0
    %4606 = vmatpush2.xpose.msra.mxu0 0.0
    %4607 = vmatprep.subr.mxu0 0.0
    %4608 = vmatpush2.xpose.msra.mxu0 0.0
    %4609 = vmatprep.subr.mxu0 0.0
    %4610 = vmatpush2.xpose.msra.mxu0 0.0
    %4611 = vmatprep.subr.mxu0 0.0
    %4612 = vmatpush2.xpose.msra.mxu0 0.0
    %4613 = vmatprep.subr.mxu0 0.0
    %4614 = vmatpush2.xpose.msra.mxu0 0.0
    %4615 = vmatprep.subr.mxu0 0.0
    %4616 = vmatpush2.xpose.msra.mxu0 0.0
    %4617 = vmatprep.subr.mxu0 0.0
    %4618 = vmatpush2.xpose.msra.mxu0 0.0
    %4619 = vmatprep.mubr.f32.mxu0 0.0
    %4620 = vmatmul.mubr.f32.gmra.mxu0 %v4543
    %v4621 = vpop.f32.mrf.mxu0
    %v4622 = vadd.f32 0.0, %v4621
    %v4623 = vpop.f32.mrf.mxu0
    %4624 = vmatprep.mubr.f32.mxu0 0.0
    %4625 = vmatmul.mubr.f32.gmra.mxu0 %v4545
    %v4626 = vpop.f32.mrf.mxu0
    %v4627 = vadd.f32 0.0, %v4626
    %v4628 = vpop.f32.mrf.mxu0
    %4629 = vmatprep.mubr.f32.mxu0 0.0
    %4630 = vmatmul.mubr.f32.gmra.mxu0 %v4547
    %v4631 = vpop.f32.mrf.mxu0
    %v4632 = vadd.f32 0.0, %v4631
    %v4633 = vpop.f32.mrf.mxu0
    %4634 = vdwg.mxu0
    %v4635 = vmul.f32 %v4622, 0.17677669
    %v4636 = vmul.f32 %v4627, 0.17677669
    %v4637 = vmul.f32 %v4632, 0.17677669
    %v4638 = vadd.f32 %v4635, %v196
    %v4639 = vadd.f32 %v4636, %v196
    %v4640 = vadd.f32 %v4637, %v196
    %v4641 = vsel %vm430, %v4638, -inf
    %4642 = vmax.xlane.f32.xlu0 %v4641
    %v4643 = vpop.xlane.xlu0 %4642
    %v4644 = vsel %vm430, %v4639, -inf
    %4645 = vmax.xlane.f32.xlu0 %v4644
    %v4646 = vpop.xlane.xlu0 %4645
    %v4647 = vsel %vm430, %v4640, -inf
    %4648 = vmax.xlane.f32.xlu0 %v4647
    %v4649 = vpop.xlane.xlu0 %4648
    %v4650 = vsub.f32 %v4638, %v4643
    %v4651 = vsub.f32 %v4639, %v4646
    %v4652 = vsub.f32 %v4640, %v4649
    %v4653 = vmul.f32 %v4650, 1.442695
    %v4654 = vpow.pop %v4653
    %v4655 = vmul.f32 %v4651, 1.442695
    %v4656 = vpow.pop %v4655
    %v4657 = vmul.f32 %v4652, 1.442695
    %v4658 = vpow.pop %v4657
    %v4659 = vsel %vm430, %v4654, 0.0
    %4660 = vadd.xlane.f32.xlu0 %v4659
    %v4661 = vpop.xlane.xlu0 %4660
    %v4662 = vsel %vm430, %v4656, 0.0
    %4663 = vadd.xlane.f32.xlu0 %v4662
    %v4664 = vpop.xlane.xlu0 %4663
    %v4665 = vsel %vm430, %v4658, 0.0
    %4666 = vadd.xlane.f32.xlu0 %v4665
    %v4667 = vpop.xlane.xlu0 %4666
    %v4668 = vrcp.pop %v4661
    %v4669 = vrcp.pop %v4664
    %v4670 = vrcp.pop %v4667
    %v4671 = vmul.f32 %v4654, %v4668
    %v4672 = vmul.f32 %v4656, %v4669
    %v4673 = vmul.f32 %v4658, %v4670
    %4677 = vrot.lane.b32.xlu0 %v2842, 96
    %v4678 = vpop.permute.xlu0 %4677
    %4679 = vrot.lane.b32.xlu0 %v2848, 96
    %v4680 = vpop.permute.xlu0 %4679
    %4681 = vrot.lane.b32.xlu0 %v2854, 96
    %v4682 = vpop.permute.xlu0 %4681
    %v4687 = vsel %vm430, %v4671, 0
    %v4690 = vsel %vm430, %v4672, 0
    %v4693 = vsel %vm430, %v4673, 0
    %4695 = vmatprep.subr.mxu0 0.0
    %4696 = vmatpush1.msra.mxu0 0.0
    %4697 = vmatprep.subr.mxu0 0.0
    %4698 = vmatpush1.msra.mxu0 0.0
    %4699 = vmatprep.subr.mxu0 0.0
    %4700 = vmatpush1.msra.mxu0 0.0
    %4701 = vmatprep.subr.mxu0 0.0
    %4702 = vmatpush1.msra.mxu0 0.0
    %4703 = vmatprep.subr.mxu0 0.0
    %4704 = vmatpush1.msra.mxu0 0.0
    %4705 = vmatprep.subr.mxu0 0.0
    %4706 = vmatpush1.msra.mxu0 0.0
    %4707 = vmatprep.subr.mxu0 0.0
    %4708 = vmatpush1.msra.mxu0 0.0
    %4709 = vmatprep.subr.mxu0 0.0
    %4710 = vmatpush1.msra.mxu0 0.0
    %4711 = vmatprep.subr.mxu0 0.0
    %4712 = vmatpush1.msra.mxu0 0.0
    %4713 = vmatprep.subr.mxu0 0.0
    %4714 = vmatpush1.msra.mxu0 0.0
    %4715 = vmatprep.subr.mxu0 0.0
    %4716 = vmatpush1.msra.mxu0 0.0
    %4717 = vmatprep.subr.mxu0 0.0
    %4718 = vmatpush1.msra.mxu0 0.0
    %4719 = vmatprep.subr.mxu0 0.0
    %4720 = vmatpush1.msra.mxu0 0.0
    %4721 = vmatprep.subr.mxu0 0.0
    %4722 = vmatpush1.msra.mxu0 %v4682
    %4723 = vmatprep.subr.mxu0 0.0
    %4724 = vmatpush1.msra.mxu0 %v4680
    %4725 = vmatprep.subr.mxu0 0.0
    %4726 = vmatpush1.msra.mxu0 %v4678
    %4727 = vmatprep.subr.mxu0 0.0
    %4728 = vmatpush2.msra.mxu0 0.0
    %4729 = vmatprep.subr.mxu0 0.0
    %4730 = vmatpush2.msra.mxu0 0.0
    %4731 = vmatprep.subr.mxu0 0.0
    %4732 = vmatpush2.msra.mxu0 0.0
    %4733 = vmatprep.subr.mxu0 0.0
    %4734 = vmatpush2.msra.mxu0 0.0
    %4735 = vmatprep.subr.mxu0 0.0
    %4736 = vmatpush2.msra.mxu0 0.0
    %4737 = vmatprep.subr.mxu0 0.0
    %4738 = vmatpush2.msra.mxu0 0.0
    %4739 = vmatprep.subr.mxu0 0.0
    %4740 = vmatpush2.msra.mxu0 0.0
    %4741 = vmatprep.subr.mxu0 0.0
    %4742 = vmatpush2.msra.mxu0 0.0
    %4743 = vmatprep.subr.mxu0 0.0
    %4744 = vmatpush2.msra.mxu0 0.0
    %4745 = vmatprep.subr.mxu0 0.0
    %4746 = vmatpush2.msra.mxu0 0.0
    %4747 = vmatprep.subr.mxu0 0.0
    %4748 = vmatpush2.msra.mxu0 0.0
    %4749 = vmatprep.subr.mxu0 0.0
    %4750 = vmatpush2.msra.mxu0 0.0
    %4751 = vmatprep.subr.mxu0 0.0
    %4752 = vmatpush2.msra.mxu0 0.0
    %4753 = vmatprep.subr.mxu0 0.0
    %4754 = vmatpush2.msra.mxu0 0.0
    %4755 = vmatprep.subr.mxu0 0.0
    %4756 = vmatpush2.msra.mxu0 0.0
    %4757 = vmatprep.subr.mxu0 0.0
    %4758 = vmatpush2.msra.mxu0 0.0
    %4759 = vmatprep.mubr.f32.mxu0 0.0
    %4760 = vmatmul.mubr.f32.gmra.mxu0 %v4687
    %v4761 = vpop.f32.mrf.mxu0
    %v4762 = vadd.f32 0.0, %v4761
    %v4763 = vpop.f32.mrf.mxu0
    %4764 = vmatprep.mubr.f32.mxu0 0.0
    %4765 = vmatmul.mubr.f32.gmra.mxu0 %v4690
    %v4766 = vpop.f32.mrf.mxu0
    %v4767 = vadd.f32 0.0, %v4766
    %v4768 = vpop.f32.mrf.mxu0
    %4769 = vmatprep.mubr.f32.mxu0 0.0
    %4770 = vmatmul.mubr.f32.gmra.mxu0 %v4693
    %v4771 = vpop.f32.mrf.mxu0
    %v4772 = vadd.f32 0.0, %v4771
    %v4773 = vpop.f32.mrf.mxu0
    %4774 = vdwg.mxu0
    %v4775 = vadd.f32 %v4528, %v4762
    %v4776 = vadd.f32 %v4529, %v4767
    %v4777 = vadd.f32 %v4530, %v4772
    %s4778 = scalar_lea.vmem %s6, 1
    %v4779 = vld [vmem:[%s4778] sm:$0x1]
    %v4781 = vlaneseq
    %v4782 = vshrl.u32 %v4781, 7
    %v4783 = vsub.s32 0, %v4782
    %v4784 = vrot.slane %v4779, %v4783
    %v4786 = vadd.f32 %v3814, %v4784
    %v4787 = vadd.f32 %v3815, %v4784
    %v4788 = vadd.f32 %v3816, %v4784
    %v4789 = vadd.f32 %v4775, %v4784
    %v4790 = vadd.f32 %v4776, %v4784
    %v4791 = vadd.f32 %v4777, %v4784
    %v4792 = vadd.f32 %v4786, %v2722
    %v4793 = vadd.f32 %v4787, %v2723
    %v4794 = vadd.f32 %v4788, %v2724
    %v4795 = vadd.f32 %v4789, %v2725
    %v4796 = vadd.f32 %v4790, %v2726
    %v4797 = vadd.f32 %v4791, %v2727
    %s4798 = scalar_lea.vmem %s7, 1
    %v4799 = vld [vmem:[%s4798] sm:$0x1]
    %s4800 = scalar_lea.vmem %s8, 1
    %v4801 = vld [vmem:[%s4800] sm:$0x1]
    %v4802 = vsel %vm205, %v4792, 0.0
    %4803 = vadd.xlane.f32.xlu0 %v4802
    %v4804 = vpop.xlane.xlu0 %4803
    %v4805 = vsel %vm205, %v4793, 0.0
    %4806 = vadd.xlane.f32.xlu0 %v4805
    %v4807 = vpop.xlane.xlu0 %4806
    %v4808 = vsel %vm205, %v4794, 0.0
    %4809 = vadd.xlane.f32.xlu0 %v4808
    %v4810 = vpop.xlane.xlu0 %4809
    %v4811 = vsel %vm205, %v4795, 0.0
    %4812 = vadd.xlane.f32.xlu0 %v4811
    %v4813 = vpop.xlane.xlu0 %4812
    %v4814 = vsel %vm205, %v4796, 0.0
    %4815 = vadd.xlane.f32.xlu0 %v4814
    %v4816 = vpop.xlane.xlu0 %4815
    %v4817 = vsel %vm205, %v4797, 0.0
    %4818 = vadd.xlane.f32.xlu0 %v4817
    %v4819 = vpop.xlane.xlu0 %4818
    %v4820 = vmul.f32 %v4804, %v2285
    %v4821 = vmul.f32 %v4807, %v2285
    %v4822 = vmul.f32 %v4810, %v2285
    %v4823 = vmul.f32 %v4813, %v2285
    %v4824 = vmul.f32 %v4816, %v2285
    %v4825 = vmul.f32 %v4819, %v2285
    %v4826 = vsub.f32 %v4792, %v4820
    %v4827 = vsub.f32 %v4793, %v4821
    %v4828 = vsub.f32 %v4794, %v4822
    %v4829 = vsub.f32 %v4795, %v4823
    %v4830 = vsub.f32 %v4796, %v4824
    %v4831 = vsub.f32 %v4797, %v4825
    %v4832 = vmul.f32 %v4826, %v4826
    %v4833 = vmul.f32 %v4827, %v4827
    %v4834 = vmul.f32 %v4828, %v4828
    %v4835 = vmul.f32 %v4829, %v4829
    %v4836 = vmul.f32 %v4830, %v4830
    %v4837 = vmul.f32 %v4831, %v4831
    %v4838 = vsel %vm205, %v4832, 0.0
    %4839 = vadd.xlane.f32.xlu0 %v4838
    %v4840 = vpop.xlane.xlu0 %4839
    %v4841 = vsel %vm205, %v4833, 0.0
    %4842 = vadd.xlane.f32.xlu0 %v4841
    %v4843 = vpop.xlane.xlu0 %4842
    %v4844 = vsel %vm205, %v4834, 0.0
    %4845 = vadd.xlane.f32.xlu0 %v4844
    %v4846 = vpop.xlane.xlu0 %4845
    %v4847 = vsel %vm205, %v4835, 0.0
    %4848 = vadd.xlane.f32.xlu0 %v4847
    %v4849 = vpop.xlane.xlu0 %4848
    %v4850 = vsel %vm205, %v4836, 0.0
    %4851 = vadd.xlane.f32.xlu0 %v4850
    %v4852 = vpop.xlane.xlu0 %4851
    %v4853 = vsel %vm205, %v4837, 0.0
    %4854 = vadd.xlane.f32.xlu0 %v4853
    %v4855 = vpop.xlane.xlu0 %4854
    %v4856 = vmul.f32 %v4840, %v2285
    %v4857 = vmul.f32 %v4843, %v2285
    %v4858 = vmul.f32 %v4846, %v2285
    %v4859 = vmul.f32 %v4849, %v2285
    %v4860 = vmul.f32 %v4852, %v2285
    %v4861 = vmul.f32 %v4855, %v2285
    %v4862 = vadd.f32 %v4856, 1e-05
    %v4863 = vadd.f32 %v4857, 1e-05
    %v4864 = vadd.f32 %v4858, 1e-05
    %v4865 = vadd.f32 %v4859, 1e-05
    %v4866 = vadd.f32 %v4860, 1e-05
    %v4867 = vadd.f32 %v4861, 1e-05
    %v4868 = vrsqrt.pop %v4862
    %v4869 = vrsqrt.pop %v4863
    %v4870 = vrsqrt.pop %v4864
    %v4871 = vrsqrt.pop %v4865
    %v4872 = vrsqrt.pop %v4866
    %v4873 = vrsqrt.pop %v4867
    %v4874 = vmul.f32 %v4826, %v4868
    %v4875 = vmul.f32 %v4827, %v4869
    %v4876 = vmul.f32 %v4828, %v4870
    %v4877 = vmul.f32 %v4829, %v4871
    %v4878 = vmul.f32 %v4830, %v4872
    %v4879 = vmul.f32 %v4831, %v4873
    %v4881 = vlaneseq
    %v4882 = vshrl.u32 %v4881, 7
    %v4883 = vsub.s32 0, %v4882
    %v4884 = vrot.slane %v4799, %v4883
    %v4886 = vmul.f32 %v4874, %v4884
    %v4887 = vmul.f32 %v4875, %v4884
    %v4888 = vmul.f32 %v4876, %v4884
    %v4889 = vmul.f32 %v4877, %v4884
    %v4890 = vmul.f32 %v4878, %v4884
    %v4891 = vmul.f32 %v4879, %v4884
    %v4893 = vlaneseq
    %v4894 = vshrl.u32 %v4893, 7
    %v4895 = vsub.s32 0, %v4894
    %v4896 = vrot.slane %v4801, %v4895
    %v4898 = vadd.f32 %v4886, %v4896
    %v4899 = vadd.f32 %v4887, %v4896
    %v4900 = vadd.f32 %v4888, %v4896
    %v4901 = vadd.f32 %v4889, %v4896
    %v4902 = vadd.f32 %v4890, %v4896
    %v4903 = vadd.f32 %v4891, %v4896
    %s4904 = scalar_lea.vmem %s9, 32
    %v4905 = vld [vmem:[%s4904] sm:$0xff]
    %v4906 = vld [vmem:[%s4904 + $0x8] sm:$0xff]
    %v4907 = vld [vmem:[%s4904 + $0x10] sm:$0xff]
    %v4908 = vld [vmem:[%s4904 + $0x18] sm:$0xff]
    %s4909 = scalar_lea.vmem %s10, 1
    %v4910 = vld [vmem:[%s4909] sm:$0x1]
    %v4912 = vlaneseq
    %v4913 = vshrl.u32 %v4912, 7
    %v4914 = vsub.s32 0, %v4913
    %v4915 = vrot.slane %v4910, %v4914
    %v4918 = vsel %vm205, %v4898, 0
    %v4921 = vsel %vm205, %v4899, 0
    %v4924 = vsel %vm205, %v4900, 0
    %v4927 = vsel %vm205, %v4901, 0
    %v4930 = vsel %vm205, %v4902, 0
    %v4933 = vsel %vm205, %v4903, 0
    %4935 = vmatprep.subr.mxu0 0.0
    %4936 = vmatpush1.msra.mxu0 0.0
    %4937 = vmatprep.subr.mxu0 0.0
    %4938 = vmatpush1.msra.mxu0 0.0
    %4939 = vmatprep.subr.mxu0 0.0
    %4940 = vmatpush1.msra.mxu0 0.0
    %4941 = vmatprep.subr.mxu0 0.0
    %4942 = vmatpush1.msra.mxu0 0.0
    %4943 = vmatprep.subr.mxu0 0.0
    %4944 = vmatpush1.msra.mxu0 0.0
    %4945 = vmatprep.subr.mxu0 0.0
    %4946 = vmatpush1.msra.mxu0 0.0
    %4947 = vmatprep.subr.mxu0 0.0
    %4948 = vmatpush1.msra.mxu0 0.0
    %4949 = vmatprep.subr.mxu0 0.0
    %4950 = vmatpush1.msra.mxu0 0.0
    %4951 = vmatprep.subr.mxu0 0.0
    %4952 = vmatpush1.msra.mxu0 0.0
    %4953 = vmatprep.subr.mxu0 0.0
    %4954 = vmatpush1.msra.mxu0 0.0
    %4955 = vmatprep.subr.mxu0 0.0
    %4956 = vmatpush1.msra.mxu0 0.0
    %4957 = vmatprep.subr.mxu0 0.0
    %4958 = vmatpush1.msra.mxu0 0.0
    %4959 = vmatprep.subr.mxu0 0.0
    %4960 = vmatpush1.msra.mxu0 %v4908
    %4961 = vmatprep.subr.mxu0 0.0
    %4962 = vmatpush1.msra.mxu0 %v4907
    %4963 = vmatprep.subr.mxu0 0.0
    %4964 = vmatpush1.msra.mxu0 %v4906
    %4965 = vmatprep.subr.mxu0 0.0
    %4966 = vmatpush1.msra.mxu0 %v4905
    %4967 = vmatprep.subr.mxu0 0.0
    %4968 = vmatpush2.msra.mxu0 0.0
    %4969 = vmatprep.subr.mxu0 0.0
    %4970 = vmatpush2.msra.mxu0 0.0
    %4971 = vmatprep.subr.mxu0 0.0
    %4972 = vmatpush2.msra.mxu0 0.0
    %4973 = vmatprep.subr.mxu0 0.0
    %4974 = vmatpush2.msra.mxu0 0.0
    %4975 = vmatprep.subr.mxu0 0.0
    %4976 = vmatpush2.msra.mxu0 0.0
    %4977 = vmatprep.subr.mxu0 0.0
    %4978 = vmatpush2.msra.mxu0 0.0
    %4979 = vmatprep.subr.mxu0 0.0
    %4980 = vmatpush2.msra.mxu0 0.0
    %4981 = vmatprep.subr.mxu0 0.0
    %4982 = vmatpush2.msra.mxu0 0.0
    %4983 = vmatprep.subr.mxu0 0.0
    %4984 = vmatpush2.msra.mxu0 0.0
    %4985 = vmatprep.subr.mxu0 0.0
    %4986 = vmatpush2.msra.mxu0 0.0
    %4987 = vmatprep.subr.mxu0 0.0
    %4988 = vmatpush2.msra.mxu0 0.0
    %4989 = vmatprep.subr.mxu0 0.0
    %4990 = vmatpush2.msra.mxu0 0.0
    %4991 = vmatprep.subr.mxu0 0.0
    %4992 = vmatpush2.msra.mxu0 0.0
    %4993 = vmatprep.subr.mxu0 0.0
    %4994 = vmatpush2.msra.mxu0 0.0
    %4995 = vmatprep.subr.mxu0 0.0
    %4996 = vmatpush2.msra.mxu0 0.0
    %4997 = vmatprep.subr.mxu0 0.0
    %4998 = vmatpush2.msra.mxu0 0.0
    %4999 = vmatprep.mubr.f32.mxu0 0.0
    %5000 = vmatmul.mubr.f32.gmra.mxu0 %v4918
    %v5001 = vpop.f32.mrf.mxu0
    %v5002 = vadd.f32 %v4915, %v5001
    %v5003 = vpop.f32.mrf.mxu0
    %5004 = vmatprep.mubr.f32.mxu0 0.0
    %5005 = vmatmul.mubr.f32.gmra.mxu0 %v4921
    %v5006 = vpop.f32.mrf.mxu0
    %v5007 = vadd.f32 %v4915, %v5006
    %v5008 = vpop.f32.mrf.mxu0
    %5009 = vmatprep.mubr.f32.mxu0 0.0
    %5010 = vmatmul.mubr.f32.gmra.mxu0 %v4924
    %v5011 = vpop.f32.mrf.mxu0
    %v5012 = vadd.f32 %v4915, %v5011
    %v5013 = vpop.f32.mrf.mxu0
    %5014 = vmatprep.mubr.f32.mxu0 0.0
    %5015 = vmatmul.mubr.f32.gmra.mxu0 %v4927
    %v5016 = vpop.f32.mrf.mxu0
    %v5017 = vadd.f32 %v4915, %v5016
    %v5018 = vpop.f32.mrf.mxu0
    %5019 = vmatprep.mubr.f32.mxu0 0.0
    %5020 = vmatmul.mubr.f32.gmra.mxu0 %v4930
    %v5021 = vpop.f32.mrf.mxu0
    %v5022 = vadd.f32 %v4915, %v5021
    %v5023 = vpop.f32.mrf.mxu0
    %5024 = vmatprep.mubr.f32.mxu0 0.0
    %5025 = vmatmul.mubr.f32.gmra.mxu0 %v4933
    %v5026 = vpop.f32.mrf.mxu0
    %v5027 = vadd.f32 %v4915, %v5026
    %v5028 = vpop.f32.mrf.mxu0
    %5029 = vdwg.mxu0
    %v5030 = vmax.f32 %v5002, 0.0
    %v5031 = vmax.f32 %v5007, 0.0
    %v5032 = vmax.f32 %v5012, 0.0
    %v5033 = vmax.f32 %v5017, 0.0
    %v5034 = vmax.f32 %v5022, 0.0
    %v5035 = vmax.f32 %v5027, 0.0
    %s5036 = scalar_lea.vmem %s11, 128
    %v5037 = vld [vmem:[%s5036] sm:$0xff]
    %v5038 = vld [vmem:[%s5036 + $0x8] sm:$0xff]
    %v5039 = vld [vmem:[%s5036 + $0x10] sm:$0xff]
    %v5040 = vld [vmem:[%s5036 + $0x18] sm:$0xff]
    %v5041 = vld [vmem:[%s5036 + $0x20] sm:$0xff]
    %v5042 = vld [vmem:[%s5036 + $0x28] sm:$0xff]
    %v5043 = vld [vmem:[%s5036 + $0x30] sm:$0xff]
    %v5044 = vld [vmem:[%s5036 + $0x38] sm:$0xff]
    %v5045 = vld [vmem:[%s5036 + $0x40] sm:$0xff]
    %v5046 = vld [vmem:[%s5036 + $0x48] sm:$0xff]
    %v5047 = vld [vmem:[%s5036 + $0x50] sm:$0xff]
    %v5048 = vld [vmem:[%s5036 + $0x58] sm:$0xff]
    %v5049 = vld [vmem:[%s5036 + $0x60] sm:$0xff]
    %v5050 = vld [vmem:[%s5036 + $0x68] sm:$0xff]
    %v5051 = vld [vmem:[%s5036 + $0x70] sm:$0xff]
    %v5052 = vld [vmem:[%s5036 + $0x78] sm:$0xff]
    %s5053 = scalar_lea.vmem %s12, 1
    %v5054 = vld [vmem:[%s5053] sm:$0x1]
    %v5056 = vlaneseq
    %v5057 = vshrl.u32 %v5056, 7
    %v5058 = vsub.s32 0, %v5057
    %v5059 = vrot.slane %v5054, %v5058
    %5061 = vmatprep.subr.mxu0 0.0
    %5062 = vmatpush1.msra.mxu0 %v5052
    %5063 = vmatprep.subr.mxu0 0.0
    %5064 = vmatpush1.msra.mxu0 %v5051
    %5065 = vmatprep.subr.mxu0 0.0
    %5066 = vmatpush1.msra.mxu0 %v5050
    %5067 = vmatprep.subr.mxu0 0.0
    %5068 = vmatpush1.msra.mxu0 %v5049
    %5069 = vmatprep.subr.mxu0 0.0
    %5070 = vmatpush1.msra.mxu0 %v5048
    %5071 = vmatprep.subr.mxu0 0.0
    %5072 = vmatpush1.msra.mxu0 %v5047
    %5073 = vmatprep.subr.mxu0 0.0
    %5074 = vmatpush1.msra.mxu0 %v5046
    %5075 = vmatprep.subr.mxu0 0.0
    %5076 = vmatpush1.msra.mxu0 %v5045
    %5077 = vmatprep.subr.mxu0 0.0
    %5078 = vmatpush1.msra.mxu0 %v5044
    %5079 = vmatprep.subr.mxu0 0.0
    %5080 = vmatpush1.msra.mxu0 %v5043
    %5081 = vmatprep.subr.mxu0 0.0
    %5082 = vmatpush1.msra.mxu0 %v5042
    %5083 = vmatprep.subr.mxu0 0.0
    %5084 = vmatpush1.msra.mxu0 %v5041
    %5085 = vmatprep.subr.mxu0 0.0
    %5086 = vmatpush1.msra.mxu0 %v5040
    %5087 = vmatprep.subr.mxu0 0.0
    %5088 = vmatpush1.msra.mxu0 %v5039
    %5089 = vmatprep.subr.mxu0 0.0
    %5090 = vmatpush1.msra.mxu0 %v5038
    %5091 = vmatprep.subr.mxu0 0.0
    %5092 = vmatpush1.msra.mxu0 %v5037
    %5093 = vmatprep.subr.mxu0 0.0
    %5094 = vmatpush2.msra.mxu0 0.0
    %5095 = vmatprep.subr.mxu0 0.0
    %5096 = vmatpush2.msra.mxu0 0.0
    %5097 = vmatprep.subr.mxu0 0.0
    %5098 = vmatpush2.msra.mxu0 0.0
    %5099 = vmatprep.subr.mxu0 0.0
    %5100 = vmatpush2.msra.mxu0 0.0
    %5101 = vmatprep.subr.mxu0 0.0
    %5102 = vmatpush2.msra.mxu0 0.0
    %5103 = vmatprep.subr.mxu0 0.0
    %5104 = vmatpush2.msra.mxu0 0.0
    %5105 = vmatprep.subr.mxu0 0.0
    %5106 = vmatpush2.msra.mxu0 0.0
    %5107 = vmatprep.subr.mxu0 0.0
    %5108 = vmatpush2.msra.mxu0 0.0
    %5109 = vmatprep.subr.mxu0 0.0
    %5110 = vmatpush2.msra.mxu0 0.0
    %5111 = vmatprep.subr.mxu0 0.0
    %5112 = vmatpush2.msra.mxu0 0.0
    %5113 = vmatprep.subr.mxu0 0.0
    %5114 = vmatpush2.msra.mxu0 0.0
    %5115 = vmatprep.subr.mxu0 0.0
    %5116 = vmatpush2.msra.mxu0 0.0
    %5117 = vmatprep.subr.mxu0 0.0
    %5118 = vmatpush2.msra.mxu0 0.0
    %5119 = vmatprep.subr.mxu0 0.0
    %5120 = vmatpush2.msra.mxu0 0.0
    %5121 = vmatprep.subr.mxu0 0.0
    %5122 = vmatpush2.msra.mxu0 0.0
    %5123 = vmatprep.subr.mxu0 0.0
    %5124 = vmatpush2.msra.mxu0 0.0
    %5125 = vmatprep.mubr.f32.mxu0 0.0
    %5126 = vmatmul.mubr.f32.gmra.mxu0 %v5030
    %v5127 = vpop.f32.mrf.mxu0
    %v5128 = vpop.f32.mrf.mxu0
    %5129 = vmatprep.mubr.f32.mxu0 0.0
    %5130 = vmatmul.mubr.f32.gmra.mxu0 %v5031
    %v5131 = vpop.f32.mrf.mxu0
    %v5132 = vpop.f32.mrf.mxu0
    %5133 = vmatprep.mubr.f32.mxu0 0.0
    %5134 = vmatmul.mubr.f32.gmra.mxu0 %v5032
    %v5135 = vpop.f32.mrf.mxu0
    %v5136 = vadd.f32 %v5059, %v5135
    %v5137 = vpop.f32.mrf.mxu0
    %5138 = vmatprep.mubr.f32.mxu0 0.0
    %5139 = vmatmul.mubr.f32.gmra.mxu0 %v5033
    %v5140 = vpop.f32.mrf.mxu0
    %v5141 = vpop.f32.mrf.mxu0
    %5142 = vmatprep.mubr.f32.mxu0 0.0
    %5143 = vmatmul.mubr.f32.gmra.mxu0 %v5034
    %v5144 = vpop.f32.mrf.mxu0
    %v5145 = vpop.f32.mrf.mxu0
    %5146 = vmatprep.mubr.f32.mxu0 0.0
    %5147 = vmatmul.mubr.f32.gmra.mxu0 %v5035
    %v5148 = vpop.f32.mrf.mxu0
    %v5149 = vadd.f32 %v5059, %v5148
    %v5150 = vpop.f32.mrf.mxu0
    %5151 = vdwg.mxu0
    %v5152 = vadd.f32 %v5136, %v4900
    %v5153 = vadd.f32 %v5149, %v4903
    %s5154 = scalar_lea.vmem %s13, 1
    %v5155 = vld [vmem:[%s5154] sm:$0x1]
    %s5156 = scalar_lea.vmem %s14, 1
    %v5157 = vld [vmem:[%s5156] sm:$0x1]
    %v5158 = vsel %vm205, %v5152, 0.0
    %5159 = vadd.xlane.f32.xlu0 %v5158
    %v5160 = vpop.xlane.xlu0 %5159
    %v5161 = vsel %vm205, %v5153, 0.0
    %5162 = vadd.xlane.f32.xlu0 %v5161
    %v5163 = vpop.xlane.xlu0 %5162
    %v5164 = vmul.f32 %v5160, %v2285
    %v5165 = vmul.f32 %v5163, %v2285
    %v5166 = vsub.f32 %v5152, %v5164
    %v5167 = vsub.f32 %v5153, %v5165
    %v5168 = vmul.f32 %v5166, %v5166
    %v5169 = vmul.f32 %v5167, %v5167
    %v5170 = vsel %vm205, %v5168, 0.0
    %5171 = vadd.xlane.f32.xlu0 %v5170
    %v5172 = vpop.xlane.xlu0 %5171
    %v5173 = vsel %vm205, %v5169, 0.0
    %5174 = vadd.xlane.f32.xlu0 %v5173
    %v5175 = vpop.xlane.xlu0 %5174
    %v5176 = vmul.f32 %v5172, %v2285
    %v5177 = vmul.f32 %v5175, %v2285
    %v5178 = vadd.f32 %v5176, 1e-05
    %v5179 = vadd.f32 %v5177, 1e-05
    %v5180 = vrsqrt.pop %v5178
    %v5181 = vrsqrt.pop %v5179
    %v5182 = vmul.f32 %v5166, %v5180
    %v5183 = vmul.f32 %v5167, %v5181
    %v5185 = vlaneseq
    %v5186 = vshrl.u32 %v5185, 7
    %v5187 = vsub.s32 0, %v5186
    %v5188 = vrot.slane %v5155, %v5187
    %v5190 = vmul.f32 %v5182, %v5188
    %v5191 = vmul.f32 %v5183, %v5188
    %v5193 = vlaneseq
    %v5194 = vshrl.u32 %v5193, 7
    %v5195 = vsub.s32 0, %v5194
    %v5196 = vrot.slane %v5157, %v5195
    %v5198 = vadd.f32 %v5190, %v5196
    %v5199 = vadd.f32 %v5191, %v5196
    %v5201 = vrot.slane %v5199, 7
    %vm5203 = vcmask 1040384
    %v5204 = vsel %vm5203, %v5198, %v5201
    %v5205 = vld [vmem:[%s15] sm:$0x1]
    %v5206 = vld [vmem:[%s16] sm:$0x1]
    %vm5207 = vcmask 254976
    %v5208 = vsel %vm5207, %v5204, 0.0
    %5209 = vadd.xlane.f32.xlu0 %v5208
    %v5210 = vpop.xlane.xlu0 %5209
    %v5211 = vmul.f32 %v5210, %v2285
    %v5212 = vsub.f32 %v5204, %v5211
    %v5213 = vmul.f32 %v5212, %v5212
    %v5214 = vsel %vm5207, %v5213, 0.0
    %5215 = vadd.xlane.f32.xlu0 %v5214
    %v5216 = vpop.xlane.xlu0 %5215
    %v5217 = vmul.f32 %v5216, %v2285
    %v5218 = vadd.f32 %v5217, 1e-05
    %v5219 = vrsqrt.pop %v5218
    %v5220 = vmul.f32 %v5212, %v5219
    %v5222 = vlaneseq
    %v5223 = vshrl.u32 %v5222, 7
    %v5224 = vsub.s32 0, %v5223
    %v5225 = vrot.slane %v5205, %v5224
    %v5227 = vmul.f32 %v5220, %v5225
    %v5229 = vlaneseq
    %v5230 = vshrl.u32 %v5229, 7
    %v5231 = vsub.s32 0, %v5230
    %v5232 = vrot.slane %v5206, %v5231
    %v5234 = vadd.f32 %v5227, %v5232
    %v5235 = vld [vmem:[%s17] sm:$0xff]
    %v5236 = vld [vmem:[%s17 + $0x8] sm:$0xff]
    %v5237 = vld [vmem:[%s17 + $0x10] sm:$0xff]
    %v5238 = vld [vmem:[%s17 + $0x18] sm:$0xff]
    %v5239 = vld [vmem:[%s18] sm:$0x1]
    %v5241 = vlaneseq
    %v5242 = vshrl.u32 %v5241, 7
    %v5243 = vsub.s32 0, %v5242
    %v5244 = vrot.slane %v5239, %v5243
    %v5247 = vsel %vm205, %v5234, 0
    %5249 = vmatprep.subr.mxu0 0.0
    %5250 = vmatpush1.msra.mxu0 0.0
    %5251 = vmatprep.subr.mxu0 0.0
    %5252 = vmatpush1.msra.mxu0 0.0
    %5253 = vmatprep.subr.mxu0 0.0
    %5254 = vmatpush1.msra.mxu0 0.0
    %5255 = vmatprep.subr.mxu0 0.0
    %5256 = vmatpush1.msra.mxu0 0.0
    %5257 = vmatprep.subr.mxu0 0.0
    %5258 = vmatpush1.msra.mxu0 0.0
    %5259 = vmatprep.subr.mxu0 0.0
    %5260 = vmatpush1.msra.mxu0 0.0
    %5261 = vmatprep.subr.mxu0 0.0
    %5262 = vmatpush1.msra.mxu0 0.0
    %5263 = vmatprep.subr.mxu0 0.0
    %5264 = vmatpush1.msra.mxu0 0.0
    %5265 = vmatprep.subr.mxu0 0.0
    %5266 = vmatpush1.msra.mxu0 0.0
    %5267 = vmatprep.subr.mxu0 0.0
    %5268 = vmatpush1.msra.mxu0 0.0
    %5269 = vmatprep.subr.mxu0 0.0
    %5270 = vmatpush1.msra.mxu0 0.0
    %5271 = vmatprep.subr.mxu0 0.0
    %5272 = vmatpush1.msra.mxu0 0.0
    %5273 = vmatprep.subr.mxu0 0.0
    %5274 = vmatpush1.msra.mxu0 %v5238
    %5275 = vmatprep.subr.mxu0 0.0
    %5276 = vmatpush1.msra.mxu0 %v5237
    %5277 = vmatprep.subr.mxu0 0.0
    %5278 = vmatpush1.msra.mxu0 %v5236
    %5279 = vmatprep.subr.mxu0 0.0
    %5280 = vmatpush1.msra.mxu0 %v5235
    %5281 = vmatprep.subr.mxu0 0.0
    %5282 = vmatpush2.msra.mxu0 0.0
    %5283 = vmatprep.subr.mxu0 0.0
    %5284 = vmatpush2.msra.mxu0 0.0
    %5285 = vmatprep.subr.mxu0 0.0
    %5286 = vmatpush2.msra.mxu0 0.0
    %5287 = vmatprep.subr.mxu0 0.0
    %5288 = vmatpush2.msra.mxu0 0.0
    %5289 = vmatprep.subr.mxu0 0.0
    %5290 = vmatpush2.msra.mxu0 0.0
    %5291 = vmatprep.subr.mxu0 0.0
    %5292 = vmatpush2.msra.mxu0 0.0
    %5293 = vmatprep.subr.mxu0 0.0
    %5294 = vmatpush2.msra.mxu0 0.0
    %5295 = vmatprep.subr.mxu0 0.0
    %5296 = vmatpush2.msra.mxu0 0.0
    %5297 = vmatprep.subr.mxu0 0.0
    %5298 = vmatpush2.msra.mxu0 0.0
    %5299 = vmatprep.subr.mxu0 0.0
    %5300 = vmatpush2.msra.mxu0 0.0
    %5301 = vmatprep.subr.mxu0 0.0
    %5302 = vmatpush2.msra.mxu0 0.0
    %5303 = vmatprep.subr.mxu0 0.0
    %5304 = vmatpush2.msra.mxu0 0.0
    %5305 = vmatprep.subr.mxu0 0.0
    %5306 = vmatpush2.msra.mxu0 0.0
    %5307 = vmatprep.subr.mxu0 0.0
    %5308 = vmatpush2.msra.mxu0 0.0
    %5309 = vmatprep.subr.mxu0 0.0
    %5310 = vmatpush2.msra.mxu0 0.0
    %5311 = vmatprep.subr.mxu0 0.0
    %5312 = vmatpush2.msra.mxu0 0.0
    %5313 = vmatprep.mubr.f32.mxu0 0.0
    %5314 = vmatmul.mubr.f32.gmra.mxu0 %v5247
    %v5315 = vpop.f32.mrf.mxu0
    %v5316 = vadd.f32 %v5244, %v5315
    %v5317 = vpop.f32.mrf.mxu0
    %5318 = vdwg.mxu0
    %v5319 = vmax.f32 %v5316, 0.0
    %v5320 = vld [vmem:[%s19] sm:$0xff]
    %v5321 = vld [vmem:[%s19 + $0x8] sm:$0xff]
    %v5322 = vld [vmem:[%s19 + $0x10] sm:$0xff]
    %v5323 = vld [vmem:[%s19 + $0x18] sm:$0xff]
    %v5324 = vld [vmem:[%s19 + $0x20] sm:$0xff]
    %v5325 = vld [vmem:[%s19 + $0x28] sm:$0xff]
    %v5326 = vld [vmem:[%s19 + $0x30] sm:$0xff]
    %v5327 = vld [vmem:[%s19 + $0x38] sm:$0xff]
    %v5328 = vld [vmem:[%s20] sm:$0x1]
    %v5330 = vlaneseq
    %v5331 = vshrl.u32 %v5330, 7
    %v5332 = vsub.s32 0, %v5331
    %v5333 = vrot.slane %v5328, %v5332
    %v5336 = vsel %vm88, %v5319, 0
    %5338 = vmatprep.subr.mxu0 0.0
    %5339 = vmatpush1.msra.mxu0 0.0
    %5340 = vmatprep.subr.mxu0 0.0
    %5341 = vmatpush1.msra.mxu0 0.0
    %5342 = vmatprep.subr.mxu0 0.0
    %5343 = vmatpush1.msra.mxu0 0.0
    %5344 = vmatprep.subr.mxu0 0.0
    %5345 = vmatpush1.msra.mxu0 0.0
    %5346 = vmatprep.subr.mxu0 0.0
    %5347 = vmatpush1.msra.mxu0 0.0
    %5348 = vmatprep.subr.mxu0 0.0
    %5349 = vmatpush1.msra.mxu0 0.0
    %5350 = vmatprep.subr.mxu0 0.0
    %5351 = vmatpush1.msra.mxu0 0.0
    %5352 = vmatprep.subr.mxu0 0.0
    %5353 = vmatpush1.msra.mxu0 0.0
    %5354 = vmatprep.subr.mxu0 0.0
    %5355 = vmatpush1.msra.mxu0 %v5327
    %5356 = vmatprep.subr.mxu0 0.0
    %5357 = vmatpush1.msra.mxu0 %v5326
    %5358 = vmatprep.subr.mxu0 0.0
    %5359 = vmatpush1.msra.mxu0 %v5325
    %5360 = vmatprep.subr.mxu0 0.0
    %5361 = vmatpush1.msra.mxu0 %v5324
    %5362 = vmatprep.subr.mxu0 0.0
    %5363 = vmatpush1.msra.mxu0 %v5323
    %5364 = vmatprep.subr.mxu0 0.0
    %5365 = vmatpush1.msra.mxu0 %v5322
    %5366 = vmatprep.subr.mxu0 0.0
    %5367 = vmatpush1.msra.mxu0 %v5321
    %5368 = vmatprep.subr.mxu0 0.0
    %5369 = vmatpush1.msra.mxu0 %v5320
    %5370 = vmatprep.subr.mxu0 0.0
    %5371 = vmatpush2.msra.mxu0 0.0
    %5372 = vmatprep.subr.mxu0 0.0
    %5373 = vmatpush2.msra.mxu0 0.0
    %5374 = vmatprep.subr.mxu0 0.0
    %5375 = vmatpush2.msra.mxu0 0.0
    %5376 = vmatprep.subr.mxu0 0.0
    %5377 = vmatpush2.msra.mxu0 0.0
    %5378 = vmatprep.subr.mxu0 0.0
    %5379 = vmatpush2.msra.mxu0 0.0
    %5380 = vmatprep.subr.mxu0 0.0
    %5381 = vmatpush2.msra.mxu0 0.0
    %5382 = vmatprep.subr.mxu0 0.0
    %5383 = vmatpush2.msra.mxu0 0.0
    %5384 = vmatprep.subr.mxu0 0.0
    %5385 = vmatpush2.msra.mxu0 0.0
    %5386 = vmatprep.subr.mxu0 0.0
    %5387 = vmatpush2.msra.mxu0 0.0
    %5388 = vmatprep.subr.mxu0 0.0
    %5389 = vmatpush2.msra.mxu0 0.0
    %5390 = vmatprep.subr.mxu0 0.0
    %5391 = vmatpush2.msra.mxu0 0.0
    %5392 = vmatprep.subr.mxu0 0.0
    %5393 = vmatpush2.msra.mxu0 0.0
    %5394 = vmatprep.subr.mxu0 0.0
    %5395 = vmatpush2.msra.mxu0 0.0
    %5396 = vmatprep.subr.mxu0 0.0
    %5397 = vmatpush2.msra.mxu0 0.0
    %5398 = vmatprep.subr.mxu0 0.0
    %5399 = vmatpush2.msra.mxu0 0.0
    %5400 = vmatprep.subr.mxu0 0.0
    %5401 = vmatpush2.msra.mxu0 0.0
    %5402 = vmatprep.mubr.f32.mxu0 0.0
    %5403 = vmatmul.mubr.f32.gmra.mxu0 %v5336
    %v5404 = vpop.f32.mrf.mxu0
    %v5405 = vadd.f32 %v5333, %v5404
    %v5406 = vpop.f32.mrf.mxu0
    %5407 = vdwg.mxu0
    %vm5408 = vcmask 74752
    %5409 = vst.msk [vmem:[#allocation2] sm:$0x3] %vm5408, %v5405
    // Predicated region
    $region86: #{vit_forward.1} parent=1 // pred_check
      _
    $region87: #{vit_forward.1} parent=1 // pred_check_branch
      %5411 = sbr.rel (0) target = $region89
    $region88: #{vit_forward.1} parent=1 // pred_region
      %s5413 = ssub.s32 32, 32
      %5414 = vsyncadd [#allocation3], %s5413
      %s5416 = sshll.u32 [#allocation2], 4
      %s5417 = int_to_ptr.vmem [resolvable:$true] %s5416
      %5419 = dma.vmem_to_hbm [thread:$0]  %s5417, 32, %s21, [#allocation3]
    $region89: #{vit_forward.1} parent=1 // pred_fallthru
      _
    // Predicated region
    $region90: #{vit_forward.1} parent=1 // pred_check
      _
    $region91: #{vit_forward.1} parent=1 // pred_check_branch
      %5421 = sbr.rel (0) target = $region93
    $region92: #{vit_forward.1} parent=1 // pred_region
      %5422 = dma.done [#allocation3], 32
    $region93: #{vit_forward.1} parent=1 // pred_fallthru
      _
    %5423 = vsyncpa [#allocation3], 1

</llo_original>
